<compile_context>
chip_gen: v6e
topology: v6e:2x2x1
jax: 0.10.0
libtpu: 0.0.40
codegen_flags: <defaults>
</compile_context>

<pallas_src>
import functools

import jax
import jax.numpy as jnp
from jax.experimental import pallas as pl
from jax.experimental.pallas import tpu as pltpu

IN_FEATURES = 196608   # Linear(196608, 60)
OUT_FEATURES = 60
TK = 24576             # K-tile (divides 196608; multiple of 128)
NCORES = 2             # leading parallel axis: K-split across TCs on v7x


def linear_kernel(x_ref, w_ref, o_ref):
    """Grid = (core_split, k).  Each step does a (B, TK) @ (TK, N) partial
    matmul accumulated directly into the resident f32 partial-output block
    (one partial per core-split index); bias is added in the wrapper."""
    k = pl.program_id(1)

    @pl.when(k == 0)
    def _():
        o_ref[...] = jnp.zeros_like(o_ref)

    o_ref[...] += jnp.dot(
        x_ref[...], w_ref[...], preferred_element_type=jnp.float32
    )[None]


@functools.partial(jax.jit, static_argnames=("tk", "ncores"))
def learn_linear(x, w, b, *, tk=TK, ncores=NCORES):
    B, K = x.shape
    _, N = w.shape
    assert K % (tk * ncores) == 0, (K, tk, ncores)
    k_blocks_per_core = K // (tk * ncores)

    grid_spec = pltpu.PrefetchScalarGridSpec(
        num_scalar_prefetch=0,
        grid=(ncores, k_blocks_per_core),
        in_specs=[
            # x tile: (B, tk) at K-block (c * k_blocks_per_core + k)
            pl.BlockSpec((B, tk), lambda c, k: (0, c * k_blocks_per_core + k)),
            # weight tile: (tk, N) at the same K-block
            pl.BlockSpec((tk, N), lambda c, k: (c * k_blocks_per_core + k, 0)),
        ],
        # one resident f32 partial-sum block per core-split index
        out_specs=pl.BlockSpec((1, B, N), lambda c, k: (c, 0, 0)),
    )

    flops = 2 * B * K * N
    bytes_accessed = (K * N + B * K + ncores * B * N) * 4

    partials = pl.pallas_call(
        linear_kernel,
        out_shape=jax.ShapeDtypeStruct((ncores, B, N), jnp.float32),
        grid_spec=grid_spec,
        compiler_params=pltpu.CompilerParams(
            # outer axis: independent partials (sharded across TCs on v7x);
            # inner axis: K reduction.
            dimension_semantics=("parallel", "arbitrary"),
            # Lane-padded weight buffers (tk*128*4 B, double-buffered) + x
            # buffers need ~26 MiB; raise scoped VMEM above v5e's 16 MiB /
            # v6e's 32 MiB defaults while staying under v7x's 64 MiB physical.
            vmem_limit_bytes=48 << 20,
        ),
        cost_estimate=pl.CostEstimate(
            flops=flops, bytes_accessed=bytes_accessed, transcendentals=0
        ),
    )(x, w)

    # Sum the per-core partials and fuse the (tiny, 240 B) bias add here.
    return partials.sum(axis=0) + b[None, :]


if __name__ == "__main__":
    key = jax.random.PRNGKey(0)
    kx, kw, kb = jax.random.split(key, 3)

    B = 2
    # Deterministic parameter init (mimics PyTorch's U(-1/sqrt(K), 1/sqrt(K))).
    bound = 1.0 / (IN_FEATURES ** 0.5)
    w = jax.random.uniform(
        kw, (IN_FEATURES, OUT_FEATURES), jnp.float32, -bound, bound
    )
    b = jax.random.uniform(kb, (OUT_FEATURES,), jnp.float32, -bound, bound)
    x = jax.random.normal(kx, (B, IN_FEATURES), jnp.float32)

    out = learn_linear(x, w, b)
    out = jax.block_until_ready(out)

    ref = x @ w + b
    assert out.shape == (B, OUT_FEATURES)
    assert jnp.allclose(out, ref, atol=1e-3, rtol=1e-3)
    print("KERNEL_OK")
</pallas_src>

<mosaic_0001>
module attributes {stable_mosaic.version = 11 : i64} {
  func.func @linear_kernel(%arg0: i32, %arg1: i32, %arg2: memref<2x24576xf32, #tpu.memory_space<vmem>>, %arg3: memref<24576x60xf32, #tpu.memory_space<vmem>>, %arg4: memref<1x2x60xf32, #tpu.memory_space<vmem>>) attributes {dimension_semantics = [#tpu.dimension_semantics<parallel>, #tpu.dimension_semantics<arbitrary>], iteration_bounds = array<i64: 2, 4>, scalar_prefetch = 0 : i64, scratch_operands = 0 : i64, tpu.core_type = #tpu.core_type<tc>, window_params = [{transform_indices = @transform_0, window_bounds = array<i64: 2, 24576>}, {transform_indices = @transform_1, window_bounds = array<i64: 24576, 60>}, {transform_indices = @transform_2, window_bounds = array<i64: 1, 2, 60>}]} {
    %c0_i32 = arith.constant 0 : i32
    %0 = arith.cmpi eq, %arg1, %c0_i32 : i32
    %1 = arith.extui %0 : i1 to i32
    %c0_i32_0 = arith.constant 0 : i32
    %2 = arith.cmpi ne, %1, %c0_i32_0 : i32
    scf.if %2 {
      %cst_10 = arith.constant 0.000000e+00 : f32
      %10 = vector.broadcast %cst_10 : f32 to vector<1x2x60xf32>
      %c0_11 = arith.constant 0 : index
      %c0_12 = arith.constant 0 : index
      %c0_13 = arith.constant 0 : index
      %11 = vector.load %arg4[%c0_11, %c0_12, %c0_13] : memref<1x2x60xf32, #tpu.memory_space<vmem>>, vector<1x2x60xf32>
      tpu.vector_store %arg4[%c0_11, %c0_12, %c0_13], %10 {strides = array<i32>} : memref<1x2x60xf32, #tpu.memory_space<vmem>>, vector<1x2x60xf32>,
    } else {
    }
    %c0 = arith.constant 0 : index
    %c0_1 = arith.constant 0 : index
    %c0_2 = arith.constant 0 : index
    %3 = vector.load %arg4[%c0, %c0_1, %c0_2] : memref<1x2x60xf32, #tpu.memory_space<vmem>>, vector<1x2x60xf32>
    %c0_3 = arith.constant 0 : index
    %c0_4 = arith.constant 0 : index
    %4 = vector.load %arg2[%c0_3, %c0_4] : memref<2x24576xf32, #tpu.memory_space<vmem>>, vector<2x24576xf32>
    %c0_5 = arith.constant 0 : index
    %c0_6 = arith.constant 0 : index
    %5 = vector.load %arg3[%c0_5, %c0_6] : memref<24576x60xf32, #tpu.memory_space<vmem>>, vector<24576x60xf32>
    %cst = arith.constant dense<0.000000e+00> : vector<2x60xf32>
    %6 = tpu.matmul %4, %5, %cst {dimension_numbers = #tpu.dot_dimension_numbers<[1], [0], [0], [1], [0, 0, 1, 1], [], []>} : vector<2x24576xf32>, vector<24576x60xf32>, vector<2x60xf32> -> vector<2x60xf32>
    %7 = vector.shape_cast %6 : vector<2x60xf32> to vector<1x2x60xf32>
    %8 = arith.addf %3, %7 : vector<1x2x60xf32>
    %c0_7 = arith.constant 0 : index
    %c0_8 = arith.constant 0 : index
    %c0_9 = arith.constant 0 : index
    %9 = vector.load %arg4[%c0_7, %c0_8, %c0_9] : memref<1x2x60xf32, #tpu.memory_space<vmem>>, vector<1x2x60xf32>
    tpu.vector_store %arg4[%c0_7, %c0_8, %c0_9], %8 {strides = array<i32>} : memref<1x2x60xf32, #tpu.memory_space<vmem>>, vector<1x2x60xf32>,
    return
  }
  func.func @transform_0(%arg0: i32, %arg1: i32) -> (i32, i32) {
    %c4_i32 = arith.constant 4 : i32
    %0 = arith.muli %arg0, %c4_i32 : i32
    %1 = arith.addi %0, %arg1 : i32
    %c0_i32 = arith.constant 0 : i32
    %c0_i32_0 = arith.constant 0 : i32
    return %c0_i32, %1 : i32, i32
  }
  func.func @transform_1(%arg0: i32, %arg1: i32) -> (i32, i32) {
    %c4_i32 = arith.constant 4 : i32
    %0 = arith.muli %arg0, %c4_i32 : i32
    %1 = arith.addi %0, %arg1 : i32
    %c0_i32 = arith.constant 0 : i32
    %c0_i32_0 = arith.constant 0 : i32
    return %1, %c0_i32 : i32, i32
  }
  func.func @transform_2(%arg0: i32, %arg1: i32) -> (i32, i32, i32) {
    %c0_i32 = arith.constant 0 : i32
    %c0_i32_0 = arith.constant 0 : i32
    %c0_i32_1 = arith.constant 0 : i32
    return %arg0, %c0_i32, %c0_i32_0 : i32, i32, i32
  }
}

</mosaic_0001>

<llo_original>
// kernel: learn_linear.1
$region0: #{learn_linear.1}
  #allocation0 [shape = 'u32[]', space=smem, size = 0x4, offset = 0x4, fixed_abs, tag = 'smem constant byte address 0x4 - core index']
  #allocation1 [shape = 'u32[144,128]{1,0:T(1,128)}', space=vmem, size = 0x12000, scoped, tag = 'internal scratch']
  %s0 = inlined_call_operand.vmem [shape: f32[2,196608], index: 0, kind: input, shape index: {}]
  %s1 = inlined_call_operand.hbm [shape: f32[196608,60], index: 1, kind: input, shape index: {}]
  %s2 = inlined_call_operand.vmem [shape: f32[2,2,60], index: 2, kind: output, shape index: {}]
  %s3 = sld [smem:[#allocation0]]
  $region49: #{learn_linear.1} parent=0
    _
  %s5 = ssub.s32 1, %s3
  %s6 = scalar_select 0, %s5, %s3
  $region1: #{learn_linear.1} parent=0
    #allocation2 [shape = 'u8[25165824]{0}', space=vmem, size = 0x1800000, scoped, tag = 'input window, operand 1']
    #allocation3 [shape = 's32[2]{0}', space=sflag, size = 0x8, scoped, tag = 'scoped memory for learn_linear.1']
    %7 = vsyncpa [#allocation3], 0
    %s8 = scalar_lea.sflag [#allocation3], 1
    %9 = vsyncpa %s8, 0
    loop: start=0, step=1, limit=10
    $region2: #{learn_linear.1} parent=1 // loop_pre_header
      _
    $region3: #{learn_linear.1} parent=1 // loop_header
      %s11 = sphi 0, %s15
      %p12 = scmp.ge.s32.totalorder %s11, 10
      %s18 = sphi 0, %s30
      %s19 = sphi 0, %s26
      %s20 = sphi 0, %s18
      %s21 = sphi 0, %s19
      %s22 = sphi 0, %s20
      %s23 = sphi 0, %s21
      %s37 = sphi 0, %s39
      %s40 = sphi 0, %s37
      %s41 = sphi 0, %s40
      %s57 = sphi 0, %s41
      %s67 = sphi 0, %s69
      %s70 = sphi 0, %s67
      %s71 = sphi 0, %s70
      %s87 = sphi 0, %s71
      %s93 = sphi 0, %s95
      %s96 = sphi 0, %s93
      %s97 = sphi 0, %s96
      %s113 = sphi 0, %s97
    $region4: #{learn_linear.1} parent=1 // loop_header_branch
      %14 = sbr.rel (%p12) target = $region8
    $region5: #{learn_linear.1} parent=1 // loop_body
      %s16 = ssub.s32 %s11, 1
      %s17 = ssub.s32 %s11, 2
      %s24 = sadd.s32 1, %s19
      %p25 = scmp.ge.s32.totalorder %s24, 4
      %s26 = scalar_select %p25, 0, %s24
      %s27 = sadd.s32 1, %s18
      %s28 = scalar_select %p25, %s27, %s18
      %p29 = scmp.ge.s32.totalorder %s28, 2
      %s30 = scalar_select %p29, 0, %s28
      %s31 = smul.u32 %s18, 4
      %s32 = sadd.s32 %s31, %s19
      %s33 = smul.u32 %s30, 4
      %s34 = sadd.s32 %s33, %s26
      %s35 = ssub.s32 %s32, %s34
      %p36 = scmp.eq.s32.totalorder %s35, 0
      %s38 = sadd.s32 %s37, 1
      %s39 = scalar_select %p36, %s37, %s38
      %p42 = pneg %p36
      %p43 = scmp.eq.s32.totalorder %s11, 7
      %p44 = por %p42, %p43
      %p45 = scmp.ne.s32.totalorder %s37, %s40
      %p46 = scmp.eq.s32.totalorder %s11, 0
      %p47 = por %p45, %p46
      %p48 = scmp.ne.s32.totalorder %s37, %s40
      %p49 = scmp.eq.s32.totalorder %s16, 7
      %p50 = por %p48, %p49
      %p51 = scmp.ne.s32.totalorder %s40, %s41
      %p52 = scmp.eq.s32.totalorder %s16, 0
      %p53 = por %p51, %p52
      %p54 = scmp.ne.s32.totalorder %s40, %s41
      %p55 = scmp.eq.s32.totalorder %s17, 7
      %p56 = por %p54, %p55
      %p58 = scmp.ne.s32.totalorder %s41, %s57
      %p59 = scmp.eq.s32.totalorder %s17, 0
      %p60 = por %p58, %p59
      %s61 = smul.u32 %s18, 4
      %s62 = sadd.s32 %s61, %s19
      %s63 = smul.u32 %s30, 4
      %s64 = sadd.s32 %s63, %s26
      %s65 = ssub.s32 %s62, %s64
      %p66 = scmp.eq.s32.totalorder %s65, 0
      %s68 = sadd.s32 %s67, 1
      %s69 = scalar_select %p66, %s67, %s68
      %p72 = pneg %p66
      %p73 = scmp.eq.s32.totalorder %s11, 7
      %p74 = por %p72, %p73
      %p75 = scmp.ne.s32.totalorder %s67, %s70
      %p76 = scmp.eq.s32.totalorder %s11, 0
      %p77 = por %p75, %p76
      %p78 = scmp.ne.s32.totalorder %s67, %s70
      %p79 = scmp.eq.s32.totalorder %s16, 7
      %p80 = por %p78, %p79
      %p81 = scmp.ne.s32.totalorder %s70, %s71
      %p82 = scmp.eq.s32.totalorder %s16, 0
      %p83 = por %p81, %p82
      %p84 = scmp.ne.s32.totalorder %s70, %s71
      %p85 = scmp.eq.s32.totalorder %s17, 7
      %p86 = por %p84, %p85
      %p88 = scmp.ne.s32.totalorder %s71, %s87
      %p89 = scmp.eq.s32.totalorder %s17, 0
      %p90 = por %p88, %p89
      %s91 = ssub.s32 %s18, %s30
      %p92 = scmp.eq.s32.totalorder %s91, 0
      %s94 = sadd.s32 %s93, 1
      %s95 = scalar_select %p92, %s93, %s94
      %p98 = pneg %p92
      %p99 = scmp.eq.s32.totalorder %s11, 7
      %p100 = por %p98, %p99
      %p101 = scmp.ne.s32.totalorder %s93, %s96
      %p102 = scmp.eq.s32.totalorder %s11, 0
      %p103 = por %p101, %p102
      %p104 = scmp.ne.s32.totalorder %s93, %s96
      %p105 = scmp.eq.s32.totalorder %s16, 7
      %p106 = por %p104, %p105
      %p107 = scmp.ne.s32.totalorder %s96, %s97
      %p108 = scmp.eq.s32.totalorder %s16, 0
      %p109 = por %p107, %p108
      %p110 = scmp.ne.s32.totalorder %s96, %s97
      %p111 = scmp.eq.s32.totalorder %s17, 7
      %p112 = por %p110, %p111
      %p114 = scmp.ne.s32.totalorder %s97, %s113
      %p115 = scmp.eq.s32.totalorder %s17, 0
      %p116 = por %p114, %p115
      %p117 = scmp.le.s32.totalorder 1, %s11
      %p118 = scmp.lt.s32.totalorder %s11, 9
      %p119 = pnand %p117, %p118
      %p120 = pneg %p119
      // Predicated region
      $region9: #{learn_linear.1} parent=5 // pred_check
        _
      $region10: #{learn_linear.1} parent=5 // pred_check_branch
        %122 = sbr.rel (%p119) target = $region12
      $region11: #{learn_linear.1} parent=5 // pred_region
        %s123 = ssub.s32 %s11, 1
      $region12: #{learn_linear.1} parent=5 // pred_fallthru
        _
      %p124 = scmp.lt.s32.totalorder %s11, 8
      // Predicated region
      $region13: #{learn_linear.1} parent=5 // pred_check
        %p125 = pneg %p124
      $region14: #{learn_linear.1} parent=5 // pred_check_branch
        %127 = sbr.rel (%p125) target = $region16
      $region15: #{learn_linear.1} parent=5 // pred_region
        // Predicated region
        $region17: #{learn_linear.1} parent=15 // pred_check
          %p128 = pneg %p47
        $region18: #{learn_linear.1} parent=15 // pred_check_branch
          %130 = sbr.rel (%p128) target = $region20
        $region19: #{learn_linear.1} parent=15 // pred_region
          %s131 = smul.u32 %s18, 4
          %s132 = sadd.s32 %s131, %s19
          %s133 = smul.u32 192, %s132
          %p134 = scmp.lt.s32.totalorder %s133, 1535
          %s135 = scalar_select %p134, %s133, 1535
          %s136 = smul.addr %s135, 2
          %s137 = scalar_lea.vmem %s0, %s136
          %s138 = smul.u32 %s18, 4
          %s139 = sadd.s32 %s138, %s19
          %s140 = smul.u32 192, %s139
        $region20: #{learn_linear.1} parent=15 // pred_fallthru
          _
        // Predicated region
        $region21: #{learn_linear.1} parent=15 // pred_check
          %p141 = pneg %p77
        $region22: #{learn_linear.1} parent=15 // pred_check_branch
          %143 = sbr.rel (%p141) target = $region24
        $region23: #{learn_linear.1} parent=15 // pred_region
          %s144 = sand.u32 %s67, 1
          %s145 = scalar_lea.sflag [#allocation3], %s144
          %s146 = sand.u32 %s67, 1
          %s147 = smul.addr %s146, 24576
          %s148 = scalar_lea.vmem [#allocation2], %s147
          %s149 = smul.u32 %s18, 4
          %s150 = sadd.s32 %s149, %s19
          %s151 = smul.u32 3072, %s150
          %s153 = ssub.s32 393216, 393216
          %154 = vsyncadd %s145, %s153
          %s155 = smul.addr %s151, 128
          %s156 = scalar_lea.hbm %s1, %s155
          %s157 = sshll.u32 %s148, 4
          %s158 = int_to_ptr.vmem [resolvable:$true] %s157
          %163 = dma.hbm_to_vmem [thread:$0]  %s156, 393216, %s158, %s145, 128, 128, 8
        $region24: #{learn_linear.1} parent=15 // pred_fallthru
          _
      $region16: #{learn_linear.1} parent=5 // pred_fallthru
        _
      %p164 = scmp.le.s32.totalorder 1, %s11
      %p165 = scmp.lt.s32.totalorder %s11, 9
      %p166 = pnand %p164, %p165
      %p167 = pneg %p166
      // Predicated region
      $region25: #{learn_linear.1} parent=5 // pred_check
        _
      $region26: #{learn_linear.1} parent=5 // pred_check_branch
        %169 = sbr.rel (%p166) target = $region28
      $region27: #{learn_linear.1} parent=5 // pred_region
        %s170 = ssub.s32 %s11, 1
        %s171 = sand.u32 %s70, 1
        %s172 = scalar_lea.sflag [#allocation3], %s171
        %s173 = sand.u32 %s70, 1
        %s174 = smul.addr %s173, 24576
        %s175 = scalar_lea.vmem [#allocation2], %s174
        // Predicated region
        $region29: #{learn_linear.1} parent=27 // pred_check
          %p176 = pneg %p83
        $region30: #{learn_linear.1} parent=27 // pred_check_branch
          %178 = sbr.rel (%p176) target = $region32
        $region31: #{learn_linear.1} parent=27 // pred_region
          %179 = dma.done %s172, 393216
        $region32: #{learn_linear.1} parent=27 // pred_fallthru
          _
        %s180 = smul.u32 %s20, 4
        %s181 = sadd.s32 %s180, %s21
        %s182 = smul.u32 192, %s181
        %p183 = scmp.lt.s32.totalorder %s182, 1535
        %s184 = scalar_select %p183, %s182, 1535
        %s185 = smul.addr %s184, 2
        %s186 = scalar_lea.vmem %s0, %s185
        %p187 = pneg %p53
        %p188 = pneg %p50
        %s189 = sand.u32 %s70, 1
        %s190 = scalar_lea.sflag [#allocation3], %s189
        %s191 = sand.u32 %s70, 1
        %s192 = smul.addr %s191, 24576
        %s193 = scalar_lea.vmem [#allocation2], %s192
        %p194 = pneg %p83
        %p195 = pneg %p80
        %p196 = pneg %p109
        %p197 = pneg %p106
        %p198 = scmp.lt.s32.totalorder %s20, 1
        %s199 = scalar_select %p198, %s20, 1
        %s200 = smul.addr %s199, 2
        %s201 = scalar_lea.vmem %s2, %s200
        %s202 = smul.u32 %s20, 4
        %s203 = sadd.s32 %s202, %s21
        %s204 = smul.u32 192, %s203
        %p205 = scmp.lt.s32.totalorder %s204, 1535
        %s206 = scalar_select %p205, %s204, 1535
        %s207 = smul.addr %s206, 2
        %s208 = scalar_lea.vmem %s0, %s207
        %s209 = smul.u32 %s20, 4
        %s210 = sadd.s32 %s209, %s21
        %s211 = smul.u32 192, %s210
        %s212 = smul.u32 %s20, 4
        %s213 = sadd.s32 %s212, %s21
        %s214 = smul.u32 3072, %s213
        %p215 = scmp.lt.s32.totalorder %s20, 1
        %s216 = scalar_select %p215, %s20, 1
        %s217 = smul.addr %s216, 2
        %s218 = scalar_lea.vmem %s2, %s217
        %p219 = scmp.eq.s32.totalorder %s21, 0
        // Predicated region
        $region33: #{learn_linear.1} parent=27 // pred_check
          %p220 = pneg %p219
        $region34: #{learn_linear.1} parent=27 // pred_check_branch
          %222 = sbr.rel (%p220) target = $region36
        $region35: #{learn_linear.1} parent=27 // pred_region
          %vm223 = vcmask 484352
          %224 = vst.msk [vmem:[%s218] sm:$0x3] %vm223, 0.0
        $region36: #{learn_linear.1} parent=27 // pred_fallthru
          _
        %v225 = vld [vmem:[%s218] sm:$0x3]
        %v226 = vld [vmem:[%s208] sm:$0xff]
        %v227 = vld [vmem:[%s208 + $0x8] sm:$0xff]
        %v228 = vld [vmem:[%s208 + $0x10] sm:$0xff]
        %v229 = vld [vmem:[%s208 + $0x18] sm:$0xff]
        %v230 = vld [vmem:[%s208 + $0x20] sm:$0xff]
        %v231 = vld [vmem:[%s208 + $0x28] sm:$0xff]
        %v232 = vld [vmem:[%s208 + $0x30] sm:$0xff]
        %v233 = vld [vmem:[%s208 + $0x38] sm:$0xff]
        %v234 = vld [vmem:[%s208 + $0x40] sm:$0xff]
        %v235 = vld [vmem:[%s208 + $0x48] sm:$0xff]
        %v236 = vld [vmem:[%s208 + $0x50] sm:$0xff]
        %v237 = vld [vmem:[%s208 + $0x58] sm:$0xff]
        %v238 = vld [vmem:[%s208 + $0x60] sm:$0xff]
        %v239 = vld [vmem:[%s208 + $0x68] sm:$0xff]
        %v240 = vld [vmem:[%s208 + $0x70] sm:$0xff]
        %v241 = vld [vmem:[%s208 + $0x78] sm:$0xff]
        %v242 = vld [vmem:[%s208 + $0x80] sm:$0xff]
        %v243 = vld [vmem:[%s208 + $0x88] sm:$0xff]
        %v244 = vld [vmem:[%s208 + $0x90] sm:$0xff]
        %v245 = vld [vmem:[%s208 + $0x98] sm:$0xff]
        %v246 = vld [vmem:[%s208 + $0xa0] sm:$0xff]
        %v247 = vld [vmem:[%s208 + $0xa8] sm:$0xff]
        %v248 = vld [vmem:[%s208 + $0xb0] sm:$0xff]
        %v249 = vld [vmem:[%s208 + $0xb8] sm:$0xff]
        %v250 = vld [vmem:[%s208 + $0xc0] sm:$0xff]
        %v251 = vld [vmem:[%s208 + $0xc8] sm:$0xff]
        %v252 = vld [vmem:[%s208 + $0xd0] sm:$0xff]
        %v253 = vld [vmem:[%s208 + $0xd8] sm:$0xff]
        %v254 = vld [vmem:[%s208 + $0xe0] sm:$0xff]
        %v255 = vld [vmem:[%s208 + $0xe8] sm:$0xff]
        %v256 = vld [vmem:[%s208 + $0xf0] sm:$0xff]
        %v257 = vld [vmem:[%s208 + $0xf8] sm:$0xff]
        %v258 = vld [vmem:[%s208 + $0x100] sm:$0xff]
        %v259 = vld [vmem:[%s208 + $0x108] sm:$0xff]
        %v260 = vld [vmem:[%s208 + $0x110] sm:$0xff]
        %v261 = vld [vmem:[%s208 + $0x118] sm:$0xff]
        %v262 = vld [vmem:[%s208 + $0x120] sm:$0xff]
        %v263 = vld [vmem:[%s208 + $0x128] sm:$0xff]
        %v264 = vld [vmem:[%s208 + $0x130] sm:$0xff]
        %v265 = vld [vmem:[%s208 + $0x138] sm:$0xff]
        %v266 = vld [vmem:[%s208 + $0x140] sm:$0xff]
        %v267 = vld [vmem:[%s208 + $0x148] sm:$0xff]
        %v268 = vld [vmem:[%s208 + $0x150] sm:$0xff]
        %v269 = vld [vmem:[%s208 + $0x158] sm:$0xff]
        %v270 = vld [vmem:[%s208 + $0x160] sm:$0xff]
        %v271 = vld [vmem:[%s208 + $0x168] sm:$0xff]
        %v272 = vld [vmem:[%s208 + $0x170] sm:$0xff]
        %v273 = vld [vmem:[%s208 + $0x178] sm:$0xff]
        %v274 = vld [vmem:[%s175] sm:$0xff]
        %v275 = vld [vmem:[%s175 + $0x8] sm:$0xff]
        %v276 = vld [vmem:[%s175 + $0x10] sm:$0xff]
        %v277 = vld [vmem:[%s175 + $0x18] sm:$0xff]
        %v278 = vld [vmem:[%s175 + $0x20] sm:$0xff]
        %v279 = vld [vmem:[%s175 + $0x28] sm:$0xff]
        %v280 = vld [vmem:[%s175 + $0x30] sm:$0xff]
        %v281 = vld [vmem:[%s175 + $0x38] sm:$0xff]
        %v282 = vld [vmem:[%s175 + $0x40] sm:$0xff]
        %v283 = vld [vmem:[%s175 + $0x48] sm:$0xff]
        %v284 = vld [vmem:[%s175 + $0x50] sm:$0xff]
        %v285 = vld [vmem:[%s175 + $0x58] sm:$0xff]
        %v286 = vld [vmem:[%s175 + $0x60] sm:$0xff]
        %v287 = vld [vmem:[%s175 + $0x68] sm:$0xff]
        %v288 = vld [vmem:[%s175 + $0x70] sm:$0xff]
        %v289 = vld [vmem:[%s175 + $0x78] sm:$0xff]
        %v290 = vld [vmem:[%s175 + $0x80] sm:$0xff]
        %v291 = vld [vmem:[%s175 + $0x88] sm:$0xff]
        %v292 = vld [vmem:[%s175 + $0x90] sm:$0xff]
        %v293 = vld [vmem:[%s175 + $0x98] sm:$0xff]
        %v294 = vld [vmem:[%s175 + $0xa0] sm:$0xff]
        %v295 = vld [vmem:[%s175 + $0xa8] sm:$0xff]
        %v296 = vld [vmem:[%s175 + $0xb0] sm:$0xff]
        %v297 = vld [vmem:[%s175 + $0xb8] sm:$0xff]
        %v298 = vld [vmem:[%s175 + $0xc0] sm:$0xff]
        %v299 = vld [vmem:[%s175 + $0xc8] sm:$0xff]
        %v300 = vld [vmem:[%s175 + $0xd0] sm:$0xff]
        %v301 = vld [vmem:[%s175 + $0xd8] sm:$0xff]
        %v302 = vld [vmem:[%s175 + $0xe0] sm:$0xff]
        %v303 = vld [vmem:[%s175 + $0xe8] sm:$0xff]
        %v304 = vld [vmem:[%s175 + $0xf0] sm:$0xff]
        %v305 = vld [vmem:[%s175 + $0xf8] sm:$0xff]
        %v306 = vld [vmem:[%s175 + $0x100] sm:$0xff]
        %v307 = vld [vmem:[%s175 + $0x108] sm:$0xff]
        %v308 = vld [vmem:[%s175 + $0x110] sm:$0xff]
        %v309 = vld [vmem:[%s175 + $0x118] sm:$0xff]
        %v310 = vld [vmem:[%s175 + $0x120] sm:$0xff]
        %v311 = vld [vmem:[%s175 + $0x128] sm:$0xff]
        %v312 = vld [vmem:[%s175 + $0x130] sm:$0xff]
        %v313 = vld [vmem:[%s175 + $0x138] sm:$0xff]
        %v314 = vld [vmem:[%s175 + $0x140] sm:$0xff]
        %v315 = vld [vmem:[%s175 + $0x148] sm:$0xff]
        %v316 = vld [vmem:[%s175 + $0x150] sm:$0xff]
        %v317 = vld [vmem:[%s175 + $0x158] sm:$0xff]
        %v318 = vld [vmem:[%s175 + $0x160] sm:$0xff]
        %v319 = vld [vmem:[%s175 + $0x168] sm:$0xff]
        %v320 = vld [vmem:[%s175 + $0x170] sm:$0xff]
        %v321 = vld [vmem:[%s175 + $0x178] sm:$0xff]
        %v322 = vld [vmem:[%s175 + $0x180] sm:$0xff]
        %v323 = vld [vmem:[%s175 + $0x188] sm:$0xff]
        %v324 = vld [vmem:[%s175 + $0x190] sm:$0xff]
        %v325 = vld [vmem:[%s175 + $0x198] sm:$0xff]
        %v326 = vld [vmem:[%s175 + $0x1a0] sm:$0xff]
        %v327 = vld [vmem:[%s175 + $0x1a8] sm:$0xff]
        %v328 = vld [vmem:[%s175 + $0x1b0] sm:$0xff]
        %v329 = vld [vmem:[%s175 + $0x1b8] sm:$0xff]
        %v330 = vld [vmem:[%s175 + $0x1c0] sm:$0xff]
        %v331 = vld [vmem:[%s175 + $0x1c8] sm:$0xff]
        %v332 = vld [vmem:[%s175 + $0x1d0] sm:$0xff]
        %v333 = vld [vmem:[%s175 + $0x1d8] sm:$0xff]
        %v334 = vld [vmem:[%s175 + $0x1e0] sm:$0xff]
        %v335 = vld [vmem:[%s175 + $0x1e8] sm:$0xff]
        %v336 = vld [vmem:[%s175 + $0x1f0] sm:$0xff]
        %v337 = vld [vmem:[%s175 + $0x1f8] sm:$0xff]
        %v338 = vld [vmem:[%s175 + $0x200] sm:$0xff]
        %v339 = vld [vmem:[%s175 + $0x208] sm:$0xff]
        %v340 = vld [vmem:[%s175 + $0x210] sm:$0xff]
        %v341 = vld [vmem:[%s175 + $0x218] sm:$0xff]
        %v342 = vld [vmem:[%s175 + $0x220] sm:$0xff]
        %v343 = vld [vmem:[%s175 + $0x228] sm:$0xff]
        %v344 = vld [vmem:[%s175 + $0x230] sm:$0xff]
        %v345 = vld [vmem:[%s175 + $0x238] sm:$0xff]
        %v346 = vld [vmem:[%s175 + $0x240] sm:$0xff]
        %v347 = vld [vmem:[%s175 + $0x248] sm:$0xff]
        %v348 = vld [vmem:[%s175 + $0x250] sm:$0xff]
        %v349 = vld [vmem:[%s175 + $0x258] sm:$0xff]
        %v350 = vld [vmem:[%s175 + $0x260] sm:$0xff]
        %v351 = vld [vmem:[%s175 + $0x268] sm:$0xff]
        %v352 = vld [vmem:[%s175 + $0x270] sm:$0xff]
        %v353 = vld [vmem:[%s175 + $0x278] sm:$0xff]
        %v354 = vld [vmem:[%s175 + $0x280] sm:$0xff]
        %v355 = vld [vmem:[%s175 + $0x288] sm:$0xff]
        %v356 = vld [vmem:[%s175 + $0x290] sm:$0xff]
        %v357 = vld [vmem:[%s175 + $0x298] sm:$0xff]
        %v358 = vld [vmem:[%s175 + $0x2a0] sm:$0xff]
        %v359 = vld [vmem:[%s175 + $0x2a8] sm:$0xff]
        %v360 = vld [vmem:[%s175 + $0x2b0] sm:$0xff]
        %v361 = vld [vmem:[%s175 + $0x2b8] sm:$0xff]
        %v362 = vld [vmem:[%s175 + $0x2c0] sm:$0xff]
        %v363 = vld [vmem:[%s175 + $0x2c8] sm:$0xff]
        %v364 = vld [vmem:[%s175 + $0x2d0] sm:$0xff]
        %v365 = vld [vmem:[%s175 + $0x2d8] sm:$0xff]
        %v366 = vld [vmem:[%s175 + $0x2e0] sm:$0xff]
        %v367 = vld [vmem:[%s175 + $0x2e8] sm:$0xff]
        %v368 = vld [vmem:[%s175 + $0x2f0] sm:$0xff]
        %v369 = vld [vmem:[%s175 + $0x2f8] sm:$0xff]
        %v370 = vld [vmem:[%s175 + $0x300] sm:$0xff]
        %v371 = vld [vmem:[%s175 + $0x308] sm:$0xff]
        %v372 = vld [vmem:[%s175 + $0x310] sm:$0xff]
        %v373 = vld [vmem:[%s175 + $0x318] sm:$0xff]
        %v374 = vld [vmem:[%s175 + $0x320] sm:$0xff]
        %v375 = vld [vmem:[%s175 + $0x328] sm:$0xff]
        %v376 = vld [vmem:[%s175 + $0x330] sm:$0xff]
        %v377 = vld [vmem:[%s175 + $0x338] sm:$0xff]
        %v378 = vld [vmem:[%s175 + $0x340] sm:$0xff]
        %v379 = vld [vmem:[%s175 + $0x348] sm:$0xff]
        %v380 = vld [vmem:[%s175 + $0x350] sm:$0xff]
        %v381 = vld [vmem:[%s175 + $0x358] sm:$0xff]
        %v382 = vld [vmem:[%s175 + $0x360] sm:$0xff]
        %v383 = vld [vmem:[%s175 + $0x368] sm:$0xff]
        %v384 = vld [vmem:[%s175 + $0x370] sm:$0xff]
        %v385 = vld [vmem:[%s175 + $0x378] sm:$0xff]
        %v386 = vld [vmem:[%s175 + $0x380] sm:$0xff]
        %v387 = vld [vmem:[%s175 + $0x388] sm:$0xff]
        %v388 = vld [vmem:[%s175 + $0x390] sm:$0xff]
        %v389 = vld [vmem:[%s175 + $0x398] sm:$0xff]
        %v390 = vld [vmem:[%s175 + $0x3a0] sm:$0xff]
        %v391 = vld [vmem:[%s175 + $0x3a8] sm:$0xff]
        %v392 = vld [vmem:[%s175 + $0x3b0] sm:$0xff]
        %v393 = vld [vmem:[%s175 + $0x3b8] sm:$0xff]
        %v394 = vld [vmem:[%s175 + $0x3c0] sm:$0xff]
        %v395 = vld [vmem:[%s175 + $0x3c8] sm:$0xff]
        %v396 = vld [vmem:[%s175 + $0x3d0] sm:$0xff]
        %v397 = vld [vmem:[%s175 + $0x3d8] sm:$0xff]
        %v398 = vld [vmem:[%s175 + $0x3e0] sm:$0xff]
        %v399 = vld [vmem:[%s175 + $0x3e8] sm:$0xff]
        %v400 = vld [vmem:[%s175 + $0x3f0] sm:$0xff]
        %v401 = vld [vmem:[%s175 + $0x3f8] sm:$0xff]
        %v402 = vld [vmem:[%s175 + $0x400] sm:$0xff]
        %v403 = vld [vmem:[%s175 + $0x408] sm:$0xff]
        %v404 = vld [vmem:[%s175 + $0x410] sm:$0xff]
        %v405 = vld [vmem:[%s175 + $0x418] sm:$0xff]
        %v406 = vld [vmem:[%s175 + $0x420] sm:$0xff]
        %v407 = vld [vmem:[%s175 + $0x428] sm:$0xff]
        %v408 = vld [vmem:[%s175 + $0x430] sm:$0xff]
        %v409 = vld [vmem:[%s175 + $0x438] sm:$0xff]
        %v410 = vld [vmem:[%s175 + $0x440] sm:$0xff]
        %v411 = vld [vmem:[%s175 + $0x448] sm:$0xff]
        %v412 = vld [vmem:[%s175 + $0x450] sm:$0xff]
        %v413 = vld [vmem:[%s175 + $0x458] sm:$0xff]
        %v414 = vld [vmem:[%s175 + $0x460] sm:$0xff]
        %v415 = vld [vmem:[%s175 + $0x468] sm:$0xff]
        %v416 = vld [vmem:[%s175 + $0x470] sm:$0xff]
        %v417 = vld [vmem:[%s175 + $0x478] sm:$0xff]
        %v418 = vld [vmem:[%s175 + $0x480] sm:$0xff]
        %v419 = vld [vmem:[%s175 + $0x488] sm:$0xff]
        %v420 = vld [vmem:[%s175 + $0x490] sm:$0xff]
        %v421 = vld [vmem:[%s175 + $0x498] sm:$0xff]
        %v422 = vld [vmem:[%s175 + $0x4a0] sm:$0xff]
        %v423 = vld [vmem:[%s175 + $0x4a8] sm:$0xff]
        %v424 = vld [vmem:[%s175 + $0x4b0] sm:$0xff]
        %v425 = vld [vmem:[%s175 + $0x4b8] sm:$0xff]
        %v426 = vld [vmem:[%s175 + $0x4c0] sm:$0xff]
        %v427 = vld [vmem:[%s175 + $0x4c8] sm:$0xff]
        %v428 = vld [vmem:[%s175 + $0x4d0] sm:$0xff]
        %v429 = vld [vmem:[%s175 + $0x4d8] sm:$0xff]
        %v430 = vld [vmem:[%s175 + $0x4e0] sm:$0xff]
        %v431 = vld [vmem:[%s175 + $0x4e8] sm:$0xff]
        %v432 = vld [vmem:[%s175 + $0x4f0] sm:$0xff]
        %v433 = vld [vmem:[%s175 + $0x4f8] sm:$0xff]
        %v434 = vld [vmem:[%s175 + $0x500] sm:$0xff]
        %v435 = vld [vmem:[%s175 + $0x508] sm:$0xff]
        %v436 = vld [vmem:[%s175 + $0x510] sm:$0xff]
        %v437 = vld [vmem:[%s175 + $0x518] sm:$0xff]
        %v438 = vld [vmem:[%s175 + $0x520] sm:$0xff]
        %v439 = vld [vmem:[%s175 + $0x528] sm:$0xff]
        %v440 = vld [vmem:[%s175 + $0x530] sm:$0xff]
        %v441 = vld [vmem:[%s175 + $0x538] sm:$0xff]
        %v442 = vld [vmem:[%s175 + $0x540] sm:$0xff]
        %v443 = vld [vmem:[%s175 + $0x548] sm:$0xff]
        %v444 = vld [vmem:[%s175 + $0x550] sm:$0xff]
        %v445 = vld [vmem:[%s175 + $0x558] sm:$0xff]
        %v446 = vld [vmem:[%s175 + $0x560] sm:$0xff]
        %v447 = vld [vmem:[%s175 + $0x568] sm:$0xff]
        %v448 = vld [vmem:[%s175 + $0x570] sm:$0xff]
        %v449 = vld [vmem:[%s175 + $0x578] sm:$0xff]
        %v450 = vld [vmem:[%s175 + $0x580] sm:$0xff]
        %v451 = vld [vmem:[%s175 + $0x588] sm:$0xff]
        %v452 = vld [vmem:[%s175 + $0x590] sm:$0xff]
        %v453 = vld [vmem:[%s175 + $0x598] sm:$0xff]
        %v454 = vld [vmem:[%s175 + $0x5a0] sm:$0xff]
        %v455 = vld [vmem:[%s175 + $0x5a8] sm:$0xff]
        %v456 = vld [vmem:[%s175 + $0x5b0] sm:$0xff]
        %v457 = vld [vmem:[%s175 + $0x5b8] sm:$0xff]
        %v458 = vld [vmem:[%s175 + $0x5c0] sm:$0xff]
        %v459 = vld [vmem:[%s175 + $0x5c8] sm:$0xff]
        %v460 = vld [vmem:[%s175 + $0x5d0] sm:$0xff]
        %v461 = vld [vmem:[%s175 + $0x5d8] sm:$0xff]
        %v462 = vld [vmem:[%s175 + $0x5e0] sm:$0xff]
        %v463 = vld [vmem:[%s175 + $0x5e8] sm:$0xff]
        %v464 = vld [vmem:[%s175 + $0x5f0] sm:$0xff]
        %v465 = vld [vmem:[%s175 + $0x5f8] sm:$0xff]
        %v466 = vld [vmem:[%s175 + $0x600] sm:$0xff]
        %v467 = vld [vmem:[%s175 + $0x608] sm:$0xff]
        %v468 = vld [vmem:[%s175 + $0x610] sm:$0xff]
        %v469 = vld [vmem:[%s175 + $0x618] sm:$0xff]
        %v470 = vld [vmem:[%s175 + $0x620] sm:$0xff]
        %v471 = vld [vmem:[%s175 + $0x628] sm:$0xff]
        %v472 = vld [vmem:[%s175 + $0x630] sm:$0xff]
        %v473 = vld [vmem:[%s175 + $0x638] sm:$0xff]
        %v474 = vld [vmem:[%s175 + $0x640] sm:$0xff]
        %v475 = vld [vmem:[%s175 + $0x648] sm:$0xff]
        %v476 = vld [vmem:[%s175 + $0x650] sm:$0xff]
        %v477 = vld [vmem:[%s175 + $0x658] sm:$0xff]
        %v478 = vld [vmem:[%s175 + $0x660] sm:$0xff]
        %v479 = vld [vmem:[%s175 + $0x668] sm:$0xff]
        %v480 = vld [vmem:[%s175 + $0x670] sm:$0xff]
        %v481 = vld [vmem:[%s175 + $0x678] sm:$0xff]
        %v482 = vld [vmem:[%s175 + $0x680] sm:$0xff]
        %v483 = vld [vmem:[%s175 + $0x688] sm:$0xff]
        %v484 = vld [vmem:[%s175 + $0x690] sm:$0xff]
        %v485 = vld [vmem:[%s175 + $0x698] sm:$0xff]
        %v486 = vld [vmem:[%s175 + $0x6a0] sm:$0xff]
        %v487 = vld [vmem:[%s175 + $0x6a8] sm:$0xff]
        %v488 = vld [vmem:[%s175 + $0x6b0] sm:$0xff]
        %v489 = vld [vmem:[%s175 + $0x6b8] sm:$0xff]
        %v490 = vld [vmem:[%s175 + $0x6c0] sm:$0xff]
        %v491 = vld [vmem:[%s175 + $0x6c8] sm:$0xff]
        %v492 = vld [vmem:[%s175 + $0x6d0] sm:$0xff]
        %v493 = vld [vmem:[%s175 + $0x6d8] sm:$0xff]
        %v494 = vld [vmem:[%s175 + $0x6e0] sm:$0xff]
        %v495 = vld [vmem:[%s175 + $0x6e8] sm:$0xff]
        %v496 = vld [vmem:[%s175 + $0x6f0] sm:$0xff]
        %v497 = vld [vmem:[%s175 + $0x6f8] sm:$0xff]
        %v498 = vld [vmem:[%s175 + $0x700] sm:$0xff]
        %v499 = vld [vmem:[%s175 + $0x708] sm:$0xff]
        %v500 = vld [vmem:[%s175 + $0x710] sm:$0xff]
        %v501 = vld [vmem:[%s175 + $0x718] sm:$0xff]
        %v502 = vld [vmem:[%s175 + $0x720] sm:$0xff]
        %v503 = vld [vmem:[%s175 + $0x728] sm:$0xff]
        %v504 = vld [vmem:[%s175 + $0x730] sm:$0xff]
        %v505 = vld [vmem:[%s175 + $0x738] sm:$0xff]
        %v506 = vld [vmem:[%s175 + $0x740] sm:$0xff]
        %v507 = vld [vmem:[%s175 + $0x748] sm:$0xff]
        %v508 = vld [vmem:[%s175 + $0x750] sm:$0xff]
        %v509 = vld [vmem:[%s175 + $0x758] sm:$0xff]
        %v510 = vld [vmem:[%s175 + $0x760] sm:$0xff]
        %v511 = vld [vmem:[%s175 + $0x768] sm:$0xff]
        %v512 = vld [vmem:[%s175 + $0x770] sm:$0xff]
        %v513 = vld [vmem:[%s175 + $0x778] sm:$0xff]
        %v514 = vld [vmem:[%s175 + $0x780] sm:$0xff]
        %v515 = vld [vmem:[%s175 + $0x788] sm:$0xff]
        %v516 = vld [vmem:[%s175 + $0x790] sm:$0xff]
        %v517 = vld [vmem:[%s175 + $0x798] sm:$0xff]
        %v518 = vld [vmem:[%s175 + $0x7a0] sm:$0xff]
        %v519 = vld [vmem:[%s175 + $0x7a8] sm:$0xff]
        %v520 = vld [vmem:[%s175 + $0x7b0] sm:$0xff]
        %v521 = vld [vmem:[%s175 + $0x7b8] sm:$0xff]
        %v522 = vld [vmem:[%s175 + $0x7c0] sm:$0xff]
        %v523 = vld [vmem:[%s175 + $0x7c8] sm:$0xff]
        %v524 = vld [vmem:[%s175 + $0x7d0] sm:$0xff]
        %v525 = vld [vmem:[%s175 + $0x7d8] sm:$0xff]
        %v526 = vld [vmem:[%s175 + $0x7e0] sm:$0xff]
        %v527 = vld [vmem:[%s175 + $0x7e8] sm:$0xff]
        %v528 = vld [vmem:[%s175 + $0x7f0] sm:$0xff]
        %v529 = vld [vmem:[%s175 + $0x7f8] sm:$0xff]
        %v530 = vld [vmem:[%s175 + $0x800] sm:$0xff]
        %v531 = vld [vmem:[%s175 + $0x808] sm:$0xff]
        %v532 = vld [vmem:[%s175 + $0x810] sm:$0xff]
        %v533 = vld [vmem:[%s175 + $0x818] sm:$0xff]
        %v534 = vld [vmem:[%s175 + $0x820] sm:$0xff]
        %v535 = vld [vmem:[%s175 + $0x828] sm:$0xff]
        %v536 = vld [vmem:[%s175 + $0x830] sm:$0xff]
        %v537 = vld [vmem:[%s175 + $0x838] sm:$0xff]
        %v538 = vld [vmem:[%s175 + $0x840] sm:$0xff]
        %v539 = vld [vmem:[%s175 + $0x848] sm:$0xff]
        %v540 = vld [vmem:[%s175 + $0x850] sm:$0xff]
        %v541 = vld [vmem:[%s175 + $0x858] sm:$0xff]
        %v542 = vld [vmem:[%s175 + $0x860] sm:$0xff]
        %v543 = vld [vmem:[%s175 + $0x868] sm:$0xff]
        %v544 = vld [vmem:[%s175 + $0x870] sm:$0xff]
        %v545 = vld [vmem:[%s175 + $0x878] sm:$0xff]
        %v546 = vld [vmem:[%s175 + $0x880] sm:$0xff]
        %v547 = vld [vmem:[%s175 + $0x888] sm:$0xff]
        %v548 = vld [vmem:[%s175 + $0x890] sm:$0xff]
        %v549 = vld [vmem:[%s175 + $0x898] sm:$0xff]
        %v550 = vld [vmem:[%s175 + $0x8a0] sm:$0xff]
        %v551 = vld [vmem:[%s175 + $0x8a8] sm:$0xff]
        %v552 = vld [vmem:[%s175 + $0x8b0] sm:$0xff]
        %v553 = vld [vmem:[%s175 + $0x8b8] sm:$0xff]
        %v554 = vld [vmem:[%s175 + $0x8c0] sm:$0xff]
        %v555 = vld [vmem:[%s175 + $0x8c8] sm:$0xff]
        %v556 = vld [vmem:[%s175 + $0x8d0] sm:$0xff]
        %v557 = vld [vmem:[%s175 + $0x8d8] sm:$0xff]
        %v558 = vld [vmem:[%s175 + $0x8e0] sm:$0xff]
        %v559 = vld [vmem:[%s175 + $0x8e8] sm:$0xff]
        %v560 = vld [vmem:[%s175 + $0x8f0] sm:$0xff]
        %v561 = vld [vmem:[%s175 + $0x8f8] sm:$0xff]
        %v562 = vld [vmem:[%s175 + $0x900] sm:$0xff]
        %v563 = vld [vmem:[%s175 + $0x908] sm:$0xff]
        %v564 = vld [vmem:[%s175 + $0x910] sm:$0xff]
        %v565 = vld [vmem:[%s175 + $0x918] sm:$0xff]
        %v566 = vld [vmem:[%s175 + $0x920] sm:$0xff]
        %v567 = vld [vmem:[%s175 + $0x928] sm:$0xff]
        %v568 = vld [vmem:[%s175 + $0x930] sm:$0xff]
        %v569 = vld [vmem:[%s175 + $0x938] sm:$0xff]
        %v570 = vld [vmem:[%s175 + $0x940] sm:$0xff]
        %v571 = vld [vmem:[%s175 + $0x948] sm:$0xff]
        %v572 = vld [vmem:[%s175 + $0x950] sm:$0xff]
        %v573 = vld [vmem:[%s175 + $0x958] sm:$0xff]
        %v574 = vld [vmem:[%s175 + $0x960] sm:$0xff]
        %v575 = vld [vmem:[%s175 + $0x968] sm:$0xff]
        %v576 = vld [vmem:[%s175 + $0x970] sm:$0xff]
        %v577 = vld [vmem:[%s175 + $0x978] sm:$0xff]
        %v578 = vld [vmem:[%s175 + $0x980] sm:$0xff]
        %v579 = vld [vmem:[%s175 + $0x988] sm:$0xff]
        %v580 = vld [vmem:[%s175 + $0x990] sm:$0xff]
        %v581 = vld [vmem:[%s175 + $0x998] sm:$0xff]
        %v582 = vld [vmem:[%s175 + $0x9a0] sm:$0xff]
        %v583 = vld [vmem:[%s175 + $0x9a8] sm:$0xff]
        %v584 = vld [vmem:[%s175 + $0x9b0] sm:$0xff]
        %v585 = vld [vmem:[%s175 + $0x9b8] sm:$0xff]
        %v586 = vld [vmem:[%s175 + $0x9c0] sm:$0xff]
        %v587 = vld [vmem:[%s175 + $0x9c8] sm:$0xff]
        %v588 = vld [vmem:[%s175 + $0x9d0] sm:$0xff]
        %v589 = vld [vmem:[%s175 + $0x9d8] sm:$0xff]
        %v590 = vld [vmem:[%s175 + $0x9e0] sm:$0xff]
        %v591 = vld [vmem:[%s175 + $0x9e8] sm:$0xff]
        %v592 = vld [vmem:[%s175 + $0x9f0] sm:$0xff]
        %v593 = vld [vmem:[%s175 + $0x9f8] sm:$0xff]
        %v594 = vld [vmem:[%s175 + $0xa00] sm:$0xff]
        %v595 = vld [vmem:[%s175 + $0xa08] sm:$0xff]
        %v596 = vld [vmem:[%s175 + $0xa10] sm:$0xff]
        %v597 = vld [vmem:[%s175 + $0xa18] sm:$0xff]
        %v598 = vld [vmem:[%s175 + $0xa20] sm:$0xff]
        %v599 = vld [vmem:[%s175 + $0xa28] sm:$0xff]
        %v600 = vld [vmem:[%s175 + $0xa30] sm:$0xff]
        %v601 = vld [vmem:[%s175 + $0xa38] sm:$0xff]
        %v602 = vld [vmem:[%s175 + $0xa40] sm:$0xff]
        %v603 = vld [vmem:[%s175 + $0xa48] sm:$0xff]
        %v604 = vld [vmem:[%s175 + $0xa50] sm:$0xff]
        %v605 = vld [vmem:[%s175 + $0xa58] sm:$0xff]
        %v606 = vld [vmem:[%s175 + $0xa60] sm:$0xff]
        %v607 = vld [vmem:[%s175 + $0xa68] sm:$0xff]
        %v608 = vld [vmem:[%s175 + $0xa70] sm:$0xff]
        %v609 = vld [vmem:[%s175 + $0xa78] sm:$0xff]
        %v610 = vld [vmem:[%s175 + $0xa80] sm:$0xff]
        %v611 = vld [vmem:[%s175 + $0xa88] sm:$0xff]
        %v612 = vld [vmem:[%s175 + $0xa90] sm:$0xff]
        %v613 = vld [vmem:[%s175 + $0xa98] sm:$0xff]
        %v614 = vld [vmem:[%s175 + $0xaa0] sm:$0xff]
        %v615 = vld [vmem:[%s175 + $0xaa8] sm:$0xff]
        %v616 = vld [vmem:[%s175 + $0xab0] sm:$0xff]
        %v617 = vld [vmem:[%s175 + $0xab8] sm:$0xff]
        %v618 = vld [vmem:[%s175 + $0xac0] sm:$0xff]
        %v619 = vld [vmem:[%s175 + $0xac8] sm:$0xff]
        %v620 = vld [vmem:[%s175 + $0xad0] sm:$0xff]
        %v621 = vld [vmem:[%s175 + $0xad8] sm:$0xff]
        %v622 = vld [vmem:[%s175 + $0xae0] sm:$0xff]
        %v623 = vld [vmem:[%s175 + $0xae8] sm:$0xff]
        %v624 = vld [vmem:[%s175 + $0xaf0] sm:$0xff]
        %v625 = vld [vmem:[%s175 + $0xaf8] sm:$0xff]
        %v626 = vld [vmem:[%s175 + $0xb00] sm:$0xff]
        %v627 = vld [vmem:[%s175 + $0xb08] sm:$0xff]
        %v628 = vld [vmem:[%s175 + $0xb10] sm:$0xff]
        %v629 = vld [vmem:[%s175 + $0xb18] sm:$0xff]
        %v630 = vld [vmem:[%s175 + $0xb20] sm:$0xff]
        %v631 = vld [vmem:[%s175 + $0xb28] sm:$0xff]
        %v632 = vld [vmem:[%s175 + $0xb30] sm:$0xff]
        %v633 = vld [vmem:[%s175 + $0xb38] sm:$0xff]
        %v634 = vld [vmem:[%s175 + $0xb40] sm:$0xff]
        %v635 = vld [vmem:[%s175 + $0xb48] sm:$0xff]
        %v636 = vld [vmem:[%s175 + $0xb50] sm:$0xff]
        %v637 = vld [vmem:[%s175 + $0xb58] sm:$0xff]
        %v638 = vld [vmem:[%s175 + $0xb60] sm:$0xff]
        %v639 = vld [vmem:[%s175 + $0xb68] sm:$0xff]
        %v640 = vld [vmem:[%s175 + $0xb70] sm:$0xff]
        %v641 = vld [vmem:[%s175 + $0xb78] sm:$0xff]
        %v642 = vld [vmem:[%s175 + $0xb80] sm:$0xff]
        %v643 = vld [vmem:[%s175 + $0xb88] sm:$0xff]
        %v644 = vld [vmem:[%s175 + $0xb90] sm:$0xff]
        %v645 = vld [vmem:[%s175 + $0xb98] sm:$0xff]
        %v646 = vld [vmem:[%s175 + $0xba0] sm:$0xff]
        %v647 = vld [vmem:[%s175 + $0xba8] sm:$0xff]
        %v648 = vld [vmem:[%s175 + $0xbb0] sm:$0xff]
        %v649 = vld [vmem:[%s175 + $0xbb8] sm:$0xff]
        %v650 = vld [vmem:[%s175 + $0xbc0] sm:$0xff]
        %v651 = vld [vmem:[%s175 + $0xbc8] sm:$0xff]
        %v652 = vld [vmem:[%s175 + $0xbd0] sm:$0xff]
        %v653 = vld [vmem:[%s175 + $0xbd8] sm:$0xff]
        %v654 = vld [vmem:[%s175 + $0xbe0] sm:$0xff]
        %v655 = vld [vmem:[%s175 + $0xbe8] sm:$0xff]
        %v656 = vld [vmem:[%s175 + $0xbf0] sm:$0xff]
        %v657 = vld [vmem:[%s175 + $0xbf8] sm:$0xff]
        %v658 = vld [vmem:[%s175 + $0xc00] sm:$0xff]
        %v659 = vld [vmem:[%s175 + $0xc08] sm:$0xff]
        %v660 = vld [vmem:[%s175 + $0xc10] sm:$0xff]
        %v661 = vld [vmem:[%s175 + $0xc18] sm:$0xff]
        %v662 = vld [vmem:[%s175 + $0xc20] sm:$0xff]
        %v663 = vld [vmem:[%s175 + $0xc28] sm:$0xff]
        %v664 = vld [vmem:[%s175 + $0xc30] sm:$0xff]
        %v665 = vld [vmem:[%s175 + $0xc38] sm:$0xff]
        %v666 = vld [vmem:[%s175 + $0xc40] sm:$0xff]
        %v667 = vld [vmem:[%s175 + $0xc48] sm:$0xff]
        %v668 = vld [vmem:[%s175 + $0xc50] sm:$0xff]
        %v669 = vld [vmem:[%s175 + $0xc58] sm:$0xff]
        %v670 = vld [vmem:[%s175 + $0xc60] sm:$0xff]
        %v671 = vld [vmem:[%s175 + $0xc68] sm:$0xff]
        %v672 = vld [vmem:[%s175 + $0xc70] sm:$0xff]
        %v673 = vld [vmem:[%s175 + $0xc78] sm:$0xff]
        %v674 = vld [vmem:[%s175 + $0xc80] sm:$0xff]
        %v675 = vld [vmem:[%s175 + $0xc88] sm:$0xff]
        %v676 = vld [vmem:[%s175 + $0xc90] sm:$0xff]
        %v677 = vld [vmem:[%s175 + $0xc98] sm:$0xff]
        %v678 = vld [vmem:[%s175 + $0xca0] sm:$0xff]
        %v679 = vld [vmem:[%s175 + $0xca8] sm:$0xff]
        %v680 = vld [vmem:[%s175 + $0xcb0] sm:$0xff]
        %v681 = vld [vmem:[%s175 + $0xcb8] sm:$0xff]
        %v682 = vld [vmem:[%s175 + $0xcc0] sm:$0xff]
        %v683 = vld [vmem:[%s175 + $0xcc8] sm:$0xff]
        %v684 = vld [vmem:[%s175 + $0xcd0] sm:$0xff]
        %v685 = vld [vmem:[%s175 + $0xcd8] sm:$0xff]
        %v686 = vld [vmem:[%s175 + $0xce0] sm:$0xff]
        %v687 = vld [vmem:[%s175 + $0xce8] sm:$0xff]
        %v688 = vld [vmem:[%s175 + $0xcf0] sm:$0xff]
        %v689 = vld [vmem:[%s175 + $0xcf8] sm:$0xff]
        %v690 = vld [vmem:[%s175 + $0xd00] sm:$0xff]
        %v691 = vld [vmem:[%s175 + $0xd08] sm:$0xff]
        %v692 = vld [vmem:[%s175 + $0xd10] sm:$0xff]
        %v693 = vld [vmem:[%s175 + $0xd18] sm:$0xff]
        %v694 = vld [vmem:[%s175 + $0xd20] sm:$0xff]
        %v695 = vld [vmem:[%s175 + $0xd28] sm:$0xff]
        %v696 = vld [vmem:[%s175 + $0xd30] sm:$0xff]
        %v697 = vld [vmem:[%s175 + $0xd38] sm:$0xff]
        %v698 = vld [vmem:[%s175 + $0xd40] sm:$0xff]
        %v699 = vld [vmem:[%s175 + $0xd48] sm:$0xff]
        %v700 = vld [vmem:[%s175 + $0xd50] sm:$0xff]
        %v701 = vld [vmem:[%s175 + $0xd58] sm:$0xff]
        %v702 = vld [vmem:[%s175 + $0xd60] sm:$0xff]
        %v703 = vld [vmem:[%s175 + $0xd68] sm:$0xff]
        %v704 = vld [vmem:[%s175 + $0xd70] sm:$0xff]
        %v705 = vld [vmem:[%s175 + $0xd78] sm:$0xff]
        %v706 = vld [vmem:[%s175 + $0xd80] sm:$0xff]
        %v707 = vld [vmem:[%s175 + $0xd88] sm:$0xff]
        %v708 = vld [vmem:[%s175 + $0xd90] sm:$0xff]
        %v709 = vld [vmem:[%s175 + $0xd98] sm:$0xff]
        %v710 = vld [vmem:[%s175 + $0xda0] sm:$0xff]
        %v711 = vld [vmem:[%s175 + $0xda8] sm:$0xff]
        %v712 = vld [vmem:[%s175 + $0xdb0] sm:$0xff]
        %v713 = vld [vmem:[%s175 + $0xdb8] sm:$0xff]
        %v714 = vld [vmem:[%s175 + $0xdc0] sm:$0xff]
        %v715 = vld [vmem:[%s175 + $0xdc8] sm:$0xff]
        %v716 = vld [vmem:[%s175 + $0xdd0] sm:$0xff]
        %v717 = vld [vmem:[%s175 + $0xdd8] sm:$0xff]
        %v718 = vld [vmem:[%s175 + $0xde0] sm:$0xff]
        %v719 = vld [vmem:[%s175 + $0xde8] sm:$0xff]
        %v720 = vld [vmem:[%s175 + $0xdf0] sm:$0xff]
        %v721 = vld [vmem:[%s175 + $0xdf8] sm:$0xff]
        %v722 = vld [vmem:[%s175 + $0xe00] sm:$0xff]
        %v723 = vld [vmem:[%s175 + $0xe08] sm:$0xff]
        %v724 = vld [vmem:[%s175 + $0xe10] sm:$0xff]
        %v725 = vld [vmem:[%s175 + $0xe18] sm:$0xff]
        %v726 = vld [vmem:[%s175 + $0xe20] sm:$0xff]
        %v727 = vld [vmem:[%s175 + $0xe28] sm:$0xff]
        %v728 = vld [vmem:[%s175 + $0xe30] sm:$0xff]
        %v729 = vld [vmem:[%s175 + $0xe38] sm:$0xff]
        %v730 = vld [vmem:[%s175 + $0xe40] sm:$0xff]
        %v731 = vld [vmem:[%s175 + $0xe48] sm:$0xff]
        %v732 = vld [vmem:[%s175 + $0xe50] sm:$0xff]
        %v733 = vld [vmem:[%s175 + $0xe58] sm:$0xff]
        %v734 = vld [vmem:[%s175 + $0xe60] sm:$0xff]
        %v735 = vld [vmem:[%s175 + $0xe68] sm:$0xff]
        %v736 = vld [vmem:[%s175 + $0xe70] sm:$0xff]
        %v737 = vld [vmem:[%s175 + $0xe78] sm:$0xff]
        %v738 = vld [vmem:[%s175 + $0xe80] sm:$0xff]
        %v739 = vld [vmem:[%s175 + $0xe88] sm:$0xff]
        %v740 = vld [vmem:[%s175 + $0xe90] sm:$0xff]
        %v741 = vld [vmem:[%s175 + $0xe98] sm:$0xff]
        %v742 = vld [vmem:[%s175 + $0xea0] sm:$0xff]
        %v743 = vld [vmem:[%s175 + $0xea8] sm:$0xff]
        %v744 = vld [vmem:[%s175 + $0xeb0] sm:$0xff]
        %v745 = vld [vmem:[%s175 + $0xeb8] sm:$0xff]
        %v746 = vld [vmem:[%s175 + $0xec0] sm:$0xff]
        %v747 = vld [vmem:[%s175 + $0xec8] sm:$0xff]
        %v748 = vld [vmem:[%s175 + $0xed0] sm:$0xff]
        %v749 = vld [vmem:[%s175 + $0xed8] sm:$0xff]
        %v750 = vld [vmem:[%s175 + $0xee0] sm:$0xff]
        %v751 = vld [vmem:[%s175 + $0xee8] sm:$0xff]
        %v752 = vld [vmem:[%s175 + $0xef0] sm:$0xff]
        %v753 = vld [vmem:[%s175 + $0xef8] sm:$0xff]
        %v754 = vld [vmem:[%s175 + $0xf00] sm:$0xff]
        %v755 = vld [vmem:[%s175 + $0xf08] sm:$0xff]
        %v756 = vld [vmem:[%s175 + $0xf10] sm:$0xff]
        %v757 = vld [vmem:[%s175 + $0xf18] sm:$0xff]
        %v758 = vld [vmem:[%s175 + $0xf20] sm:$0xff]
        %v759 = vld [vmem:[%s175 + $0xf28] sm:$0xff]
        %v760 = vld [vmem:[%s175 + $0xf30] sm:$0xff]
        %v761 = vld [vmem:[%s175 + $0xf38] sm:$0xff]
        %v762 = vld [vmem:[%s175 + $0xf40] sm:$0xff]
        %v763 = vld [vmem:[%s175 + $0xf48] sm:$0xff]
        %v764 = vld [vmem:[%s175 + $0xf50] sm:$0xff]
        %v765 = vld [vmem:[%s175 + $0xf58] sm:$0xff]
        %v766 = vld [vmem:[%s175 + $0xf60] sm:$0xff]
        %v767 = vld [vmem:[%s175 + $0xf68] sm:$0xff]
        %v768 = vld [vmem:[%s175 + $0xf70] sm:$0xff]
        %v769 = vld [vmem:[%s175 + $0xf78] sm:$0xff]
        %v770 = vld [vmem:[%s175 + $0xf80] sm:$0xff]
        %v771 = vld [vmem:[%s175 + $0xf88] sm:$0xff]
        %v772 = vld [vmem:[%s175 + $0xf90] sm:$0xff]
        %v773 = vld [vmem:[%s175 + $0xf98] sm:$0xff]
        %v774 = vld [vmem:[%s175 + $0xfa0] sm:$0xff]
        %v775 = vld [vmem:[%s175 + $0xfa8] sm:$0xff]
        %v776 = vld [vmem:[%s175 + $0xfb0] sm:$0xff]
        %v777 = vld [vmem:[%s175 + $0xfb8] sm:$0xff]
        %v778 = vld [vmem:[%s175 + $0xfc0] sm:$0xff]
        %v779 = vld [vmem:[%s175 + $0xfc8] sm:$0xff]
        %v780 = vld [vmem:[%s175 + $0xfd0] sm:$0xff]
        %v781 = vld [vmem:[%s175 + $0xfd8] sm:$0xff]
        %v782 = vld [vmem:[%s175 + $0xfe0] sm:$0xff]
        %v783 = vld [vmem:[%s175 + $0xfe8] sm:$0xff]
        %v784 = vld [vmem:[%s175 + $0xff0] sm:$0xff]
        %v785 = vld [vmem:[%s175 + $0xff8] sm:$0xff]
        %v786 = vld [vmem:[%s175 + $0x1000] sm:$0xff]
        %v787 = vld [vmem:[%s175 + $0x1008] sm:$0xff]
        %v788 = vld [vmem:[%s175 + $0x1010] sm:$0xff]
        %v789 = vld [vmem:[%s175 + $0x1018] sm:$0xff]
        %v790 = vld [vmem:[%s175 + $0x1020] sm:$0xff]
        %v791 = vld [vmem:[%s175 + $0x1028] sm:$0xff]
        %v792 = vld [vmem:[%s175 + $0x1030] sm:$0xff]
        %v793 = vld [vmem:[%s175 + $0x1038] sm:$0xff]
        %v794 = vld [vmem:[%s175 + $0x1040] sm:$0xff]
        %v795 = vld [vmem:[%s175 + $0x1048] sm:$0xff]
        %v796 = vld [vmem:[%s175 + $0x1050] sm:$0xff]
        %v797 = vld [vmem:[%s175 + $0x1058] sm:$0xff]
        %v798 = vld [vmem:[%s175 + $0x1060] sm:$0xff]
        %v799 = vld [vmem:[%s175 + $0x1068] sm:$0xff]
        %v800 = vld [vmem:[%s175 + $0x1070] sm:$0xff]
        %v801 = vld [vmem:[%s175 + $0x1078] sm:$0xff]
        %v802 = vld [vmem:[%s175 + $0x1080] sm:$0xff]
        %v803 = vld [vmem:[%s175 + $0x1088] sm:$0xff]
        %v804 = vld [vmem:[%s175 + $0x1090] sm:$0xff]
        %v805 = vld [vmem:[%s175 + $0x1098] sm:$0xff]
        %v806 = vld [vmem:[%s175 + $0x10a0] sm:$0xff]
        %v807 = vld [vmem:[%s175 + $0x10a8] sm:$0xff]
        %v808 = vld [vmem:[%s175 + $0x10b0] sm:$0xff]
        %v809 = vld [vmem:[%s175 + $0x10b8] sm:$0xff]
        %v810 = vld [vmem:[%s175 + $0x10c0] sm:$0xff]
        %v811 = vld [vmem:[%s175 + $0x10c8] sm:$0xff]
        %v812 = vld [vmem:[%s175 + $0x10d0] sm:$0xff]
        %v813 = vld [vmem:[%s175 + $0x10d8] sm:$0xff]
        %v814 = vld [vmem:[%s175 + $0x10e0] sm:$0xff]
        %v815 = vld [vmem:[%s175 + $0x10e8] sm:$0xff]
        %v816 = vld [vmem:[%s175 + $0x10f0] sm:$0xff]
        %v817 = vld [vmem:[%s175 + $0x10f8] sm:$0xff]
        %v818 = vld [vmem:[%s175 + $0x1100] sm:$0xff]
        %v819 = vld [vmem:[%s175 + $0x1108] sm:$0xff]
        %v820 = vld [vmem:[%s175 + $0x1110] sm:$0xff]
        %v821 = vld [vmem:[%s175 + $0x1118] sm:$0xff]
        %v822 = vld [vmem:[%s175 + $0x1120] sm:$0xff]
        %v823 = vld [vmem:[%s175 + $0x1128] sm:$0xff]
        %v824 = vld [vmem:[%s175 + $0x1130] sm:$0xff]
        %v825 = vld [vmem:[%s175 + $0x1138] sm:$0xff]
        %v826 = vld [vmem:[%s175 + $0x1140] sm:$0xff]
        %v827 = vld [vmem:[%s175 + $0x1148] sm:$0xff]
        %v828 = vld [vmem:[%s175 + $0x1150] sm:$0xff]
        %v829 = vld [vmem:[%s175 + $0x1158] sm:$0xff]
        %v830 = vld [vmem:[%s175 + $0x1160] sm:$0xff]
        %v831 = vld [vmem:[%s175 + $0x1168] sm:$0xff]
        %v832 = vld [vmem:[%s175 + $0x1170] sm:$0xff]
        %v833 = vld [vmem:[%s175 + $0x1178] sm:$0xff]
        %v834 = vld [vmem:[%s175 + $0x1180] sm:$0xff]
        %v835 = vld [vmem:[%s175 + $0x1188] sm:$0xff]
        %v836 = vld [vmem:[%s175 + $0x1190] sm:$0xff]
        %v837 = vld [vmem:[%s175 + $0x1198] sm:$0xff]
        %v838 = vld [vmem:[%s175 + $0x11a0] sm:$0xff]
        %v839 = vld [vmem:[%s175 + $0x11a8] sm:$0xff]
        %v840 = vld [vmem:[%s175 + $0x11b0] sm:$0xff]
        %v841 = vld [vmem:[%s175 + $0x11b8] sm:$0xff]
        %v842 = vld [vmem:[%s175 + $0x11c0] sm:$0xff]
        %v843 = vld [vmem:[%s175 + $0x11c8] sm:$0xff]
        %v844 = vld [vmem:[%s175 + $0x11d0] sm:$0xff]
        %v845 = vld [vmem:[%s175 + $0x11d8] sm:$0xff]
        %v846 = vld [vmem:[%s175 + $0x11e0] sm:$0xff]
        %v847 = vld [vmem:[%s175 + $0x11e8] sm:$0xff]
        %v848 = vld [vmem:[%s175 + $0x11f0] sm:$0xff]
        %v849 = vld [vmem:[%s175 + $0x11f8] sm:$0xff]
        %v850 = vld [vmem:[%s175 + $0x1200] sm:$0xff]
        %v851 = vld [vmem:[%s175 + $0x1208] sm:$0xff]
        %v852 = vld [vmem:[%s175 + $0x1210] sm:$0xff]
        %v853 = vld [vmem:[%s175 + $0x1218] sm:$0xff]
        %v854 = vld [vmem:[%s175 + $0x1220] sm:$0xff]
        %v855 = vld [vmem:[%s175 + $0x1228] sm:$0xff]
        %v856 = vld [vmem:[%s175 + $0x1230] sm:$0xff]
        %v857 = vld [vmem:[%s175 + $0x1238] sm:$0xff]
        %v858 = vld [vmem:[%s175 + $0x1240] sm:$0xff]
        %v859 = vld [vmem:[%s175 + $0x1248] sm:$0xff]
        %v860 = vld [vmem:[%s175 + $0x1250] sm:$0xff]
        %v861 = vld [vmem:[%s175 + $0x1258] sm:$0xff]
        %v862 = vld [vmem:[%s175 + $0x1260] sm:$0xff]
        %v863 = vld [vmem:[%s175 + $0x1268] sm:$0xff]
        %v864 = vld [vmem:[%s175 + $0x1270] sm:$0xff]
        %v865 = vld [vmem:[%s175 + $0x1278] sm:$0xff]
        %v866 = vld [vmem:[%s175 + $0x1280] sm:$0xff]
        %v867 = vld [vmem:[%s175 + $0x1288] sm:$0xff]
        %v868 = vld [vmem:[%s175 + $0x1290] sm:$0xff]
        %v869 = vld [vmem:[%s175 + $0x1298] sm:$0xff]
        %v870 = vld [vmem:[%s175 + $0x12a0] sm:$0xff]
        %v871 = vld [vmem:[%s175 + $0x12a8] sm:$0xff]
        %v872 = vld [vmem:[%s175 + $0x12b0] sm:$0xff]
        %v873 = vld [vmem:[%s175 + $0x12b8] sm:$0xff]
        %v874 = vld [vmem:[%s175 + $0x12c0] sm:$0xff]
        %v875 = vld [vmem:[%s175 + $0x12c8] sm:$0xff]
        %v876 = vld [vmem:[%s175 + $0x12d0] sm:$0xff]
        %v877 = vld [vmem:[%s175 + $0x12d8] sm:$0xff]
        %v878 = vld [vmem:[%s175 + $0x12e0] sm:$0xff]
        %v879 = vld [vmem:[%s175 + $0x12e8] sm:$0xff]
        %v880 = vld [vmem:[%s175 + $0x12f0] sm:$0xff]
        %v881 = vld [vmem:[%s175 + $0x12f8] sm:$0xff]
        %v882 = vld [vmem:[%s175 + $0x1300] sm:$0xff]
        %v883 = vld [vmem:[%s175 + $0x1308] sm:$0xff]
        %v884 = vld [vmem:[%s175 + $0x1310] sm:$0xff]
        %v885 = vld [vmem:[%s175 + $0x1318] sm:$0xff]
        %v886 = vld [vmem:[%s175 + $0x1320] sm:$0xff]
        %v887 = vld [vmem:[%s175 + $0x1328] sm:$0xff]
        %v888 = vld [vmem:[%s175 + $0x1330] sm:$0xff]
        %v889 = vld [vmem:[%s175 + $0x1338] sm:$0xff]
        %v890 = vld [vmem:[%s175 + $0x1340] sm:$0xff]
        %v891 = vld [vmem:[%s175 + $0x1348] sm:$0xff]
        %v892 = vld [vmem:[%s175 + $0x1350] sm:$0xff]
        %v893 = vld [vmem:[%s175 + $0x1358] sm:$0xff]
        %v894 = vld [vmem:[%s175 + $0x1360] sm:$0xff]
        %v895 = vld [vmem:[%s175 + $0x1368] sm:$0xff]
        %v896 = vld [vmem:[%s175 + $0x1370] sm:$0xff]
        %v897 = vld [vmem:[%s175 + $0x1378] sm:$0xff]
        %v898 = vld [vmem:[%s175 + $0x1380] sm:$0xff]
        %v899 = vld [vmem:[%s175 + $0x1388] sm:$0xff]
        %v900 = vld [vmem:[%s175 + $0x1390] sm:$0xff]
        %v901 = vld [vmem:[%s175 + $0x1398] sm:$0xff]
        %v902 = vld [vmem:[%s175 + $0x13a0] sm:$0xff]
        %v903 = vld [vmem:[%s175 + $0x13a8] sm:$0xff]
        %v904 = vld [vmem:[%s175 + $0x13b0] sm:$0xff]
        %v905 = vld [vmem:[%s175 + $0x13b8] sm:$0xff]
        %v906 = vld [vmem:[%s175 + $0x13c0] sm:$0xff]
        %v907 = vld [vmem:[%s175 + $0x13c8] sm:$0xff]
        %v908 = vld [vmem:[%s175 + $0x13d0] sm:$0xff]
        %v909 = vld [vmem:[%s175 + $0x13d8] sm:$0xff]
        %v910 = vld [vmem:[%s175 + $0x13e0] sm:$0xff]
        %v911 = vld [vmem:[%s175 + $0x13e8] sm:$0xff]
        %v912 = vld [vmem:[%s175 + $0x13f0] sm:$0xff]
        %v913 = vld [vmem:[%s175 + $0x13f8] sm:$0xff]
        %v914 = vld [vmem:[%s175 + $0x1400] sm:$0xff]
        %v915 = vld [vmem:[%s175 + $0x1408] sm:$0xff]
        %v916 = vld [vmem:[%s175 + $0x1410] sm:$0xff]
        %v917 = vld [vmem:[%s175 + $0x1418] sm:$0xff]
        %v918 = vld [vmem:[%s175 + $0x1420] sm:$0xff]
        %v919 = vld [vmem:[%s175 + $0x1428] sm:$0xff]
        %v920 = vld [vmem:[%s175 + $0x1430] sm:$0xff]
        %v921 = vld [vmem:[%s175 + $0x1438] sm:$0xff]
        %v922 = vld [vmem:[%s175 + $0x1440] sm:$0xff]
        %v923 = vld [vmem:[%s175 + $0x1448] sm:$0xff]
        %v924 = vld [vmem:[%s175 + $0x1450] sm:$0xff]
        %v925 = vld [vmem:[%s175 + $0x1458] sm:$0xff]
        %v926 = vld [vmem:[%s175 + $0x1460] sm:$0xff]
        %v927 = vld [vmem:[%s175 + $0x1468] sm:$0xff]
        %v928 = vld [vmem:[%s175 + $0x1470] sm:$0xff]
        %v929 = vld [vmem:[%s175 + $0x1478] sm:$0xff]
        %v930 = vld [vmem:[%s175 + $0x1480] sm:$0xff]
        %v931 = vld [vmem:[%s175 + $0x1488] sm:$0xff]
        %v932 = vld [vmem:[%s175 + $0x1490] sm:$0xff]
        %v933 = vld [vmem:[%s175 + $0x1498] sm:$0xff]
        %v934 = vld [vmem:[%s175 + $0x14a0] sm:$0xff]
        %v935 = vld [vmem:[%s175 + $0x14a8] sm:$0xff]
        %v936 = vld [vmem:[%s175 + $0x14b0] sm:$0xff]
        %v937 = vld [vmem:[%s175 + $0x14b8] sm:$0xff]
        %v938 = vld [vmem:[%s175 + $0x14c0] sm:$0xff]
        %v939 = vld [vmem:[%s175 + $0x14c8] sm:$0xff]
        %v940 = vld [vmem:[%s175 + $0x14d0] sm:$0xff]
        %v941 = vld [vmem:[%s175 + $0x14d8] sm:$0xff]
        %v942 = vld [vmem:[%s175 + $0x14e0] sm:$0xff]
        %v943 = vld [vmem:[%s175 + $0x14e8] sm:$0xff]
        %v944 = vld [vmem:[%s175 + $0x14f0] sm:$0xff]
        %v945 = vld [vmem:[%s175 + $0x14f8] sm:$0xff]
        %v946 = vld [vmem:[%s175 + $0x1500] sm:$0xff]
        %v947 = vld [vmem:[%s175 + $0x1508] sm:$0xff]
        %v948 = vld [vmem:[%s175 + $0x1510] sm:$0xff]
        %v949 = vld [vmem:[%s175 + $0x1518] sm:$0xff]
        %v950 = vld [vmem:[%s175 + $0x1520] sm:$0xff]
        %v951 = vld [vmem:[%s175 + $0x1528] sm:$0xff]
        %v952 = vld [vmem:[%s175 + $0x1530] sm:$0xff]
        %v953 = vld [vmem:[%s175 + $0x1538] sm:$0xff]
        %v954 = vld [vmem:[%s175 + $0x1540] sm:$0xff]
        %v955 = vld [vmem:[%s175 + $0x1548] sm:$0xff]
        %v956 = vld [vmem:[%s175 + $0x1550] sm:$0xff]
        %v957 = vld [vmem:[%s175 + $0x1558] sm:$0xff]
        %v958 = vld [vmem:[%s175 + $0x1560] sm:$0xff]
        %v959 = vld [vmem:[%s175 + $0x1568] sm:$0xff]
        %v960 = vld [vmem:[%s175 + $0x1570] sm:$0xff]
        %v961 = vld [vmem:[%s175 + $0x1578] sm:$0xff]
        %v962 = vld [vmem:[%s175 + $0x1580] sm:$0xff]
        %v963 = vld [vmem:[%s175 + $0x1588] sm:$0xff]
        %v964 = vld [vmem:[%s175 + $0x1590] sm:$0xff]
        %v965 = vld [vmem:[%s175 + $0x1598] sm:$0xff]
        %v966 = vld [vmem:[%s175 + $0x15a0] sm:$0xff]
        %v967 = vld [vmem:[%s175 + $0x15a8] sm:$0xff]
        %v968 = vld [vmem:[%s175 + $0x15b0] sm:$0xff]
        %v969 = vld [vmem:[%s175 + $0x15b8] sm:$0xff]
        %v970 = vld [vmem:[%s175 + $0x15c0] sm:$0xff]
        %v971 = vld [vmem:[%s175 + $0x15c8] sm:$0xff]
        %v972 = vld [vmem:[%s175 + $0x15d0] sm:$0xff]
        %v973 = vld [vmem:[%s175 + $0x15d8] sm:$0xff]
        %v974 = vld [vmem:[%s175 + $0x15e0] sm:$0xff]
        %v975 = vld [vmem:[%s175 + $0x15e8] sm:$0xff]
        %v976 = vld [vmem:[%s175 + $0x15f0] sm:$0xff]
        %v977 = vld [vmem:[%s175 + $0x15f8] sm:$0xff]
        %v978 = vld [vmem:[%s175 + $0x1600] sm:$0xff]
        %v979 = vld [vmem:[%s175 + $0x1608] sm:$0xff]
        %v980 = vld [vmem:[%s175 + $0x1610] sm:$0xff]
        %v981 = vld [vmem:[%s175 + $0x1618] sm:$0xff]
        %v982 = vld [vmem:[%s175 + $0x1620] sm:$0xff]
        %v983 = vld [vmem:[%s175 + $0x1628] sm:$0xff]
        %v984 = vld [vmem:[%s175 + $0x1630] sm:$0xff]
        %v985 = vld [vmem:[%s175 + $0x1638] sm:$0xff]
        %v986 = vld [vmem:[%s175 + $0x1640] sm:$0xff]
        %v987 = vld [vmem:[%s175 + $0x1648] sm:$0xff]
        %v988 = vld [vmem:[%s175 + $0x1650] sm:$0xff]
        %v989 = vld [vmem:[%s175 + $0x1658] sm:$0xff]
        %v990 = vld [vmem:[%s175 + $0x1660] sm:$0xff]
        %v991 = vld [vmem:[%s175 + $0x1668] sm:$0xff]
        %v992 = vld [vmem:[%s175 + $0x1670] sm:$0xff]
        %v993 = vld [vmem:[%s175 + $0x1678] sm:$0xff]
        %v994 = vld [vmem:[%s175 + $0x1680] sm:$0xff]
        %v995 = vld [vmem:[%s175 + $0x1688] sm:$0xff]
        %v996 = vld [vmem:[%s175 + $0x1690] sm:$0xff]
        %v997 = vld [vmem:[%s175 + $0x1698] sm:$0xff]
        %v998 = vld [vmem:[%s175 + $0x16a0] sm:$0xff]
        %v999 = vld [vmem:[%s175 + $0x16a8] sm:$0xff]
        %v1000 = vld [vmem:[%s175 + $0x16b0] sm:$0xff]
        %v1001 = vld [vmem:[%s175 + $0x16b8] sm:$0xff]
        %v1002 = vld [vmem:[%s175 + $0x16c0] sm:$0xff]
        %v1003 = vld [vmem:[%s175 + $0x16c8] sm:$0xff]
        %v1004 = vld [vmem:[%s175 + $0x16d0] sm:$0xff]
        %v1005 = vld [vmem:[%s175 + $0x16d8] sm:$0xff]
        %v1006 = vld [vmem:[%s175 + $0x16e0] sm:$0xff]
        %v1007 = vld [vmem:[%s175 + $0x16e8] sm:$0xff]
        %v1008 = vld [vmem:[%s175 + $0x16f0] sm:$0xff]
        %v1009 = vld [vmem:[%s175 + $0x16f8] sm:$0xff]
        %v1010 = vld [vmem:[%s175 + $0x1700] sm:$0xff]
        %v1011 = vld [vmem:[%s175 + $0x1708] sm:$0xff]
        %v1012 = vld [vmem:[%s175 + $0x1710] sm:$0xff]
        %v1013 = vld [vmem:[%s175 + $0x1718] sm:$0xff]
        %v1014 = vld [vmem:[%s175 + $0x1720] sm:$0xff]
        %v1015 = vld [vmem:[%s175 + $0x1728] sm:$0xff]
        %v1016 = vld [vmem:[%s175 + $0x1730] sm:$0xff]
        %v1017 = vld [vmem:[%s175 + $0x1738] sm:$0xff]
        %v1018 = vld [vmem:[%s175 + $0x1740] sm:$0xff]
        %v1019 = vld [vmem:[%s175 + $0x1748] sm:$0xff]
        %v1020 = vld [vmem:[%s175 + $0x1750] sm:$0xff]
        %v1021 = vld [vmem:[%s175 + $0x1758] sm:$0xff]
        %v1022 = vld [vmem:[%s175 + $0x1760] sm:$0xff]
        %v1023 = vld [vmem:[%s175 + $0x1768] sm:$0xff]
        %v1024 = vld [vmem:[%s175 + $0x1770] sm:$0xff]
        %v1025 = vld [vmem:[%s175 + $0x1778] sm:$0xff]
        %v1026 = vld [vmem:[%s175 + $0x1780] sm:$0xff]
        %v1027 = vld [vmem:[%s175 + $0x1788] sm:$0xff]
        %v1028 = vld [vmem:[%s175 + $0x1790] sm:$0xff]
        %v1029 = vld [vmem:[%s175 + $0x1798] sm:$0xff]
        %v1030 = vld [vmem:[%s175 + $0x17a0] sm:$0xff]
        %v1031 = vld [vmem:[%s175 + $0x17a8] sm:$0xff]
        %v1032 = vld [vmem:[%s175 + $0x17b0] sm:$0xff]
        %v1033 = vld [vmem:[%s175 + $0x17b8] sm:$0xff]
        %v1034 = vld [vmem:[%s175 + $0x17c0] sm:$0xff]
        %v1035 = vld [vmem:[%s175 + $0x17c8] sm:$0xff]
        %v1036 = vld [vmem:[%s175 + $0x17d0] sm:$0xff]
        %v1037 = vld [vmem:[%s175 + $0x17d8] sm:$0xff]
        %v1038 = vld [vmem:[%s175 + $0x17e0] sm:$0xff]
        %v1039 = vld [vmem:[%s175 + $0x17e8] sm:$0xff]
        %v1040 = vld [vmem:[%s175 + $0x17f0] sm:$0xff]
        %v1041 = vld [vmem:[%s175 + $0x17f8] sm:$0xff]
        %v1042 = vld [vmem:[%s175 + $0x1800] sm:$0xff]
        %v1043 = vld [vmem:[%s175 + $0x1808] sm:$0xff]
        %v1044 = vld [vmem:[%s175 + $0x1810] sm:$0xff]
        %v1045 = vld [vmem:[%s175 + $0x1818] sm:$0xff]
        %v1046 = vld [vmem:[%s175 + $0x1820] sm:$0xff]
        %v1047 = vld [vmem:[%s175 + $0x1828] sm:$0xff]
        %v1048 = vld [vmem:[%s175 + $0x1830] sm:$0xff]
        %v1049 = vld [vmem:[%s175 + $0x1838] sm:$0xff]
        %v1050 = vld [vmem:[%s175 + $0x1840] sm:$0xff]
        %v1051 = vld [vmem:[%s175 + $0x1848] sm:$0xff]
        %v1052 = vld [vmem:[%s175 + $0x1850] sm:$0xff]
        %v1053 = vld [vmem:[%s175 + $0x1858] sm:$0xff]
        %v1054 = vld [vmem:[%s175 + $0x1860] sm:$0xff]
        %v1055 = vld [vmem:[%s175 + $0x1868] sm:$0xff]
        %v1056 = vld [vmem:[%s175 + $0x1870] sm:$0xff]
        %v1057 = vld [vmem:[%s175 + $0x1878] sm:$0xff]
        %v1058 = vld [vmem:[%s175 + $0x1880] sm:$0xff]
        %v1059 = vld [vmem:[%s175 + $0x1888] sm:$0xff]
        %v1060 = vld [vmem:[%s175 + $0x1890] sm:$0xff]
        %v1061 = vld [vmem:[%s175 + $0x1898] sm:$0xff]
        %v1062 = vld [vmem:[%s175 + $0x18a0] sm:$0xff]
        %v1063 = vld [vmem:[%s175 + $0x18a8] sm:$0xff]
        %v1064 = vld [vmem:[%s175 + $0x18b0] sm:$0xff]
        %v1065 = vld [vmem:[%s175 + $0x18b8] sm:$0xff]
        %v1066 = vld [vmem:[%s175 + $0x18c0] sm:$0xff]
        %v1067 = vld [vmem:[%s175 + $0x18c8] sm:$0xff]
        %v1068 = vld [vmem:[%s175 + $0x18d0] sm:$0xff]
        %v1069 = vld [vmem:[%s175 + $0x18d8] sm:$0xff]
        %v1070 = vld [vmem:[%s175 + $0x18e0] sm:$0xff]
        %v1071 = vld [vmem:[%s175 + $0x18e8] sm:$0xff]
        %v1072 = vld [vmem:[%s175 + $0x18f0] sm:$0xff]
        %v1073 = vld [vmem:[%s175 + $0x18f8] sm:$0xff]
        %v1074 = vld [vmem:[%s175 + $0x1900] sm:$0xff]
        %v1075 = vld [vmem:[%s175 + $0x1908] sm:$0xff]
        %v1076 = vld [vmem:[%s175 + $0x1910] sm:$0xff]
        %v1077 = vld [vmem:[%s175 + $0x1918] sm:$0xff]
        %v1078 = vld [vmem:[%s175 + $0x1920] sm:$0xff]
        %v1079 = vld [vmem:[%s175 + $0x1928] sm:$0xff]
        %v1080 = vld [vmem:[%s175 + $0x1930] sm:$0xff]
        %v1081 = vld [vmem:[%s175 + $0x1938] sm:$0xff]
        %v1082 = vld [vmem:[%s175 + $0x1940] sm:$0xff]
        %v1083 = vld [vmem:[%s175 + $0x1948] sm:$0xff]
        %v1084 = vld [vmem:[%s175 + $0x1950] sm:$0xff]
        %v1085 = vld [vmem:[%s175 + $0x1958] sm:$0xff]
        %v1086 = vld [vmem:[%s175 + $0x1960] sm:$0xff]
        %v1087 = vld [vmem:[%s175 + $0x1968] sm:$0xff]
        %v1088 = vld [vmem:[%s175 + $0x1970] sm:$0xff]
        %v1089 = vld [vmem:[%s175 + $0x1978] sm:$0xff]
        %v1090 = vld [vmem:[%s175 + $0x1980] sm:$0xff]
        %v1091 = vld [vmem:[%s175 + $0x1988] sm:$0xff]
        %v1092 = vld [vmem:[%s175 + $0x1990] sm:$0xff]
        %v1093 = vld [vmem:[%s175 + $0x1998] sm:$0xff]
        %v1094 = vld [vmem:[%s175 + $0x19a0] sm:$0xff]
        %v1095 = vld [vmem:[%s175 + $0x19a8] sm:$0xff]
        %v1096 = vld [vmem:[%s175 + $0x19b0] sm:$0xff]
        %v1097 = vld [vmem:[%s175 + $0x19b8] sm:$0xff]
        %v1098 = vld [vmem:[%s175 + $0x19c0] sm:$0xff]
        %v1099 = vld [vmem:[%s175 + $0x19c8] sm:$0xff]
        %v1100 = vld [vmem:[%s175 + $0x19d0] sm:$0xff]
        %v1101 = vld [vmem:[%s175 + $0x19d8] sm:$0xff]
        %v1102 = vld [vmem:[%s175 + $0x19e0] sm:$0xff]
        %v1103 = vld [vmem:[%s175 + $0x19e8] sm:$0xff]
        %v1104 = vld [vmem:[%s175 + $0x19f0] sm:$0xff]
        %v1105 = vld [vmem:[%s175 + $0x19f8] sm:$0xff]
        %v1106 = vld [vmem:[%s175 + $0x1a00] sm:$0xff]
        %v1107 = vld [vmem:[%s175 + $0x1a08] sm:$0xff]
        %v1108 = vld [vmem:[%s175 + $0x1a10] sm:$0xff]
        %v1109 = vld [vmem:[%s175 + $0x1a18] sm:$0xff]
        %v1110 = vld [vmem:[%s175 + $0x1a20] sm:$0xff]
        %v1111 = vld [vmem:[%s175 + $0x1a28] sm:$0xff]
        %v1112 = vld [vmem:[%s175 + $0x1a30] sm:$0xff]
        %v1113 = vld [vmem:[%s175 + $0x1a38] sm:$0xff]
        %v1114 = vld [vmem:[%s175 + $0x1a40] sm:$0xff]
        %v1115 = vld [vmem:[%s175 + $0x1a48] sm:$0xff]
        %v1116 = vld [vmem:[%s175 + $0x1a50] sm:$0xff]
        %v1117 = vld [vmem:[%s175 + $0x1a58] sm:$0xff]
        %v1118 = vld [vmem:[%s175 + $0x1a60] sm:$0xff]
        %v1119 = vld [vmem:[%s175 + $0x1a68] sm:$0xff]
        %v1120 = vld [vmem:[%s175 + $0x1a70] sm:$0xff]
        %v1121 = vld [vmem:[%s175 + $0x1a78] sm:$0xff]
        %v1122 = vld [vmem:[%s175 + $0x1a80] sm:$0xff]
        %v1123 = vld [vmem:[%s175 + $0x1a88] sm:$0xff]
        %v1124 = vld [vmem:[%s175 + $0x1a90] sm:$0xff]
        %v1125 = vld [vmem:[%s175 + $0x1a98] sm:$0xff]
        %v1126 = vld [vmem:[%s175 + $0x1aa0] sm:$0xff]
        %v1127 = vld [vmem:[%s175 + $0x1aa8] sm:$0xff]
        %v1128 = vld [vmem:[%s175 + $0x1ab0] sm:$0xff]
        %v1129 = vld [vmem:[%s175 + $0x1ab8] sm:$0xff]
        %v1130 = vld [vmem:[%s175 + $0x1ac0] sm:$0xff]
        %v1131 = vld [vmem:[%s175 + $0x1ac8] sm:$0xff]
        %v1132 = vld [vmem:[%s175 + $0x1ad0] sm:$0xff]
        %v1133 = vld [vmem:[%s175 + $0x1ad8] sm:$0xff]
        %v1134 = vld [vmem:[%s175 + $0x1ae0] sm:$0xff]
        %v1135 = vld [vmem:[%s175 + $0x1ae8] sm:$0xff]
        %v1136 = vld [vmem:[%s175 + $0x1af0] sm:$0xff]
        %v1137 = vld [vmem:[%s175 + $0x1af8] sm:$0xff]
        %v1138 = vld [vmem:[%s175 + $0x1b00] sm:$0xff]
        %v1139 = vld [vmem:[%s175 + $0x1b08] sm:$0xff]
        %v1140 = vld [vmem:[%s175 + $0x1b10] sm:$0xff]
        %v1141 = vld [vmem:[%s175 + $0x1b18] sm:$0xff]
        %v1142 = vld [vmem:[%s175 + $0x1b20] sm:$0xff]
        %v1143 = vld [vmem:[%s175 + $0x1b28] sm:$0xff]
        %v1144 = vld [vmem:[%s175 + $0x1b30] sm:$0xff]
        %v1145 = vld [vmem:[%s175 + $0x1b38] sm:$0xff]
        %v1146 = vld [vmem:[%s175 + $0x1b40] sm:$0xff]
        %v1147 = vld [vmem:[%s175 + $0x1b48] sm:$0xff]
        %v1148 = vld [vmem:[%s175 + $0x1b50] sm:$0xff]
        %v1149 = vld [vmem:[%s175 + $0x1b58] sm:$0xff]
        %v1150 = vld [vmem:[%s175 + $0x1b60] sm:$0xff]
        %v1151 = vld [vmem:[%s175 + $0x1b68] sm:$0xff]
        %v1152 = vld [vmem:[%s175 + $0x1b70] sm:$0xff]
        %v1153 = vld [vmem:[%s175 + $0x1b78] sm:$0xff]
        %v1154 = vld [vmem:[%s175 + $0x1b80] sm:$0xff]
        %v1155 = vld [vmem:[%s175 + $0x1b88] sm:$0xff]
        %v1156 = vld [vmem:[%s175 + $0x1b90] sm:$0xff]
        %v1157 = vld [vmem:[%s175 + $0x1b98] sm:$0xff]
        %v1158 = vld [vmem:[%s175 + $0x1ba0] sm:$0xff]
        %v1159 = vld [vmem:[%s175 + $0x1ba8] sm:$0xff]
        %v1160 = vld [vmem:[%s175 + $0x1bb0] sm:$0xff]
        %v1161 = vld [vmem:[%s175 + $0x1bb8] sm:$0xff]
        %v1162 = vld [vmem:[%s175 + $0x1bc0] sm:$0xff]
        %v1163 = vld [vmem:[%s175 + $0x1bc8] sm:$0xff]
        %v1164 = vld [vmem:[%s175 + $0x1bd0] sm:$0xff]
        %v1165 = vld [vmem:[%s175 + $0x1bd8] sm:$0xff]
        %v1166 = vld [vmem:[%s175 + $0x1be0] sm:$0xff]
        %v1167 = vld [vmem:[%s175 + $0x1be8] sm:$0xff]
        %v1168 = vld [vmem:[%s175 + $0x1bf0] sm:$0xff]
        %v1169 = vld [vmem:[%s175 + $0x1bf8] sm:$0xff]
        %v1170 = vld [vmem:[%s175 + $0x1c00] sm:$0xff]
        %v1171 = vld [vmem:[%s175 + $0x1c08] sm:$0xff]
        %v1172 = vld [vmem:[%s175 + $0x1c10] sm:$0xff]
        %v1173 = vld [vmem:[%s175 + $0x1c18] sm:$0xff]
        %v1174 = vld [vmem:[%s175 + $0x1c20] sm:$0xff]
        %v1175 = vld [vmem:[%s175 + $0x1c28] sm:$0xff]
        %v1176 = vld [vmem:[%s175 + $0x1c30] sm:$0xff]
        %v1177 = vld [vmem:[%s175 + $0x1c38] sm:$0xff]
        %v1178 = vld [vmem:[%s175 + $0x1c40] sm:$0xff]
        %v1179 = vld [vmem:[%s175 + $0x1c48] sm:$0xff]
        %v1180 = vld [vmem:[%s175 + $0x1c50] sm:$0xff]
        %v1181 = vld [vmem:[%s175 + $0x1c58] sm:$0xff]
        %v1182 = vld [vmem:[%s175 + $0x1c60] sm:$0xff]
        %v1183 = vld [vmem:[%s175 + $0x1c68] sm:$0xff]
        %v1184 = vld [vmem:[%s175 + $0x1c70] sm:$0xff]
        %v1185 = vld [vmem:[%s175 + $0x1c78] sm:$0xff]
        %v1186 = vld [vmem:[%s175 + $0x1c80] sm:$0xff]
        %v1187 = vld [vmem:[%s175 + $0x1c88] sm:$0xff]
        %v1188 = vld [vmem:[%s175 + $0x1c90] sm:$0xff]
        %v1189 = vld [vmem:[%s175 + $0x1c98] sm:$0xff]
        %v1190 = vld [vmem:[%s175 + $0x1ca0] sm:$0xff]
        %v1191 = vld [vmem:[%s175 + $0x1ca8] sm:$0xff]
        %v1192 = vld [vmem:[%s175 + $0x1cb0] sm:$0xff]
        %v1193 = vld [vmem:[%s175 + $0x1cb8] sm:$0xff]
        %v1194 = vld [vmem:[%s175 + $0x1cc0] sm:$0xff]
        %v1195 = vld [vmem:[%s175 + $0x1cc8] sm:$0xff]
        %v1196 = vld [vmem:[%s175 + $0x1cd0] sm:$0xff]
        %v1197 = vld [vmem:[%s175 + $0x1cd8] sm:$0xff]
        %v1198 = vld [vmem:[%s175 + $0x1ce0] sm:$0xff]
        %v1199 = vld [vmem:[%s175 + $0x1ce8] sm:$0xff]
        %v1200 = vld [vmem:[%s175 + $0x1cf0] sm:$0xff]
        %v1201 = vld [vmem:[%s175 + $0x1cf8] sm:$0xff]
        %v1202 = vld [vmem:[%s175 + $0x1d00] sm:$0xff]
        %v1203 = vld [vmem:[%s175 + $0x1d08] sm:$0xff]
        %v1204 = vld [vmem:[%s175 + $0x1d10] sm:$0xff]
        %v1205 = vld [vmem:[%s175 + $0x1d18] sm:$0xff]
        %v1206 = vld [vmem:[%s175 + $0x1d20] sm:$0xff]
        %v1207 = vld [vmem:[%s175 + $0x1d28] sm:$0xff]
        %v1208 = vld [vmem:[%s175 + $0x1d30] sm:$0xff]
        %v1209 = vld [vmem:[%s175 + $0x1d38] sm:$0xff]
        %v1210 = vld [vmem:[%s175 + $0x1d40] sm:$0xff]
        %v1211 = vld [vmem:[%s175 + $0x1d48] sm:$0xff]
        %v1212 = vld [vmem:[%s175 + $0x1d50] sm:$0xff]
        %v1213 = vld [vmem:[%s175 + $0x1d58] sm:$0xff]
        %v1214 = vld [vmem:[%s175 + $0x1d60] sm:$0xff]
        %v1215 = vld [vmem:[%s175 + $0x1d68] sm:$0xff]
        %v1216 = vld [vmem:[%s175 + $0x1d70] sm:$0xff]
        %v1217 = vld [vmem:[%s175 + $0x1d78] sm:$0xff]
        %v1218 = vld [vmem:[%s175 + $0x1d80] sm:$0xff]
        %v1219 = vld [vmem:[%s175 + $0x1d88] sm:$0xff]
        %v1220 = vld [vmem:[%s175 + $0x1d90] sm:$0xff]
        %v1221 = vld [vmem:[%s175 + $0x1d98] sm:$0xff]
        %v1222 = vld [vmem:[%s175 + $0x1da0] sm:$0xff]
        %v1223 = vld [vmem:[%s175 + $0x1da8] sm:$0xff]
        %v1224 = vld [vmem:[%s175 + $0x1db0] sm:$0xff]
        %v1225 = vld [vmem:[%s175 + $0x1db8] sm:$0xff]
        %v1226 = vld [vmem:[%s175 + $0x1dc0] sm:$0xff]
        %v1227 = vld [vmem:[%s175 + $0x1dc8] sm:$0xff]
        %v1228 = vld [vmem:[%s175 + $0x1dd0] sm:$0xff]
        %v1229 = vld [vmem:[%s175 + $0x1dd8] sm:$0xff]
        %v1230 = vld [vmem:[%s175 + $0x1de0] sm:$0xff]
        %v1231 = vld [vmem:[%s175 + $0x1de8] sm:$0xff]
        %v1232 = vld [vmem:[%s175 + $0x1df0] sm:$0xff]
        %v1233 = vld [vmem:[%s175 + $0x1df8] sm:$0xff]
        %v1234 = vld [vmem:[%s175 + $0x1e00] sm:$0xff]
        %v1235 = vld [vmem:[%s175 + $0x1e08] sm:$0xff]
        %v1236 = vld [vmem:[%s175 + $0x1e10] sm:$0xff]
        %v1237 = vld [vmem:[%s175 + $0x1e18] sm:$0xff]
        %v1238 = vld [vmem:[%s175 + $0x1e20] sm:$0xff]
        %v1239 = vld [vmem:[%s175 + $0x1e28] sm:$0xff]
        %v1240 = vld [vmem:[%s175 + $0x1e30] sm:$0xff]
        %v1241 = vld [vmem:[%s175 + $0x1e38] sm:$0xff]
        %v1242 = vld [vmem:[%s175 + $0x1e40] sm:$0xff]
        %v1243 = vld [vmem:[%s175 + $0x1e48] sm:$0xff]
        %v1244 = vld [vmem:[%s175 + $0x1e50] sm:$0xff]
        %v1245 = vld [vmem:[%s175 + $0x1e58] sm:$0xff]
        %v1246 = vld [vmem:[%s175 + $0x1e60] sm:$0xff]
        %v1247 = vld [vmem:[%s175 + $0x1e68] sm:$0xff]
        %v1248 = vld [vmem:[%s175 + $0x1e70] sm:$0xff]
        %v1249 = vld [vmem:[%s175 + $0x1e78] sm:$0xff]
        %v1250 = vld [vmem:[%s175 + $0x1e80] sm:$0xff]
        %v1251 = vld [vmem:[%s175 + $0x1e88] sm:$0xff]
        %v1252 = vld [vmem:[%s175 + $0x1e90] sm:$0xff]
        %v1253 = vld [vmem:[%s175 + $0x1e98] sm:$0xff]
        %v1254 = vld [vmem:[%s175 + $0x1ea0] sm:$0xff]
        %v1255 = vld [vmem:[%s175 + $0x1ea8] sm:$0xff]
        %v1256 = vld [vmem:[%s175 + $0x1eb0] sm:$0xff]
        %v1257 = vld [vmem:[%s175 + $0x1eb8] sm:$0xff]
        %v1258 = vld [vmem:[%s175 + $0x1ec0] sm:$0xff]
        %v1259 = vld [vmem:[%s175 + $0x1ec8] sm:$0xff]
        %v1260 = vld [vmem:[%s175 + $0x1ed0] sm:$0xff]
        %v1261 = vld [vmem:[%s175 + $0x1ed8] sm:$0xff]
        %v1262 = vld [vmem:[%s175 + $0x1ee0] sm:$0xff]
        %v1263 = vld [vmem:[%s175 + $0x1ee8] sm:$0xff]
        %v1264 = vld [vmem:[%s175 + $0x1ef0] sm:$0xff]
        %v1265 = vld [vmem:[%s175 + $0x1ef8] sm:$0xff]
        %v1266 = vld [vmem:[%s175 + $0x1f00] sm:$0xff]
        %v1267 = vld [vmem:[%s175 + $0x1f08] sm:$0xff]
        %v1268 = vld [vmem:[%s175 + $0x1f10] sm:$0xff]
        %v1269 = vld [vmem:[%s175 + $0x1f18] sm:$0xff]
        %v1270 = vld [vmem:[%s175 + $0x1f20] sm:$0xff]
        %v1271 = vld [vmem:[%s175 + $0x1f28] sm:$0xff]
        %v1272 = vld [vmem:[%s175 + $0x1f30] sm:$0xff]
        %v1273 = vld [vmem:[%s175 + $0x1f38] sm:$0xff]
        %v1274 = vld [vmem:[%s175 + $0x1f40] sm:$0xff]
        %v1275 = vld [vmem:[%s175 + $0x1f48] sm:$0xff]
        %v1276 = vld [vmem:[%s175 + $0x1f50] sm:$0xff]
        %v1277 = vld [vmem:[%s175 + $0x1f58] sm:$0xff]
        %v1278 = vld [vmem:[%s175 + $0x1f60] sm:$0xff]
        %v1279 = vld [vmem:[%s175 + $0x1f68] sm:$0xff]
        %v1280 = vld [vmem:[%s175 + $0x1f70] sm:$0xff]
        %v1281 = vld [vmem:[%s175 + $0x1f78] sm:$0xff]
        %v1282 = vld [vmem:[%s175 + $0x1f80] sm:$0xff]
        %v1283 = vld [vmem:[%s175 + $0x1f88] sm:$0xff]
        %v1284 = vld [vmem:[%s175 + $0x1f90] sm:$0xff]
        %v1285 = vld [vmem:[%s175 + $0x1f98] sm:$0xff]
        %v1286 = vld [vmem:[%s175 + $0x1fa0] sm:$0xff]
        %v1287 = vld [vmem:[%s175 + $0x1fa8] sm:$0xff]
        %v1288 = vld [vmem:[%s175 + $0x1fb0] sm:$0xff]
        %v1289 = vld [vmem:[%s175 + $0x1fb8] sm:$0xff]
        %v1290 = vld [vmem:[%s175 + $0x1fc0] sm:$0xff]
        %v1291 = vld [vmem:[%s175 + $0x1fc8] sm:$0xff]
        %v1292 = vld [vmem:[%s175 + $0x1fd0] sm:$0xff]
        %v1293 = vld [vmem:[%s175 + $0x1fd8] sm:$0xff]
        %v1294 = vld [vmem:[%s175 + $0x1fe0] sm:$0xff]
        %v1295 = vld [vmem:[%s175 + $0x1fe8] sm:$0xff]
        %v1296 = vld [vmem:[%s175 + $0x1ff0] sm:$0xff]
        %v1297 = vld [vmem:[%s175 + $0x1ff8] sm:$0xff]
        %v1298 = vld [vmem:[%s175 + $0x2000] sm:$0xff]
        %v1299 = vld [vmem:[%s175 + $0x2008] sm:$0xff]
        %v1300 = vld [vmem:[%s175 + $0x2010] sm:$0xff]
        %v1301 = vld [vmem:[%s175 + $0x2018] sm:$0xff]
        %v1302 = vld [vmem:[%s175 + $0x2020] sm:$0xff]
        %v1303 = vld [vmem:[%s175 + $0x2028] sm:$0xff]
        %v1304 = vld [vmem:[%s175 + $0x2030] sm:$0xff]
        %v1305 = vld [vmem:[%s175 + $0x2038] sm:$0xff]
        %v1306 = vld [vmem:[%s175 + $0x2040] sm:$0xff]
        %v1307 = vld [vmem:[%s175 + $0x2048] sm:$0xff]
        %v1308 = vld [vmem:[%s175 + $0x2050] sm:$0xff]
        %v1309 = vld [vmem:[%s175 + $0x2058] sm:$0xff]
        %v1310 = vld [vmem:[%s175 + $0x2060] sm:$0xff]
        %v1311 = vld [vmem:[%s175 + $0x2068] sm:$0xff]
        %v1312 = vld [vmem:[%s175 + $0x2070] sm:$0xff]
        %v1313 = vld [vmem:[%s175 + $0x2078] sm:$0xff]
        %v1314 = vld [vmem:[%s175 + $0x2080] sm:$0xff]
        %v1315 = vld [vmem:[%s175 + $0x2088] sm:$0xff]
        %v1316 = vld [vmem:[%s175 + $0x2090] sm:$0xff]
        %v1317 = vld [vmem:[%s175 + $0x2098] sm:$0xff]
        %v1318 = vld [vmem:[%s175 + $0x20a0] sm:$0xff]
        %v1319 = vld [vmem:[%s175 + $0x20a8] sm:$0xff]
        %v1320 = vld [vmem:[%s175 + $0x20b0] sm:$0xff]
        %v1321 = vld [vmem:[%s175 + $0x20b8] sm:$0xff]
        %v1322 = vld [vmem:[%s175 + $0x20c0] sm:$0xff]
        %v1323 = vld [vmem:[%s175 + $0x20c8] sm:$0xff]
        %v1324 = vld [vmem:[%s175 + $0x20d0] sm:$0xff]
        %v1325 = vld [vmem:[%s175 + $0x20d8] sm:$0xff]
        %v1326 = vld [vmem:[%s175 + $0x20e0] sm:$0xff]
        %v1327 = vld [vmem:[%s175 + $0x20e8] sm:$0xff]
        %v1328 = vld [vmem:[%s175 + $0x20f0] sm:$0xff]
        %v1329 = vld [vmem:[%s175 + $0x20f8] sm:$0xff]
        %v1330 = vld [vmem:[%s175 + $0x2100] sm:$0xff]
        %v1331 = vld [vmem:[%s175 + $0x2108] sm:$0xff]
        %v1332 = vld [vmem:[%s175 + $0x2110] sm:$0xff]
        %v1333 = vld [vmem:[%s175 + $0x2118] sm:$0xff]
        %v1334 = vld [vmem:[%s175 + $0x2120] sm:$0xff]
        %v1335 = vld [vmem:[%s175 + $0x2128] sm:$0xff]
        %v1336 = vld [vmem:[%s175 + $0x2130] sm:$0xff]
        %v1337 = vld [vmem:[%s175 + $0x2138] sm:$0xff]
        %v1338 = vld [vmem:[%s175 + $0x2140] sm:$0xff]
        %v1339 = vld [vmem:[%s175 + $0x2148] sm:$0xff]
        %v1340 = vld [vmem:[%s175 + $0x2150] sm:$0xff]
        %v1341 = vld [vmem:[%s175 + $0x2158] sm:$0xff]
        %v1342 = vld [vmem:[%s175 + $0x2160] sm:$0xff]
        %v1343 = vld [vmem:[%s175 + $0x2168] sm:$0xff]
        %v1344 = vld [vmem:[%s175 + $0x2170] sm:$0xff]
        %v1345 = vld [vmem:[%s175 + $0x2178] sm:$0xff]
        %v1346 = vld [vmem:[%s175 + $0x2180] sm:$0xff]
        %v1347 = vld [vmem:[%s175 + $0x2188] sm:$0xff]
        %v1348 = vld [vmem:[%s175 + $0x2190] sm:$0xff]
        %v1349 = vld [vmem:[%s175 + $0x2198] sm:$0xff]
        %v1350 = vld [vmem:[%s175 + $0x21a0] sm:$0xff]
        %v1351 = vld [vmem:[%s175 + $0x21a8] sm:$0xff]
        %v1352 = vld [vmem:[%s175 + $0x21b0] sm:$0xff]
        %v1353 = vld [vmem:[%s175 + $0x21b8] sm:$0xff]
        %v1354 = vld [vmem:[%s175 + $0x21c0] sm:$0xff]
        %v1355 = vld [vmem:[%s175 + $0x21c8] sm:$0xff]
        %v1356 = vld [vmem:[%s175 + $0x21d0] sm:$0xff]
        %v1357 = vld [vmem:[%s175 + $0x21d8] sm:$0xff]
        %v1358 = vld [vmem:[%s175 + $0x21e0] sm:$0xff]
        %v1359 = vld [vmem:[%s175 + $0x21e8] sm:$0xff]
        %v1360 = vld [vmem:[%s175 + $0x21f0] sm:$0xff]
        %v1361 = vld [vmem:[%s175 + $0x21f8] sm:$0xff]
        %v1362 = vld [vmem:[%s175 + $0x2200] sm:$0xff]
        %v1363 = vld [vmem:[%s175 + $0x2208] sm:$0xff]
        %v1364 = vld [vmem:[%s175 + $0x2210] sm:$0xff]
        %v1365 = vld [vmem:[%s175 + $0x2218] sm:$0xff]
        %v1366 = vld [vmem:[%s175 + $0x2220] sm:$0xff]
        %v1367 = vld [vmem:[%s175 + $0x2228] sm:$0xff]
        %v1368 = vld [vmem:[%s175 + $0x2230] sm:$0xff]
        %v1369 = vld [vmem:[%s175 + $0x2238] sm:$0xff]
        %v1370 = vld [vmem:[%s175 + $0x2240] sm:$0xff]
        %v1371 = vld [vmem:[%s175 + $0x2248] sm:$0xff]
        %v1372 = vld [vmem:[%s175 + $0x2250] sm:$0xff]
        %v1373 = vld [vmem:[%s175 + $0x2258] sm:$0xff]
        %v1374 = vld [vmem:[%s175 + $0x2260] sm:$0xff]
        %v1375 = vld [vmem:[%s175 + $0x2268] sm:$0xff]
        %v1376 = vld [vmem:[%s175 + $0x2270] sm:$0xff]
        %v1377 = vld [vmem:[%s175 + $0x2278] sm:$0xff]
        %v1378 = vld [vmem:[%s175 + $0x2280] sm:$0xff]
        %v1379 = vld [vmem:[%s175 + $0x2288] sm:$0xff]
        %v1380 = vld [vmem:[%s175 + $0x2290] sm:$0xff]
        %v1381 = vld [vmem:[%s175 + $0x2298] sm:$0xff]
        %v1382 = vld [vmem:[%s175 + $0x22a0] sm:$0xff]
        %v1383 = vld [vmem:[%s175 + $0x22a8] sm:$0xff]
        %v1384 = vld [vmem:[%s175 + $0x22b0] sm:$0xff]
        %v1385 = vld [vmem:[%s175 + $0x22b8] sm:$0xff]
        %v1386 = vld [vmem:[%s175 + $0x22c0] sm:$0xff]
        %v1387 = vld [vmem:[%s175 + $0x22c8] sm:$0xff]
        %v1388 = vld [vmem:[%s175 + $0x22d0] sm:$0xff]
        %v1389 = vld [vmem:[%s175 + $0x22d8] sm:$0xff]
        %v1390 = vld [vmem:[%s175 + $0x22e0] sm:$0xff]
        %v1391 = vld [vmem:[%s175 + $0x22e8] sm:$0xff]
        %v1392 = vld [vmem:[%s175 + $0x22f0] sm:$0xff]
        %v1393 = vld [vmem:[%s175 + $0x22f8] sm:$0xff]
        %v1394 = vld [vmem:[%s175 + $0x2300] sm:$0xff]
        %v1395 = vld [vmem:[%s175 + $0x2308] sm:$0xff]
        %v1396 = vld [vmem:[%s175 + $0x2310] sm:$0xff]
        %v1397 = vld [vmem:[%s175 + $0x2318] sm:$0xff]
        %v1398 = vld [vmem:[%s175 + $0x2320] sm:$0xff]
        %v1399 = vld [vmem:[%s175 + $0x2328] sm:$0xff]
        %v1400 = vld [vmem:[%s175 + $0x2330] sm:$0xff]
        %v1401 = vld [vmem:[%s175 + $0x2338] sm:$0xff]
        %v1402 = vld [vmem:[%s175 + $0x2340] sm:$0xff]
        %v1403 = vld [vmem:[%s175 + $0x2348] sm:$0xff]
        %v1404 = vld [vmem:[%s175 + $0x2350] sm:$0xff]
        %v1405 = vld [vmem:[%s175 + $0x2358] sm:$0xff]
        %v1406 = vld [vmem:[%s175 + $0x2360] sm:$0xff]
        %v1407 = vld [vmem:[%s175 + $0x2368] sm:$0xff]
        %v1408 = vld [vmem:[%s175 + $0x2370] sm:$0xff]
        %v1409 = vld [vmem:[%s175 + $0x2378] sm:$0xff]
        %v1410 = vld [vmem:[%s175 + $0x2380] sm:$0xff]
        %v1411 = vld [vmem:[%s175 + $0x2388] sm:$0xff]
        %v1412 = vld [vmem:[%s175 + $0x2390] sm:$0xff]
        %v1413 = vld [vmem:[%s175 + $0x2398] sm:$0xff]
        %v1414 = vld [vmem:[%s175 + $0x23a0] sm:$0xff]
        %v1415 = vld [vmem:[%s175 + $0x23a8] sm:$0xff]
        %v1416 = vld [vmem:[%s175 + $0x23b0] sm:$0xff]
        %v1417 = vld [vmem:[%s175 + $0x23b8] sm:$0xff]
        %v1418 = vld [vmem:[%s175 + $0x23c0] sm:$0xff]
        %v1419 = vld [vmem:[%s175 + $0x23c8] sm:$0xff]
        %v1420 = vld [vmem:[%s175 + $0x23d0] sm:$0xff]
        %v1421 = vld [vmem:[%s175 + $0x23d8] sm:$0xff]
        %v1422 = vld [vmem:[%s175 + $0x23e0] sm:$0xff]
        %v1423 = vld [vmem:[%s175 + $0x23e8] sm:$0xff]
        %v1424 = vld [vmem:[%s175 + $0x23f0] sm:$0xff]
        %v1425 = vld [vmem:[%s175 + $0x23f8] sm:$0xff]
        %v1426 = vld [vmem:[%s175 + $0x2400] sm:$0xff]
        %v1427 = vld [vmem:[%s175 + $0x2408] sm:$0xff]
        %v1428 = vld [vmem:[%s175 + $0x2410] sm:$0xff]
        %v1429 = vld [vmem:[%s175 + $0x2418] sm:$0xff]
        %v1430 = vld [vmem:[%s175 + $0x2420] sm:$0xff]
        %v1431 = vld [vmem:[%s175 + $0x2428] sm:$0xff]
        %v1432 = vld [vmem:[%s175 + $0x2430] sm:$0xff]
        %v1433 = vld [vmem:[%s175 + $0x2438] sm:$0xff]
        %v1434 = vld [vmem:[%s175 + $0x2440] sm:$0xff]
        %v1435 = vld [vmem:[%s175 + $0x2448] sm:$0xff]
        %v1436 = vld [vmem:[%s175 + $0x2450] sm:$0xff]
        %v1437 = vld [vmem:[%s175 + $0x2458] sm:$0xff]
        %v1438 = vld [vmem:[%s175 + $0x2460] sm:$0xff]
        %v1439 = vld [vmem:[%s175 + $0x2468] sm:$0xff]
        %v1440 = vld [vmem:[%s175 + $0x2470] sm:$0xff]
        %v1441 = vld [vmem:[%s175 + $0x2478] sm:$0xff]
        %v1442 = vld [vmem:[%s175 + $0x2480] sm:$0xff]
        %v1443 = vld [vmem:[%s175 + $0x2488] sm:$0xff]
        %v1444 = vld [vmem:[%s175 + $0x2490] sm:$0xff]
        %v1445 = vld [vmem:[%s175 + $0x2498] sm:$0xff]
        %v1446 = vld [vmem:[%s175 + $0x24a0] sm:$0xff]
        %v1447 = vld [vmem:[%s175 + $0x24a8] sm:$0xff]
        %v1448 = vld [vmem:[%s175 + $0x24b0] sm:$0xff]
        %v1449 = vld [vmem:[%s175 + $0x24b8] sm:$0xff]
        %v1450 = vld [vmem:[%s175 + $0x24c0] sm:$0xff]
        %v1451 = vld [vmem:[%s175 + $0x24c8] sm:$0xff]
        %v1452 = vld [vmem:[%s175 + $0x24d0] sm:$0xff]
        %v1453 = vld [vmem:[%s175 + $0x24d8] sm:$0xff]
        %v1454 = vld [vmem:[%s175 + $0x24e0] sm:$0xff]
        %v1455 = vld [vmem:[%s175 + $0x24e8] sm:$0xff]
        %v1456 = vld [vmem:[%s175 + $0x24f0] sm:$0xff]
        %v1457 = vld [vmem:[%s175 + $0x24f8] sm:$0xff]
        %v1458 = vld [vmem:[%s175 + $0x2500] sm:$0xff]
        %v1459 = vld [vmem:[%s175 + $0x2508] sm:$0xff]
        %v1460 = vld [vmem:[%s175 + $0x2510] sm:$0xff]
        %v1461 = vld [vmem:[%s175 + $0x2518] sm:$0xff]
        %v1462 = vld [vmem:[%s175 + $0x2520] sm:$0xff]
        %v1463 = vld [vmem:[%s175 + $0x2528] sm:$0xff]
        %v1464 = vld [vmem:[%s175 + $0x2530] sm:$0xff]
        %v1465 = vld [vmem:[%s175 + $0x2538] sm:$0xff]
        %v1466 = vld [vmem:[%s175 + $0x2540] sm:$0xff]
        %v1467 = vld [vmem:[%s175 + $0x2548] sm:$0xff]
        %v1468 = vld [vmem:[%s175 + $0x2550] sm:$0xff]
        %v1469 = vld [vmem:[%s175 + $0x2558] sm:$0xff]
        %v1470 = vld [vmem:[%s175 + $0x2560] sm:$0xff]
        %v1471 = vld [vmem:[%s175 + $0x2568] sm:$0xff]
        %v1472 = vld [vmem:[%s175 + $0x2570] sm:$0xff]
        %v1473 = vld [vmem:[%s175 + $0x2578] sm:$0xff]
        %v1474 = vld [vmem:[%s175 + $0x2580] sm:$0xff]
        %v1475 = vld [vmem:[%s175 + $0x2588] sm:$0xff]
        %v1476 = vld [vmem:[%s175 + $0x2590] sm:$0xff]
        %v1477 = vld [vmem:[%s175 + $0x2598] sm:$0xff]
        %v1478 = vld [vmem:[%s175 + $0x25a0] sm:$0xff]
        %v1479 = vld [vmem:[%s175 + $0x25a8] sm:$0xff]
        %v1480 = vld [vmem:[%s175 + $0x25b0] sm:$0xff]
        %v1481 = vld [vmem:[%s175 + $0x25b8] sm:$0xff]
        %v1482 = vld [vmem:[%s175 + $0x25c0] sm:$0xff]
        %v1483 = vld [vmem:[%s175 + $0x25c8] sm:$0xff]
        %v1484 = vld [vmem:[%s175 + $0x25d0] sm:$0xff]
        %v1485 = vld [vmem:[%s175 + $0x25d8] sm:$0xff]
        %v1486 = vld [vmem:[%s175 + $0x25e0] sm:$0xff]
        %v1487 = vld [vmem:[%s175 + $0x25e8] sm:$0xff]
        %v1488 = vld [vmem:[%s175 + $0x25f0] sm:$0xff]
        %v1489 = vld [vmem:[%s175 + $0x25f8] sm:$0xff]
        %v1490 = vld [vmem:[%s175 + $0x2600] sm:$0xff]
        %v1491 = vld [vmem:[%s175 + $0x2608] sm:$0xff]
        %v1492 = vld [vmem:[%s175 + $0x2610] sm:$0xff]
        %v1493 = vld [vmem:[%s175 + $0x2618] sm:$0xff]
        %v1494 = vld [vmem:[%s175 + $0x2620] sm:$0xff]
        %v1495 = vld [vmem:[%s175 + $0x2628] sm:$0xff]
        %v1496 = vld [vmem:[%s175 + $0x2630] sm:$0xff]
        %v1497 = vld [vmem:[%s175 + $0x2638] sm:$0xff]
        %v1498 = vld [vmem:[%s175 + $0x2640] sm:$0xff]
        %v1499 = vld [vmem:[%s175 + $0x2648] sm:$0xff]
        %v1500 = vld [vmem:[%s175 + $0x2650] sm:$0xff]
        %v1501 = vld [vmem:[%s175 + $0x2658] sm:$0xff]
        %v1502 = vld [vmem:[%s175 + $0x2660] sm:$0xff]
        %v1503 = vld [vmem:[%s175 + $0x2668] sm:$0xff]
        %v1504 = vld [vmem:[%s175 + $0x2670] sm:$0xff]
        %v1505 = vld [vmem:[%s175 + $0x2678] sm:$0xff]
        %v1506 = vld [vmem:[%s175 + $0x2680] sm:$0xff]
        %v1507 = vld [vmem:[%s175 + $0x2688] sm:$0xff]
        %v1508 = vld [vmem:[%s175 + $0x2690] sm:$0xff]
        %v1509 = vld [vmem:[%s175 + $0x2698] sm:$0xff]
        %v1510 = vld [vmem:[%s175 + $0x26a0] sm:$0xff]
        %v1511 = vld [vmem:[%s175 + $0x26a8] sm:$0xff]
        %v1512 = vld [vmem:[%s175 + $0x26b0] sm:$0xff]
        %v1513 = vld [vmem:[%s175 + $0x26b8] sm:$0xff]
        %v1514 = vld [vmem:[%s175 + $0x26c0] sm:$0xff]
        %v1515 = vld [vmem:[%s175 + $0x26c8] sm:$0xff]
        %v1516 = vld [vmem:[%s175 + $0x26d0] sm:$0xff]
        %v1517 = vld [vmem:[%s175 + $0x26d8] sm:$0xff]
        %v1518 = vld [vmem:[%s175 + $0x26e0] sm:$0xff]
        %v1519 = vld [vmem:[%s175 + $0x26e8] sm:$0xff]
        %v1520 = vld [vmem:[%s175 + $0x26f0] sm:$0xff]
        %v1521 = vld [vmem:[%s175 + $0x26f8] sm:$0xff]
        %v1522 = vld [vmem:[%s175 + $0x2700] sm:$0xff]
        %v1523 = vld [vmem:[%s175 + $0x2708] sm:$0xff]
        %v1524 = vld [vmem:[%s175 + $0x2710] sm:$0xff]
        %v1525 = vld [vmem:[%s175 + $0x2718] sm:$0xff]
        %v1526 = vld [vmem:[%s175 + $0x2720] sm:$0xff]
        %v1527 = vld [vmem:[%s175 + $0x2728] sm:$0xff]
        %v1528 = vld [vmem:[%s175 + $0x2730] sm:$0xff]
        %v1529 = vld [vmem:[%s175 + $0x2738] sm:$0xff]
        %v1530 = vld [vmem:[%s175 + $0x2740] sm:$0xff]
        %v1531 = vld [vmem:[%s175 + $0x2748] sm:$0xff]
        %v1532 = vld [vmem:[%s175 + $0x2750] sm:$0xff]
        %v1533 = vld [vmem:[%s175 + $0x2758] sm:$0xff]
        %v1534 = vld [vmem:[%s175 + $0x2760] sm:$0xff]
        %v1535 = vld [vmem:[%s175 + $0x2768] sm:$0xff]
        %v1536 = vld [vmem:[%s175 + $0x2770] sm:$0xff]
        %v1537 = vld [vmem:[%s175 + $0x2778] sm:$0xff]
        %v1538 = vld [vmem:[%s175 + $0x2780] sm:$0xff]
        %v1539 = vld [vmem:[%s175 + $0x2788] sm:$0xff]
        %v1540 = vld [vmem:[%s175 + $0x2790] sm:$0xff]
        %v1541 = vld [vmem:[%s175 + $0x2798] sm:$0xff]
        %v1542 = vld [vmem:[%s175 + $0x27a0] sm:$0xff]
        %v1543 = vld [vmem:[%s175 + $0x27a8] sm:$0xff]
        %v1544 = vld [vmem:[%s175 + $0x27b0] sm:$0xff]
        %v1545 = vld [vmem:[%s175 + $0x27b8] sm:$0xff]
        %v1546 = vld [vmem:[%s175 + $0x27c0] sm:$0xff]
        %v1547 = vld [vmem:[%s175 + $0x27c8] sm:$0xff]
        %v1548 = vld [vmem:[%s175 + $0x27d0] sm:$0xff]
        %v1549 = vld [vmem:[%s175 + $0x27d8] sm:$0xff]
        %v1550 = vld [vmem:[%s175 + $0x27e0] sm:$0xff]
        %v1551 = vld [vmem:[%s175 + $0x27e8] sm:$0xff]
        %v1552 = vld [vmem:[%s175 + $0x27f0] sm:$0xff]
        %v1553 = vld [vmem:[%s175 + $0x27f8] sm:$0xff]
        %v1554 = vld [vmem:[%s175 + $0x2800] sm:$0xff]
        %v1555 = vld [vmem:[%s175 + $0x2808] sm:$0xff]
        %v1556 = vld [vmem:[%s175 + $0x2810] sm:$0xff]
        %v1557 = vld [vmem:[%s175 + $0x2818] sm:$0xff]
        %v1558 = vld [vmem:[%s175 + $0x2820] sm:$0xff]
        %v1559 = vld [vmem:[%s175 + $0x2828] sm:$0xff]
        %v1560 = vld [vmem:[%s175 + $0x2830] sm:$0xff]
        %v1561 = vld [vmem:[%s175 + $0x2838] sm:$0xff]
        %v1562 = vld [vmem:[%s175 + $0x2840] sm:$0xff]
        %v1563 = vld [vmem:[%s175 + $0x2848] sm:$0xff]
        %v1564 = vld [vmem:[%s175 + $0x2850] sm:$0xff]
        %v1565 = vld [vmem:[%s175 + $0x2858] sm:$0xff]
        %v1566 = vld [vmem:[%s175 + $0x2860] sm:$0xff]
        %v1567 = vld [vmem:[%s175 + $0x2868] sm:$0xff]
        %v1568 = vld [vmem:[%s175 + $0x2870] sm:$0xff]
        %v1569 = vld [vmem:[%s175 + $0x2878] sm:$0xff]
        %v1570 = vld [vmem:[%s175 + $0x2880] sm:$0xff]
        %v1571 = vld [vmem:[%s175 + $0x2888] sm:$0xff]
        %v1572 = vld [vmem:[%s175 + $0x2890] sm:$0xff]
        %v1573 = vld [vmem:[%s175 + $0x2898] sm:$0xff]
        %v1574 = vld [vmem:[%s175 + $0x28a0] sm:$0xff]
        %v1575 = vld [vmem:[%s175 + $0x28a8] sm:$0xff]
        %v1576 = vld [vmem:[%s175 + $0x28b0] sm:$0xff]
        %v1577 = vld [vmem:[%s175 + $0x28b8] sm:$0xff]
        %v1578 = vld [vmem:[%s175 + $0x28c0] sm:$0xff]
        %v1579 = vld [vmem:[%s175 + $0x28c8] sm:$0xff]
        %v1580 = vld [vmem:[%s175 + $0x28d0] sm:$0xff]
        %v1581 = vld [vmem:[%s175 + $0x28d8] sm:$0xff]
        %v1582 = vld [vmem:[%s175 + $0x28e0] sm:$0xff]
        %v1583 = vld [vmem:[%s175 + $0x28e8] sm:$0xff]
        %v1584 = vld [vmem:[%s175 + $0x28f0] sm:$0xff]
        %v1585 = vld [vmem:[%s175 + $0x28f8] sm:$0xff]
        %v1586 = vld [vmem:[%s175 + $0x2900] sm:$0xff]
        %v1587 = vld [vmem:[%s175 + $0x2908] sm:$0xff]
        %v1588 = vld [vmem:[%s175 + $0x2910] sm:$0xff]
        %v1589 = vld [vmem:[%s175 + $0x2918] sm:$0xff]
        %v1590 = vld [vmem:[%s175 + $0x2920] sm:$0xff]
        %v1591 = vld [vmem:[%s175 + $0x2928] sm:$0xff]
        %v1592 = vld [vmem:[%s175 + $0x2930] sm:$0xff]
        %v1593 = vld [vmem:[%s175 + $0x2938] sm:$0xff]
        %v1594 = vld [vmem:[%s175 + $0x2940] sm:$0xff]
        %v1595 = vld [vmem:[%s175 + $0x2948] sm:$0xff]
        %v1596 = vld [vmem:[%s175 + $0x2950] sm:$0xff]
        %v1597 = vld [vmem:[%s175 + $0x2958] sm:$0xff]
        %v1598 = vld [vmem:[%s175 + $0x2960] sm:$0xff]
        %v1599 = vld [vmem:[%s175 + $0x2968] sm:$0xff]
        %v1600 = vld [vmem:[%s175 + $0x2970] sm:$0xff]
        %v1601 = vld [vmem:[%s175 + $0x2978] sm:$0xff]
        %v1602 = vld [vmem:[%s175 + $0x2980] sm:$0xff]
        %v1603 = vld [vmem:[%s175 + $0x2988] sm:$0xff]
        %v1604 = vld [vmem:[%s175 + $0x2990] sm:$0xff]
        %v1605 = vld [vmem:[%s175 + $0x2998] sm:$0xff]
        %v1606 = vld [vmem:[%s175 + $0x29a0] sm:$0xff]
        %v1607 = vld [vmem:[%s175 + $0x29a8] sm:$0xff]
        %v1608 = vld [vmem:[%s175 + $0x29b0] sm:$0xff]
        %v1609 = vld [vmem:[%s175 + $0x29b8] sm:$0xff]
        %v1610 = vld [vmem:[%s175 + $0x29c0] sm:$0xff]
        %v1611 = vld [vmem:[%s175 + $0x29c8] sm:$0xff]
        %v1612 = vld [vmem:[%s175 + $0x29d0] sm:$0xff]
        %v1613 = vld [vmem:[%s175 + $0x29d8] sm:$0xff]
        %v1614 = vld [vmem:[%s175 + $0x29e0] sm:$0xff]
        %v1615 = vld [vmem:[%s175 + $0x29e8] sm:$0xff]
        %v1616 = vld [vmem:[%s175 + $0x29f0] sm:$0xff]
        %v1617 = vld [vmem:[%s175 + $0x29f8] sm:$0xff]
        %v1618 = vld [vmem:[%s175 + $0x2a00] sm:$0xff]
        %v1619 = vld [vmem:[%s175 + $0x2a08] sm:$0xff]
        %v1620 = vld [vmem:[%s175 + $0x2a10] sm:$0xff]
        %v1621 = vld [vmem:[%s175 + $0x2a18] sm:$0xff]
        %v1622 = vld [vmem:[%s175 + $0x2a20] sm:$0xff]
        %v1623 = vld [vmem:[%s175 + $0x2a28] sm:$0xff]
        %v1624 = vld [vmem:[%s175 + $0x2a30] sm:$0xff]
        %v1625 = vld [vmem:[%s175 + $0x2a38] sm:$0xff]
        %v1626 = vld [vmem:[%s175 + $0x2a40] sm:$0xff]
        %v1627 = vld [vmem:[%s175 + $0x2a48] sm:$0xff]
        %v1628 = vld [vmem:[%s175 + $0x2a50] sm:$0xff]
        %v1629 = vld [vmem:[%s175 + $0x2a58] sm:$0xff]
        %v1630 = vld [vmem:[%s175 + $0x2a60] sm:$0xff]
        %v1631 = vld [vmem:[%s175 + $0x2a68] sm:$0xff]
        %v1632 = vld [vmem:[%s175 + $0x2a70] sm:$0xff]
        %v1633 = vld [vmem:[%s175 + $0x2a78] sm:$0xff]
        %v1634 = vld [vmem:[%s175 + $0x2a80] sm:$0xff]
        %v1635 = vld [vmem:[%s175 + $0x2a88] sm:$0xff]
        %v1636 = vld [vmem:[%s175 + $0x2a90] sm:$0xff]
        %v1637 = vld [vmem:[%s175 + $0x2a98] sm:$0xff]
        %v1638 = vld [vmem:[%s175 + $0x2aa0] sm:$0xff]
        %v1639 = vld [vmem:[%s175 + $0x2aa8] sm:$0xff]
        %v1640 = vld [vmem:[%s175 + $0x2ab0] sm:$0xff]
        %v1641 = vld [vmem:[%s175 + $0x2ab8] sm:$0xff]
        %v1642 = vld [vmem:[%s175 + $0x2ac0] sm:$0xff]
        %v1643 = vld [vmem:[%s175 + $0x2ac8] sm:$0xff]
        %v1644 = vld [vmem:[%s175 + $0x2ad0] sm:$0xff]
        %v1645 = vld [vmem:[%s175 + $0x2ad8] sm:$0xff]
        %v1646 = vld [vmem:[%s175 + $0x2ae0] sm:$0xff]
        %v1647 = vld [vmem:[%s175 + $0x2ae8] sm:$0xff]
        %v1648 = vld [vmem:[%s175 + $0x2af0] sm:$0xff]
        %v1649 = vld [vmem:[%s175 + $0x2af8] sm:$0xff]
        %v1650 = vld [vmem:[%s175 + $0x2b00] sm:$0xff]
        %v1651 = vld [vmem:[%s175 + $0x2b08] sm:$0xff]
        %v1652 = vld [vmem:[%s175 + $0x2b10] sm:$0xff]
        %v1653 = vld [vmem:[%s175 + $0x2b18] sm:$0xff]
        %v1654 = vld [vmem:[%s175 + $0x2b20] sm:$0xff]
        %v1655 = vld [vmem:[%s175 + $0x2b28] sm:$0xff]
        %v1656 = vld [vmem:[%s175 + $0x2b30] sm:$0xff]
        %v1657 = vld [vmem:[%s175 + $0x2b38] sm:$0xff]
        %v1658 = vld [vmem:[%s175 + $0x2b40] sm:$0xff]
        %v1659 = vld [vmem:[%s175 + $0x2b48] sm:$0xff]
        %v1660 = vld [vmem:[%s175 + $0x2b50] sm:$0xff]
        %v1661 = vld [vmem:[%s175 + $0x2b58] sm:$0xff]
        %v1662 = vld [vmem:[%s175 + $0x2b60] sm:$0xff]
        %v1663 = vld [vmem:[%s175 + $0x2b68] sm:$0xff]
        %v1664 = vld [vmem:[%s175 + $0x2b70] sm:$0xff]
        %v1665 = vld [vmem:[%s175 + $0x2b78] sm:$0xff]
        %v1666 = vld [vmem:[%s175 + $0x2b80] sm:$0xff]
        %v1667 = vld [vmem:[%s175 + $0x2b88] sm:$0xff]
        %v1668 = vld [vmem:[%s175 + $0x2b90] sm:$0xff]
        %v1669 = vld [vmem:[%s175 + $0x2b98] sm:$0xff]
        %v1670 = vld [vmem:[%s175 + $0x2ba0] sm:$0xff]
        %v1671 = vld [vmem:[%s175 + $0x2ba8] sm:$0xff]
        %v1672 = vld [vmem:[%s175 + $0x2bb0] sm:$0xff]
        %v1673 = vld [vmem:[%s175 + $0x2bb8] sm:$0xff]
        %v1674 = vld [vmem:[%s175 + $0x2bc0] sm:$0xff]
        %v1675 = vld [vmem:[%s175 + $0x2bc8] sm:$0xff]
        %v1676 = vld [vmem:[%s175 + $0x2bd0] sm:$0xff]
        %v1677 = vld [vmem:[%s175 + $0x2bd8] sm:$0xff]
        %v1678 = vld [vmem:[%s175 + $0x2be0] sm:$0xff]
        %v1679 = vld [vmem:[%s175 + $0x2be8] sm:$0xff]
        %v1680 = vld [vmem:[%s175 + $0x2bf0] sm:$0xff]
        %v1681 = vld [vmem:[%s175 + $0x2bf8] sm:$0xff]
        %v1682 = vld [vmem:[%s175 + $0x2c00] sm:$0xff]
        %v1683 = vld [vmem:[%s175 + $0x2c08] sm:$0xff]
        %v1684 = vld [vmem:[%s175 + $0x2c10] sm:$0xff]
        %v1685 = vld [vmem:[%s175 + $0x2c18] sm:$0xff]
        %v1686 = vld [vmem:[%s175 + $0x2c20] sm:$0xff]
        %v1687 = vld [vmem:[%s175 + $0x2c28] sm:$0xff]
        %v1688 = vld [vmem:[%s175 + $0x2c30] sm:$0xff]
        %v1689 = vld [vmem:[%s175 + $0x2c38] sm:$0xff]
        %v1690 = vld [vmem:[%s175 + $0x2c40] sm:$0xff]
        %v1691 = vld [vmem:[%s175 + $0x2c48] sm:$0xff]
        %v1692 = vld [vmem:[%s175 + $0x2c50] sm:$0xff]
        %v1693 = vld [vmem:[%s175 + $0x2c58] sm:$0xff]
        %v1694 = vld [vmem:[%s175 + $0x2c60] sm:$0xff]
        %v1695 = vld [vmem:[%s175 + $0x2c68] sm:$0xff]
        %v1696 = vld [vmem:[%s175 + $0x2c70] sm:$0xff]
        %v1697 = vld [vmem:[%s175 + $0x2c78] sm:$0xff]
        %v1698 = vld [vmem:[%s175 + $0x2c80] sm:$0xff]
        %v1699 = vld [vmem:[%s175 + $0x2c88] sm:$0xff]
        %v1700 = vld [vmem:[%s175 + $0x2c90] sm:$0xff]
        %v1701 = vld [vmem:[%s175 + $0x2c98] sm:$0xff]
        %v1702 = vld [vmem:[%s175 + $0x2ca0] sm:$0xff]
        %v1703 = vld [vmem:[%s175 + $0x2ca8] sm:$0xff]
        %v1704 = vld [vmem:[%s175 + $0x2cb0] sm:$0xff]
        %v1705 = vld [vmem:[%s175 + $0x2cb8] sm:$0xff]
        %v1706 = vld [vmem:[%s175 + $0x2cc0] sm:$0xff]
        %v1707 = vld [vmem:[%s175 + $0x2cc8] sm:$0xff]
        %v1708 = vld [vmem:[%s175 + $0x2cd0] sm:$0xff]
        %v1709 = vld [vmem:[%s175 + $0x2cd8] sm:$0xff]
        %v1710 = vld [vmem:[%s175 + $0x2ce0] sm:$0xff]
        %v1711 = vld [vmem:[%s175 + $0x2ce8] sm:$0xff]
        %v1712 = vld [vmem:[%s175 + $0x2cf0] sm:$0xff]
        %v1713 = vld [vmem:[%s175 + $0x2cf8] sm:$0xff]
        %v1714 = vld [vmem:[%s175 + $0x2d00] sm:$0xff]
        %v1715 = vld [vmem:[%s175 + $0x2d08] sm:$0xff]
        %v1716 = vld [vmem:[%s175 + $0x2d10] sm:$0xff]
        %v1717 = vld [vmem:[%s175 + $0x2d18] sm:$0xff]
        %v1718 = vld [vmem:[%s175 + $0x2d20] sm:$0xff]
        %v1719 = vld [vmem:[%s175 + $0x2d28] sm:$0xff]
        %v1720 = vld [vmem:[%s175 + $0x2d30] sm:$0xff]
        %v1721 = vld [vmem:[%s175 + $0x2d38] sm:$0xff]
        %v1722 = vld [vmem:[%s175 + $0x2d40] sm:$0xff]
        %v1723 = vld [vmem:[%s175 + $0x2d48] sm:$0xff]
        %v1724 = vld [vmem:[%s175 + $0x2d50] sm:$0xff]
        %v1725 = vld [vmem:[%s175 + $0x2d58] sm:$0xff]
        %v1726 = vld [vmem:[%s175 + $0x2d60] sm:$0xff]
        %v1727 = vld [vmem:[%s175 + $0x2d68] sm:$0xff]
        %v1728 = vld [vmem:[%s175 + $0x2d70] sm:$0xff]
        %v1729 = vld [vmem:[%s175 + $0x2d78] sm:$0xff]
        %v1730 = vld [vmem:[%s175 + $0x2d80] sm:$0xff]
        %v1731 = vld [vmem:[%s175 + $0x2d88] sm:$0xff]
        %v1732 = vld [vmem:[%s175 + $0x2d90] sm:$0xff]
        %v1733 = vld [vmem:[%s175 + $0x2d98] sm:$0xff]
        %v1734 = vld [vmem:[%s175 + $0x2da0] sm:$0xff]
        %v1735 = vld [vmem:[%s175 + $0x2da8] sm:$0xff]
        %v1736 = vld [vmem:[%s175 + $0x2db0] sm:$0xff]
        %v1737 = vld [vmem:[%s175 + $0x2db8] sm:$0xff]
        %v1738 = vld [vmem:[%s175 + $0x2dc0] sm:$0xff]
        %v1739 = vld [vmem:[%s175 + $0x2dc8] sm:$0xff]
        %v1740 = vld [vmem:[%s175 + $0x2dd0] sm:$0xff]
        %v1741 = vld [vmem:[%s175 + $0x2dd8] sm:$0xff]
        %v1742 = vld [vmem:[%s175 + $0x2de0] sm:$0xff]
        %v1743 = vld [vmem:[%s175 + $0x2de8] sm:$0xff]
        %v1744 = vld [vmem:[%s175 + $0x2df0] sm:$0xff]
        %v1745 = vld [vmem:[%s175 + $0x2df8] sm:$0xff]
        %v1746 = vld [vmem:[%s175 + $0x2e00] sm:$0xff]
        %v1747 = vld [vmem:[%s175 + $0x2e08] sm:$0xff]
        %v1748 = vld [vmem:[%s175 + $0x2e10] sm:$0xff]
        %v1749 = vld [vmem:[%s175 + $0x2e18] sm:$0xff]
        %v1750 = vld [vmem:[%s175 + $0x2e20] sm:$0xff]
        %v1751 = vld [vmem:[%s175 + $0x2e28] sm:$0xff]
        %v1752 = vld [vmem:[%s175 + $0x2e30] sm:$0xff]
        %v1753 = vld [vmem:[%s175 + $0x2e38] sm:$0xff]
        %v1754 = vld [vmem:[%s175 + $0x2e40] sm:$0xff]
        %v1755 = vld [vmem:[%s175 + $0x2e48] sm:$0xff]
        %v1756 = vld [vmem:[%s175 + $0x2e50] sm:$0xff]
        %v1757 = vld [vmem:[%s175 + $0x2e58] sm:$0xff]
        %v1758 = vld [vmem:[%s175 + $0x2e60] sm:$0xff]
        %v1759 = vld [vmem:[%s175 + $0x2e68] sm:$0xff]
        %v1760 = vld [vmem:[%s175 + $0x2e70] sm:$0xff]
        %v1761 = vld [vmem:[%s175 + $0x2e78] sm:$0xff]
        %v1762 = vld [vmem:[%s175 + $0x2e80] sm:$0xff]
        %v1763 = vld [vmem:[%s175 + $0x2e88] sm:$0xff]
        %v1764 = vld [vmem:[%s175 + $0x2e90] sm:$0xff]
        %v1765 = vld [vmem:[%s175 + $0x2e98] sm:$0xff]
        %v1766 = vld [vmem:[%s175 + $0x2ea0] sm:$0xff]
        %v1767 = vld [vmem:[%s175 + $0x2ea8] sm:$0xff]
        %v1768 = vld [vmem:[%s175 + $0x2eb0] sm:$0xff]
        %v1769 = vld [vmem:[%s175 + $0x2eb8] sm:$0xff]
        %v1770 = vld [vmem:[%s175 + $0x2ec0] sm:$0xff]
        %v1771 = vld [vmem:[%s175 + $0x2ec8] sm:$0xff]
        %v1772 = vld [vmem:[%s175 + $0x2ed0] sm:$0xff]
        %v1773 = vld [vmem:[%s175 + $0x2ed8] sm:$0xff]
        %v1774 = vld [vmem:[%s175 + $0x2ee0] sm:$0xff]
        %v1775 = vld [vmem:[%s175 + $0x2ee8] sm:$0xff]
        %v1776 = vld [vmem:[%s175 + $0x2ef0] sm:$0xff]
        %v1777 = vld [vmem:[%s175 + $0x2ef8] sm:$0xff]
        %v1778 = vld [vmem:[%s175 + $0x2f00] sm:$0xff]
        %v1779 = vld [vmem:[%s175 + $0x2f08] sm:$0xff]
        %v1780 = vld [vmem:[%s175 + $0x2f10] sm:$0xff]
        %v1781 = vld [vmem:[%s175 + $0x2f18] sm:$0xff]
        %v1782 = vld [vmem:[%s175 + $0x2f20] sm:$0xff]
        %v1783 = vld [vmem:[%s175 + $0x2f28] sm:$0xff]
        %v1784 = vld [vmem:[%s175 + $0x2f30] sm:$0xff]
        %v1785 = vld [vmem:[%s175 + $0x2f38] sm:$0xff]
        %v1786 = vld [vmem:[%s175 + $0x2f40] sm:$0xff]
        %v1787 = vld [vmem:[%s175 + $0x2f48] sm:$0xff]
        %v1788 = vld [vmem:[%s175 + $0x2f50] sm:$0xff]
        %v1789 = vld [vmem:[%s175 + $0x2f58] sm:$0xff]
        %v1790 = vld [vmem:[%s175 + $0x2f60] sm:$0xff]
        %v1791 = vld [vmem:[%s175 + $0x2f68] sm:$0xff]
        %v1792 = vld [vmem:[%s175 + $0x2f70] sm:$0xff]
        %v1793 = vld [vmem:[%s175 + $0x2f78] sm:$0xff]
        %v1794 = vld [vmem:[%s175 + $0x2f80] sm:$0xff]
        %v1795 = vld [vmem:[%s175 + $0x2f88] sm:$0xff]
        %v1796 = vld [vmem:[%s175 + $0x2f90] sm:$0xff]
        %v1797 = vld [vmem:[%s175 + $0x2f98] sm:$0xff]
        %v1798 = vld [vmem:[%s175 + $0x2fa0] sm:$0xff]
        %v1799 = vld [vmem:[%s175 + $0x2fa8] sm:$0xff]
        %v1800 = vld [vmem:[%s175 + $0x2fb0] sm:$0xff]
        %v1801 = vld [vmem:[%s175 + $0x2fb8] sm:$0xff]
        %v1802 = vld [vmem:[%s175 + $0x2fc0] sm:$0xff]
        %v1803 = vld [vmem:[%s175 + $0x2fc8] sm:$0xff]
        %v1804 = vld [vmem:[%s175 + $0x2fd0] sm:$0xff]
        %v1805 = vld [vmem:[%s175 + $0x2fd8] sm:$0xff]
        %v1806 = vld [vmem:[%s175 + $0x2fe0] sm:$0xff]
        %v1807 = vld [vmem:[%s175 + $0x2fe8] sm:$0xff]
        %v1808 = vld [vmem:[%s175 + $0x2ff0] sm:$0xff]
        %v1809 = vld [vmem:[%s175 + $0x2ff8] sm:$0xff]
        %v1810 = vld [vmem:[%s175 + $0x3000] sm:$0xff]
        %v1811 = vld [vmem:[%s175 + $0x3008] sm:$0xff]
        %v1812 = vld [vmem:[%s175 + $0x3010] sm:$0xff]
        %v1813 = vld [vmem:[%s175 + $0x3018] sm:$0xff]
        %v1814 = vld [vmem:[%s175 + $0x3020] sm:$0xff]
        %v1815 = vld [vmem:[%s175 + $0x3028] sm:$0xff]
        %v1816 = vld [vmem:[%s175 + $0x3030] sm:$0xff]
        %v1817 = vld [vmem:[%s175 + $0x3038] sm:$0xff]
        %v1818 = vld [vmem:[%s175 + $0x3040] sm:$0xff]
        %v1819 = vld [vmem:[%s175 + $0x3048] sm:$0xff]
        %v1820 = vld [vmem:[%s175 + $0x3050] sm:$0xff]
        %v1821 = vld [vmem:[%s175 + $0x3058] sm:$0xff]
        %v1822 = vld [vmem:[%s175 + $0x3060] sm:$0xff]
        %v1823 = vld [vmem:[%s175 + $0x3068] sm:$0xff]
        %v1824 = vld [vmem:[%s175 + $0x3070] sm:$0xff]
        %v1825 = vld [vmem:[%s175 + $0x3078] sm:$0xff]
        %v1826 = vld [vmem:[%s175 + $0x3080] sm:$0xff]
        %v1827 = vld [vmem:[%s175 + $0x3088] sm:$0xff]
        %v1828 = vld [vmem:[%s175 + $0x3090] sm:$0xff]
        %v1829 = vld [vmem:[%s175 + $0x3098] sm:$0xff]
        %v1830 = vld [vmem:[%s175 + $0x30a0] sm:$0xff]
        %v1831 = vld [vmem:[%s175 + $0x30a8] sm:$0xff]
        %v1832 = vld [vmem:[%s175 + $0x30b0] sm:$0xff]
        %v1833 = vld [vmem:[%s175 + $0x30b8] sm:$0xff]
        %v1834 = vld [vmem:[%s175 + $0x30c0] sm:$0xff]
        %v1835 = vld [vmem:[%s175 + $0x30c8] sm:$0xff]
        %v1836 = vld [vmem:[%s175 + $0x30d0] sm:$0xff]
        %v1837 = vld [vmem:[%s175 + $0x30d8] sm:$0xff]
        %v1838 = vld [vmem:[%s175 + $0x30e0] sm:$0xff]
        %v1839 = vld [vmem:[%s175 + $0x30e8] sm:$0xff]
        %v1840 = vld [vmem:[%s175 + $0x30f0] sm:$0xff]
        %v1841 = vld [vmem:[%s175 + $0x30f8] sm:$0xff]
        %v1842 = vld [vmem:[%s175 + $0x3100] sm:$0xff]
        %v1843 = vld [vmem:[%s175 + $0x3108] sm:$0xff]
        %v1844 = vld [vmem:[%s175 + $0x3110] sm:$0xff]
        %v1845 = vld [vmem:[%s175 + $0x3118] sm:$0xff]
        %v1846 = vld [vmem:[%s175 + $0x3120] sm:$0xff]
        %v1847 = vld [vmem:[%s175 + $0x3128] sm:$0xff]
        %v1848 = vld [vmem:[%s175 + $0x3130] sm:$0xff]
        %v1849 = vld [vmem:[%s175 + $0x3138] sm:$0xff]
        %v1850 = vld [vmem:[%s175 + $0x3140] sm:$0xff]
        %v1851 = vld [vmem:[%s175 + $0x3148] sm:$0xff]
        %v1852 = vld [vmem:[%s175 + $0x3150] sm:$0xff]
        %v1853 = vld [vmem:[%s175 + $0x3158] sm:$0xff]
        %v1854 = vld [vmem:[%s175 + $0x3160] sm:$0xff]
        %v1855 = vld [vmem:[%s175 + $0x3168] sm:$0xff]
        %v1856 = vld [vmem:[%s175 + $0x3170] sm:$0xff]
        %v1857 = vld [vmem:[%s175 + $0x3178] sm:$0xff]
        %v1858 = vld [vmem:[%s175 + $0x3180] sm:$0xff]
        %v1859 = vld [vmem:[%s175 + $0x3188] sm:$0xff]
        %v1860 = vld [vmem:[%s175 + $0x3190] sm:$0xff]
        %v1861 = vld [vmem:[%s175 + $0x3198] sm:$0xff]
        %v1862 = vld [vmem:[%s175 + $0x31a0] sm:$0xff]
        %v1863 = vld [vmem:[%s175 + $0x31a8] sm:$0xff]
        %v1864 = vld [vmem:[%s175 + $0x31b0] sm:$0xff]
        %v1865 = vld [vmem:[%s175 + $0x31b8] sm:$0xff]
        %v1866 = vld [vmem:[%s175 + $0x31c0] sm:$0xff]
        %v1867 = vld [vmem:[%s175 + $0x31c8] sm:$0xff]
        %v1868 = vld [vmem:[%s175 + $0x31d0] sm:$0xff]
        %v1869 = vld [vmem:[%s175 + $0x31d8] sm:$0xff]
        %v1870 = vld [vmem:[%s175 + $0x31e0] sm:$0xff]
        %v1871 = vld [vmem:[%s175 + $0x31e8] sm:$0xff]
        %v1872 = vld [vmem:[%s175 + $0x31f0] sm:$0xff]
        %v1873 = vld [vmem:[%s175 + $0x31f8] sm:$0xff]
        %v1874 = vld [vmem:[%s175 + $0x3200] sm:$0xff]
        %v1875 = vld [vmem:[%s175 + $0x3208] sm:$0xff]
        %v1876 = vld [vmem:[%s175 + $0x3210] sm:$0xff]
        %v1877 = vld [vmem:[%s175 + $0x3218] sm:$0xff]
        %v1878 = vld [vmem:[%s175 + $0x3220] sm:$0xff]
        %v1879 = vld [vmem:[%s175 + $0x3228] sm:$0xff]
        %v1880 = vld [vmem:[%s175 + $0x3230] sm:$0xff]
        %v1881 = vld [vmem:[%s175 + $0x3238] sm:$0xff]
        %v1882 = vld [vmem:[%s175 + $0x3240] sm:$0xff]
        %v1883 = vld [vmem:[%s175 + $0x3248] sm:$0xff]
        %v1884 = vld [vmem:[%s175 + $0x3250] sm:$0xff]
        %v1885 = vld [vmem:[%s175 + $0x3258] sm:$0xff]
        %v1886 = vld [vmem:[%s175 + $0x3260] sm:$0xff]
        %v1887 = vld [vmem:[%s175 + $0x3268] sm:$0xff]
        %v1888 = vld [vmem:[%s175 + $0x3270] sm:$0xff]
        %v1889 = vld [vmem:[%s175 + $0x3278] sm:$0xff]
        %v1890 = vld [vmem:[%s175 + $0x3280] sm:$0xff]
        %v1891 = vld [vmem:[%s175 + $0x3288] sm:$0xff]
        %v1892 = vld [vmem:[%s175 + $0x3290] sm:$0xff]
        %v1893 = vld [vmem:[%s175 + $0x3298] sm:$0xff]
        %v1894 = vld [vmem:[%s175 + $0x32a0] sm:$0xff]
        %v1895 = vld [vmem:[%s175 + $0x32a8] sm:$0xff]
        %v1896 = vld [vmem:[%s175 + $0x32b0] sm:$0xff]
        %v1897 = vld [vmem:[%s175 + $0x32b8] sm:$0xff]
        %v1898 = vld [vmem:[%s175 + $0x32c0] sm:$0xff]
        %v1899 = vld [vmem:[%s175 + $0x32c8] sm:$0xff]
        %v1900 = vld [vmem:[%s175 + $0x32d0] sm:$0xff]
        %v1901 = vld [vmem:[%s175 + $0x32d8] sm:$0xff]
        %v1902 = vld [vmem:[%s175 + $0x32e0] sm:$0xff]
        %v1903 = vld [vmem:[%s175 + $0x32e8] sm:$0xff]
        %v1904 = vld [vmem:[%s175 + $0x32f0] sm:$0xff]
        %v1905 = vld [vmem:[%s175 + $0x32f8] sm:$0xff]
        %v1906 = vld [vmem:[%s175 + $0x3300] sm:$0xff]
        %v1907 = vld [vmem:[%s175 + $0x3308] sm:$0xff]
        %v1908 = vld [vmem:[%s175 + $0x3310] sm:$0xff]
        %v1909 = vld [vmem:[%s175 + $0x3318] sm:$0xff]
        %v1910 = vld [vmem:[%s175 + $0x3320] sm:$0xff]
        %v1911 = vld [vmem:[%s175 + $0x3328] sm:$0xff]
        %v1912 = vld [vmem:[%s175 + $0x3330] sm:$0xff]
        %v1913 = vld [vmem:[%s175 + $0x3338] sm:$0xff]
        %v1914 = vld [vmem:[%s175 + $0x3340] sm:$0xff]
        %v1915 = vld [vmem:[%s175 + $0x3348] sm:$0xff]
        %v1916 = vld [vmem:[%s175 + $0x3350] sm:$0xff]
        %v1917 = vld [vmem:[%s175 + $0x3358] sm:$0xff]
        %v1918 = vld [vmem:[%s175 + $0x3360] sm:$0xff]
        %v1919 = vld [vmem:[%s175 + $0x3368] sm:$0xff]
        %v1920 = vld [vmem:[%s175 + $0x3370] sm:$0xff]
        %v1921 = vld [vmem:[%s175 + $0x3378] sm:$0xff]
        %v1922 = vld [vmem:[%s175 + $0x3380] sm:$0xff]
        %v1923 = vld [vmem:[%s175 + $0x3388] sm:$0xff]
        %v1924 = vld [vmem:[%s175 + $0x3390] sm:$0xff]
        %v1925 = vld [vmem:[%s175 + $0x3398] sm:$0xff]
        %v1926 = vld [vmem:[%s175 + $0x33a0] sm:$0xff]
        %v1927 = vld [vmem:[%s175 + $0x33a8] sm:$0xff]
        %v1928 = vld [vmem:[%s175 + $0x33b0] sm:$0xff]
        %v1929 = vld [vmem:[%s175 + $0x33b8] sm:$0xff]
        %v1930 = vld [vmem:[%s175 + $0x33c0] sm:$0xff]
        %v1931 = vld [vmem:[%s175 + $0x33c8] sm:$0xff]
        %v1932 = vld [vmem:[%s175 + $0x33d0] sm:$0xff]
        %v1933 = vld [vmem:[%s175 + $0x33d8] sm:$0xff]
        %v1934 = vld [vmem:[%s175 + $0x33e0] sm:$0xff]
        %v1935 = vld [vmem:[%s175 + $0x33e8] sm:$0xff]
        %v1936 = vld [vmem:[%s175 + $0x33f0] sm:$0xff]
        %v1937 = vld [vmem:[%s175 + $0x33f8] sm:$0xff]
        %v1938 = vld [vmem:[%s175 + $0x3400] sm:$0xff]
        %v1939 = vld [vmem:[%s175 + $0x3408] sm:$0xff]
        %v1940 = vld [vmem:[%s175 + $0x3410] sm:$0xff]
        %v1941 = vld [vmem:[%s175 + $0x3418] sm:$0xff]
        %v1942 = vld [vmem:[%s175 + $0x3420] sm:$0xff]
        %v1943 = vld [vmem:[%s175 + $0x3428] sm:$0xff]
        %v1944 = vld [vmem:[%s175 + $0x3430] sm:$0xff]
        %v1945 = vld [vmem:[%s175 + $0x3438] sm:$0xff]
        %v1946 = vld [vmem:[%s175 + $0x3440] sm:$0xff]
        %v1947 = vld [vmem:[%s175 + $0x3448] sm:$0xff]
        %v1948 = vld [vmem:[%s175 + $0x3450] sm:$0xff]
        %v1949 = vld [vmem:[%s175 + $0x3458] sm:$0xff]
        %v1950 = vld [vmem:[%s175 + $0x3460] sm:$0xff]
        %v1951 = vld [vmem:[%s175 + $0x3468] sm:$0xff]
        %v1952 = vld [vmem:[%s175 + $0x3470] sm:$0xff]
        %v1953 = vld [vmem:[%s175 + $0x3478] sm:$0xff]
        %v1954 = vld [vmem:[%s175 + $0x3480] sm:$0xff]
        %v1955 = vld [vmem:[%s175 + $0x3488] sm:$0xff]
        %v1956 = vld [vmem:[%s175 + $0x3490] sm:$0xff]
        %v1957 = vld [vmem:[%s175 + $0x3498] sm:$0xff]
        %v1958 = vld [vmem:[%s175 + $0x34a0] sm:$0xff]
        %v1959 = vld [vmem:[%s175 + $0x34a8] sm:$0xff]
        %v1960 = vld [vmem:[%s175 + $0x34b0] sm:$0xff]
        %v1961 = vld [vmem:[%s175 + $0x34b8] sm:$0xff]
        %v1962 = vld [vmem:[%s175 + $0x34c0] sm:$0xff]
        %v1963 = vld [vmem:[%s175 + $0x34c8] sm:$0xff]
        %v1964 = vld [vmem:[%s175 + $0x34d0] sm:$0xff]
        %v1965 = vld [vmem:[%s175 + $0x34d8] sm:$0xff]
        %v1966 = vld [vmem:[%s175 + $0x34e0] sm:$0xff]
        %v1967 = vld [vmem:[%s175 + $0x34e8] sm:$0xff]
        %v1968 = vld [vmem:[%s175 + $0x34f0] sm:$0xff]
        %v1969 = vld [vmem:[%s175 + $0x34f8] sm:$0xff]
        %v1970 = vld [vmem:[%s175 + $0x3500] sm:$0xff]
        %v1971 = vld [vmem:[%s175 + $0x3508] sm:$0xff]
        %v1972 = vld [vmem:[%s175 + $0x3510] sm:$0xff]
        %v1973 = vld [vmem:[%s175 + $0x3518] sm:$0xff]
        %v1974 = vld [vmem:[%s175 + $0x3520] sm:$0xff]
        %v1975 = vld [vmem:[%s175 + $0x3528] sm:$0xff]
        %v1976 = vld [vmem:[%s175 + $0x3530] sm:$0xff]
        %v1977 = vld [vmem:[%s175 + $0x3538] sm:$0xff]
        %v1978 = vld [vmem:[%s175 + $0x3540] sm:$0xff]
        %v1979 = vld [vmem:[%s175 + $0x3548] sm:$0xff]
        %v1980 = vld [vmem:[%s175 + $0x3550] sm:$0xff]
        %v1981 = vld [vmem:[%s175 + $0x3558] sm:$0xff]
        %v1982 = vld [vmem:[%s175 + $0x3560] sm:$0xff]
        %v1983 = vld [vmem:[%s175 + $0x3568] sm:$0xff]
        %v1984 = vld [vmem:[%s175 + $0x3570] sm:$0xff]
        %v1985 = vld [vmem:[%s175 + $0x3578] sm:$0xff]
        %v1986 = vld [vmem:[%s175 + $0x3580] sm:$0xff]
        %v1987 = vld [vmem:[%s175 + $0x3588] sm:$0xff]
        %v1988 = vld [vmem:[%s175 + $0x3590] sm:$0xff]
        %v1989 = vld [vmem:[%s175 + $0x3598] sm:$0xff]
        %v1990 = vld [vmem:[%s175 + $0x35a0] sm:$0xff]
        %v1991 = vld [vmem:[%s175 + $0x35a8] sm:$0xff]
        %v1992 = vld [vmem:[%s175 + $0x35b0] sm:$0xff]
        %v1993 = vld [vmem:[%s175 + $0x35b8] sm:$0xff]
        %v1994 = vld [vmem:[%s175 + $0x35c0] sm:$0xff]
        %v1995 = vld [vmem:[%s175 + $0x35c8] sm:$0xff]
        %v1996 = vld [vmem:[%s175 + $0x35d0] sm:$0xff]
        %v1997 = vld [vmem:[%s175 + $0x35d8] sm:$0xff]
        %v1998 = vld [vmem:[%s175 + $0x35e0] sm:$0xff]
        %v1999 = vld [vmem:[%s175 + $0x35e8] sm:$0xff]
        %v2000 = vld [vmem:[%s175 + $0x35f0] sm:$0xff]
        %v2001 = vld [vmem:[%s175 + $0x35f8] sm:$0xff]
        %v2002 = vld [vmem:[%s175 + $0x3600] sm:$0xff]
        %v2003 = vld [vmem:[%s175 + $0x3608] sm:$0xff]
        %v2004 = vld [vmem:[%s175 + $0x3610] sm:$0xff]
        %v2005 = vld [vmem:[%s175 + $0x3618] sm:$0xff]
        %v2006 = vld [vmem:[%s175 + $0x3620] sm:$0xff]
        %v2007 = vld [vmem:[%s175 + $0x3628] sm:$0xff]
        %v2008 = vld [vmem:[%s175 + $0x3630] sm:$0xff]
        %v2009 = vld [vmem:[%s175 + $0x3638] sm:$0xff]
        %v2010 = vld [vmem:[%s175 + $0x3640] sm:$0xff]
        %v2011 = vld [vmem:[%s175 + $0x3648] sm:$0xff]
        %v2012 = vld [vmem:[%s175 + $0x3650] sm:$0xff]
        %v2013 = vld [vmem:[%s175 + $0x3658] sm:$0xff]
        %v2014 = vld [vmem:[%s175 + $0x3660] sm:$0xff]
        %v2015 = vld [vmem:[%s175 + $0x3668] sm:$0xff]
        %v2016 = vld [vmem:[%s175 + $0x3670] sm:$0xff]
        %v2017 = vld [vmem:[%s175 + $0x3678] sm:$0xff]
        %v2018 = vld [vmem:[%s175 + $0x3680] sm:$0xff]
        %v2019 = vld [vmem:[%s175 + $0x3688] sm:$0xff]
        %v2020 = vld [vmem:[%s175 + $0x3690] sm:$0xff]
        %v2021 = vld [vmem:[%s175 + $0x3698] sm:$0xff]
        %v2022 = vld [vmem:[%s175 + $0x36a0] sm:$0xff]
        %v2023 = vld [vmem:[%s175 + $0x36a8] sm:$0xff]
        %v2024 = vld [vmem:[%s175 + $0x36b0] sm:$0xff]
        %v2025 = vld [vmem:[%s175 + $0x36b8] sm:$0xff]
        %v2026 = vld [vmem:[%s175 + $0x36c0] sm:$0xff]
        %v2027 = vld [vmem:[%s175 + $0x36c8] sm:$0xff]
        %v2028 = vld [vmem:[%s175 + $0x36d0] sm:$0xff]
        %v2029 = vld [vmem:[%s175 + $0x36d8] sm:$0xff]
        %v2030 = vld [vmem:[%s175 + $0x36e0] sm:$0xff]
        %v2031 = vld [vmem:[%s175 + $0x36e8] sm:$0xff]
        %v2032 = vld [vmem:[%s175 + $0x36f0] sm:$0xff]
        %v2033 = vld [vmem:[%s175 + $0x36f8] sm:$0xff]
        %v2034 = vld [vmem:[%s175 + $0x3700] sm:$0xff]
        %v2035 = vld [vmem:[%s175 + $0x3708] sm:$0xff]
        %v2036 = vld [vmem:[%s175 + $0x3710] sm:$0xff]
        %v2037 = vld [vmem:[%s175 + $0x3718] sm:$0xff]
        %v2038 = vld [vmem:[%s175 + $0x3720] sm:$0xff]
        %v2039 = vld [vmem:[%s175 + $0x3728] sm:$0xff]
        %v2040 = vld [vmem:[%s175 + $0x3730] sm:$0xff]
        %v2041 = vld [vmem:[%s175 + $0x3738] sm:$0xff]
        %v2042 = vld [vmem:[%s175 + $0x3740] sm:$0xff]
        %v2043 = vld [vmem:[%s175 + $0x3748] sm:$0xff]
        %v2044 = vld [vmem:[%s175 + $0x3750] sm:$0xff]
        %v2045 = vld [vmem:[%s175 + $0x3758] sm:$0xff]
        %v2046 = vld [vmem:[%s175 + $0x3760] sm:$0xff]
        %v2047 = vld [vmem:[%s175 + $0x3768] sm:$0xff]
        %v2048 = vld [vmem:[%s175 + $0x3770] sm:$0xff]
        %v2049 = vld [vmem:[%s175 + $0x3778] sm:$0xff]
        %v2050 = vld [vmem:[%s175 + $0x3780] sm:$0xff]
        %v2051 = vld [vmem:[%s175 + $0x3788] sm:$0xff]
        %v2052 = vld [vmem:[%s175 + $0x3790] sm:$0xff]
        %v2053 = vld [vmem:[%s175 + $0x3798] sm:$0xff]
        %v2054 = vld [vmem:[%s175 + $0x37a0] sm:$0xff]
        %v2055 = vld [vmem:[%s175 + $0x37a8] sm:$0xff]
        %v2056 = vld [vmem:[%s175 + $0x37b0] sm:$0xff]
        %v2057 = vld [vmem:[%s175 + $0x37b8] sm:$0xff]
        %v2058 = vld [vmem:[%s175 + $0x37c0] sm:$0xff]
        %v2059 = vld [vmem:[%s175 + $0x37c8] sm:$0xff]
        %v2060 = vld [vmem:[%s175 + $0x37d0] sm:$0xff]
        %v2061 = vld [vmem:[%s175 + $0x37d8] sm:$0xff]
        %v2062 = vld [vmem:[%s175 + $0x37e0] sm:$0xff]
        %v2063 = vld [vmem:[%s175 + $0x37e8] sm:$0xff]
        %v2064 = vld [vmem:[%s175 + $0x37f0] sm:$0xff]
        %v2065 = vld [vmem:[%s175 + $0x37f8] sm:$0xff]
        %v2066 = vld [vmem:[%s175 + $0x3800] sm:$0xff]
        %v2067 = vld [vmem:[%s175 + $0x3808] sm:$0xff]
        %v2068 = vld [vmem:[%s175 + $0x3810] sm:$0xff]
        %v2069 = vld [vmem:[%s175 + $0x3818] sm:$0xff]
        %v2070 = vld [vmem:[%s175 + $0x3820] sm:$0xff]
        %v2071 = vld [vmem:[%s175 + $0x3828] sm:$0xff]
        %v2072 = vld [vmem:[%s175 + $0x3830] sm:$0xff]
        %v2073 = vld [vmem:[%s175 + $0x3838] sm:$0xff]
        %v2074 = vld [vmem:[%s175 + $0x3840] sm:$0xff]
        %v2075 = vld [vmem:[%s175 + $0x3848] sm:$0xff]
        %v2076 = vld [vmem:[%s175 + $0x3850] sm:$0xff]
        %v2077 = vld [vmem:[%s175 + $0x3858] sm:$0xff]
        %v2078 = vld [vmem:[%s175 + $0x3860] sm:$0xff]
        %v2079 = vld [vmem:[%s175 + $0x3868] sm:$0xff]
        %v2080 = vld [vmem:[%s175 + $0x3870] sm:$0xff]
        %v2081 = vld [vmem:[%s175 + $0x3878] sm:$0xff]
        %v2082 = vld [vmem:[%s175 + $0x3880] sm:$0xff]
        %v2083 = vld [vmem:[%s175 + $0x3888] sm:$0xff]
        %v2084 = vld [vmem:[%s175 + $0x3890] sm:$0xff]
        %v2085 = vld [vmem:[%s175 + $0x3898] sm:$0xff]
        %v2086 = vld [vmem:[%s175 + $0x38a0] sm:$0xff]
        %v2087 = vld [vmem:[%s175 + $0x38a8] sm:$0xff]
        %v2088 = vld [vmem:[%s175 + $0x38b0] sm:$0xff]
        %v2089 = vld [vmem:[%s175 + $0x38b8] sm:$0xff]
        %v2090 = vld [vmem:[%s175 + $0x38c0] sm:$0xff]
        %v2091 = vld [vmem:[%s175 + $0x38c8] sm:$0xff]
        %v2092 = vld [vmem:[%s175 + $0x38d0] sm:$0xff]
        %v2093 = vld [vmem:[%s175 + $0x38d8] sm:$0xff]
        %v2094 = vld [vmem:[%s175 + $0x38e0] sm:$0xff]
        %v2095 = vld [vmem:[%s175 + $0x38e8] sm:$0xff]
        %v2096 = vld [vmem:[%s175 + $0x38f0] sm:$0xff]
        %v2097 = vld [vmem:[%s175 + $0x38f8] sm:$0xff]
        %v2098 = vld [vmem:[%s175 + $0x3900] sm:$0xff]
        %v2099 = vld [vmem:[%s175 + $0x3908] sm:$0xff]
        %v2100 = vld [vmem:[%s175 + $0x3910] sm:$0xff]
        %v2101 = vld [vmem:[%s175 + $0x3918] sm:$0xff]
        %v2102 = vld [vmem:[%s175 + $0x3920] sm:$0xff]
        %v2103 = vld [vmem:[%s175 + $0x3928] sm:$0xff]
        %v2104 = vld [vmem:[%s175 + $0x3930] sm:$0xff]
        %v2105 = vld [vmem:[%s175 + $0x3938] sm:$0xff]
        %v2106 = vld [vmem:[%s175 + $0x3940] sm:$0xff]
        %v2107 = vld [vmem:[%s175 + $0x3948] sm:$0xff]
        %v2108 = vld [vmem:[%s175 + $0x3950] sm:$0xff]
        %v2109 = vld [vmem:[%s175 + $0x3958] sm:$0xff]
        %v2110 = vld [vmem:[%s175 + $0x3960] sm:$0xff]
        %v2111 = vld [vmem:[%s175 + $0x3968] sm:$0xff]
        %v2112 = vld [vmem:[%s175 + $0x3970] sm:$0xff]
        %v2113 = vld [vmem:[%s175 + $0x3978] sm:$0xff]
        %v2114 = vld [vmem:[%s175 + $0x3980] sm:$0xff]
        %v2115 = vld [vmem:[%s175 + $0x3988] sm:$0xff]
        %v2116 = vld [vmem:[%s175 + $0x3990] sm:$0xff]
        %v2117 = vld [vmem:[%s175 + $0x3998] sm:$0xff]
        %v2118 = vld [vmem:[%s175 + $0x39a0] sm:$0xff]
        %v2119 = vld [vmem:[%s175 + $0x39a8] sm:$0xff]
        %v2120 = vld [vmem:[%s175 + $0x39b0] sm:$0xff]
        %v2121 = vld [vmem:[%s175 + $0x39b8] sm:$0xff]
        %v2122 = vld [vmem:[%s175 + $0x39c0] sm:$0xff]
        %v2123 = vld [vmem:[%s175 + $0x39c8] sm:$0xff]
        %v2124 = vld [vmem:[%s175 + $0x39d0] sm:$0xff]
        %v2125 = vld [vmem:[%s175 + $0x39d8] sm:$0xff]
        %v2126 = vld [vmem:[%s175 + $0x39e0] sm:$0xff]
        %v2127 = vld [vmem:[%s175 + $0x39e8] sm:$0xff]
        %v2128 = vld [vmem:[%s175 + $0x39f0] sm:$0xff]
        %v2129 = vld [vmem:[%s175 + $0x39f8] sm:$0xff]
        %v2130 = vld [vmem:[%s175 + $0x3a00] sm:$0xff]
        %v2131 = vld [vmem:[%s175 + $0x3a08] sm:$0xff]
        %v2132 = vld [vmem:[%s175 + $0x3a10] sm:$0xff]
        %v2133 = vld [vmem:[%s175 + $0x3a18] sm:$0xff]
        %v2134 = vld [vmem:[%s175 + $0x3a20] sm:$0xff]
        %v2135 = vld [vmem:[%s175 + $0x3a28] sm:$0xff]
        %v2136 = vld [vmem:[%s175 + $0x3a30] sm:$0xff]
        %v2137 = vld [vmem:[%s175 + $0x3a38] sm:$0xff]
        %v2138 = vld [vmem:[%s175 + $0x3a40] sm:$0xff]
        %v2139 = vld [vmem:[%s175 + $0x3a48] sm:$0xff]
        %v2140 = vld [vmem:[%s175 + $0x3a50] sm:$0xff]
        %v2141 = vld [vmem:[%s175 + $0x3a58] sm:$0xff]
        %v2142 = vld [vmem:[%s175 + $0x3a60] sm:$0xff]
        %v2143 = vld [vmem:[%s175 + $0x3a68] sm:$0xff]
        %v2144 = vld [vmem:[%s175 + $0x3a70] sm:$0xff]
        %v2145 = vld [vmem:[%s175 + $0x3a78] sm:$0xff]
        %v2146 = vld [vmem:[%s175 + $0x3a80] sm:$0xff]
        %v2147 = vld [vmem:[%s175 + $0x3a88] sm:$0xff]
        %v2148 = vld [vmem:[%s175 + $0x3a90] sm:$0xff]
        %v2149 = vld [vmem:[%s175 + $0x3a98] sm:$0xff]
        %v2150 = vld [vmem:[%s175 + $0x3aa0] sm:$0xff]
        %v2151 = vld [vmem:[%s175 + $0x3aa8] sm:$0xff]
        %v2152 = vld [vmem:[%s175 + $0x3ab0] sm:$0xff]
        %v2153 = vld [vmem:[%s175 + $0x3ab8] sm:$0xff]
        %v2154 = vld [vmem:[%s175 + $0x3ac0] sm:$0xff]
        %v2155 = vld [vmem:[%s175 + $0x3ac8] sm:$0xff]
        %v2156 = vld [vmem:[%s175 + $0x3ad0] sm:$0xff]
        %v2157 = vld [vmem:[%s175 + $0x3ad8] sm:$0xff]
        %v2158 = vld [vmem:[%s175 + $0x3ae0] sm:$0xff]
        %v2159 = vld [vmem:[%s175 + $0x3ae8] sm:$0xff]
        %v2160 = vld [vmem:[%s175 + $0x3af0] sm:$0xff]
        %v2161 = vld [vmem:[%s175 + $0x3af8] sm:$0xff]
        %v2162 = vld [vmem:[%s175 + $0x3b00] sm:$0xff]
        %v2163 = vld [vmem:[%s175 + $0x3b08] sm:$0xff]
        %v2164 = vld [vmem:[%s175 + $0x3b10] sm:$0xff]
        %v2165 = vld [vmem:[%s175 + $0x3b18] sm:$0xff]
        %v2166 = vld [vmem:[%s175 + $0x3b20] sm:$0xff]
        %v2167 = vld [vmem:[%s175 + $0x3b28] sm:$0xff]
        %v2168 = vld [vmem:[%s175 + $0x3b30] sm:$0xff]
        %v2169 = vld [vmem:[%s175 + $0x3b38] sm:$0xff]
        %v2170 = vld [vmem:[%s175 + $0x3b40] sm:$0xff]
        %v2171 = vld [vmem:[%s175 + $0x3b48] sm:$0xff]
        %v2172 = vld [vmem:[%s175 + $0x3b50] sm:$0xff]
        %v2173 = vld [vmem:[%s175 + $0x3b58] sm:$0xff]
        %v2174 = vld [vmem:[%s175 + $0x3b60] sm:$0xff]
        %v2175 = vld [vmem:[%s175 + $0x3b68] sm:$0xff]
        %v2176 = vld [vmem:[%s175 + $0x3b70] sm:$0xff]
        %v2177 = vld [vmem:[%s175 + $0x3b78] sm:$0xff]
        %v2178 = vld [vmem:[%s175 + $0x3b80] sm:$0xff]
        %v2179 = vld [vmem:[%s175 + $0x3b88] sm:$0xff]
        %v2180 = vld [vmem:[%s175 + $0x3b90] sm:$0xff]
        %v2181 = vld [vmem:[%s175 + $0x3b98] sm:$0xff]
        %v2182 = vld [vmem:[%s175 + $0x3ba0] sm:$0xff]
        %v2183 = vld [vmem:[%s175 + $0x3ba8] sm:$0xff]
        %v2184 = vld [vmem:[%s175 + $0x3bb0] sm:$0xff]
        %v2185 = vld [vmem:[%s175 + $0x3bb8] sm:$0xff]
        %v2186 = vld [vmem:[%s175 + $0x3bc0] sm:$0xff]
        %v2187 = vld [vmem:[%s175 + $0x3bc8] sm:$0xff]
        %v2188 = vld [vmem:[%s175 + $0x3bd0] sm:$0xff]
        %v2189 = vld [vmem:[%s175 + $0x3bd8] sm:$0xff]
        %v2190 = vld [vmem:[%s175 + $0x3be0] sm:$0xff]
        %v2191 = vld [vmem:[%s175 + $0x3be8] sm:$0xff]
        %v2192 = vld [vmem:[%s175 + $0x3bf0] sm:$0xff]
        %v2193 = vld [vmem:[%s175 + $0x3bf8] sm:$0xff]
        %v2194 = vld [vmem:[%s175 + $0x3c00] sm:$0xff]
        %v2195 = vld [vmem:[%s175 + $0x3c08] sm:$0xff]
        %v2196 = vld [vmem:[%s175 + $0x3c10] sm:$0xff]
        %v2197 = vld [vmem:[%s175 + $0x3c18] sm:$0xff]
        %v2198 = vld [vmem:[%s175 + $0x3c20] sm:$0xff]
        %v2199 = vld [vmem:[%s175 + $0x3c28] sm:$0xff]
        %v2200 = vld [vmem:[%s175 + $0x3c30] sm:$0xff]
        %v2201 = vld [vmem:[%s175 + $0x3c38] sm:$0xff]
        %v2202 = vld [vmem:[%s175 + $0x3c40] sm:$0xff]
        %v2203 = vld [vmem:[%s175 + $0x3c48] sm:$0xff]
        %v2204 = vld [vmem:[%s175 + $0x3c50] sm:$0xff]
        %v2205 = vld [vmem:[%s175 + $0x3c58] sm:$0xff]
        %v2206 = vld [vmem:[%s175 + $0x3c60] sm:$0xff]
        %v2207 = vld [vmem:[%s175 + $0x3c68] sm:$0xff]
        %v2208 = vld [vmem:[%s175 + $0x3c70] sm:$0xff]
        %v2209 = vld [vmem:[%s175 + $0x3c78] sm:$0xff]
        %v2210 = vld [vmem:[%s175 + $0x3c80] sm:$0xff]
        %v2211 = vld [vmem:[%s175 + $0x3c88] sm:$0xff]
        %v2212 = vld [vmem:[%s175 + $0x3c90] sm:$0xff]
        %v2213 = vld [vmem:[%s175 + $0x3c98] sm:$0xff]
        %v2214 = vld [vmem:[%s175 + $0x3ca0] sm:$0xff]
        %v2215 = vld [vmem:[%s175 + $0x3ca8] sm:$0xff]
        %v2216 = vld [vmem:[%s175 + $0x3cb0] sm:$0xff]
        %v2217 = vld [vmem:[%s175 + $0x3cb8] sm:$0xff]
        %v2218 = vld [vmem:[%s175 + $0x3cc0] sm:$0xff]
        %v2219 = vld [vmem:[%s175 + $0x3cc8] sm:$0xff]
        %v2220 = vld [vmem:[%s175 + $0x3cd0] sm:$0xff]
        %v2221 = vld [vmem:[%s175 + $0x3cd8] sm:$0xff]
        %v2222 = vld [vmem:[%s175 + $0x3ce0] sm:$0xff]
        %v2223 = vld [vmem:[%s175 + $0x3ce8] sm:$0xff]
        %v2224 = vld [vmem:[%s175 + $0x3cf0] sm:$0xff]
        %v2225 = vld [vmem:[%s175 + $0x3cf8] sm:$0xff]
        %v2226 = vld [vmem:[%s175 + $0x3d00] sm:$0xff]
        %v2227 = vld [vmem:[%s175 + $0x3d08] sm:$0xff]
        %v2228 = vld [vmem:[%s175 + $0x3d10] sm:$0xff]
        %v2229 = vld [vmem:[%s175 + $0x3d18] sm:$0xff]
        %v2230 = vld [vmem:[%s175 + $0x3d20] sm:$0xff]
        %v2231 = vld [vmem:[%s175 + $0x3d28] sm:$0xff]
        %v2232 = vld [vmem:[%s175 + $0x3d30] sm:$0xff]
        %v2233 = vld [vmem:[%s175 + $0x3d38] sm:$0xff]
        %v2234 = vld [vmem:[%s175 + $0x3d40] sm:$0xff]
        %v2235 = vld [vmem:[%s175 + $0x3d48] sm:$0xff]
        %v2236 = vld [vmem:[%s175 + $0x3d50] sm:$0xff]
        %v2237 = vld [vmem:[%s175 + $0x3d58] sm:$0xff]
        %v2238 = vld [vmem:[%s175 + $0x3d60] sm:$0xff]
        %v2239 = vld [vmem:[%s175 + $0x3d68] sm:$0xff]
        %v2240 = vld [vmem:[%s175 + $0x3d70] sm:$0xff]
        %v2241 = vld [vmem:[%s175 + $0x3d78] sm:$0xff]
        %v2242 = vld [vmem:[%s175 + $0x3d80] sm:$0xff]
        %v2243 = vld [vmem:[%s175 + $0x3d88] sm:$0xff]
        %v2244 = vld [vmem:[%s175 + $0x3d90] sm:$0xff]
        %v2245 = vld [vmem:[%s175 + $0x3d98] sm:$0xff]
        %v2246 = vld [vmem:[%s175 + $0x3da0] sm:$0xff]
        %v2247 = vld [vmem:[%s175 + $0x3da8] sm:$0xff]
        %v2248 = vld [vmem:[%s175 + $0x3db0] sm:$0xff]
        %v2249 = vld [vmem:[%s175 + $0x3db8] sm:$0xff]
        %v2250 = vld [vmem:[%s175 + $0x3dc0] sm:$0xff]
        %v2251 = vld [vmem:[%s175 + $0x3dc8] sm:$0xff]
        %v2252 = vld [vmem:[%s175 + $0x3dd0] sm:$0xff]
        %v2253 = vld [vmem:[%s175 + $0x3dd8] sm:$0xff]
        %v2254 = vld [vmem:[%s175 + $0x3de0] sm:$0xff]
        %v2255 = vld [vmem:[%s175 + $0x3de8] sm:$0xff]
        %v2256 = vld [vmem:[%s175 + $0x3df0] sm:$0xff]
        %v2257 = vld [vmem:[%s175 + $0x3df8] sm:$0xff]
        %v2258 = vld [vmem:[%s175 + $0x3e00] sm:$0xff]
        %v2259 = vld [vmem:[%s175 + $0x3e08] sm:$0xff]
        %v2260 = vld [vmem:[%s175 + $0x3e10] sm:$0xff]
        %v2261 = vld [vmem:[%s175 + $0x3e18] sm:$0xff]
        %v2262 = vld [vmem:[%s175 + $0x3e20] sm:$0xff]
        %v2263 = vld [vmem:[%s175 + $0x3e28] sm:$0xff]
        %v2264 = vld [vmem:[%s175 + $0x3e30] sm:$0xff]
        %v2265 = vld [vmem:[%s175 + $0x3e38] sm:$0xff]
        %v2266 = vld [vmem:[%s175 + $0x3e40] sm:$0xff]
        %v2267 = vld [vmem:[%s175 + $0x3e48] sm:$0xff]
        %v2268 = vld [vmem:[%s175 + $0x3e50] sm:$0xff]
        %v2269 = vld [vmem:[%s175 + $0x3e58] sm:$0xff]
        %v2270 = vld [vmem:[%s175 + $0x3e60] sm:$0xff]
        %v2271 = vld [vmem:[%s175 + $0x3e68] sm:$0xff]
        %v2272 = vld [vmem:[%s175 + $0x3e70] sm:$0xff]
        %v2273 = vld [vmem:[%s175 + $0x3e78] sm:$0xff]
        %v2274 = vld [vmem:[%s175 + $0x3e80] sm:$0xff]
        %v2275 = vld [vmem:[%s175 + $0x3e88] sm:$0xff]
        %v2276 = vld [vmem:[%s175 + $0x3e90] sm:$0xff]
        %v2277 = vld [vmem:[%s175 + $0x3e98] sm:$0xff]
        %v2278 = vld [vmem:[%s175 + $0x3ea0] sm:$0xff]
        %v2279 = vld [vmem:[%s175 + $0x3ea8] sm:$0xff]
        %v2280 = vld [vmem:[%s175 + $0x3eb0] sm:$0xff]
        %v2281 = vld [vmem:[%s175 + $0x3eb8] sm:$0xff]
        %v2282 = vld [vmem:[%s175 + $0x3ec0] sm:$0xff]
        %v2283 = vld [vmem:[%s175 + $0x3ec8] sm:$0xff]
        %v2284 = vld [vmem:[%s175 + $0x3ed0] sm:$0xff]
        %v2285 = vld [vmem:[%s175 + $0x3ed8] sm:$0xff]
        %v2286 = vld [vmem:[%s175 + $0x3ee0] sm:$0xff]
        %v2287 = vld [vmem:[%s175 + $0x3ee8] sm:$0xff]
        %v2288 = vld [vmem:[%s175 + $0x3ef0] sm:$0xff]
        %v2289 = vld [vmem:[%s175 + $0x3ef8] sm:$0xff]
        %v2290 = vld [vmem:[%s175 + $0x3f00] sm:$0xff]
        %v2291 = vld [vmem:[%s175 + $0x3f08] sm:$0xff]
        %v2292 = vld [vmem:[%s175 + $0x3f10] sm:$0xff]
        %v2293 = vld [vmem:[%s175 + $0x3f18] sm:$0xff]
        %v2294 = vld [vmem:[%s175 + $0x3f20] sm:$0xff]
        %v2295 = vld [vmem:[%s175 + $0x3f28] sm:$0xff]
        %v2296 = vld [vmem:[%s175 + $0x3f30] sm:$0xff]
        %v2297 = vld [vmem:[%s175 + $0x3f38] sm:$0xff]
        %v2298 = vld [vmem:[%s175 + $0x3f40] sm:$0xff]
        %v2299 = vld [vmem:[%s175 + $0x3f48] sm:$0xff]
        %v2300 = vld [vmem:[%s175 + $0x3f50] sm:$0xff]
        %v2301 = vld [vmem:[%s175 + $0x3f58] sm:$0xff]
        %v2302 = vld [vmem:[%s175 + $0x3f60] sm:$0xff]
        %v2303 = vld [vmem:[%s175 + $0x3f68] sm:$0xff]
        %v2304 = vld [vmem:[%s175 + $0x3f70] sm:$0xff]
        %v2305 = vld [vmem:[%s175 + $0x3f78] sm:$0xff]
        %v2306 = vld [vmem:[%s175 + $0x3f80] sm:$0xff]
        %v2307 = vld [vmem:[%s175 + $0x3f88] sm:$0xff]
        %v2308 = vld [vmem:[%s175 + $0x3f90] sm:$0xff]
        %v2309 = vld [vmem:[%s175 + $0x3f98] sm:$0xff]
        %v2310 = vld [vmem:[%s175 + $0x3fa0] sm:$0xff]
        %v2311 = vld [vmem:[%s175 + $0x3fa8] sm:$0xff]
        %v2312 = vld [vmem:[%s175 + $0x3fb0] sm:$0xff]
        %v2313 = vld [vmem:[%s175 + $0x3fb8] sm:$0xff]
        %v2314 = vld [vmem:[%s175 + $0x3fc0] sm:$0xff]
        %v2315 = vld [vmem:[%s175 + $0x3fc8] sm:$0xff]
        %v2316 = vld [vmem:[%s175 + $0x3fd0] sm:$0xff]
        %v2317 = vld [vmem:[%s175 + $0x3fd8] sm:$0xff]
        %v2318 = vld [vmem:[%s175 + $0x3fe0] sm:$0xff]
        %v2319 = vld [vmem:[%s175 + $0x3fe8] sm:$0xff]
        %v2320 = vld [vmem:[%s175 + $0x3ff0] sm:$0xff]
        %v2321 = vld [vmem:[%s175 + $0x3ff8] sm:$0xff]
        %v2322 = vld [vmem:[%s175 + $0x4000] sm:$0xff]
        %v2323 = vld [vmem:[%s175 + $0x4008] sm:$0xff]
        %v2324 = vld [vmem:[%s175 + $0x4010] sm:$0xff]
        %v2325 = vld [vmem:[%s175 + $0x4018] sm:$0xff]
        %v2326 = vld [vmem:[%s175 + $0x4020] sm:$0xff]
        %v2327 = vld [vmem:[%s175 + $0x4028] sm:$0xff]
        %v2328 = vld [vmem:[%s175 + $0x4030] sm:$0xff]
        %v2329 = vld [vmem:[%s175 + $0x4038] sm:$0xff]
        %v2330 = vld [vmem:[%s175 + $0x4040] sm:$0xff]
        %v2331 = vld [vmem:[%s175 + $0x4048] sm:$0xff]
        %v2332 = vld [vmem:[%s175 + $0x4050] sm:$0xff]
        %v2333 = vld [vmem:[%s175 + $0x4058] sm:$0xff]
        %v2334 = vld [vmem:[%s175 + $0x4060] sm:$0xff]
        %v2335 = vld [vmem:[%s175 + $0x4068] sm:$0xff]
        %v2336 = vld [vmem:[%s175 + $0x4070] sm:$0xff]
        %v2337 = vld [vmem:[%s175 + $0x4078] sm:$0xff]
        %v2338 = vld [vmem:[%s175 + $0x4080] sm:$0xff]
        %v2339 = vld [vmem:[%s175 + $0x4088] sm:$0xff]
        %v2340 = vld [vmem:[%s175 + $0x4090] sm:$0xff]
        %v2341 = vld [vmem:[%s175 + $0x4098] sm:$0xff]
        %v2342 = vld [vmem:[%s175 + $0x40a0] sm:$0xff]
        %v2343 = vld [vmem:[%s175 + $0x40a8] sm:$0xff]
        %v2344 = vld [vmem:[%s175 + $0x40b0] sm:$0xff]
        %v2345 = vld [vmem:[%s175 + $0x40b8] sm:$0xff]
        %v2346 = vld [vmem:[%s175 + $0x40c0] sm:$0xff]
        %v2347 = vld [vmem:[%s175 + $0x40c8] sm:$0xff]
        %v2348 = vld [vmem:[%s175 + $0x40d0] sm:$0xff]
        %v2349 = vld [vmem:[%s175 + $0x40d8] sm:$0xff]
        %v2350 = vld [vmem:[%s175 + $0x40e0] sm:$0xff]
        %v2351 = vld [vmem:[%s175 + $0x40e8] sm:$0xff]
        %v2352 = vld [vmem:[%s175 + $0x40f0] sm:$0xff]
        %v2353 = vld [vmem:[%s175 + $0x40f8] sm:$0xff]
        %v2354 = vld [vmem:[%s175 + $0x4100] sm:$0xff]
        %v2355 = vld [vmem:[%s175 + $0x4108] sm:$0xff]
        %v2356 = vld [vmem:[%s175 + $0x4110] sm:$0xff]
        %v2357 = vld [vmem:[%s175 + $0x4118] sm:$0xff]
        %v2358 = vld [vmem:[%s175 + $0x4120] sm:$0xff]
        %v2359 = vld [vmem:[%s175 + $0x4128] sm:$0xff]
        %v2360 = vld [vmem:[%s175 + $0x4130] sm:$0xff]
        %v2361 = vld [vmem:[%s175 + $0x4138] sm:$0xff]
        %v2362 = vld [vmem:[%s175 + $0x4140] sm:$0xff]
        %v2363 = vld [vmem:[%s175 + $0x4148] sm:$0xff]
        %v2364 = vld [vmem:[%s175 + $0x4150] sm:$0xff]
        %v2365 = vld [vmem:[%s175 + $0x4158] sm:$0xff]
        %v2366 = vld [vmem:[%s175 + $0x4160] sm:$0xff]
        %v2367 = vld [vmem:[%s175 + $0x4168] sm:$0xff]
        %v2368 = vld [vmem:[%s175 + $0x4170] sm:$0xff]
        %v2369 = vld [vmem:[%s175 + $0x4178] sm:$0xff]
        %v2370 = vld [vmem:[%s175 + $0x4180] sm:$0xff]
        %v2371 = vld [vmem:[%s175 + $0x4188] sm:$0xff]
        %v2372 = vld [vmem:[%s175 + $0x4190] sm:$0xff]
        %v2373 = vld [vmem:[%s175 + $0x4198] sm:$0xff]
        %v2374 = vld [vmem:[%s175 + $0x41a0] sm:$0xff]
        %v2375 = vld [vmem:[%s175 + $0x41a8] sm:$0xff]
        %v2376 = vld [vmem:[%s175 + $0x41b0] sm:$0xff]
        %v2377 = vld [vmem:[%s175 + $0x41b8] sm:$0xff]
        %v2378 = vld [vmem:[%s175 + $0x41c0] sm:$0xff]
        %v2379 = vld [vmem:[%s175 + $0x41c8] sm:$0xff]
        %v2380 = vld [vmem:[%s175 + $0x41d0] sm:$0xff]
        %v2381 = vld [vmem:[%s175 + $0x41d8] sm:$0xff]
        %v2382 = vld [vmem:[%s175 + $0x41e0] sm:$0xff]
        %v2383 = vld [vmem:[%s175 + $0x41e8] sm:$0xff]
        %v2384 = vld [vmem:[%s175 + $0x41f0] sm:$0xff]
        %v2385 = vld [vmem:[%s175 + $0x41f8] sm:$0xff]
        %v2386 = vld [vmem:[%s175 + $0x4200] sm:$0xff]
        %v2387 = vld [vmem:[%s175 + $0x4208] sm:$0xff]
        %v2388 = vld [vmem:[%s175 + $0x4210] sm:$0xff]
        %v2389 = vld [vmem:[%s175 + $0x4218] sm:$0xff]
        %v2390 = vld [vmem:[%s175 + $0x4220] sm:$0xff]
        %v2391 = vld [vmem:[%s175 + $0x4228] sm:$0xff]
        %v2392 = vld [vmem:[%s175 + $0x4230] sm:$0xff]
        %v2393 = vld [vmem:[%s175 + $0x4238] sm:$0xff]
        %v2394 = vld [vmem:[%s175 + $0x4240] sm:$0xff]
        %v2395 = vld [vmem:[%s175 + $0x4248] sm:$0xff]
        %v2396 = vld [vmem:[%s175 + $0x4250] sm:$0xff]
        %v2397 = vld [vmem:[%s175 + $0x4258] sm:$0xff]
        %v2398 = vld [vmem:[%s175 + $0x4260] sm:$0xff]
        %v2399 = vld [vmem:[%s175 + $0x4268] sm:$0xff]
        %v2400 = vld [vmem:[%s175 + $0x4270] sm:$0xff]
        %v2401 = vld [vmem:[%s175 + $0x4278] sm:$0xff]
        %v2402 = vld [vmem:[%s175 + $0x4280] sm:$0xff]
        %v2403 = vld [vmem:[%s175 + $0x4288] sm:$0xff]
        %v2404 = vld [vmem:[%s175 + $0x4290] sm:$0xff]
        %v2405 = vld [vmem:[%s175 + $0x4298] sm:$0xff]
        %v2406 = vld [vmem:[%s175 + $0x42a0] sm:$0xff]
        %v2407 = vld [vmem:[%s175 + $0x42a8] sm:$0xff]
        %v2408 = vld [vmem:[%s175 + $0x42b0] sm:$0xff]
        %v2409 = vld [vmem:[%s175 + $0x42b8] sm:$0xff]
        %v2410 = vld [vmem:[%s175 + $0x42c0] sm:$0xff]
        %v2411 = vld [vmem:[%s175 + $0x42c8] sm:$0xff]
        %v2412 = vld [vmem:[%s175 + $0x42d0] sm:$0xff]
        %v2413 = vld [vmem:[%s175 + $0x42d8] sm:$0xff]
        %v2414 = vld [vmem:[%s175 + $0x42e0] sm:$0xff]
        %v2415 = vld [vmem:[%s175 + $0x42e8] sm:$0xff]
        %v2416 = vld [vmem:[%s175 + $0x42f0] sm:$0xff]
        %v2417 = vld [vmem:[%s175 + $0x42f8] sm:$0xff]
        %v2418 = vld [vmem:[%s175 + $0x4300] sm:$0xff]
        %v2419 = vld [vmem:[%s175 + $0x4308] sm:$0xff]
        %v2420 = vld [vmem:[%s175 + $0x4310] sm:$0xff]
        %v2421 = vld [vmem:[%s175 + $0x4318] sm:$0xff]
        %v2422 = vld [vmem:[%s175 + $0x4320] sm:$0xff]
        %v2423 = vld [vmem:[%s175 + $0x4328] sm:$0xff]
        %v2424 = vld [vmem:[%s175 + $0x4330] sm:$0xff]
        %v2425 = vld [vmem:[%s175 + $0x4338] sm:$0xff]
        %v2426 = vld [vmem:[%s175 + $0x4340] sm:$0xff]
        %v2427 = vld [vmem:[%s175 + $0x4348] sm:$0xff]
        %v2428 = vld [vmem:[%s175 + $0x4350] sm:$0xff]
        %v2429 = vld [vmem:[%s175 + $0x4358] sm:$0xff]
        %v2430 = vld [vmem:[%s175 + $0x4360] sm:$0xff]
        %v2431 = vld [vmem:[%s175 + $0x4368] sm:$0xff]
        %v2432 = vld [vmem:[%s175 + $0x4370] sm:$0xff]
        %v2433 = vld [vmem:[%s175 + $0x4378] sm:$0xff]
        %v2434 = vld [vmem:[%s175 + $0x4380] sm:$0xff]
        %v2435 = vld [vmem:[%s175 + $0x4388] sm:$0xff]
        %v2436 = vld [vmem:[%s175 + $0x4390] sm:$0xff]
        %v2437 = vld [vmem:[%s175 + $0x4398] sm:$0xff]
        %v2438 = vld [vmem:[%s175 + $0x43a0] sm:$0xff]
        %v2439 = vld [vmem:[%s175 + $0x43a8] sm:$0xff]
        %v2440 = vld [vmem:[%s175 + $0x43b0] sm:$0xff]
        %v2441 = vld [vmem:[%s175 + $0x43b8] sm:$0xff]
        %v2442 = vld [vmem:[%s175 + $0x43c0] sm:$0xff]
        %v2443 = vld [vmem:[%s175 + $0x43c8] sm:$0xff]
        %v2444 = vld [vmem:[%s175 + $0x43d0] sm:$0xff]
        %v2445 = vld [vmem:[%s175 + $0x43d8] sm:$0xff]
        %v2446 = vld [vmem:[%s175 + $0x43e0] sm:$0xff]
        %v2447 = vld [vmem:[%s175 + $0x43e8] sm:$0xff]
        %v2448 = vld [vmem:[%s175 + $0x43f0] sm:$0xff]
        %v2449 = vld [vmem:[%s175 + $0x43f8] sm:$0xff]
        %v2450 = vld [vmem:[%s175 + $0x4400] sm:$0xff]
        %v2451 = vld [vmem:[%s175 + $0x4408] sm:$0xff]
        %v2452 = vld [vmem:[%s175 + $0x4410] sm:$0xff]
        %v2453 = vld [vmem:[%s175 + $0x4418] sm:$0xff]
        %v2454 = vld [vmem:[%s175 + $0x4420] sm:$0xff]
        %v2455 = vld [vmem:[%s175 + $0x4428] sm:$0xff]
        %v2456 = vld [vmem:[%s175 + $0x4430] sm:$0xff]
        %v2457 = vld [vmem:[%s175 + $0x4438] sm:$0xff]
        %v2458 = vld [vmem:[%s175 + $0x4440] sm:$0xff]
        %v2459 = vld [vmem:[%s175 + $0x4448] sm:$0xff]
        %v2460 = vld [vmem:[%s175 + $0x4450] sm:$0xff]
        %v2461 = vld [vmem:[%s175 + $0x4458] sm:$0xff]
        %v2462 = vld [vmem:[%s175 + $0x4460] sm:$0xff]
        %v2463 = vld [vmem:[%s175 + $0x4468] sm:$0xff]
        %v2464 = vld [vmem:[%s175 + $0x4470] sm:$0xff]
        %v2465 = vld [vmem:[%s175 + $0x4478] sm:$0xff]
        %v2466 = vld [vmem:[%s175 + $0x4480] sm:$0xff]
        %v2467 = vld [vmem:[%s175 + $0x4488] sm:$0xff]
        %v2468 = vld [vmem:[%s175 + $0x4490] sm:$0xff]
        %v2469 = vld [vmem:[%s175 + $0x4498] sm:$0xff]
        %v2470 = vld [vmem:[%s175 + $0x44a0] sm:$0xff]
        %v2471 = vld [vmem:[%s175 + $0x44a8] sm:$0xff]
        %v2472 = vld [vmem:[%s175 + $0x44b0] sm:$0xff]
        %v2473 = vld [vmem:[%s175 + $0x44b8] sm:$0xff]
        %v2474 = vld [vmem:[%s175 + $0x44c0] sm:$0xff]
        %v2475 = vld [vmem:[%s175 + $0x44c8] sm:$0xff]
        %v2476 = vld [vmem:[%s175 + $0x44d0] sm:$0xff]
        %v2477 = vld [vmem:[%s175 + $0x44d8] sm:$0xff]
        %v2478 = vld [vmem:[%s175 + $0x44e0] sm:$0xff]
        %v2479 = vld [vmem:[%s175 + $0x44e8] sm:$0xff]
        %v2480 = vld [vmem:[%s175 + $0x44f0] sm:$0xff]
        %v2481 = vld [vmem:[%s175 + $0x44f8] sm:$0xff]
        %v2482 = vld [vmem:[%s175 + $0x4500] sm:$0xff]
        %v2483 = vld [vmem:[%s175 + $0x4508] sm:$0xff]
        %v2484 = vld [vmem:[%s175 + $0x4510] sm:$0xff]
        %v2485 = vld [vmem:[%s175 + $0x4518] sm:$0xff]
        %v2486 = vld [vmem:[%s175 + $0x4520] sm:$0xff]
        %v2487 = vld [vmem:[%s175 + $0x4528] sm:$0xff]
        %v2488 = vld [vmem:[%s175 + $0x4530] sm:$0xff]
        %v2489 = vld [vmem:[%s175 + $0x4538] sm:$0xff]
        %v2490 = vld [vmem:[%s175 + $0x4540] sm:$0xff]
        %v2491 = vld [vmem:[%s175 + $0x4548] sm:$0xff]
        %v2492 = vld [vmem:[%s175 + $0x4550] sm:$0xff]
        %v2493 = vld [vmem:[%s175 + $0x4558] sm:$0xff]
        %v2494 = vld [vmem:[%s175 + $0x4560] sm:$0xff]
        %v2495 = vld [vmem:[%s175 + $0x4568] sm:$0xff]
        %v2496 = vld [vmem:[%s175 + $0x4570] sm:$0xff]
        %v2497 = vld [vmem:[%s175 + $0x4578] sm:$0xff]
        %v2498 = vld [vmem:[%s175 + $0x4580] sm:$0xff]
        %v2499 = vld [vmem:[%s175 + $0x4588] sm:$0xff]
        %v2500 = vld [vmem:[%s175 + $0x4590] sm:$0xff]
        %v2501 = vld [vmem:[%s175 + $0x4598] sm:$0xff]
        %v2502 = vld [vmem:[%s175 + $0x45a0] sm:$0xff]
        %v2503 = vld [vmem:[%s175 + $0x45a8] sm:$0xff]
        %v2504 = vld [vmem:[%s175 + $0x45b0] sm:$0xff]
        %v2505 = vld [vmem:[%s175 + $0x45b8] sm:$0xff]
        %v2506 = vld [vmem:[%s175 + $0x45c0] sm:$0xff]
        %v2507 = vld [vmem:[%s175 + $0x45c8] sm:$0xff]
        %v2508 = vld [vmem:[%s175 + $0x45d0] sm:$0xff]
        %v2509 = vld [vmem:[%s175 + $0x45d8] sm:$0xff]
        %v2510 = vld [vmem:[%s175 + $0x45e0] sm:$0xff]
        %v2511 = vld [vmem:[%s175 + $0x45e8] sm:$0xff]
        %v2512 = vld [vmem:[%s175 + $0x45f0] sm:$0xff]
        %v2513 = vld [vmem:[%s175 + $0x45f8] sm:$0xff]
        %v2514 = vld [vmem:[%s175 + $0x4600] sm:$0xff]
        %v2515 = vld [vmem:[%s175 + $0x4608] sm:$0xff]
        %v2516 = vld [vmem:[%s175 + $0x4610] sm:$0xff]
        %v2517 = vld [vmem:[%s175 + $0x4618] sm:$0xff]
        %v2518 = vld [vmem:[%s175 + $0x4620] sm:$0xff]
        %v2519 = vld [vmem:[%s175 + $0x4628] sm:$0xff]
        %v2520 = vld [vmem:[%s175 + $0x4630] sm:$0xff]
        %v2521 = vld [vmem:[%s175 + $0x4638] sm:$0xff]
        %v2522 = vld [vmem:[%s175 + $0x4640] sm:$0xff]
        %v2523 = vld [vmem:[%s175 + $0x4648] sm:$0xff]
        %v2524 = vld [vmem:[%s175 + $0x4650] sm:$0xff]
        %v2525 = vld [vmem:[%s175 + $0x4658] sm:$0xff]
        %v2526 = vld [vmem:[%s175 + $0x4660] sm:$0xff]
        %v2527 = vld [vmem:[%s175 + $0x4668] sm:$0xff]
        %v2528 = vld [vmem:[%s175 + $0x4670] sm:$0xff]
        %v2529 = vld [vmem:[%s175 + $0x4678] sm:$0xff]
        %v2530 = vld [vmem:[%s175 + $0x4680] sm:$0xff]
        %v2531 = vld [vmem:[%s175 + $0x4688] sm:$0xff]
        %v2532 = vld [vmem:[%s175 + $0x4690] sm:$0xff]
        %v2533 = vld [vmem:[%s175 + $0x4698] sm:$0xff]
        %v2534 = vld [vmem:[%s175 + $0x46a0] sm:$0xff]
        %v2535 = vld [vmem:[%s175 + $0x46a8] sm:$0xff]
        %v2536 = vld [vmem:[%s175 + $0x46b0] sm:$0xff]
        %v2537 = vld [vmem:[%s175 + $0x46b8] sm:$0xff]
        %v2538 = vld [vmem:[%s175 + $0x46c0] sm:$0xff]
        %v2539 = vld [vmem:[%s175 + $0x46c8] sm:$0xff]
        %v2540 = vld [vmem:[%s175 + $0x46d0] sm:$0xff]
        %v2541 = vld [vmem:[%s175 + $0x46d8] sm:$0xff]
        %v2542 = vld [vmem:[%s175 + $0x46e0] sm:$0xff]
        %v2543 = vld [vmem:[%s175 + $0x46e8] sm:$0xff]
        %v2544 = vld [vmem:[%s175 + $0x46f0] sm:$0xff]
        %v2545 = vld [vmem:[%s175 + $0x46f8] sm:$0xff]
        %v2546 = vld [vmem:[%s175 + $0x4700] sm:$0xff]
        %v2547 = vld [vmem:[%s175 + $0x4708] sm:$0xff]
        %v2548 = vld [vmem:[%s175 + $0x4710] sm:$0xff]
        %v2549 = vld [vmem:[%s175 + $0x4718] sm:$0xff]
        %v2550 = vld [vmem:[%s175 + $0x4720] sm:$0xff]
        %v2551 = vld [vmem:[%s175 + $0x4728] sm:$0xff]
        %v2552 = vld [vmem:[%s175 + $0x4730] sm:$0xff]
        %v2553 = vld [vmem:[%s175 + $0x4738] sm:$0xff]
        %v2554 = vld [vmem:[%s175 + $0x4740] sm:$0xff]
        %v2555 = vld [vmem:[%s175 + $0x4748] sm:$0xff]
        %v2556 = vld [vmem:[%s175 + $0x4750] sm:$0xff]
        %v2557 = vld [vmem:[%s175 + $0x4758] sm:$0xff]
        %v2558 = vld [vmem:[%s175 + $0x4760] sm:$0xff]
        %v2559 = vld [vmem:[%s175 + $0x4768] sm:$0xff]
        %v2560 = vld [vmem:[%s175 + $0x4770] sm:$0xff]
        %v2561 = vld [vmem:[%s175 + $0x4778] sm:$0xff]
        %v2562 = vld [vmem:[%s175 + $0x4780] sm:$0xff]
        %v2563 = vld [vmem:[%s175 + $0x4788] sm:$0xff]
        %v2564 = vld [vmem:[%s175 + $0x4790] sm:$0xff]
        %v2565 = vld [vmem:[%s175 + $0x4798] sm:$0xff]
        %v2566 = vld [vmem:[%s175 + $0x47a0] sm:$0xff]
        %v2567 = vld [vmem:[%s175 + $0x47a8] sm:$0xff]
        %v2568 = vld [vmem:[%s175 + $0x47b0] sm:$0xff]
        %v2569 = vld [vmem:[%s175 + $0x47b8] sm:$0xff]
        %v2570 = vld [vmem:[%s175 + $0x47c0] sm:$0xff]
        %v2571 = vld [vmem:[%s175 + $0x47c8] sm:$0xff]
        %v2572 = vld [vmem:[%s175 + $0x47d0] sm:$0xff]
        %v2573 = vld [vmem:[%s175 + $0x47d8] sm:$0xff]
        %v2574 = vld [vmem:[%s175 + $0x47e0] sm:$0xff]
        %v2575 = vld [vmem:[%s175 + $0x47e8] sm:$0xff]
        %v2576 = vld [vmem:[%s175 + $0x47f0] sm:$0xff]
        %v2577 = vld [vmem:[%s175 + $0x47f8] sm:$0xff]
        %v2578 = vld [vmem:[%s175 + $0x4800] sm:$0xff]
        %v2579 = vld [vmem:[%s175 + $0x4808] sm:$0xff]
        %v2580 = vld [vmem:[%s175 + $0x4810] sm:$0xff]
        %v2581 = vld [vmem:[%s175 + $0x4818] sm:$0xff]
        %v2582 = vld [vmem:[%s175 + $0x4820] sm:$0xff]
        %v2583 = vld [vmem:[%s175 + $0x4828] sm:$0xff]
        %v2584 = vld [vmem:[%s175 + $0x4830] sm:$0xff]
        %v2585 = vld [vmem:[%s175 + $0x4838] sm:$0xff]
        %v2586 = vld [vmem:[%s175 + $0x4840] sm:$0xff]
        %v2587 = vld [vmem:[%s175 + $0x4848] sm:$0xff]
        %v2588 = vld [vmem:[%s175 + $0x4850] sm:$0xff]
        %v2589 = vld [vmem:[%s175 + $0x4858] sm:$0xff]
        %v2590 = vld [vmem:[%s175 + $0x4860] sm:$0xff]
        %v2591 = vld [vmem:[%s175 + $0x4868] sm:$0xff]
        %v2592 = vld [vmem:[%s175 + $0x4870] sm:$0xff]
        %v2593 = vld [vmem:[%s175 + $0x4878] sm:$0xff]
        %v2594 = vld [vmem:[%s175 + $0x4880] sm:$0xff]
        %v2595 = vld [vmem:[%s175 + $0x4888] sm:$0xff]
        %v2596 = vld [vmem:[%s175 + $0x4890] sm:$0xff]
        %v2597 = vld [vmem:[%s175 + $0x4898] sm:$0xff]
        %v2598 = vld [vmem:[%s175 + $0x48a0] sm:$0xff]
        %v2599 = vld [vmem:[%s175 + $0x48a8] sm:$0xff]
        %v2600 = vld [vmem:[%s175 + $0x48b0] sm:$0xff]
        %v2601 = vld [vmem:[%s175 + $0x48b8] sm:$0xff]
        %v2602 = vld [vmem:[%s175 + $0x48c0] sm:$0xff]
        %v2603 = vld [vmem:[%s175 + $0x48c8] sm:$0xff]
        %v2604 = vld [vmem:[%s175 + $0x48d0] sm:$0xff]
        %v2605 = vld [vmem:[%s175 + $0x48d8] sm:$0xff]
        %v2606 = vld [vmem:[%s175 + $0x48e0] sm:$0xff]
        %v2607 = vld [vmem:[%s175 + $0x48e8] sm:$0xff]
        %v2608 = vld [vmem:[%s175 + $0x48f0] sm:$0xff]
        %v2609 = vld [vmem:[%s175 + $0x48f8] sm:$0xff]
        %v2610 = vld [vmem:[%s175 + $0x4900] sm:$0xff]
        %v2611 = vld [vmem:[%s175 + $0x4908] sm:$0xff]
        %v2612 = vld [vmem:[%s175 + $0x4910] sm:$0xff]
        %v2613 = vld [vmem:[%s175 + $0x4918] sm:$0xff]
        %v2614 = vld [vmem:[%s175 + $0x4920] sm:$0xff]
        %v2615 = vld [vmem:[%s175 + $0x4928] sm:$0xff]
        %v2616 = vld [vmem:[%s175 + $0x4930] sm:$0xff]
        %v2617 = vld [vmem:[%s175 + $0x4938] sm:$0xff]
        %v2618 = vld [vmem:[%s175 + $0x4940] sm:$0xff]
        %v2619 = vld [vmem:[%s175 + $0x4948] sm:$0xff]
        %v2620 = vld [vmem:[%s175 + $0x4950] sm:$0xff]
        %v2621 = vld [vmem:[%s175 + $0x4958] sm:$0xff]
        %v2622 = vld [vmem:[%s175 + $0x4960] sm:$0xff]
        %v2623 = vld [vmem:[%s175 + $0x4968] sm:$0xff]
        %v2624 = vld [vmem:[%s175 + $0x4970] sm:$0xff]
        %v2625 = vld [vmem:[%s175 + $0x4978] sm:$0xff]
        %v2626 = vld [vmem:[%s175 + $0x4980] sm:$0xff]
        %v2627 = vld [vmem:[%s175 + $0x4988] sm:$0xff]
        %v2628 = vld [vmem:[%s175 + $0x4990] sm:$0xff]
        %v2629 = vld [vmem:[%s175 + $0x4998] sm:$0xff]
        %v2630 = vld [vmem:[%s175 + $0x49a0] sm:$0xff]
        %v2631 = vld [vmem:[%s175 + $0x49a8] sm:$0xff]
        %v2632 = vld [vmem:[%s175 + $0x49b0] sm:$0xff]
        %v2633 = vld [vmem:[%s175 + $0x49b8] sm:$0xff]
        %v2634 = vld [vmem:[%s175 + $0x49c0] sm:$0xff]
        %v2635 = vld [vmem:[%s175 + $0x49c8] sm:$0xff]
        %v2636 = vld [vmem:[%s175 + $0x49d0] sm:$0xff]
        %v2637 = vld [vmem:[%s175 + $0x49d8] sm:$0xff]
        %v2638 = vld [vmem:[%s175 + $0x49e0] sm:$0xff]
        %v2639 = vld [vmem:[%s175 + $0x49e8] sm:$0xff]
        %v2640 = vld [vmem:[%s175 + $0x49f0] sm:$0xff]
        %v2641 = vld [vmem:[%s175 + $0x49f8] sm:$0xff]
        %v2642 = vld [vmem:[%s175 + $0x4a00] sm:$0xff]
        %v2643 = vld [vmem:[%s175 + $0x4a08] sm:$0xff]
        %v2644 = vld [vmem:[%s175 + $0x4a10] sm:$0xff]
        %v2645 = vld [vmem:[%s175 + $0x4a18] sm:$0xff]
        %v2646 = vld [vmem:[%s175 + $0x4a20] sm:$0xff]
        %v2647 = vld [vmem:[%s175 + $0x4a28] sm:$0xff]
        %v2648 = vld [vmem:[%s175 + $0x4a30] sm:$0xff]
        %v2649 = vld [vmem:[%s175 + $0x4a38] sm:$0xff]
        %v2650 = vld [vmem:[%s175 + $0x4a40] sm:$0xff]
        %v2651 = vld [vmem:[%s175 + $0x4a48] sm:$0xff]
        %v2652 = vld [vmem:[%s175 + $0x4a50] sm:$0xff]
        %v2653 = vld [vmem:[%s175 + $0x4a58] sm:$0xff]
        %v2654 = vld [vmem:[%s175 + $0x4a60] sm:$0xff]
        %v2655 = vld [vmem:[%s175 + $0x4a68] sm:$0xff]
        %v2656 = vld [vmem:[%s175 + $0x4a70] sm:$0xff]
        %v2657 = vld [vmem:[%s175 + $0x4a78] sm:$0xff]
        %v2658 = vld [vmem:[%s175 + $0x4a80] sm:$0xff]
        %v2659 = vld [vmem:[%s175 + $0x4a88] sm:$0xff]
        %v2660 = vld [vmem:[%s175 + $0x4a90] sm:$0xff]
        %v2661 = vld [vmem:[%s175 + $0x4a98] sm:$0xff]
        %v2662 = vld [vmem:[%s175 + $0x4aa0] sm:$0xff]
        %v2663 = vld [vmem:[%s175 + $0x4aa8] sm:$0xff]
        %v2664 = vld [vmem:[%s175 + $0x4ab0] sm:$0xff]
        %v2665 = vld [vmem:[%s175 + $0x4ab8] sm:$0xff]
        %v2666 = vld [vmem:[%s175 + $0x4ac0] sm:$0xff]
        %v2667 = vld [vmem:[%s175 + $0x4ac8] sm:$0xff]
        %v2668 = vld [vmem:[%s175 + $0x4ad0] sm:$0xff]
        %v2669 = vld [vmem:[%s175 + $0x4ad8] sm:$0xff]
        %v2670 = vld [vmem:[%s175 + $0x4ae0] sm:$0xff]
        %v2671 = vld [vmem:[%s175 + $0x4ae8] sm:$0xff]
        %v2672 = vld [vmem:[%s175 + $0x4af0] sm:$0xff]
        %v2673 = vld [vmem:[%s175 + $0x4af8] sm:$0xff]
        %v2674 = vld [vmem:[%s175 + $0x4b00] sm:$0xff]
        %v2675 = vld [vmem:[%s175 + $0x4b08] sm:$0xff]
        %v2676 = vld [vmem:[%s175 + $0x4b10] sm:$0xff]
        %v2677 = vld [vmem:[%s175 + $0x4b18] sm:$0xff]
        %v2678 = vld [vmem:[%s175 + $0x4b20] sm:$0xff]
        %v2679 = vld [vmem:[%s175 + $0x4b28] sm:$0xff]
        %v2680 = vld [vmem:[%s175 + $0x4b30] sm:$0xff]
        %v2681 = vld [vmem:[%s175 + $0x4b38] sm:$0xff]
        %v2682 = vld [vmem:[%s175 + $0x4b40] sm:$0xff]
        %v2683 = vld [vmem:[%s175 + $0x4b48] sm:$0xff]
        %v2684 = vld [vmem:[%s175 + $0x4b50] sm:$0xff]
        %v2685 = vld [vmem:[%s175 + $0x4b58] sm:$0xff]
        %v2686 = vld [vmem:[%s175 + $0x4b60] sm:$0xff]
        %v2687 = vld [vmem:[%s175 + $0x4b68] sm:$0xff]
        %v2688 = vld [vmem:[%s175 + $0x4b70] sm:$0xff]
        %v2689 = vld [vmem:[%s175 + $0x4b78] sm:$0xff]
        %v2690 = vld [vmem:[%s175 + $0x4b80] sm:$0xff]
        %v2691 = vld [vmem:[%s175 + $0x4b88] sm:$0xff]
        %v2692 = vld [vmem:[%s175 + $0x4b90] sm:$0xff]
        %v2693 = vld [vmem:[%s175 + $0x4b98] sm:$0xff]
        %v2694 = vld [vmem:[%s175 + $0x4ba0] sm:$0xff]
        %v2695 = vld [vmem:[%s175 + $0x4ba8] sm:$0xff]
        %v2696 = vld [vmem:[%s175 + $0x4bb0] sm:$0xff]
        %v2697 = vld [vmem:[%s175 + $0x4bb8] sm:$0xff]
        %v2698 = vld [vmem:[%s175 + $0x4bc0] sm:$0xff]
        %v2699 = vld [vmem:[%s175 + $0x4bc8] sm:$0xff]
        %v2700 = vld [vmem:[%s175 + $0x4bd0] sm:$0xff]
        %v2701 = vld [vmem:[%s175 + $0x4bd8] sm:$0xff]
        %v2702 = vld [vmem:[%s175 + $0x4be0] sm:$0xff]
        %v2703 = vld [vmem:[%s175 + $0x4be8] sm:$0xff]
        %v2704 = vld [vmem:[%s175 + $0x4bf0] sm:$0xff]
        %v2705 = vld [vmem:[%s175 + $0x4bf8] sm:$0xff]
        %v2706 = vld [vmem:[%s175 + $0x4c00] sm:$0xff]
        %v2707 = vld [vmem:[%s175 + $0x4c08] sm:$0xff]
        %v2708 = vld [vmem:[%s175 + $0x4c10] sm:$0xff]
        %v2709 = vld [vmem:[%s175 + $0x4c18] sm:$0xff]
        %v2710 = vld [vmem:[%s175 + $0x4c20] sm:$0xff]
        %v2711 = vld [vmem:[%s175 + $0x4c28] sm:$0xff]
        %v2712 = vld [vmem:[%s175 + $0x4c30] sm:$0xff]
        %v2713 = vld [vmem:[%s175 + $0x4c38] sm:$0xff]
        %v2714 = vld [vmem:[%s175 + $0x4c40] sm:$0xff]
        %v2715 = vld [vmem:[%s175 + $0x4c48] sm:$0xff]
        %v2716 = vld [vmem:[%s175 + $0x4c50] sm:$0xff]
        %v2717 = vld [vmem:[%s175 + $0x4c58] sm:$0xff]
        %v2718 = vld [vmem:[%s175 + $0x4c60] sm:$0xff]
        %v2719 = vld [vmem:[%s175 + $0x4c68] sm:$0xff]
        %v2720 = vld [vmem:[%s175 + $0x4c70] sm:$0xff]
        %v2721 = vld [vmem:[%s175 + $0x4c78] sm:$0xff]
        %v2722 = vld [vmem:[%s175 + $0x4c80] sm:$0xff]
        %v2723 = vld [vmem:[%s175 + $0x4c88] sm:$0xff]
        %v2724 = vld [vmem:[%s175 + $0x4c90] sm:$0xff]
        %v2725 = vld [vmem:[%s175 + $0x4c98] sm:$0xff]
        %v2726 = vld [vmem:[%s175 + $0x4ca0] sm:$0xff]
        %v2727 = vld [vmem:[%s175 + $0x4ca8] sm:$0xff]
        %v2728 = vld [vmem:[%s175 + $0x4cb0] sm:$0xff]
        %v2729 = vld [vmem:[%s175 + $0x4cb8] sm:$0xff]
        %v2730 = vld [vmem:[%s175 + $0x4cc0] sm:$0xff]
        %v2731 = vld [vmem:[%s175 + $0x4cc8] sm:$0xff]
        %v2732 = vld [vmem:[%s175 + $0x4cd0] sm:$0xff]
        %v2733 = vld [vmem:[%s175 + $0x4cd8] sm:$0xff]
        %v2734 = vld [vmem:[%s175 + $0x4ce0] sm:$0xff]
        %v2735 = vld [vmem:[%s175 + $0x4ce8] sm:$0xff]
        %v2736 = vld [vmem:[%s175 + $0x4cf0] sm:$0xff]
        %v2737 = vld [vmem:[%s175 + $0x4cf8] sm:$0xff]
        %v2738 = vld [vmem:[%s175 + $0x4d00] sm:$0xff]
        %v2739 = vld [vmem:[%s175 + $0x4d08] sm:$0xff]
        %v2740 = vld [vmem:[%s175 + $0x4d10] sm:$0xff]
        %v2741 = vld [vmem:[%s175 + $0x4d18] sm:$0xff]
        %v2742 = vld [vmem:[%s175 + $0x4d20] sm:$0xff]
        %v2743 = vld [vmem:[%s175 + $0x4d28] sm:$0xff]
        %v2744 = vld [vmem:[%s175 + $0x4d30] sm:$0xff]
        %v2745 = vld [vmem:[%s175 + $0x4d38] sm:$0xff]
        %v2746 = vld [vmem:[%s175 + $0x4d40] sm:$0xff]
        %v2747 = vld [vmem:[%s175 + $0x4d48] sm:$0xff]
        %v2748 = vld [vmem:[%s175 + $0x4d50] sm:$0xff]
        %v2749 = vld [vmem:[%s175 + $0x4d58] sm:$0xff]
        %v2750 = vld [vmem:[%s175 + $0x4d60] sm:$0xff]
        %v2751 = vld [vmem:[%s175 + $0x4d68] sm:$0xff]
        %v2752 = vld [vmem:[%s175 + $0x4d70] sm:$0xff]
        %v2753 = vld [vmem:[%s175 + $0x4d78] sm:$0xff]
        %v2754 = vld [vmem:[%s175 + $0x4d80] sm:$0xff]
        %v2755 = vld [vmem:[%s175 + $0x4d88] sm:$0xff]
        %v2756 = vld [vmem:[%s175 + $0x4d90] sm:$0xff]
        %v2757 = vld [vmem:[%s175 + $0x4d98] sm:$0xff]
        %v2758 = vld [vmem:[%s175 + $0x4da0] sm:$0xff]
        %v2759 = vld [vmem:[%s175 + $0x4da8] sm:$0xff]
        %v2760 = vld [vmem:[%s175 + $0x4db0] sm:$0xff]
        %v2761 = vld [vmem:[%s175 + $0x4db8] sm:$0xff]
        %v2762 = vld [vmem:[%s175 + $0x4dc0] sm:$0xff]
        %v2763 = vld [vmem:[%s175 + $0x4dc8] sm:$0xff]
        %v2764 = vld [vmem:[%s175 + $0x4dd0] sm:$0xff]
        %v2765 = vld [vmem:[%s175 + $0x4dd8] sm:$0xff]
        %v2766 = vld [vmem:[%s175 + $0x4de0] sm:$0xff]
        %v2767 = vld [vmem:[%s175 + $0x4de8] sm:$0xff]
        %v2768 = vld [vmem:[%s175 + $0x4df0] sm:$0xff]
        %v2769 = vld [vmem:[%s175 + $0x4df8] sm:$0xff]
        %v2770 = vld [vmem:[%s175 + $0x4e00] sm:$0xff]
        %v2771 = vld [vmem:[%s175 + $0x4e08] sm:$0xff]
        %v2772 = vld [vmem:[%s175 + $0x4e10] sm:$0xff]
        %v2773 = vld [vmem:[%s175 + $0x4e18] sm:$0xff]
        %v2774 = vld [vmem:[%s175 + $0x4e20] sm:$0xff]
        %v2775 = vld [vmem:[%s175 + $0x4e28] sm:$0xff]
        %v2776 = vld [vmem:[%s175 + $0x4e30] sm:$0xff]
        %v2777 = vld [vmem:[%s175 + $0x4e38] sm:$0xff]
        %v2778 = vld [vmem:[%s175 + $0x4e40] sm:$0xff]
        %v2779 = vld [vmem:[%s175 + $0x4e48] sm:$0xff]
        %v2780 = vld [vmem:[%s175 + $0x4e50] sm:$0xff]
        %v2781 = vld [vmem:[%s175 + $0x4e58] sm:$0xff]
        %v2782 = vld [vmem:[%s175 + $0x4e60] sm:$0xff]
        %v2783 = vld [vmem:[%s175 + $0x4e68] sm:$0xff]
        %v2784 = vld [vmem:[%s175 + $0x4e70] sm:$0xff]
        %v2785 = vld [vmem:[%s175 + $0x4e78] sm:$0xff]
        %v2786 = vld [vmem:[%s175 + $0x4e80] sm:$0xff]
        %v2787 = vld [vmem:[%s175 + $0x4e88] sm:$0xff]
        %v2788 = vld [vmem:[%s175 + $0x4e90] sm:$0xff]
        %v2789 = vld [vmem:[%s175 + $0x4e98] sm:$0xff]
        %v2790 = vld [vmem:[%s175 + $0x4ea0] sm:$0xff]
        %v2791 = vld [vmem:[%s175 + $0x4ea8] sm:$0xff]
        %v2792 = vld [vmem:[%s175 + $0x4eb0] sm:$0xff]
        %v2793 = vld [vmem:[%s175 + $0x4eb8] sm:$0xff]
        %v2794 = vld [vmem:[%s175 + $0x4ec0] sm:$0xff]
        %v2795 = vld [vmem:[%s175 + $0x4ec8] sm:$0xff]
        %v2796 = vld [vmem:[%s175 + $0x4ed0] sm:$0xff]
        %v2797 = vld [vmem:[%s175 + $0x4ed8] sm:$0xff]
        %v2798 = vld [vmem:[%s175 + $0x4ee0] sm:$0xff]
        %v2799 = vld [vmem:[%s175 + $0x4ee8] sm:$0xff]
        %v2800 = vld [vmem:[%s175 + $0x4ef0] sm:$0xff]
        %v2801 = vld [vmem:[%s175 + $0x4ef8] sm:$0xff]
        %v2802 = vld [vmem:[%s175 + $0x4f00] sm:$0xff]
        %v2803 = vld [vmem:[%s175 + $0x4f08] sm:$0xff]
        %v2804 = vld [vmem:[%s175 + $0x4f10] sm:$0xff]
        %v2805 = vld [vmem:[%s175 + $0x4f18] sm:$0xff]
        %v2806 = vld [vmem:[%s175 + $0x4f20] sm:$0xff]
        %v2807 = vld [vmem:[%s175 + $0x4f28] sm:$0xff]
        %v2808 = vld [vmem:[%s175 + $0x4f30] sm:$0xff]
        %v2809 = vld [vmem:[%s175 + $0x4f38] sm:$0xff]
        %v2810 = vld [vmem:[%s175 + $0x4f40] sm:$0xff]
        %v2811 = vld [vmem:[%s175 + $0x4f48] sm:$0xff]
        %v2812 = vld [vmem:[%s175 + $0x4f50] sm:$0xff]
        %v2813 = vld [vmem:[%s175 + $0x4f58] sm:$0xff]
        %v2814 = vld [vmem:[%s175 + $0x4f60] sm:$0xff]
        %v2815 = vld [vmem:[%s175 + $0x4f68] sm:$0xff]
        %v2816 = vld [vmem:[%s175 + $0x4f70] sm:$0xff]
        %v2817 = vld [vmem:[%s175 + $0x4f78] sm:$0xff]
        %v2818 = vld [vmem:[%s175 + $0x4f80] sm:$0xff]
        %v2819 = vld [vmem:[%s175 + $0x4f88] sm:$0xff]
        %v2820 = vld [vmem:[%s175 + $0x4f90] sm:$0xff]
        %v2821 = vld [vmem:[%s175 + $0x4f98] sm:$0xff]
        %v2822 = vld [vmem:[%s175 + $0x4fa0] sm:$0xff]
        %v2823 = vld [vmem:[%s175 + $0x4fa8] sm:$0xff]
        %v2824 = vld [vmem:[%s175 + $0x4fb0] sm:$0xff]
        %v2825 = vld [vmem:[%s175 + $0x4fb8] sm:$0xff]
        %v2826 = vld [vmem:[%s175 + $0x4fc0] sm:$0xff]
        %v2827 = vld [vmem:[%s175 + $0x4fc8] sm:$0xff]
        %v2828 = vld [vmem:[%s175 + $0x4fd0] sm:$0xff]
        %v2829 = vld [vmem:[%s175 + $0x4fd8] sm:$0xff]
        %v2830 = vld [vmem:[%s175 + $0x4fe0] sm:$0xff]
        %v2831 = vld [vmem:[%s175 + $0x4fe8] sm:$0xff]
        %v2832 = vld [vmem:[%s175 + $0x4ff0] sm:$0xff]
        %v2833 = vld [vmem:[%s175 + $0x4ff8] sm:$0xff]
        %v2834 = vld [vmem:[%s175 + $0x5000] sm:$0xff]
        %v2835 = vld [vmem:[%s175 + $0x5008] sm:$0xff]
        %v2836 = vld [vmem:[%s175 + $0x5010] sm:$0xff]
        %v2837 = vld [vmem:[%s175 + $0x5018] sm:$0xff]
        %v2838 = vld [vmem:[%s175 + $0x5020] sm:$0xff]
        %v2839 = vld [vmem:[%s175 + $0x5028] sm:$0xff]
        %v2840 = vld [vmem:[%s175 + $0x5030] sm:$0xff]
        %v2841 = vld [vmem:[%s175 + $0x5038] sm:$0xff]
        %v2842 = vld [vmem:[%s175 + $0x5040] sm:$0xff]
        %v2843 = vld [vmem:[%s175 + $0x5048] sm:$0xff]
        %v2844 = vld [vmem:[%s175 + $0x5050] sm:$0xff]
        %v2845 = vld [vmem:[%s175 + $0x5058] sm:$0xff]
        %v2846 = vld [vmem:[%s175 + $0x5060] sm:$0xff]
        %v2847 = vld [vmem:[%s175 + $0x5068] sm:$0xff]
        %v2848 = vld [vmem:[%s175 + $0x5070] sm:$0xff]
        %v2849 = vld [vmem:[%s175 + $0x5078] sm:$0xff]
        %v2850 = vld [vmem:[%s175 + $0x5080] sm:$0xff]
        %v2851 = vld [vmem:[%s175 + $0x5088] sm:$0xff]
        %v2852 = vld [vmem:[%s175 + $0x5090] sm:$0xff]
        %v2853 = vld [vmem:[%s175 + $0x5098] sm:$0xff]
        %v2854 = vld [vmem:[%s175 + $0x50a0] sm:$0xff]
        %v2855 = vld [vmem:[%s175 + $0x50a8] sm:$0xff]
        %v2856 = vld [vmem:[%s175 + $0x50b0] sm:$0xff]
        %v2857 = vld [vmem:[%s175 + $0x50b8] sm:$0xff]
        %v2858 = vld [vmem:[%s175 + $0x50c0] sm:$0xff]
        %v2859 = vld [vmem:[%s175 + $0x50c8] sm:$0xff]
        %v2860 = vld [vmem:[%s175 + $0x50d0] sm:$0xff]
        %v2861 = vld [vmem:[%s175 + $0x50d8] sm:$0xff]
        %v2862 = vld [vmem:[%s175 + $0x50e0] sm:$0xff]
        %v2863 = vld [vmem:[%s175 + $0x50e8] sm:$0xff]
        %v2864 = vld [vmem:[%s175 + $0x50f0] sm:$0xff]
        %v2865 = vld [vmem:[%s175 + $0x50f8] sm:$0xff]
        %v2866 = vld [vmem:[%s175 + $0x5100] sm:$0xff]
        %v2867 = vld [vmem:[%s175 + $0x5108] sm:$0xff]
        %v2868 = vld [vmem:[%s175 + $0x5110] sm:$0xff]
        %v2869 = vld [vmem:[%s175 + $0x5118] sm:$0xff]
        %v2870 = vld [vmem:[%s175 + $0x5120] sm:$0xff]
        %v2871 = vld [vmem:[%s175 + $0x5128] sm:$0xff]
        %v2872 = vld [vmem:[%s175 + $0x5130] sm:$0xff]
        %v2873 = vld [vmem:[%s175 + $0x5138] sm:$0xff]
        %v2874 = vld [vmem:[%s175 + $0x5140] sm:$0xff]
        %v2875 = vld [vmem:[%s175 + $0x5148] sm:$0xff]
        %v2876 = vld [vmem:[%s175 + $0x5150] sm:$0xff]
        %v2877 = vld [vmem:[%s175 + $0x5158] sm:$0xff]
        %v2878 = vld [vmem:[%s175 + $0x5160] sm:$0xff]
        %v2879 = vld [vmem:[%s175 + $0x5168] sm:$0xff]
        %v2880 = vld [vmem:[%s175 + $0x5170] sm:$0xff]
        %v2881 = vld [vmem:[%s175 + $0x5178] sm:$0xff]
        %v2882 = vld [vmem:[%s175 + $0x5180] sm:$0xff]
        %v2883 = vld [vmem:[%s175 + $0x5188] sm:$0xff]
        %v2884 = vld [vmem:[%s175 + $0x5190] sm:$0xff]
        %v2885 = vld [vmem:[%s175 + $0x5198] sm:$0xff]
        %v2886 = vld [vmem:[%s175 + $0x51a0] sm:$0xff]
        %v2887 = vld [vmem:[%s175 + $0x51a8] sm:$0xff]
        %v2888 = vld [vmem:[%s175 + $0x51b0] sm:$0xff]
        %v2889 = vld [vmem:[%s175 + $0x51b8] sm:$0xff]
        %v2890 = vld [vmem:[%s175 + $0x51c0] sm:$0xff]
        %v2891 = vld [vmem:[%s175 + $0x51c8] sm:$0xff]
        %v2892 = vld [vmem:[%s175 + $0x51d0] sm:$0xff]
        %v2893 = vld [vmem:[%s175 + $0x51d8] sm:$0xff]
        %v2894 = vld [vmem:[%s175 + $0x51e0] sm:$0xff]
        %v2895 = vld [vmem:[%s175 + $0x51e8] sm:$0xff]
        %v2896 = vld [vmem:[%s175 + $0x51f0] sm:$0xff]
        %v2897 = vld [vmem:[%s175 + $0x51f8] sm:$0xff]
        %v2898 = vld [vmem:[%s175 + $0x5200] sm:$0xff]
        %v2899 = vld [vmem:[%s175 + $0x5208] sm:$0xff]
        %v2900 = vld [vmem:[%s175 + $0x5210] sm:$0xff]
        %v2901 = vld [vmem:[%s175 + $0x5218] sm:$0xff]
        %v2902 = vld [vmem:[%s175 + $0x5220] sm:$0xff]
        %v2903 = vld [vmem:[%s175 + $0x5228] sm:$0xff]
        %v2904 = vld [vmem:[%s175 + $0x5230] sm:$0xff]
        %v2905 = vld [vmem:[%s175 + $0x5238] sm:$0xff]
        %v2906 = vld [vmem:[%s175 + $0x5240] sm:$0xff]
        %v2907 = vld [vmem:[%s175 + $0x5248] sm:$0xff]
        %v2908 = vld [vmem:[%s175 + $0x5250] sm:$0xff]
        %v2909 = vld [vmem:[%s175 + $0x5258] sm:$0xff]
        %v2910 = vld [vmem:[%s175 + $0x5260] sm:$0xff]
        %v2911 = vld [vmem:[%s175 + $0x5268] sm:$0xff]
        %v2912 = vld [vmem:[%s175 + $0x5270] sm:$0xff]
        %v2913 = vld [vmem:[%s175 + $0x5278] sm:$0xff]
        %v2914 = vld [vmem:[%s175 + $0x5280] sm:$0xff]
        %v2915 = vld [vmem:[%s175 + $0x5288] sm:$0xff]
        %v2916 = vld [vmem:[%s175 + $0x5290] sm:$0xff]
        %v2917 = vld [vmem:[%s175 + $0x5298] sm:$0xff]
        %v2918 = vld [vmem:[%s175 + $0x52a0] sm:$0xff]
        %v2919 = vld [vmem:[%s175 + $0x52a8] sm:$0xff]
        %v2920 = vld [vmem:[%s175 + $0x52b0] sm:$0xff]
        %v2921 = vld [vmem:[%s175 + $0x52b8] sm:$0xff]
        %v2922 = vld [vmem:[%s175 + $0x52c0] sm:$0xff]
        %v2923 = vld [vmem:[%s175 + $0x52c8] sm:$0xff]
        %v2924 = vld [vmem:[%s175 + $0x52d0] sm:$0xff]
        %v2925 = vld [vmem:[%s175 + $0x52d8] sm:$0xff]
        %v2926 = vld [vmem:[%s175 + $0x52e0] sm:$0xff]
        %v2927 = vld [vmem:[%s175 + $0x52e8] sm:$0xff]
        %v2928 = vld [vmem:[%s175 + $0x52f0] sm:$0xff]
        %v2929 = vld [vmem:[%s175 + $0x52f8] sm:$0xff]
        %v2930 = vld [vmem:[%s175 + $0x5300] sm:$0xff]
        %v2931 = vld [vmem:[%s175 + $0x5308] sm:$0xff]
        %v2932 = vld [vmem:[%s175 + $0x5310] sm:$0xff]
        %v2933 = vld [vmem:[%s175 + $0x5318] sm:$0xff]
        %v2934 = vld [vmem:[%s175 + $0x5320] sm:$0xff]
        %v2935 = vld [vmem:[%s175 + $0x5328] sm:$0xff]
        %v2936 = vld [vmem:[%s175 + $0x5330] sm:$0xff]
        %v2937 = vld [vmem:[%s175 + $0x5338] sm:$0xff]
        %v2938 = vld [vmem:[%s175 + $0x5340] sm:$0xff]
        %v2939 = vld [vmem:[%s175 + $0x5348] sm:$0xff]
        %v2940 = vld [vmem:[%s175 + $0x5350] sm:$0xff]
        %v2941 = vld [vmem:[%s175 + $0x5358] sm:$0xff]
        %v2942 = vld [vmem:[%s175 + $0x5360] sm:$0xff]
        %v2943 = vld [vmem:[%s175 + $0x5368] sm:$0xff]
        %v2944 = vld [vmem:[%s175 + $0x5370] sm:$0xff]
        %v2945 = vld [vmem:[%s175 + $0x5378] sm:$0xff]
        %v2946 = vld [vmem:[%s175 + $0x5380] sm:$0xff]
        %v2947 = vld [vmem:[%s175 + $0x5388] sm:$0xff]
        %v2948 = vld [vmem:[%s175 + $0x5390] sm:$0xff]
        %v2949 = vld [vmem:[%s175 + $0x5398] sm:$0xff]
        %v2950 = vld [vmem:[%s175 + $0x53a0] sm:$0xff]
        %v2951 = vld [vmem:[%s175 + $0x53a8] sm:$0xff]
        %v2952 = vld [vmem:[%s175 + $0x53b0] sm:$0xff]
        %v2953 = vld [vmem:[%s175 + $0x53b8] sm:$0xff]
        %v2954 = vld [vmem:[%s175 + $0x53c0] sm:$0xff]
        %v2955 = vld [vmem:[%s175 + $0x53c8] sm:$0xff]
        %v2956 = vld [vmem:[%s175 + $0x53d0] sm:$0xff]
        %v2957 = vld [vmem:[%s175 + $0x53d8] sm:$0xff]
        %v2958 = vld [vmem:[%s175 + $0x53e0] sm:$0xff]
        %v2959 = vld [vmem:[%s175 + $0x53e8] sm:$0xff]
        %v2960 = vld [vmem:[%s175 + $0x53f0] sm:$0xff]
        %v2961 = vld [vmem:[%s175 + $0x53f8] sm:$0xff]
        %v2962 = vld [vmem:[%s175 + $0x5400] sm:$0xff]
        %v2963 = vld [vmem:[%s175 + $0x5408] sm:$0xff]
        %v2964 = vld [vmem:[%s175 + $0x5410] sm:$0xff]
        %v2965 = vld [vmem:[%s175 + $0x5418] sm:$0xff]
        %v2966 = vld [vmem:[%s175 + $0x5420] sm:$0xff]
        %v2967 = vld [vmem:[%s175 + $0x5428] sm:$0xff]
        %v2968 = vld [vmem:[%s175 + $0x5430] sm:$0xff]
        %v2969 = vld [vmem:[%s175 + $0x5438] sm:$0xff]
        %v2970 = vld [vmem:[%s175 + $0x5440] sm:$0xff]
        %v2971 = vld [vmem:[%s175 + $0x5448] sm:$0xff]
        %v2972 = vld [vmem:[%s175 + $0x5450] sm:$0xff]
        %v2973 = vld [vmem:[%s175 + $0x5458] sm:$0xff]
        %v2974 = vld [vmem:[%s175 + $0x5460] sm:$0xff]
        %v2975 = vld [vmem:[%s175 + $0x5468] sm:$0xff]
        %v2976 = vld [vmem:[%s175 + $0x5470] sm:$0xff]
        %v2977 = vld [vmem:[%s175 + $0x5478] sm:$0xff]
        %v2978 = vld [vmem:[%s175 + $0x5480] sm:$0xff]
        %v2979 = vld [vmem:[%s175 + $0x5488] sm:$0xff]
        %v2980 = vld [vmem:[%s175 + $0x5490] sm:$0xff]
        %v2981 = vld [vmem:[%s175 + $0x5498] sm:$0xff]
        %v2982 = vld [vmem:[%s175 + $0x54a0] sm:$0xff]
        %v2983 = vld [vmem:[%s175 + $0x54a8] sm:$0xff]
        %v2984 = vld [vmem:[%s175 + $0x54b0] sm:$0xff]
        %v2985 = vld [vmem:[%s175 + $0x54b8] sm:$0xff]
        %v2986 = vld [vmem:[%s175 + $0x54c0] sm:$0xff]
        %v2987 = vld [vmem:[%s175 + $0x54c8] sm:$0xff]
        %v2988 = vld [vmem:[%s175 + $0x54d0] sm:$0xff]
        %v2989 = vld [vmem:[%s175 + $0x54d8] sm:$0xff]
        %v2990 = vld [vmem:[%s175 + $0x54e0] sm:$0xff]
        %v2991 = vld [vmem:[%s175 + $0x54e8] sm:$0xff]
        %v2992 = vld [vmem:[%s175 + $0x54f0] sm:$0xff]
        %v2993 = vld [vmem:[%s175 + $0x54f8] sm:$0xff]
        %v2994 = vld [vmem:[%s175 + $0x5500] sm:$0xff]
        %v2995 = vld [vmem:[%s175 + $0x5508] sm:$0xff]
        %v2996 = vld [vmem:[%s175 + $0x5510] sm:$0xff]
        %v2997 = vld [vmem:[%s175 + $0x5518] sm:$0xff]
        %v2998 = vld [vmem:[%s175 + $0x5520] sm:$0xff]
        %v2999 = vld [vmem:[%s175 + $0x5528] sm:$0xff]
        %v3000 = vld [vmem:[%s175 + $0x5530] sm:$0xff]
        %v3001 = vld [vmem:[%s175 + $0x5538] sm:$0xff]
        %v3002 = vld [vmem:[%s175 + $0x5540] sm:$0xff]
        %v3003 = vld [vmem:[%s175 + $0x5548] sm:$0xff]
        %v3004 = vld [vmem:[%s175 + $0x5550] sm:$0xff]
        %v3005 = vld [vmem:[%s175 + $0x5558] sm:$0xff]
        %v3006 = vld [vmem:[%s175 + $0x5560] sm:$0xff]
        %v3007 = vld [vmem:[%s175 + $0x5568] sm:$0xff]
        %v3008 = vld [vmem:[%s175 + $0x5570] sm:$0xff]
        %v3009 = vld [vmem:[%s175 + $0x5578] sm:$0xff]
        %v3010 = vld [vmem:[%s175 + $0x5580] sm:$0xff]
        %v3011 = vld [vmem:[%s175 + $0x5588] sm:$0xff]
        %v3012 = vld [vmem:[%s175 + $0x5590] sm:$0xff]
        %v3013 = vld [vmem:[%s175 + $0x5598] sm:$0xff]
        %v3014 = vld [vmem:[%s175 + $0x55a0] sm:$0xff]
        %v3015 = vld [vmem:[%s175 + $0x55a8] sm:$0xff]
        %v3016 = vld [vmem:[%s175 + $0x55b0] sm:$0xff]
        %v3017 = vld [vmem:[%s175 + $0x55b8] sm:$0xff]
        %v3018 = vld [vmem:[%s175 + $0x55c0] sm:$0xff]
        %v3019 = vld [vmem:[%s175 + $0x55c8] sm:$0xff]
        %v3020 = vld [vmem:[%s175 + $0x55d0] sm:$0xff]
        %v3021 = vld [vmem:[%s175 + $0x55d8] sm:$0xff]
        %v3022 = vld [vmem:[%s175 + $0x55e0] sm:$0xff]
        %v3023 = vld [vmem:[%s175 + $0x55e8] sm:$0xff]
        %v3024 = vld [vmem:[%s175 + $0x55f0] sm:$0xff]
        %v3025 = vld [vmem:[%s175 + $0x55f8] sm:$0xff]
        %v3026 = vld [vmem:[%s175 + $0x5600] sm:$0xff]
        %v3027 = vld [vmem:[%s175 + $0x5608] sm:$0xff]
        %v3028 = vld [vmem:[%s175 + $0x5610] sm:$0xff]
        %v3029 = vld [vmem:[%s175 + $0x5618] sm:$0xff]
        %v3030 = vld [vmem:[%s175 + $0x5620] sm:$0xff]
        %v3031 = vld [vmem:[%s175 + $0x5628] sm:$0xff]
        %v3032 = vld [vmem:[%s175 + $0x5630] sm:$0xff]
        %v3033 = vld [vmem:[%s175 + $0x5638] sm:$0xff]
        %v3034 = vld [vmem:[%s175 + $0x5640] sm:$0xff]
        %v3035 = vld [vmem:[%s175 + $0x5648] sm:$0xff]
        %v3036 = vld [vmem:[%s175 + $0x5650] sm:$0xff]
        %v3037 = vld [vmem:[%s175 + $0x5658] sm:$0xff]
        %v3038 = vld [vmem:[%s175 + $0x5660] sm:$0xff]
        %v3039 = vld [vmem:[%s175 + $0x5668] sm:$0xff]
        %v3040 = vld [vmem:[%s175 + $0x5670] sm:$0xff]
        %v3041 = vld [vmem:[%s175 + $0x5678] sm:$0xff]
        %v3042 = vld [vmem:[%s175 + $0x5680] sm:$0xff]
        %v3043 = vld [vmem:[%s175 + $0x5688] sm:$0xff]
        %v3044 = vld [vmem:[%s175 + $0x5690] sm:$0xff]
        %v3045 = vld [vmem:[%s175 + $0x5698] sm:$0xff]
        %v3046 = vld [vmem:[%s175 + $0x56a0] sm:$0xff]
        %v3047 = vld [vmem:[%s175 + $0x56a8] sm:$0xff]
        %v3048 = vld [vmem:[%s175 + $0x56b0] sm:$0xff]
        %v3049 = vld [vmem:[%s175 + $0x56b8] sm:$0xff]
        %v3050 = vld [vmem:[%s175 + $0x56c0] sm:$0xff]
        %v3051 = vld [vmem:[%s175 + $0x56c8] sm:$0xff]
        %v3052 = vld [vmem:[%s175 + $0x56d0] sm:$0xff]
        %v3053 = vld [vmem:[%s175 + $0x56d8] sm:$0xff]
        %v3054 = vld [vmem:[%s175 + $0x56e0] sm:$0xff]
        %v3055 = vld [vmem:[%s175 + $0x56e8] sm:$0xff]
        %v3056 = vld [vmem:[%s175 + $0x56f0] sm:$0xff]
        %v3057 = vld [vmem:[%s175 + $0x56f8] sm:$0xff]
        %v3058 = vld [vmem:[%s175 + $0x5700] sm:$0xff]
        %v3059 = vld [vmem:[%s175 + $0x5708] sm:$0xff]
        %v3060 = vld [vmem:[%s175 + $0x5710] sm:$0xff]
        %v3061 = vld [vmem:[%s175 + $0x5718] sm:$0xff]
        %v3062 = vld [vmem:[%s175 + $0x5720] sm:$0xff]
        %v3063 = vld [vmem:[%s175 + $0x5728] sm:$0xff]
        %v3064 = vld [vmem:[%s175 + $0x5730] sm:$0xff]
        %v3065 = vld [vmem:[%s175 + $0x5738] sm:$0xff]
        %v3066 = vld [vmem:[%s175 + $0x5740] sm:$0xff]
        %v3067 = vld [vmem:[%s175 + $0x5748] sm:$0xff]
        %v3068 = vld [vmem:[%s175 + $0x5750] sm:$0xff]
        %v3069 = vld [vmem:[%s175 + $0x5758] sm:$0xff]
        %v3070 = vld [vmem:[%s175 + $0x5760] sm:$0xff]
        %v3071 = vld [vmem:[%s175 + $0x5768] sm:$0xff]
        %v3072 = vld [vmem:[%s175 + $0x5770] sm:$0xff]
        %v3073 = vld [vmem:[%s175 + $0x5778] sm:$0xff]
        %v3074 = vld [vmem:[%s175 + $0x5780] sm:$0xff]
        %v3075 = vld [vmem:[%s175 + $0x5788] sm:$0xff]
        %v3076 = vld [vmem:[%s175 + $0x5790] sm:$0xff]
        %v3077 = vld [vmem:[%s175 + $0x5798] sm:$0xff]
        %v3078 = vld [vmem:[%s175 + $0x57a0] sm:$0xff]
        %v3079 = vld [vmem:[%s175 + $0x57a8] sm:$0xff]
        %v3080 = vld [vmem:[%s175 + $0x57b0] sm:$0xff]
        %v3081 = vld [vmem:[%s175 + $0x57b8] sm:$0xff]
        %v3082 = vld [vmem:[%s175 + $0x57c0] sm:$0xff]
        %v3083 = vld [vmem:[%s175 + $0x57c8] sm:$0xff]
        %v3084 = vld [vmem:[%s175 + $0x57d0] sm:$0xff]
        %v3085 = vld [vmem:[%s175 + $0x57d8] sm:$0xff]
        %v3086 = vld [vmem:[%s175 + $0x57e0] sm:$0xff]
        %v3087 = vld [vmem:[%s175 + $0x57e8] sm:$0xff]
        %v3088 = vld [vmem:[%s175 + $0x57f0] sm:$0xff]
        %v3089 = vld [vmem:[%s175 + $0x57f8] sm:$0xff]
        %v3090 = vld [vmem:[%s175 + $0x5800] sm:$0xff]
        %v3091 = vld [vmem:[%s175 + $0x5808] sm:$0xff]
        %v3092 = vld [vmem:[%s175 + $0x5810] sm:$0xff]
        %v3093 = vld [vmem:[%s175 + $0x5818] sm:$0xff]
        %v3094 = vld [vmem:[%s175 + $0x5820] sm:$0xff]
        %v3095 = vld [vmem:[%s175 + $0x5828] sm:$0xff]
        %v3096 = vld [vmem:[%s175 + $0x5830] sm:$0xff]
        %v3097 = vld [vmem:[%s175 + $0x5838] sm:$0xff]
        %v3098 = vld [vmem:[%s175 + $0x5840] sm:$0xff]
        %v3099 = vld [vmem:[%s175 + $0x5848] sm:$0xff]
        %v3100 = vld [vmem:[%s175 + $0x5850] sm:$0xff]
        %v3101 = vld [vmem:[%s175 + $0x5858] sm:$0xff]
        %v3102 = vld [vmem:[%s175 + $0x5860] sm:$0xff]
        %v3103 = vld [vmem:[%s175 + $0x5868] sm:$0xff]
        %v3104 = vld [vmem:[%s175 + $0x5870] sm:$0xff]
        %v3105 = vld [vmem:[%s175 + $0x5878] sm:$0xff]
        %v3106 = vld [vmem:[%s175 + $0x5880] sm:$0xff]
        %v3107 = vld [vmem:[%s175 + $0x5888] sm:$0xff]
        %v3108 = vld [vmem:[%s175 + $0x5890] sm:$0xff]
        %v3109 = vld [vmem:[%s175 + $0x5898] sm:$0xff]
        %v3110 = vld [vmem:[%s175 + $0x58a0] sm:$0xff]
        %v3111 = vld [vmem:[%s175 + $0x58a8] sm:$0xff]
        %v3112 = vld [vmem:[%s175 + $0x58b0] sm:$0xff]
        %v3113 = vld [vmem:[%s175 + $0x58b8] sm:$0xff]
        %v3114 = vld [vmem:[%s175 + $0x58c0] sm:$0xff]
        %v3115 = vld [vmem:[%s175 + $0x58c8] sm:$0xff]
        %v3116 = vld [vmem:[%s175 + $0x58d0] sm:$0xff]
        %v3117 = vld [vmem:[%s175 + $0x58d8] sm:$0xff]
        %v3118 = vld [vmem:[%s175 + $0x58e0] sm:$0xff]
        %v3119 = vld [vmem:[%s175 + $0x58e8] sm:$0xff]
        %v3120 = vld [vmem:[%s175 + $0x58f0] sm:$0xff]
        %v3121 = vld [vmem:[%s175 + $0x58f8] sm:$0xff]
        %v3122 = vld [vmem:[%s175 + $0x5900] sm:$0xff]
        %v3123 = vld [vmem:[%s175 + $0x5908] sm:$0xff]
        %v3124 = vld [vmem:[%s175 + $0x5910] sm:$0xff]
        %v3125 = vld [vmem:[%s175 + $0x5918] sm:$0xff]
        %v3126 = vld [vmem:[%s175 + $0x5920] sm:$0xff]
        %v3127 = vld [vmem:[%s175 + $0x5928] sm:$0xff]
        %v3128 = vld [vmem:[%s175 + $0x5930] sm:$0xff]
        %v3129 = vld [vmem:[%s175 + $0x5938] sm:$0xff]
        %v3130 = vld [vmem:[%s175 + $0x5940] sm:$0xff]
        %v3131 = vld [vmem:[%s175 + $0x5948] sm:$0xff]
        %v3132 = vld [vmem:[%s175 + $0x5950] sm:$0xff]
        %v3133 = vld [vmem:[%s175 + $0x5958] sm:$0xff]
        %v3134 = vld [vmem:[%s175 + $0x5960] sm:$0xff]
        %v3135 = vld [vmem:[%s175 + $0x5968] sm:$0xff]
        %v3136 = vld [vmem:[%s175 + $0x5970] sm:$0xff]
        %v3137 = vld [vmem:[%s175 + $0x5978] sm:$0xff]
        %v3138 = vld [vmem:[%s175 + $0x5980] sm:$0xff]
        %v3139 = vld [vmem:[%s175 + $0x5988] sm:$0xff]
        %v3140 = vld [vmem:[%s175 + $0x5990] sm:$0xff]
        %v3141 = vld [vmem:[%s175 + $0x5998] sm:$0xff]
        %v3142 = vld [vmem:[%s175 + $0x59a0] sm:$0xff]
        %v3143 = vld [vmem:[%s175 + $0x59a8] sm:$0xff]
        %v3144 = vld [vmem:[%s175 + $0x59b0] sm:$0xff]
        %v3145 = vld [vmem:[%s175 + $0x59b8] sm:$0xff]
        %v3146 = vld [vmem:[%s175 + $0x59c0] sm:$0xff]
        %v3147 = vld [vmem:[%s175 + $0x59c8] sm:$0xff]
        %v3148 = vld [vmem:[%s175 + $0x59d0] sm:$0xff]
        %v3149 = vld [vmem:[%s175 + $0x59d8] sm:$0xff]
        %v3150 = vld [vmem:[%s175 + $0x59e0] sm:$0xff]
        %v3151 = vld [vmem:[%s175 + $0x59e8] sm:$0xff]
        %v3152 = vld [vmem:[%s175 + $0x59f0] sm:$0xff]
        %v3153 = vld [vmem:[%s175 + $0x59f8] sm:$0xff]
        %v3154 = vld [vmem:[%s175 + $0x5a00] sm:$0xff]
        %v3155 = vld [vmem:[%s175 + $0x5a08] sm:$0xff]
        %v3156 = vld [vmem:[%s175 + $0x5a10] sm:$0xff]
        %v3157 = vld [vmem:[%s175 + $0x5a18] sm:$0xff]
        %v3158 = vld [vmem:[%s175 + $0x5a20] sm:$0xff]
        %v3159 = vld [vmem:[%s175 + $0x5a28] sm:$0xff]
        %v3160 = vld [vmem:[%s175 + $0x5a30] sm:$0xff]
        %v3161 = vld [vmem:[%s175 + $0x5a38] sm:$0xff]
        %v3162 = vld [vmem:[%s175 + $0x5a40] sm:$0xff]
        %v3163 = vld [vmem:[%s175 + $0x5a48] sm:$0xff]
        %v3164 = vld [vmem:[%s175 + $0x5a50] sm:$0xff]
        %v3165 = vld [vmem:[%s175 + $0x5a58] sm:$0xff]
        %v3166 = vld [vmem:[%s175 + $0x5a60] sm:$0xff]
        %v3167 = vld [vmem:[%s175 + $0x5a68] sm:$0xff]
        %v3168 = vld [vmem:[%s175 + $0x5a70] sm:$0xff]
        %v3169 = vld [vmem:[%s175 + $0x5a78] sm:$0xff]
        %v3170 = vld [vmem:[%s175 + $0x5a80] sm:$0xff]
        %v3171 = vld [vmem:[%s175 + $0x5a88] sm:$0xff]
        %v3172 = vld [vmem:[%s175 + $0x5a90] sm:$0xff]
        %v3173 = vld [vmem:[%s175 + $0x5a98] sm:$0xff]
        %v3174 = vld [vmem:[%s175 + $0x5aa0] sm:$0xff]
        %v3175 = vld [vmem:[%s175 + $0x5aa8] sm:$0xff]
        %v3176 = vld [vmem:[%s175 + $0x5ab0] sm:$0xff]
        %v3177 = vld [vmem:[%s175 + $0x5ab8] sm:$0xff]
        %v3178 = vld [vmem:[%s175 + $0x5ac0] sm:$0xff]
        %v3179 = vld [vmem:[%s175 + $0x5ac8] sm:$0xff]
        %v3180 = vld [vmem:[%s175 + $0x5ad0] sm:$0xff]
        %v3181 = vld [vmem:[%s175 + $0x5ad8] sm:$0xff]
        %v3182 = vld [vmem:[%s175 + $0x5ae0] sm:$0xff]
        %v3183 = vld [vmem:[%s175 + $0x5ae8] sm:$0xff]
        %v3184 = vld [vmem:[%s175 + $0x5af0] sm:$0xff]
        %v3185 = vld [vmem:[%s175 + $0x5af8] sm:$0xff]
        %v3186 = vld [vmem:[%s175 + $0x5b00] sm:$0xff]
        %v3187 = vld [vmem:[%s175 + $0x5b08] sm:$0xff]
        %v3188 = vld [vmem:[%s175 + $0x5b10] sm:$0xff]
        %v3189 = vld [vmem:[%s175 + $0x5b18] sm:$0xff]
        %v3190 = vld [vmem:[%s175 + $0x5b20] sm:$0xff]
        %v3191 = vld [vmem:[%s175 + $0x5b28] sm:$0xff]
        %v3192 = vld [vmem:[%s175 + $0x5b30] sm:$0xff]
        %v3193 = vld [vmem:[%s175 + $0x5b38] sm:$0xff]
        %v3194 = vld [vmem:[%s175 + $0x5b40] sm:$0xff]
        %v3195 = vld [vmem:[%s175 + $0x5b48] sm:$0xff]
        %v3196 = vld [vmem:[%s175 + $0x5b50] sm:$0xff]
        %v3197 = vld [vmem:[%s175 + $0x5b58] sm:$0xff]
        %v3198 = vld [vmem:[%s175 + $0x5b60] sm:$0xff]
        %v3199 = vld [vmem:[%s175 + $0x5b68] sm:$0xff]
        %v3200 = vld [vmem:[%s175 + $0x5b70] sm:$0xff]
        %v3201 = vld [vmem:[%s175 + $0x5b78] sm:$0xff]
        %v3202 = vld [vmem:[%s175 + $0x5b80] sm:$0xff]
        %v3203 = vld [vmem:[%s175 + $0x5b88] sm:$0xff]
        %v3204 = vld [vmem:[%s175 + $0x5b90] sm:$0xff]
        %v3205 = vld [vmem:[%s175 + $0x5b98] sm:$0xff]
        %v3206 = vld [vmem:[%s175 + $0x5ba0] sm:$0xff]
        %v3207 = vld [vmem:[%s175 + $0x5ba8] sm:$0xff]
        %v3208 = vld [vmem:[%s175 + $0x5bb0] sm:$0xff]
        %v3209 = vld [vmem:[%s175 + $0x5bb8] sm:$0xff]
        %v3210 = vld [vmem:[%s175 + $0x5bc0] sm:$0xff]
        %v3211 = vld [vmem:[%s175 + $0x5bc8] sm:$0xff]
        %v3212 = vld [vmem:[%s175 + $0x5bd0] sm:$0xff]
        %v3213 = vld [vmem:[%s175 + $0x5bd8] sm:$0xff]
        %v3214 = vld [vmem:[%s175 + $0x5be0] sm:$0xff]
        %v3215 = vld [vmem:[%s175 + $0x5be8] sm:$0xff]
        %v3216 = vld [vmem:[%s175 + $0x5bf0] sm:$0xff]
        %v3217 = vld [vmem:[%s175 + $0x5bf8] sm:$0xff]
        %v3218 = vld [vmem:[%s175 + $0x5c00] sm:$0xff]
        %v3219 = vld [vmem:[%s175 + $0x5c08] sm:$0xff]
        %v3220 = vld [vmem:[%s175 + $0x5c10] sm:$0xff]
        %v3221 = vld [vmem:[%s175 + $0x5c18] sm:$0xff]
        %v3222 = vld [vmem:[%s175 + $0x5c20] sm:$0xff]
        %v3223 = vld [vmem:[%s175 + $0x5c28] sm:$0xff]
        %v3224 = vld [vmem:[%s175 + $0x5c30] sm:$0xff]
        %v3225 = vld [vmem:[%s175 + $0x5c38] sm:$0xff]
        %v3226 = vld [vmem:[%s175 + $0x5c40] sm:$0xff]
        %v3227 = vld [vmem:[%s175 + $0x5c48] sm:$0xff]
        %v3228 = vld [vmem:[%s175 + $0x5c50] sm:$0xff]
        %v3229 = vld [vmem:[%s175 + $0x5c58] sm:$0xff]
        %v3230 = vld [vmem:[%s175 + $0x5c60] sm:$0xff]
        %v3231 = vld [vmem:[%s175 + $0x5c68] sm:$0xff]
        %v3232 = vld [vmem:[%s175 + $0x5c70] sm:$0xff]
        %v3233 = vld [vmem:[%s175 + $0x5c78] sm:$0xff]
        %v3234 = vld [vmem:[%s175 + $0x5c80] sm:$0xff]
        %v3235 = vld [vmem:[%s175 + $0x5c88] sm:$0xff]
        %v3236 = vld [vmem:[%s175 + $0x5c90] sm:$0xff]
        %v3237 = vld [vmem:[%s175 + $0x5c98] sm:$0xff]
        %v3238 = vld [vmem:[%s175 + $0x5ca0] sm:$0xff]
        %v3239 = vld [vmem:[%s175 + $0x5ca8] sm:$0xff]
        %v3240 = vld [vmem:[%s175 + $0x5cb0] sm:$0xff]
        %v3241 = vld [vmem:[%s175 + $0x5cb8] sm:$0xff]
        %v3242 = vld [vmem:[%s175 + $0x5cc0] sm:$0xff]
        %v3243 = vld [vmem:[%s175 + $0x5cc8] sm:$0xff]
        %v3244 = vld [vmem:[%s175 + $0x5cd0] sm:$0xff]
        %v3245 = vld [vmem:[%s175 + $0x5cd8] sm:$0xff]
        %v3246 = vld [vmem:[%s175 + $0x5ce0] sm:$0xff]
        %v3247 = vld [vmem:[%s175 + $0x5ce8] sm:$0xff]
        %v3248 = vld [vmem:[%s175 + $0x5cf0] sm:$0xff]
        %v3249 = vld [vmem:[%s175 + $0x5cf8] sm:$0xff]
        %v3250 = vld [vmem:[%s175 + $0x5d00] sm:$0xff]
        %v3251 = vld [vmem:[%s175 + $0x5d08] sm:$0xff]
        %v3252 = vld [vmem:[%s175 + $0x5d10] sm:$0xff]
        %v3253 = vld [vmem:[%s175 + $0x5d18] sm:$0xff]
        %v3254 = vld [vmem:[%s175 + $0x5d20] sm:$0xff]
        %v3255 = vld [vmem:[%s175 + $0x5d28] sm:$0xff]
        %v3256 = vld [vmem:[%s175 + $0x5d30] sm:$0xff]
        %v3257 = vld [vmem:[%s175 + $0x5d38] sm:$0xff]
        %v3258 = vld [vmem:[%s175 + $0x5d40] sm:$0xff]
        %v3259 = vld [vmem:[%s175 + $0x5d48] sm:$0xff]
        %v3260 = vld [vmem:[%s175 + $0x5d50] sm:$0xff]
        %v3261 = vld [vmem:[%s175 + $0x5d58] sm:$0xff]
        %v3262 = vld [vmem:[%s175 + $0x5d60] sm:$0xff]
        %v3263 = vld [vmem:[%s175 + $0x5d68] sm:$0xff]
        %v3264 = vld [vmem:[%s175 + $0x5d70] sm:$0xff]
        %v3265 = vld [vmem:[%s175 + $0x5d78] sm:$0xff]
        %v3266 = vld [vmem:[%s175 + $0x5d80] sm:$0xff]
        %v3267 = vld [vmem:[%s175 + $0x5d88] sm:$0xff]
        %v3268 = vld [vmem:[%s175 + $0x5d90] sm:$0xff]
        %v3269 = vld [vmem:[%s175 + $0x5d98] sm:$0xff]
        %v3270 = vld [vmem:[%s175 + $0x5da0] sm:$0xff]
        %v3271 = vld [vmem:[%s175 + $0x5da8] sm:$0xff]
        %v3272 = vld [vmem:[%s175 + $0x5db0] sm:$0xff]
        %v3273 = vld [vmem:[%s175 + $0x5db8] sm:$0xff]
        %v3274 = vld [vmem:[%s175 + $0x5dc0] sm:$0xff]
        %v3275 = vld [vmem:[%s175 + $0x5dc8] sm:$0xff]
        %v3276 = vld [vmem:[%s175 + $0x5dd0] sm:$0xff]
        %v3277 = vld [vmem:[%s175 + $0x5dd8] sm:$0xff]
        %v3278 = vld [vmem:[%s175 + $0x5de0] sm:$0xff]
        %v3279 = vld [vmem:[%s175 + $0x5de8] sm:$0xff]
        %v3280 = vld [vmem:[%s175 + $0x5df0] sm:$0xff]
        %v3281 = vld [vmem:[%s175 + $0x5df8] sm:$0xff]
        %v3282 = vld [vmem:[%s175 + $0x5e00] sm:$0xff]
        %v3283 = vld [vmem:[%s175 + $0x5e08] sm:$0xff]
        %v3284 = vld [vmem:[%s175 + $0x5e10] sm:$0xff]
        %v3285 = vld [vmem:[%s175 + $0x5e18] sm:$0xff]
        %v3286 = vld [vmem:[%s175 + $0x5e20] sm:$0xff]
        %v3287 = vld [vmem:[%s175 + $0x5e28] sm:$0xff]
        %v3288 = vld [vmem:[%s175 + $0x5e30] sm:$0xff]
        %v3289 = vld [vmem:[%s175 + $0x5e38] sm:$0xff]
        %v3290 = vld [vmem:[%s175 + $0x5e40] sm:$0xff]
        %v3291 = vld [vmem:[%s175 + $0x5e48] sm:$0xff]
        %v3292 = vld [vmem:[%s175 + $0x5e50] sm:$0xff]
        %v3293 = vld [vmem:[%s175 + $0x5e58] sm:$0xff]
        %v3294 = vld [vmem:[%s175 + $0x5e60] sm:$0xff]
        %v3295 = vld [vmem:[%s175 + $0x5e68] sm:$0xff]
        %v3296 = vld [vmem:[%s175 + $0x5e70] sm:$0xff]
        %v3297 = vld [vmem:[%s175 + $0x5e78] sm:$0xff]
        %v3298 = vld [vmem:[%s175 + $0x5e80] sm:$0xff]
        %v3299 = vld [vmem:[%s175 + $0x5e88] sm:$0xff]
        %v3300 = vld [vmem:[%s175 + $0x5e90] sm:$0xff]
        %v3301 = vld [vmem:[%s175 + $0x5e98] sm:$0xff]
        %v3302 = vld [vmem:[%s175 + $0x5ea0] sm:$0xff]
        %v3303 = vld [vmem:[%s175 + $0x5ea8] sm:$0xff]
        %v3304 = vld [vmem:[%s175 + $0x5eb0] sm:$0xff]
        %v3305 = vld [vmem:[%s175 + $0x5eb8] sm:$0xff]
        %v3306 = vld [vmem:[%s175 + $0x5ec0] sm:$0xff]
        %v3307 = vld [vmem:[%s175 + $0x5ec8] sm:$0xff]
        %v3308 = vld [vmem:[%s175 + $0x5ed0] sm:$0xff]
        %v3309 = vld [vmem:[%s175 + $0x5ed8] sm:$0xff]
        %v3310 = vld [vmem:[%s175 + $0x5ee0] sm:$0xff]
        %v3311 = vld [vmem:[%s175 + $0x5ee8] sm:$0xff]
        %v3312 = vld [vmem:[%s175 + $0x5ef0] sm:$0xff]
        %v3313 = vld [vmem:[%s175 + $0x5ef8] sm:$0xff]
        %v3314 = vld [vmem:[%s175 + $0x5f00] sm:$0xff]
        %v3315 = vld [vmem:[%s175 + $0x5f08] sm:$0xff]
        %v3316 = vld [vmem:[%s175 + $0x5f10] sm:$0xff]
        %v3317 = vld [vmem:[%s175 + $0x5f18] sm:$0xff]
        %v3318 = vld [vmem:[%s175 + $0x5f20] sm:$0xff]
        %v3319 = vld [vmem:[%s175 + $0x5f28] sm:$0xff]
        %v3320 = vld [vmem:[%s175 + $0x5f30] sm:$0xff]
        %v3321 = vld [vmem:[%s175 + $0x5f38] sm:$0xff]
        %v3322 = vld [vmem:[%s175 + $0x5f40] sm:$0xff]
        %v3323 = vld [vmem:[%s175 + $0x5f48] sm:$0xff]
        %v3324 = vld [vmem:[%s175 + $0x5f50] sm:$0xff]
        %v3325 = vld [vmem:[%s175 + $0x5f58] sm:$0xff]
        %v3326 = vld [vmem:[%s175 + $0x5f60] sm:$0xff]
        %v3327 = vld [vmem:[%s175 + $0x5f68] sm:$0xff]
        %v3328 = vld [vmem:[%s175 + $0x5f70] sm:$0xff]
        %v3329 = vld [vmem:[%s175 + $0x5f78] sm:$0xff]
        %v3330 = vld [vmem:[%s175 + $0x5f80] sm:$0xff]
        %v3331 = vld [vmem:[%s175 + $0x5f88] sm:$0xff]
        %v3332 = vld [vmem:[%s175 + $0x5f90] sm:$0xff]
        %v3333 = vld [vmem:[%s175 + $0x5f98] sm:$0xff]
        %v3334 = vld [vmem:[%s175 + $0x5fa0] sm:$0xff]
        %v3335 = vld [vmem:[%s175 + $0x5fa8] sm:$0xff]
        %v3336 = vld [vmem:[%s175 + $0x5fb0] sm:$0xff]
        %v3337 = vld [vmem:[%s175 + $0x5fb8] sm:$0xff]
        %v3338 = vld [vmem:[%s175 + $0x5fc0] sm:$0xff]
        %v3339 = vld [vmem:[%s175 + $0x5fc8] sm:$0xff]
        %v3340 = vld [vmem:[%s175 + $0x5fd0] sm:$0xff]
        %v3341 = vld [vmem:[%s175 + $0x5fd8] sm:$0xff]
        %v3342 = vld [vmem:[%s175 + $0x5fe0] sm:$0xff]
        %v3343 = vld [vmem:[%s175 + $0x5fe8] sm:$0xff]
        %v3344 = vld [vmem:[%s175 + $0x5ff0] sm:$0xff]
        %v3345 = vld [vmem:[%s175 + $0x5ff8] sm:$0xff]
        %v3394 = vcombine.high %v226, %v226
        %v3396 = vunpack.c.l.s4 1983009808
        %v3397 = vunpack.c.0.s8 %v3396
        %v3398 = vlaneseq
        %v3399 = vshrl.u32 %v3398, 7
        %v3400 = vsub.s32 %v3397, %v3399
        %v3401 = vrot.slane %v226, %v3400
        %v3403 = vunpack.c.l.s4 1983009808
        %v3404 = vunpack.c.0.s8 %v3403
        %v3405 = vlaneseq
        %v3406 = vshrl.u32 %v3405, 7
        %v3407 = vsub.s32 %v3404, %v3406
        %v3408 = vrot.slane %v3394, %v3407
        %v3409 = vcombine.high %v3401, %v3401
        %v3410 = vcombine.high %v3408, %v3408
        %v3411 = vcombine.high %v227, %v227
        %v3413 = vunpack.c.l.s4 1983009808
        %v3414 = vunpack.c.0.s8 %v3413
        %v3415 = vlaneseq
        %v3416 = vshrl.u32 %v3415, 7
        %v3417 = vsub.s32 %v3414, %v3416
        %v3418 = vrot.slane %v227, %v3417
        %v3420 = vunpack.c.l.s4 1983009808
        %v3421 = vunpack.c.0.s8 %v3420
        %v3422 = vlaneseq
        %v3423 = vshrl.u32 %v3422, 7
        %v3424 = vsub.s32 %v3421, %v3423
        %v3425 = vrot.slane %v3411, %v3424
        %v3426 = vcombine.high %v3418, %v3418
        %v3427 = vcombine.high %v3425, %v3425
        %v3428 = vcombine.high %v228, %v228
        %v3430 = vunpack.c.l.s4 1983009808
        %v3431 = vunpack.c.0.s8 %v3430
        %v3432 = vlaneseq
        %v3433 = vshrl.u32 %v3432, 7
        %v3434 = vsub.s32 %v3431, %v3433
        %v3435 = vrot.slane %v228, %v3434
        %v3437 = vunpack.c.l.s4 1983009808
        %v3438 = vunpack.c.0.s8 %v3437
        %v3439 = vlaneseq
        %v3440 = vshrl.u32 %v3439, 7
        %v3441 = vsub.s32 %v3438, %v3440
        %v3442 = vrot.slane %v3428, %v3441
        %v3443 = vcombine.high %v3435, %v3435
        %v3444 = vcombine.high %v3442, %v3442
        %v3445 = vcombine.high %v229, %v229
        %v3447 = vunpack.c.l.s4 1983009808
        %v3448 = vunpack.c.0.s8 %v3447
        %v3449 = vlaneseq
        %v3450 = vshrl.u32 %v3449, 7
        %v3451 = vsub.s32 %v3448, %v3450
        %v3452 = vrot.slane %v229, %v3451
        %v3454 = vunpack.c.l.s4 1983009808
        %v3455 = vunpack.c.0.s8 %v3454
        %v3456 = vlaneseq
        %v3457 = vshrl.u32 %v3456, 7
        %v3458 = vsub.s32 %v3455, %v3457
        %v3459 = vrot.slane %v3445, %v3458
        %v3460 = vcombine.high %v3452, %v3452
        %v3461 = vcombine.high %v3459, %v3459
        %v3462 = vcombine.high %v230, %v230
        %v3464 = vunpack.c.l.s4 1983009808
        %v3465 = vunpack.c.0.s8 %v3464
        %v3466 = vlaneseq
        %v3467 = vshrl.u32 %v3466, 7
        %v3468 = vsub.s32 %v3465, %v3467
        %v3469 = vrot.slane %v230, %v3468
        %v3471 = vunpack.c.l.s4 1983009808
        %v3472 = vunpack.c.0.s8 %v3471
        %v3473 = vlaneseq
        %v3474 = vshrl.u32 %v3473, 7
        %v3475 = vsub.s32 %v3472, %v3474
        %v3476 = vrot.slane %v3462, %v3475
        %v3477 = vcombine.high %v3469, %v3469
        %v3478 = vcombine.high %v3476, %v3476
        %v3479 = vcombine.high %v231, %v231
        %v3481 = vunpack.c.l.s4 1983009808
        %v3482 = vunpack.c.0.s8 %v3481
        %v3483 = vlaneseq
        %v3484 = vshrl.u32 %v3483, 7
        %v3485 = vsub.s32 %v3482, %v3484
        %v3486 = vrot.slane %v231, %v3485
        %v3488 = vunpack.c.l.s4 1983009808
        %v3489 = vunpack.c.0.s8 %v3488
        %v3490 = vlaneseq
        %v3491 = vshrl.u32 %v3490, 7
        %v3492 = vsub.s32 %v3489, %v3491
        %v3493 = vrot.slane %v3479, %v3492
        %v3494 = vcombine.high %v3486, %v3486
        %v3495 = vcombine.high %v3493, %v3493
        %v3496 = vcombine.high %v232, %v232
        %v3498 = vunpack.c.l.s4 1983009808
        %v3499 = vunpack.c.0.s8 %v3498
        %v3500 = vlaneseq
        %v3501 = vshrl.u32 %v3500, 7
        %v3502 = vsub.s32 %v3499, %v3501
        %v3503 = vrot.slane %v232, %v3502
        %v3505 = vunpack.c.l.s4 1983009808
        %v3506 = vunpack.c.0.s8 %v3505
        %v3507 = vlaneseq
        %v3508 = vshrl.u32 %v3507, 7
        %v3509 = vsub.s32 %v3506, %v3508
        %v3510 = vrot.slane %v3496, %v3509
        %v3511 = vcombine.high %v3503, %v3503
        %v3512 = vcombine.high %v3510, %v3510
        %v3513 = vcombine.high %v233, %v233
        %v3515 = vunpack.c.l.s4 1983009808
        %v3516 = vunpack.c.0.s8 %v3515
        %v3517 = vlaneseq
        %v3518 = vshrl.u32 %v3517, 7
        %v3519 = vsub.s32 %v3516, %v3518
        %v3520 = vrot.slane %v233, %v3519
        %v3522 = vunpack.c.l.s4 1983009808
        %v3523 = vunpack.c.0.s8 %v3522
        %v3524 = vlaneseq
        %v3525 = vshrl.u32 %v3524, 7
        %v3526 = vsub.s32 %v3523, %v3525
        %v3527 = vrot.slane %v3513, %v3526
        %v3528 = vcombine.high %v3520, %v3520
        %v3529 = vcombine.high %v3527, %v3527
        %v3530 = vcombine.high %v234, %v234
        %v3532 = vunpack.c.l.s4 1983009808
        %v3533 = vunpack.c.0.s8 %v3532
        %v3534 = vlaneseq
        %v3535 = vshrl.u32 %v3534, 7
        %v3536 = vsub.s32 %v3533, %v3535
        %v3537 = vrot.slane %v234, %v3536
        %v3539 = vunpack.c.l.s4 1983009808
        %v3540 = vunpack.c.0.s8 %v3539
        %v3541 = vlaneseq
        %v3542 = vshrl.u32 %v3541, 7
        %v3543 = vsub.s32 %v3540, %v3542
        %v3544 = vrot.slane %v3530, %v3543
        %v3545 = vcombine.high %v3537, %v3537
        %v3546 = vcombine.high %v3544, %v3544
        %v3547 = vcombine.high %v235, %v235
        %v3549 = vunpack.c.l.s4 1983009808
        %v3550 = vunpack.c.0.s8 %v3549
        %v3551 = vlaneseq
        %v3552 = vshrl.u32 %v3551, 7
        %v3553 = vsub.s32 %v3550, %v3552
        %v3554 = vrot.slane %v235, %v3553
        %v3556 = vunpack.c.l.s4 1983009808
        %v3557 = vunpack.c.0.s8 %v3556
        %v3558 = vlaneseq
        %v3559 = vshrl.u32 %v3558, 7
        %v3560 = vsub.s32 %v3557, %v3559
        %v3561 = vrot.slane %v3547, %v3560
        %v3562 = vcombine.high %v3554, %v3554
        %v3563 = vcombine.high %v3561, %v3561
        %v3564 = vcombine.high %v236, %v236
        %v3566 = vunpack.c.l.s4 1983009808
        %v3567 = vunpack.c.0.s8 %v3566
        %v3568 = vlaneseq
        %v3569 = vshrl.u32 %v3568, 7
        %v3570 = vsub.s32 %v3567, %v3569
        %v3571 = vrot.slane %v236, %v3570
        %v3573 = vunpack.c.l.s4 1983009808
        %v3574 = vunpack.c.0.s8 %v3573
        %v3575 = vlaneseq
        %v3576 = vshrl.u32 %v3575, 7
        %v3577 = vsub.s32 %v3574, %v3576
        %v3578 = vrot.slane %v3564, %v3577
        %v3579 = vcombine.high %v3571, %v3571
        %v3580 = vcombine.high %v3578, %v3578
        %v3581 = vcombine.high %v237, %v237
        %v3583 = vunpack.c.l.s4 1983009808
        %v3584 = vunpack.c.0.s8 %v3583
        %v3585 = vlaneseq
        %v3586 = vshrl.u32 %v3585, 7
        %v3587 = vsub.s32 %v3584, %v3586
        %v3588 = vrot.slane %v237, %v3587
        %v3590 = vunpack.c.l.s4 1983009808
        %v3591 = vunpack.c.0.s8 %v3590
        %v3592 = vlaneseq
        %v3593 = vshrl.u32 %v3592, 7
        %v3594 = vsub.s32 %v3591, %v3593
        %v3595 = vrot.slane %v3581, %v3594
        %v3596 = vcombine.high %v3588, %v3588
        %v3597 = vcombine.high %v3595, %v3595
        %v3598 = vcombine.high %v238, %v238
        %v3600 = vunpack.c.l.s4 1983009808
        %v3601 = vunpack.c.0.s8 %v3600
        %v3602 = vlaneseq
        %v3603 = vshrl.u32 %v3602, 7
        %v3604 = vsub.s32 %v3601, %v3603
        %v3605 = vrot.slane %v238, %v3604
        %v3607 = vunpack.c.l.s4 1983009808
        %v3608 = vunpack.c.0.s8 %v3607
        %v3609 = vlaneseq
        %v3610 = vshrl.u32 %v3609, 7
        %v3611 = vsub.s32 %v3608, %v3610
        %v3612 = vrot.slane %v3598, %v3611
        %v3613 = vcombine.high %v3605, %v3605
        %v3614 = vcombine.high %v3612, %v3612
        %v3615 = vcombine.high %v239, %v239
        %v3617 = vunpack.c.l.s4 1983009808
        %v3618 = vunpack.c.0.s8 %v3617
        %v3619 = vlaneseq
        %v3620 = vshrl.u32 %v3619, 7
        %v3621 = vsub.s32 %v3618, %v3620
        %v3622 = vrot.slane %v239, %v3621
        %v3624 = vunpack.c.l.s4 1983009808
        %v3625 = vunpack.c.0.s8 %v3624
        %v3626 = vlaneseq
        %v3627 = vshrl.u32 %v3626, 7
        %v3628 = vsub.s32 %v3625, %v3627
        %v3629 = vrot.slane %v3615, %v3628
        %v3630 = vcombine.high %v3622, %v3622
        %v3631 = vcombine.high %v3629, %v3629
        %v3632 = vcombine.high %v240, %v240
        %v3634 = vunpack.c.l.s4 1983009808
        %v3635 = vunpack.c.0.s8 %v3634
        %v3636 = vlaneseq
        %v3637 = vshrl.u32 %v3636, 7
        %v3638 = vsub.s32 %v3635, %v3637
        %v3639 = vrot.slane %v240, %v3638
        %v3641 = vunpack.c.l.s4 1983009808
        %v3642 = vunpack.c.0.s8 %v3641
        %v3643 = vlaneseq
        %v3644 = vshrl.u32 %v3643, 7
        %v3645 = vsub.s32 %v3642, %v3644
        %v3646 = vrot.slane %v3632, %v3645
        %v3647 = vcombine.high %v3639, %v3639
        %v3648 = vcombine.high %v3646, %v3646
        %v3649 = vcombine.high %v241, %v241
        %v3651 = vunpack.c.l.s4 1983009808
        %v3652 = vunpack.c.0.s8 %v3651
        %v3653 = vlaneseq
        %v3654 = vshrl.u32 %v3653, 7
        %v3655 = vsub.s32 %v3652, %v3654
        %v3656 = vrot.slane %v241, %v3655
        %v3658 = vunpack.c.l.s4 1983009808
        %v3659 = vunpack.c.0.s8 %v3658
        %v3660 = vlaneseq
        %v3661 = vshrl.u32 %v3660, 7
        %v3662 = vsub.s32 %v3659, %v3661
        %v3663 = vrot.slane %v3649, %v3662
        %v3664 = vcombine.high %v3656, %v3656
        %v3665 = vcombine.high %v3663, %v3663
        %v3666 = vcombine.high %v242, %v242
        %v3668 = vunpack.c.l.s4 1983009808
        %v3669 = vunpack.c.0.s8 %v3668
        %v3670 = vlaneseq
        %v3671 = vshrl.u32 %v3670, 7
        %v3672 = vsub.s32 %v3669, %v3671
        %v3673 = vrot.slane %v242, %v3672
        %v3675 = vunpack.c.l.s4 1983009808
        %v3676 = vunpack.c.0.s8 %v3675
        %v3677 = vlaneseq
        %v3678 = vshrl.u32 %v3677, 7
        %v3679 = vsub.s32 %v3676, %v3678
        %v3680 = vrot.slane %v3666, %v3679
        %v3681 = vcombine.high %v3673, %v3673
        %v3682 = vcombine.high %v3680, %v3680
        %v3683 = vcombine.high %v243, %v243
        %v3685 = vunpack.c.l.s4 1983009808
        %v3686 = vunpack.c.0.s8 %v3685
        %v3687 = vlaneseq
        %v3688 = vshrl.u32 %v3687, 7
        %v3689 = vsub.s32 %v3686, %v3688
        %v3690 = vrot.slane %v243, %v3689
        %v3692 = vunpack.c.l.s4 1983009808
        %v3693 = vunpack.c.0.s8 %v3692
        %v3694 = vlaneseq
        %v3695 = vshrl.u32 %v3694, 7
        %v3696 = vsub.s32 %v3693, %v3695
        %v3697 = vrot.slane %v3683, %v3696
        %v3698 = vcombine.high %v3690, %v3690
        %v3699 = vcombine.high %v3697, %v3697
        %v3700 = vcombine.high %v244, %v244
        %v3702 = vunpack.c.l.s4 1983009808
        %v3703 = vunpack.c.0.s8 %v3702
        %v3704 = vlaneseq
        %v3705 = vshrl.u32 %v3704, 7
        %v3706 = vsub.s32 %v3703, %v3705
        %v3707 = vrot.slane %v244, %v3706
        %v3709 = vunpack.c.l.s4 1983009808
        %v3710 = vunpack.c.0.s8 %v3709
        %v3711 = vlaneseq
        %v3712 = vshrl.u32 %v3711, 7
        %v3713 = vsub.s32 %v3710, %v3712
        %v3714 = vrot.slane %v3700, %v3713
        %v3715 = vcombine.high %v3707, %v3707
        %v3716 = vcombine.high %v3714, %v3714
        %v3717 = vcombine.high %v245, %v245
        %v3719 = vunpack.c.l.s4 1983009808
        %v3720 = vunpack.c.0.s8 %v3719
        %v3721 = vlaneseq
        %v3722 = vshrl.u32 %v3721, 7
        %v3723 = vsub.s32 %v3720, %v3722
        %v3724 = vrot.slane %v245, %v3723
        %v3726 = vunpack.c.l.s4 1983009808
        %v3727 = vunpack.c.0.s8 %v3726
        %v3728 = vlaneseq
        %v3729 = vshrl.u32 %v3728, 7
        %v3730 = vsub.s32 %v3727, %v3729
        %v3731 = vrot.slane %v3717, %v3730
        %v3732 = vcombine.high %v3724, %v3724
        %v3733 = vcombine.high %v3731, %v3731
        %v3734 = vcombine.high %v246, %v246
        %v3736 = vunpack.c.l.s4 1983009808
        %v3737 = vunpack.c.0.s8 %v3736
        %v3738 = vlaneseq
        %v3739 = vshrl.u32 %v3738, 7
        %v3740 = vsub.s32 %v3737, %v3739
        %v3741 = vrot.slane %v246, %v3740
        %v3743 = vunpack.c.l.s4 1983009808
        %v3744 = vunpack.c.0.s8 %v3743
        %v3745 = vlaneseq
        %v3746 = vshrl.u32 %v3745, 7
        %v3747 = vsub.s32 %v3744, %v3746
        %v3748 = vrot.slane %v3734, %v3747
        %v3749 = vcombine.high %v3741, %v3741
        %v3750 = vcombine.high %v3748, %v3748
        %v3751 = vcombine.high %v247, %v247
        %v3753 = vunpack.c.l.s4 1983009808
        %v3754 = vunpack.c.0.s8 %v3753
        %v3755 = vlaneseq
        %v3756 = vshrl.u32 %v3755, 7
        %v3757 = vsub.s32 %v3754, %v3756
        %v3758 = vrot.slane %v247, %v3757
        %v3760 = vunpack.c.l.s4 1983009808
        %v3761 = vunpack.c.0.s8 %v3760
        %v3762 = vlaneseq
        %v3763 = vshrl.u32 %v3762, 7
        %v3764 = vsub.s32 %v3761, %v3763
        %v3765 = vrot.slane %v3751, %v3764
        %v3766 = vcombine.high %v3758, %v3758
        %v3767 = vcombine.high %v3765, %v3765
        %v3768 = vcombine.high %v248, %v248
        %v3770 = vunpack.c.l.s4 1983009808
        %v3771 = vunpack.c.0.s8 %v3770
        %v3772 = vlaneseq
        %v3773 = vshrl.u32 %v3772, 7
        %v3774 = vsub.s32 %v3771, %v3773
        %v3775 = vrot.slane %v248, %v3774
        %v3777 = vunpack.c.l.s4 1983009808
        %v3778 = vunpack.c.0.s8 %v3777
        %v3779 = vlaneseq
        %v3780 = vshrl.u32 %v3779, 7
        %v3781 = vsub.s32 %v3778, %v3780
        %v3782 = vrot.slane %v3768, %v3781
        %v3783 = vcombine.high %v3775, %v3775
        %v3784 = vcombine.high %v3782, %v3782
        %v3785 = vcombine.high %v249, %v249
        %v3787 = vunpack.c.l.s4 1983009808
        %v3788 = vunpack.c.0.s8 %v3787
        %v3789 = vlaneseq
        %v3790 = vshrl.u32 %v3789, 7
        %v3791 = vsub.s32 %v3788, %v3790
        %v3792 = vrot.slane %v249, %v3791
        %v3794 = vunpack.c.l.s4 1983009808
        %v3795 = vunpack.c.0.s8 %v3794
        %v3796 = vlaneseq
        %v3797 = vshrl.u32 %v3796, 7
        %v3798 = vsub.s32 %v3795, %v3797
        %v3799 = vrot.slane %v3785, %v3798
        %v3800 = vcombine.high %v3792, %v3792
        %v3801 = vcombine.high %v3799, %v3799
        %v3802 = vcombine.high %v250, %v250
        %v3804 = vunpack.c.l.s4 1983009808
        %v3805 = vunpack.c.0.s8 %v3804
        %v3806 = vlaneseq
        %v3807 = vshrl.u32 %v3806, 7
        %v3808 = vsub.s32 %v3805, %v3807
        %v3809 = vrot.slane %v250, %v3808
        %v3811 = vunpack.c.l.s4 1983009808
        %v3812 = vunpack.c.0.s8 %v3811
        %v3813 = vlaneseq
        %v3814 = vshrl.u32 %v3813, 7
        %v3815 = vsub.s32 %v3812, %v3814
        %v3816 = vrot.slane %v3802, %v3815
        %v3817 = vcombine.high %v3809, %v3809
        %v3818 = vcombine.high %v3816, %v3816
        %v3819 = vcombine.high %v251, %v251
        %v3821 = vunpack.c.l.s4 1983009808
        %v3822 = vunpack.c.0.s8 %v3821
        %v3823 = vlaneseq
        %v3824 = vshrl.u32 %v3823, 7
        %v3825 = vsub.s32 %v3822, %v3824
        %v3826 = vrot.slane %v251, %v3825
        %v3828 = vunpack.c.l.s4 1983009808
        %v3829 = vunpack.c.0.s8 %v3828
        %v3830 = vlaneseq
        %v3831 = vshrl.u32 %v3830, 7
        %v3832 = vsub.s32 %v3829, %v3831
        %v3833 = vrot.slane %v3819, %v3832
        %v3834 = vcombine.high %v3826, %v3826
        %v3835 = vcombine.high %v3833, %v3833
        %v3836 = vcombine.high %v252, %v252
        %v3838 = vunpack.c.l.s4 1983009808
        %v3839 = vunpack.c.0.s8 %v3838
        %v3840 = vlaneseq
        %v3841 = vshrl.u32 %v3840, 7
        %v3842 = vsub.s32 %v3839, %v3841
        %v3843 = vrot.slane %v252, %v3842
        %v3845 = vunpack.c.l.s4 1983009808
        %v3846 = vunpack.c.0.s8 %v3845
        %v3847 = vlaneseq
        %v3848 = vshrl.u32 %v3847, 7
        %v3849 = vsub.s32 %v3846, %v3848
        %v3850 = vrot.slane %v3836, %v3849
        %v3851 = vcombine.high %v3843, %v3843
        %v3852 = vcombine.high %v3850, %v3850
        %v3853 = vcombine.high %v253, %v253
        %v3855 = vunpack.c.l.s4 1983009808
        %v3856 = vunpack.c.0.s8 %v3855
        %v3857 = vlaneseq
        %v3858 = vshrl.u32 %v3857, 7
        %v3859 = vsub.s32 %v3856, %v3858
        %v3860 = vrot.slane %v253, %v3859
        %v3862 = vunpack.c.l.s4 1983009808
        %v3863 = vunpack.c.0.s8 %v3862
        %v3864 = vlaneseq
        %v3865 = vshrl.u32 %v3864, 7
        %v3866 = vsub.s32 %v3863, %v3865
        %v3867 = vrot.slane %v3853, %v3866
        %v3868 = vcombine.high %v3860, %v3860
        %v3869 = vcombine.high %v3867, %v3867
        %v3870 = vcombine.high %v254, %v254
        %v3872 = vunpack.c.l.s4 1983009808
        %v3873 = vunpack.c.0.s8 %v3872
        %v3874 = vlaneseq
        %v3875 = vshrl.u32 %v3874, 7
        %v3876 = vsub.s32 %v3873, %v3875
        %v3877 = vrot.slane %v254, %v3876
        %v3879 = vunpack.c.l.s4 1983009808
        %v3880 = vunpack.c.0.s8 %v3879
        %v3881 = vlaneseq
        %v3882 = vshrl.u32 %v3881, 7
        %v3883 = vsub.s32 %v3880, %v3882
        %v3884 = vrot.slane %v3870, %v3883
        %v3885 = vcombine.high %v3877, %v3877
        %v3886 = vcombine.high %v3884, %v3884
        %v3887 = vcombine.high %v255, %v255
        %v3889 = vunpack.c.l.s4 1983009808
        %v3890 = vunpack.c.0.s8 %v3889
        %v3891 = vlaneseq
        %v3892 = vshrl.u32 %v3891, 7
        %v3893 = vsub.s32 %v3890, %v3892
        %v3894 = vrot.slane %v255, %v3893
        %v3896 = vunpack.c.l.s4 1983009808
        %v3897 = vunpack.c.0.s8 %v3896
        %v3898 = vlaneseq
        %v3899 = vshrl.u32 %v3898, 7
        %v3900 = vsub.s32 %v3897, %v3899
        %v3901 = vrot.slane %v3887, %v3900
        %v3902 = vcombine.high %v3894, %v3894
        %v3903 = vcombine.high %v3901, %v3901
        %v3904 = vcombine.high %v256, %v256
        %v3906 = vunpack.c.l.s4 1983009808
        %v3907 = vunpack.c.0.s8 %v3906
        %v3908 = vlaneseq
        %v3909 = vshrl.u32 %v3908, 7
        %v3910 = vsub.s32 %v3907, %v3909
        %v3911 = vrot.slane %v256, %v3910
        %v3913 = vunpack.c.l.s4 1983009808
        %v3914 = vunpack.c.0.s8 %v3913
        %v3915 = vlaneseq
        %v3916 = vshrl.u32 %v3915, 7
        %v3917 = vsub.s32 %v3914, %v3916
        %v3918 = vrot.slane %v3904, %v3917
        %v3919 = vcombine.high %v3911, %v3911
        %v3920 = vcombine.high %v3918, %v3918
        %v3921 = vcombine.high %v257, %v257
        %v3923 = vunpack.c.l.s4 1983009808
        %v3924 = vunpack.c.0.s8 %v3923
        %v3925 = vlaneseq
        %v3926 = vshrl.u32 %v3925, 7
        %v3927 = vsub.s32 %v3924, %v3926
        %v3928 = vrot.slane %v257, %v3927
        %v3930 = vunpack.c.l.s4 1983009808
        %v3931 = vunpack.c.0.s8 %v3930
        %v3932 = vlaneseq
        %v3933 = vshrl.u32 %v3932, 7
        %v3934 = vsub.s32 %v3931, %v3933
        %v3935 = vrot.slane %v3921, %v3934
        %v3936 = vcombine.high %v3928, %v3928
        %v3937 = vcombine.high %v3935, %v3935
        %v3938 = vcombine.high %v258, %v258
        %v3940 = vunpack.c.l.s4 1983009808
        %v3941 = vunpack.c.0.s8 %v3940
        %v3942 = vlaneseq
        %v3943 = vshrl.u32 %v3942, 7
        %v3944 = vsub.s32 %v3941, %v3943
        %v3945 = vrot.slane %v258, %v3944
        %v3947 = vunpack.c.l.s4 1983009808
        %v3948 = vunpack.c.0.s8 %v3947
        %v3949 = vlaneseq
        %v3950 = vshrl.u32 %v3949, 7
        %v3951 = vsub.s32 %v3948, %v3950
        %v3952 = vrot.slane %v3938, %v3951
        %v3953 = vcombine.high %v3945, %v3945
        %v3954 = vcombine.high %v3952, %v3952
        %v3955 = vcombine.high %v259, %v259
        %v3957 = vunpack.c.l.s4 1983009808
        %v3958 = vunpack.c.0.s8 %v3957
        %v3959 = vlaneseq
        %v3960 = vshrl.u32 %v3959, 7
        %v3961 = vsub.s32 %v3958, %v3960
        %v3962 = vrot.slane %v259, %v3961
        %v3964 = vunpack.c.l.s4 1983009808
        %v3965 = vunpack.c.0.s8 %v3964
        %v3966 = vlaneseq
        %v3967 = vshrl.u32 %v3966, 7
        %v3968 = vsub.s32 %v3965, %v3967
        %v3969 = vrot.slane %v3955, %v3968
        %v3970 = vcombine.high %v3962, %v3962
        %v3971 = vcombine.high %v3969, %v3969
        %v3972 = vcombine.high %v260, %v260
        %v3974 = vunpack.c.l.s4 1983009808
        %v3975 = vunpack.c.0.s8 %v3974
        %v3976 = vlaneseq
        %v3977 = vshrl.u32 %v3976, 7
        %v3978 = vsub.s32 %v3975, %v3977
        %v3979 = vrot.slane %v260, %v3978
        %v3981 = vunpack.c.l.s4 1983009808
        %v3982 = vunpack.c.0.s8 %v3981
        %v3983 = vlaneseq
        %v3984 = vshrl.u32 %v3983, 7
        %v3985 = vsub.s32 %v3982, %v3984
        %v3986 = vrot.slane %v3972, %v3985
        %v3987 = vcombine.high %v3979, %v3979
        %v3988 = vcombine.high %v3986, %v3986
        %v3989 = vcombine.high %v261, %v261
        %v3991 = vunpack.c.l.s4 1983009808
        %v3992 = vunpack.c.0.s8 %v3991
        %v3993 = vlaneseq
        %v3994 = vshrl.u32 %v3993, 7
        %v3995 = vsub.s32 %v3992, %v3994
        %v3996 = vrot.slane %v261, %v3995
        %v3998 = vunpack.c.l.s4 1983009808
        %v3999 = vunpack.c.0.s8 %v3998
        %v4000 = vlaneseq
        %v4001 = vshrl.u32 %v4000, 7
        %v4002 = vsub.s32 %v3999, %v4001
        %v4003 = vrot.slane %v3989, %v4002
        %v4004 = vcombine.high %v3996, %v3996
        %v4005 = vcombine.high %v4003, %v4003
        %v4006 = vcombine.high %v262, %v262
        %v4008 = vunpack.c.l.s4 1983009808
        %v4009 = vunpack.c.0.s8 %v4008
        %v4010 = vlaneseq
        %v4011 = vshrl.u32 %v4010, 7
        %v4012 = vsub.s32 %v4009, %v4011
        %v4013 = vrot.slane %v262, %v4012
        %v4015 = vunpack.c.l.s4 1983009808
        %v4016 = vunpack.c.0.s8 %v4015
        %v4017 = vlaneseq
        %v4018 = vshrl.u32 %v4017, 7
        %v4019 = vsub.s32 %v4016, %v4018
        %v4020 = vrot.slane %v4006, %v4019
        %v4021 = vcombine.high %v4013, %v4013
        %v4022 = vcombine.high %v4020, %v4020
        %v4023 = vcombine.high %v263, %v263
        %v4025 = vunpack.c.l.s4 1983009808
        %v4026 = vunpack.c.0.s8 %v4025
        %v4027 = vlaneseq
        %v4028 = vshrl.u32 %v4027, 7
        %v4029 = vsub.s32 %v4026, %v4028
        %v4030 = vrot.slane %v263, %v4029
        %v4032 = vunpack.c.l.s4 1983009808
        %v4033 = vunpack.c.0.s8 %v4032
        %v4034 = vlaneseq
        %v4035 = vshrl.u32 %v4034, 7
        %v4036 = vsub.s32 %v4033, %v4035
        %v4037 = vrot.slane %v4023, %v4036
        %v4038 = vcombine.high %v4030, %v4030
        %v4039 = vcombine.high %v4037, %v4037
        %v4040 = vcombine.high %v264, %v264
        %v4042 = vunpack.c.l.s4 1983009808
        %v4043 = vunpack.c.0.s8 %v4042
        %v4044 = vlaneseq
        %v4045 = vshrl.u32 %v4044, 7
        %v4046 = vsub.s32 %v4043, %v4045
        %v4047 = vrot.slane %v264, %v4046
        %v4049 = vunpack.c.l.s4 1983009808
        %v4050 = vunpack.c.0.s8 %v4049
        %v4051 = vlaneseq
        %v4052 = vshrl.u32 %v4051, 7
        %v4053 = vsub.s32 %v4050, %v4052
        %v4054 = vrot.slane %v4040, %v4053
        %v4055 = vcombine.high %v4047, %v4047
        %v4056 = vcombine.high %v4054, %v4054
        %v4057 = vcombine.high %v265, %v265
        %v4059 = vunpack.c.l.s4 1983009808
        %v4060 = vunpack.c.0.s8 %v4059
        %v4061 = vlaneseq
        %v4062 = vshrl.u32 %v4061, 7
        %v4063 = vsub.s32 %v4060, %v4062
        %v4064 = vrot.slane %v265, %v4063
        %v4066 = vunpack.c.l.s4 1983009808
        %v4067 = vunpack.c.0.s8 %v4066
        %v4068 = vlaneseq
        %v4069 = vshrl.u32 %v4068, 7
        %v4070 = vsub.s32 %v4067, %v4069
        %v4071 = vrot.slane %v4057, %v4070
        %v4072 = vcombine.high %v4064, %v4064
        %v4073 = vcombine.high %v4071, %v4071
        %v4074 = vcombine.high %v266, %v266
        %v4076 = vunpack.c.l.s4 1983009808
        %v4077 = vunpack.c.0.s8 %v4076
        %v4078 = vlaneseq
        %v4079 = vshrl.u32 %v4078, 7
        %v4080 = vsub.s32 %v4077, %v4079
        %v4081 = vrot.slane %v266, %v4080
        %v4083 = vunpack.c.l.s4 1983009808
        %v4084 = vunpack.c.0.s8 %v4083
        %v4085 = vlaneseq
        %v4086 = vshrl.u32 %v4085, 7
        %v4087 = vsub.s32 %v4084, %v4086
        %v4088 = vrot.slane %v4074, %v4087
        %v4089 = vcombine.high %v4081, %v4081
        %v4090 = vcombine.high %v4088, %v4088
        %v4091 = vcombine.high %v267, %v267
        %v4093 = vunpack.c.l.s4 1983009808
        %v4094 = vunpack.c.0.s8 %v4093
        %v4095 = vlaneseq
        %v4096 = vshrl.u32 %v4095, 7
        %v4097 = vsub.s32 %v4094, %v4096
        %v4098 = vrot.slane %v267, %v4097
        %v4100 = vunpack.c.l.s4 1983009808
        %v4101 = vunpack.c.0.s8 %v4100
        %v4102 = vlaneseq
        %v4103 = vshrl.u32 %v4102, 7
        %v4104 = vsub.s32 %v4101, %v4103
        %v4105 = vrot.slane %v4091, %v4104
        %v4106 = vcombine.high %v4098, %v4098
        %v4107 = vcombine.high %v4105, %v4105
        %v4108 = vcombine.high %v268, %v268
        %v4110 = vunpack.c.l.s4 1983009808
        %v4111 = vunpack.c.0.s8 %v4110
        %v4112 = vlaneseq
        %v4113 = vshrl.u32 %v4112, 7
        %v4114 = vsub.s32 %v4111, %v4113
        %v4115 = vrot.slane %v268, %v4114
        %v4117 = vunpack.c.l.s4 1983009808
        %v4118 = vunpack.c.0.s8 %v4117
        %v4119 = vlaneseq
        %v4120 = vshrl.u32 %v4119, 7
        %v4121 = vsub.s32 %v4118, %v4120
        %v4122 = vrot.slane %v4108, %v4121
        %v4123 = vcombine.high %v4115, %v4115
        %v4124 = vcombine.high %v4122, %v4122
        %v4125 = vcombine.high %v269, %v269
        %v4127 = vunpack.c.l.s4 1983009808
        %v4128 = vunpack.c.0.s8 %v4127
        %v4129 = vlaneseq
        %v4130 = vshrl.u32 %v4129, 7
        %v4131 = vsub.s32 %v4128, %v4130
        %v4132 = vrot.slane %v269, %v4131
        %v4134 = vunpack.c.l.s4 1983009808
        %v4135 = vunpack.c.0.s8 %v4134
        %v4136 = vlaneseq
        %v4137 = vshrl.u32 %v4136, 7
        %v4138 = vsub.s32 %v4135, %v4137
        %v4139 = vrot.slane %v4125, %v4138
        %v4140 = vcombine.high %v4132, %v4132
        %v4141 = vcombine.high %v4139, %v4139
        %v4142 = vcombine.high %v270, %v270
        %v4144 = vunpack.c.l.s4 1983009808
        %v4145 = vunpack.c.0.s8 %v4144
        %v4146 = vlaneseq
        %v4147 = vshrl.u32 %v4146, 7
        %v4148 = vsub.s32 %v4145, %v4147
        %v4149 = vrot.slane %v270, %v4148
        %v4151 = vunpack.c.l.s4 1983009808
        %v4152 = vunpack.c.0.s8 %v4151
        %v4153 = vlaneseq
        %v4154 = vshrl.u32 %v4153, 7
        %v4155 = vsub.s32 %v4152, %v4154
        %v4156 = vrot.slane %v4142, %v4155
        %v4157 = vcombine.high %v4149, %v4149
        %v4158 = vcombine.high %v4156, %v4156
        %v4159 = vcombine.high %v271, %v271
        %v4161 = vunpack.c.l.s4 1983009808
        %v4162 = vunpack.c.0.s8 %v4161
        %v4163 = vlaneseq
        %v4164 = vshrl.u32 %v4163, 7
        %v4165 = vsub.s32 %v4162, %v4164
        %v4166 = vrot.slane %v271, %v4165
        %v4168 = vunpack.c.l.s4 1983009808
        %v4169 = vunpack.c.0.s8 %v4168
        %v4170 = vlaneseq
        %v4171 = vshrl.u32 %v4170, 7
        %v4172 = vsub.s32 %v4169, %v4171
        %v4173 = vrot.slane %v4159, %v4172
        %v4174 = vcombine.high %v4166, %v4166
        %v4175 = vcombine.high %v4173, %v4173
        %v4176 = vcombine.high %v272, %v272
        %v4178 = vunpack.c.l.s4 1983009808
        %v4179 = vunpack.c.0.s8 %v4178
        %v4180 = vlaneseq
        %v4181 = vshrl.u32 %v4180, 7
        %v4182 = vsub.s32 %v4179, %v4181
        %v4183 = vrot.slane %v272, %v4182
        %v4185 = vunpack.c.l.s4 1983009808
        %v4186 = vunpack.c.0.s8 %v4185
        %v4187 = vlaneseq
        %v4188 = vshrl.u32 %v4187, 7
        %v4189 = vsub.s32 %v4186, %v4188
        %v4190 = vrot.slane %v4176, %v4189
        %v4191 = vcombine.high %v4183, %v4183
        %v4192 = vcombine.high %v4190, %v4190
        %v4193 = vcombine.high %v273, %v273
        %v4195 = vunpack.c.l.s4 1983009808
        %v4196 = vunpack.c.0.s8 %v4195
        %v4197 = vlaneseq
        %v4198 = vshrl.u32 %v4197, 7
        %v4199 = vsub.s32 %v4196, %v4198
        %v4200 = vrot.slane %v273, %v4199
        %v4202 = vunpack.c.l.s4 1983009808
        %v4203 = vunpack.c.0.s8 %v4202
        %v4204 = vlaneseq
        %v4205 = vshrl.u32 %v4204, 7
        %v4206 = vsub.s32 %v4203, %v4205
        %v4207 = vrot.slane %v4193, %v4206
        %v4208 = vcombine.high %v4200, %v4200
        %v4209 = vcombine.high %v4207, %v4207
        %4402 = vmatprep.subr.mxu0 0.0
        %4403 = vmatpush1.msra.mxu0 %v289
        %4404 = vmatprep.subr.mxu0 0.0
        %4405 = vmatpush1.msra.mxu0 %v288
        %4406 = vmatprep.subr.mxu0 0.0
        %4407 = vmatpush1.msra.mxu0 %v287
        %4408 = vmatprep.subr.mxu0 0.0
        %4409 = vmatpush1.msra.mxu0 %v286
        %4410 = vmatprep.subr.mxu0 0.0
        %4411 = vmatpush1.msra.mxu0 %v285
        %4412 = vmatprep.subr.mxu0 0.0
        %4413 = vmatpush1.msra.mxu0 %v284
        %4414 = vmatprep.subr.mxu0 0.0
        %4415 = vmatpush1.msra.mxu0 %v283
        %4416 = vmatprep.subr.mxu0 0.0
        %4417 = vmatpush1.msra.mxu0 %v282
        %4418 = vmatprep.subr.mxu0 0.0
        %4419 = vmatpush1.msra.mxu0 %v281
        %4420 = vmatprep.subr.mxu0 0.0
        %4421 = vmatpush1.msra.mxu0 %v280
        %4422 = vmatprep.subr.mxu0 0.0
        %4423 = vmatpush1.msra.mxu0 %v279
        %4424 = vmatprep.subr.mxu0 0.0
        %4425 = vmatpush1.msra.mxu0 %v278
        %4426 = vmatprep.subr.mxu0 0.0
        %4427 = vmatpush1.msra.mxu0 %v277
        %4428 = vmatprep.subr.mxu0 0.0
        %4429 = vmatpush1.msra.mxu0 %v276
        %4430 = vmatprep.subr.mxu0 0.0
        %4431 = vmatpush1.msra.mxu0 %v275
        %4432 = vmatprep.subr.mxu0 0.0
        %4433 = vmatpush1.msra.mxu0 %v274
        %4434 = vmatprep.subr.mxu0 0.0
        %4435 = vmatpush2.msra.mxu0 %v305
        %4436 = vmatprep.subr.mxu0 0.0
        %4437 = vmatpush2.msra.mxu0 %v304
        %4438 = vmatprep.subr.mxu0 0.0
        %4439 = vmatpush2.msra.mxu0 %v303
        %4440 = vmatprep.subr.mxu0 0.0
        %4441 = vmatpush2.msra.mxu0 %v302
        %4442 = vmatprep.subr.mxu0 0.0
        %4443 = vmatpush2.msra.mxu0 %v301
        %4444 = vmatprep.subr.mxu0 0.0
        %4445 = vmatpush2.msra.mxu0 %v300
        %4446 = vmatprep.subr.mxu0 0.0
        %4447 = vmatpush2.msra.mxu0 %v299
        %4448 = vmatprep.subr.mxu0 0.0
        %4449 = vmatpush2.msra.mxu0 %v298
        %4450 = vmatprep.subr.mxu0 0.0
        %4451 = vmatpush2.msra.mxu0 %v297
        %4452 = vmatprep.subr.mxu0 0.0
        %4453 = vmatpush2.msra.mxu0 %v296
        %4454 = vmatprep.subr.mxu0 0.0
        %4455 = vmatpush2.msra.mxu0 %v295
        %4456 = vmatprep.subr.mxu0 0.0
        %4457 = vmatpush2.msra.mxu0 %v294
        %4458 = vmatprep.subr.mxu0 0.0
        %4459 = vmatpush2.msra.mxu0 %v293
        %4460 = vmatprep.subr.mxu0 0.0
        %4461 = vmatpush2.msra.mxu0 %v292
        %4462 = vmatprep.subr.mxu0 0.0
        %4463 = vmatpush2.msra.mxu0 %v291
        %4464 = vmatprep.subr.mxu0 0.0
        %4465 = vmatpush2.msra.mxu0 %v290
        %4466 = vmatprep.mubr.f32.mxu0 %v3409
        %4467 = vmatmul.mubr.f32.gmra.mxu0 %v3401
        %v4468 = vpop.f32.mrf.mxu0
        %v4469 = vadd.f32 0.0, %v4468
        %v4470 = vpop.f32.mrf.mxu0
        %4471 = vdwg.mxu0
        %4472 = vmatprep.subr.mxu0 0.0
        %4473 = vmatpush1.msra.mxu0 %v321
        %4474 = vmatprep.subr.mxu0 0.0
        %4475 = vmatpush1.msra.mxu0 %v320
        %4476 = vmatprep.subr.mxu0 0.0
        %4477 = vmatpush1.msra.mxu0 %v319
        %4478 = vmatprep.subr.mxu0 0.0
        %4479 = vmatpush1.msra.mxu0 %v318
        %4480 = vmatprep.subr.mxu0 0.0
        %4481 = vmatpush1.msra.mxu0 %v317
        %4482 = vmatprep.subr.mxu0 0.0
        %4483 = vmatpush1.msra.mxu0 %v316
        %4484 = vmatprep.subr.mxu0 0.0
        %4485 = vmatpush1.msra.mxu0 %v315
        %4486 = vmatprep.subr.mxu0 0.0
        %4487 = vmatpush1.msra.mxu0 %v314
        %4488 = vmatprep.subr.mxu0 0.0
        %4489 = vmatpush1.msra.mxu0 %v313
        %4490 = vmatprep.subr.mxu0 0.0
        %4491 = vmatpush1.msra.mxu0 %v312
        %4492 = vmatprep.subr.mxu0 0.0
        %4493 = vmatpush1.msra.mxu0 %v311
        %4494 = vmatprep.subr.mxu0 0.0
        %4495 = vmatpush1.msra.mxu0 %v310
        %4496 = vmatprep.subr.mxu0 0.0
        %4497 = vmatpush1.msra.mxu0 %v309
        %4498 = vmatprep.subr.mxu0 0.0
        %4499 = vmatpush1.msra.mxu0 %v308
        %4500 = vmatprep.subr.mxu0 0.0
        %4501 = vmatpush1.msra.mxu0 %v307
        %4502 = vmatprep.subr.mxu0 0.0
        %4503 = vmatpush1.msra.mxu0 %v306
        %4504 = vmatprep.subr.mxu0 0.0
        %4505 = vmatpush2.msra.mxu0 %v337
        %4506 = vmatprep.subr.mxu0 0.0
        %4507 = vmatpush2.msra.mxu0 %v336
        %4508 = vmatprep.subr.mxu0 0.0
        %4509 = vmatpush2.msra.mxu0 %v335
        %4510 = vmatprep.subr.mxu0 0.0
        %4511 = vmatpush2.msra.mxu0 %v334
        %4512 = vmatprep.subr.mxu0 0.0
        %4513 = vmatpush2.msra.mxu0 %v333
        %4514 = vmatprep.subr.mxu0 0.0
        %4515 = vmatpush2.msra.mxu0 %v332
        %4516 = vmatprep.subr.mxu0 0.0
        %4517 = vmatpush2.msra.mxu0 %v331
        %4518 = vmatprep.subr.mxu0 0.0
        %4519 = vmatpush2.msra.mxu0 %v330
        %4520 = vmatprep.subr.mxu0 0.0
        %4521 = vmatpush2.msra.mxu0 %v329
        %4522 = vmatprep.subr.mxu0 0.0
        %4523 = vmatpush2.msra.mxu0 %v328
        %4524 = vmatprep.subr.mxu0 0.0
        %4525 = vmatpush2.msra.mxu0 %v327
        %4526 = vmatprep.subr.mxu0 0.0
        %4527 = vmatpush2.msra.mxu0 %v326
        %4528 = vmatprep.subr.mxu0 0.0
        %4529 = vmatpush2.msra.mxu0 %v325
        %4530 = vmatprep.subr.mxu0 0.0
        %4531 = vmatpush2.msra.mxu0 %v324
        %4532 = vmatprep.subr.mxu0 0.0
        %4533 = vmatpush2.msra.mxu0 %v323
        %4534 = vmatprep.subr.mxu0 0.0
        %4535 = vmatpush2.msra.mxu0 %v322
        %4536 = vmatprep.mubr.f32.mxu0 %v3410
        %4537 = vmatmul.mubr.f32.gmra.mxu0 %v3408
        %v4538 = vpop.f32.mrf.mxu0
        %v4539 = vadd.f32 %v4469, %v4538
        %v4540 = vpop.f32.mrf.mxu0
        %4541 = vdwg.mxu0
        %4542 = vmatprep.subr.mxu0 0.0
        %4543 = vmatpush1.msra.mxu0 %v353
        %4544 = vmatprep.subr.mxu0 0.0
        %4545 = vmatpush1.msra.mxu0 %v352
        %4546 = vmatprep.subr.mxu0 0.0
        %4547 = vmatpush1.msra.mxu0 %v351
        %4548 = vmatprep.subr.mxu0 0.0
        %4549 = vmatpush1.msra.mxu0 %v350
        %4550 = vmatprep.subr.mxu0 0.0
        %4551 = vmatpush1.msra.mxu0 %v349
        %4552 = vmatprep.subr.mxu0 0.0
        %4553 = vmatpush1.msra.mxu0 %v348
        %4554 = vmatprep.subr.mxu0 0.0
        %4555 = vmatpush1.msra.mxu0 %v347
        %4556 = vmatprep.subr.mxu0 0.0
        %4557 = vmatpush1.msra.mxu0 %v346
        %4558 = vmatprep.subr.mxu0 0.0
        %4559 = vmatpush1.msra.mxu0 %v345
        %4560 = vmatprep.subr.mxu0 0.0
        %4561 = vmatpush1.msra.mxu0 %v344
        %4562 = vmatprep.subr.mxu0 0.0
        %4563 = vmatpush1.msra.mxu0 %v343
        %4564 = vmatprep.subr.mxu0 0.0
        %4565 = vmatpush1.msra.mxu0 %v342
        %4566 = vmatprep.subr.mxu0 0.0
        %4567 = vmatpush1.msra.mxu0 %v341
        %4568 = vmatprep.subr.mxu0 0.0
        %4569 = vmatpush1.msra.mxu0 %v340
        %4570 = vmatprep.subr.mxu0 0.0
        %4571 = vmatpush1.msra.mxu0 %v339
        %4572 = vmatprep.subr.mxu0 0.0
        %4573 = vmatpush1.msra.mxu0 %v338
        %4574 = vmatprep.subr.mxu0 0.0
        %4575 = vmatpush2.msra.mxu0 %v369
        %4576 = vmatprep.subr.mxu0 0.0
        %4577 = vmatpush2.msra.mxu0 %v368
        %4578 = vmatprep.subr.mxu0 0.0
        %4579 = vmatpush2.msra.mxu0 %v367
        %4580 = vmatprep.subr.mxu0 0.0
        %4581 = vmatpush2.msra.mxu0 %v366
        %4582 = vmatprep.subr.mxu0 0.0
        %4583 = vmatpush2.msra.mxu0 %v365
        %4584 = vmatprep.subr.mxu0 0.0
        %4585 = vmatpush2.msra.mxu0 %v364
        %4586 = vmatprep.subr.mxu0 0.0
        %4587 = vmatpush2.msra.mxu0 %v363
        %4588 = vmatprep.subr.mxu0 0.0
        %4589 = vmatpush2.msra.mxu0 %v362
        %4590 = vmatprep.subr.mxu0 0.0
        %4591 = vmatpush2.msra.mxu0 %v361
        %4592 = vmatprep.subr.mxu0 0.0
        %4593 = vmatpush2.msra.mxu0 %v360
        %4594 = vmatprep.subr.mxu0 0.0
        %4595 = vmatpush2.msra.mxu0 %v359
        %4596 = vmatprep.subr.mxu0 0.0
        %4597 = vmatpush2.msra.mxu0 %v358
        %4598 = vmatprep.subr.mxu0 0.0
        %4599 = vmatpush2.msra.mxu0 %v357
        %4600 = vmatprep.subr.mxu0 0.0
        %4601 = vmatpush2.msra.mxu0 %v356
        %4602 = vmatprep.subr.mxu0 0.0
        %4603 = vmatpush2.msra.mxu0 %v355
        %4604 = vmatprep.subr.mxu0 0.0
        %4605 = vmatpush2.msra.mxu0 %v354
        %4606 = vmatprep.mubr.f32.mxu0 %v3426
        %4607 = vmatmul.mubr.f32.gmra.mxu0 %v3418
        %v4608 = vpop.f32.mrf.mxu0
        %v4609 = vadd.f32 %v4539, %v4608
        %v4610 = vpop.f32.mrf.mxu0
        %4611 = vdwg.mxu0
        %4612 = vmatprep.subr.mxu0 0.0
        %4613 = vmatpush1.msra.mxu0 %v385
        %4614 = vmatprep.subr.mxu0 0.0
        %4615 = vmatpush1.msra.mxu0 %v384
        %4616 = vmatprep.subr.mxu0 0.0
        %4617 = vmatpush1.msra.mxu0 %v383
        %4618 = vmatprep.subr.mxu0 0.0
        %4619 = vmatpush1.msra.mxu0 %v382
        %4620 = vmatprep.subr.mxu0 0.0
        %4621 = vmatpush1.msra.mxu0 %v381
        %4622 = vmatprep.subr.mxu0 0.0
        %4623 = vmatpush1.msra.mxu0 %v380
        %4624 = vmatprep.subr.mxu0 0.0
        %4625 = vmatpush1.msra.mxu0 %v379
        %4626 = vmatprep.subr.mxu0 0.0
        %4627 = vmatpush1.msra.mxu0 %v378
        %4628 = vmatprep.subr.mxu0 0.0
        %4629 = vmatpush1.msra.mxu0 %v377
        %4630 = vmatprep.subr.mxu0 0.0
        %4631 = vmatpush1.msra.mxu0 %v376
        %4632 = vmatprep.subr.mxu0 0.0
        %4633 = vmatpush1.msra.mxu0 %v375
        %4634 = vmatprep.subr.mxu0 0.0
        %4635 = vmatpush1.msra.mxu0 %v374
        %4636 = vmatprep.subr.mxu0 0.0
        %4637 = vmatpush1.msra.mxu0 %v373
        %4638 = vmatprep.subr.mxu0 0.0
        %4639 = vmatpush1.msra.mxu0 %v372
        %4640 = vmatprep.subr.mxu0 0.0
        %4641 = vmatpush1.msra.mxu0 %v371
        %4642 = vmatprep.subr.mxu0 0.0
        %4643 = vmatpush1.msra.mxu0 %v370
        %4644 = vmatprep.subr.mxu0 0.0
        %4645 = vmatpush2.msra.mxu0 %v401
        %4646 = vmatprep.subr.mxu0 0.0
        %4647 = vmatpush2.msra.mxu0 %v400
        %4648 = vmatprep.subr.mxu0 0.0
        %4649 = vmatpush2.msra.mxu0 %v399
        %4650 = vmatprep.subr.mxu0 0.0
        %4651 = vmatpush2.msra.mxu0 %v398
        %4652 = vmatprep.subr.mxu0 0.0
        %4653 = vmatpush2.msra.mxu0 %v397
        %4654 = vmatprep.subr.mxu0 0.0
        %4655 = vmatpush2.msra.mxu0 %v396
        %4656 = vmatprep.subr.mxu0 0.0
        %4657 = vmatpush2.msra.mxu0 %v395
        %4658 = vmatprep.subr.mxu0 0.0
        %4659 = vmatpush2.msra.mxu0 %v394
        %4660 = vmatprep.subr.mxu0 0.0
        %4661 = vmatpush2.msra.mxu0 %v393
        %4662 = vmatprep.subr.mxu0 0.0
        %4663 = vmatpush2.msra.mxu0 %v392
        %4664 = vmatprep.subr.mxu0 0.0
        %4665 = vmatpush2.msra.mxu0 %v391
        %4666 = vmatprep.subr.mxu0 0.0
        %4667 = vmatpush2.msra.mxu0 %v390
        %4668 = vmatprep.subr.mxu0 0.0
        %4669 = vmatpush2.msra.mxu0 %v389
        %4670 = vmatprep.subr.mxu0 0.0
        %4671 = vmatpush2.msra.mxu0 %v388
        %4672 = vmatprep.subr.mxu0 0.0
        %4673 = vmatpush2.msra.mxu0 %v387
        %4674 = vmatprep.subr.mxu0 0.0
        %4675 = vmatpush2.msra.mxu0 %v386
        %4676 = vmatprep.mubr.f32.mxu0 %v3427
        %4677 = vmatmul.mubr.f32.gmra.mxu0 %v3425
        %v4678 = vpop.f32.mrf.mxu0
        %v4679 = vadd.f32 %v4609, %v4678
        %v4680 = vpop.f32.mrf.mxu0
        %4681 = vdwg.mxu0
        %4682 = vmatprep.subr.mxu0 0.0
        %4683 = vmatpush1.msra.mxu0 %v417
        %4684 = vmatprep.subr.mxu0 0.0
        %4685 = vmatpush1.msra.mxu0 %v416
        %4686 = vmatprep.subr.mxu0 0.0
        %4687 = vmatpush1.msra.mxu0 %v415
        %4688 = vmatprep.subr.mxu0 0.0
        %4689 = vmatpush1.msra.mxu0 %v414
        %4690 = vmatprep.subr.mxu0 0.0
        %4691 = vmatpush1.msra.mxu0 %v413
        %4692 = vmatprep.subr.mxu0 0.0
        %4693 = vmatpush1.msra.mxu0 %v412
        %4694 = vmatprep.subr.mxu0 0.0
        %4695 = vmatpush1.msra.mxu0 %v411
        %4696 = vmatprep.subr.mxu0 0.0
        %4697 = vmatpush1.msra.mxu0 %v410
        %4698 = vmatprep.subr.mxu0 0.0
        %4699 = vmatpush1.msra.mxu0 %v409
        %4700 = vmatprep.subr.mxu0 0.0
        %4701 = vmatpush1.msra.mxu0 %v408
        %4702 = vmatprep.subr.mxu0 0.0
        %4703 = vmatpush1.msra.mxu0 %v407
        %4704 = vmatprep.subr.mxu0 0.0
        %4705 = vmatpush1.msra.mxu0 %v406
        %4706 = vmatprep.subr.mxu0 0.0
        %4707 = vmatpush1.msra.mxu0 %v405
        %4708 = vmatprep.subr.mxu0 0.0
        %4709 = vmatpush1.msra.mxu0 %v404
        %4710 = vmatprep.subr.mxu0 0.0
        %4711 = vmatpush1.msra.mxu0 %v403
        %4712 = vmatprep.subr.mxu0 0.0
        %4713 = vmatpush1.msra.mxu0 %v402
        %4714 = vmatprep.subr.mxu0 0.0
        %4715 = vmatpush2.msra.mxu0 %v433
        %4716 = vmatprep.subr.mxu0 0.0
        %4717 = vmatpush2.msra.mxu0 %v432
        %4718 = vmatprep.subr.mxu0 0.0
        %4719 = vmatpush2.msra.mxu0 %v431
        %4720 = vmatprep.subr.mxu0 0.0
        %4721 = vmatpush2.msra.mxu0 %v430
        %4722 = vmatprep.subr.mxu0 0.0
        %4723 = vmatpush2.msra.mxu0 %v429
        %4724 = vmatprep.subr.mxu0 0.0
        %4725 = vmatpush2.msra.mxu0 %v428
        %4726 = vmatprep.subr.mxu0 0.0
        %4727 = vmatpush2.msra.mxu0 %v427
        %4728 = vmatprep.subr.mxu0 0.0
        %4729 = vmatpush2.msra.mxu0 %v426
        %4730 = vmatprep.subr.mxu0 0.0
        %4731 = vmatpush2.msra.mxu0 %v425
        %4732 = vmatprep.subr.mxu0 0.0
        %4733 = vmatpush2.msra.mxu0 %v424
        %4734 = vmatprep.subr.mxu0 0.0
        %4735 = vmatpush2.msra.mxu0 %v423
        %4736 = vmatprep.subr.mxu0 0.0
        %4737 = vmatpush2.msra.mxu0 %v422
        %4738 = vmatprep.subr.mxu0 0.0
        %4739 = vmatpush2.msra.mxu0 %v421
        %4740 = vmatprep.subr.mxu0 0.0
        %4741 = vmatpush2.msra.mxu0 %v420
        %4742 = vmatprep.subr.mxu0 0.0
        %4743 = vmatpush2.msra.mxu0 %v419
        %4744 = vmatprep.subr.mxu0 0.0
        %4745 = vmatpush2.msra.mxu0 %v418
        %4746 = vmatprep.mubr.f32.mxu0 %v3443
        %4747 = vmatmul.mubr.f32.gmra.mxu0 %v3435
        %v4748 = vpop.f32.mrf.mxu0
        %v4749 = vadd.f32 %v4679, %v4748
        %v4750 = vpop.f32.mrf.mxu0
        %4751 = vdwg.mxu0
        %4752 = vmatprep.subr.mxu0 0.0
        %4753 = vmatpush1.msra.mxu0 %v449
        %4754 = vmatprep.subr.mxu0 0.0
        %4755 = vmatpush1.msra.mxu0 %v448
        %4756 = vmatprep.subr.mxu0 0.0
        %4757 = vmatpush1.msra.mxu0 %v447
        %4758 = vmatprep.subr.mxu0 0.0
        %4759 = vmatpush1.msra.mxu0 %v446
        %4760 = vmatprep.subr.mxu0 0.0
        %4761 = vmatpush1.msra.mxu0 %v445
        %4762 = vmatprep.subr.mxu0 0.0
        %4763 = vmatpush1.msra.mxu0 %v444
        %4764 = vmatprep.subr.mxu0 0.0
        %4765 = vmatpush1.msra.mxu0 %v443
        %4766 = vmatprep.subr.mxu0 0.0
        %4767 = vmatpush1.msra.mxu0 %v442
        %4768 = vmatprep.subr.mxu0 0.0
        %4769 = vmatpush1.msra.mxu0 %v441
        %4770 = vmatprep.subr.mxu0 0.0
        %4771 = vmatpush1.msra.mxu0 %v440
        %4772 = vmatprep.subr.mxu0 0.0
        %4773 = vmatpush1.msra.mxu0 %v439
        %4774 = vmatprep.subr.mxu0 0.0
        %4775 = vmatpush1.msra.mxu0 %v438
        %4776 = vmatprep.subr.mxu0 0.0
        %4777 = vmatpush1.msra.mxu0 %v437
        %4778 = vmatprep.subr.mxu0 0.0
        %4779 = vmatpush1.msra.mxu0 %v436
        %4780 = vmatprep.subr.mxu0 0.0
        %4781 = vmatpush1.msra.mxu0 %v435
        %4782 = vmatprep.subr.mxu0 0.0
        %4783 = vmatpush1.msra.mxu0 %v434
        %4784 = vmatprep.subr.mxu0 0.0
        %4785 = vmatpush2.msra.mxu0 %v465
        %4786 = vmatprep.subr.mxu0 0.0
        %4787 = vmatpush2.msra.mxu0 %v464
        %4788 = vmatprep.subr.mxu0 0.0
        %4789 = vmatpush2.msra.mxu0 %v463
        %4790 = vmatprep.subr.mxu0 0.0
        %4791 = vmatpush2.msra.mxu0 %v462
        %4792 = vmatprep.subr.mxu0 0.0
        %4793 = vmatpush2.msra.mxu0 %v461
        %4794 = vmatprep.subr.mxu0 0.0
        %4795 = vmatpush2.msra.mxu0 %v460
        %4796 = vmatprep.subr.mxu0 0.0
        %4797 = vmatpush2.msra.mxu0 %v459
        %4798 = vmatprep.subr.mxu0 0.0
        %4799 = vmatpush2.msra.mxu0 %v458
        %4800 = vmatprep.subr.mxu0 0.0
        %4801 = vmatpush2.msra.mxu0 %v457
        %4802 = vmatprep.subr.mxu0 0.0
        %4803 = vmatpush2.msra.mxu0 %v456
        %4804 = vmatprep.subr.mxu0 0.0
        %4805 = vmatpush2.msra.mxu0 %v455
        %4806 = vmatprep.subr.mxu0 0.0
        %4807 = vmatpush2.msra.mxu0 %v454
        %4808 = vmatprep.subr.mxu0 0.0
        %4809 = vmatpush2.msra.mxu0 %v453
        %4810 = vmatprep.subr.mxu0 0.0
        %4811 = vmatpush2.msra.mxu0 %v452
        %4812 = vmatprep.subr.mxu0 0.0
        %4813 = vmatpush2.msra.mxu0 %v451
        %4814 = vmatprep.subr.mxu0 0.0
        %4815 = vmatpush2.msra.mxu0 %v450
        %4816 = vmatprep.mubr.f32.mxu0 %v3444
        %4817 = vmatmul.mubr.f32.gmra.mxu0 %v3442
        %v4818 = vpop.f32.mrf.mxu0
        %v4819 = vadd.f32 %v4749, %v4818
        %v4820 = vpop.f32.mrf.mxu0
        %4821 = vdwg.mxu0
        %4822 = vmatprep.subr.mxu0 0.0
        %4823 = vmatpush1.msra.mxu0 %v481
        %4824 = vmatprep.subr.mxu0 0.0
        %4825 = vmatpush1.msra.mxu0 %v480
        %4826 = vmatprep.subr.mxu0 0.0
        %4827 = vmatpush1.msra.mxu0 %v479
        %4828 = vmatprep.subr.mxu0 0.0
        %4829 = vmatpush1.msra.mxu0 %v478
        %4830 = vmatprep.subr.mxu0 0.0
        %4831 = vmatpush1.msra.mxu0 %v477
        %4832 = vmatprep.subr.mxu0 0.0
        %4833 = vmatpush1.msra.mxu0 %v476
        %4834 = vmatprep.subr.mxu0 0.0
        %4835 = vmatpush1.msra.mxu0 %v475
        %4836 = vmatprep.subr.mxu0 0.0
        %4837 = vmatpush1.msra.mxu0 %v474
        %4838 = vmatprep.subr.mxu0 0.0
        %4839 = vmatpush1.msra.mxu0 %v473
        %4840 = vmatprep.subr.mxu0 0.0
        %4841 = vmatpush1.msra.mxu0 %v472
        %4842 = vmatprep.subr.mxu0 0.0
        %4843 = vmatpush1.msra.mxu0 %v471
        %4844 = vmatprep.subr.mxu0 0.0
        %4845 = vmatpush1.msra.mxu0 %v470
        %4846 = vmatprep.subr.mxu0 0.0
        %4847 = vmatpush1.msra.mxu0 %v469
        %4848 = vmatprep.subr.mxu0 0.0
        %4849 = vmatpush1.msra.mxu0 %v468
        %4850 = vmatprep.subr.mxu0 0.0
        %4851 = vmatpush1.msra.mxu0 %v467
        %4852 = vmatprep.subr.mxu0 0.0
        %4853 = vmatpush1.msra.mxu0 %v466
        %4854 = vmatprep.subr.mxu0 0.0
        %4855 = vmatpush2.msra.mxu0 %v497
        %4856 = vmatprep.subr.mxu0 0.0
        %4857 = vmatpush2.msra.mxu0 %v496
        %4858 = vmatprep.subr.mxu0 0.0
        %4859 = vmatpush2.msra.mxu0 %v495
        %4860 = vmatprep.subr.mxu0 0.0
        %4861 = vmatpush2.msra.mxu0 %v494
        %4862 = vmatprep.subr.mxu0 0.0
        %4863 = vmatpush2.msra.mxu0 %v493
        %4864 = vmatprep.subr.mxu0 0.0
        %4865 = vmatpush2.msra.mxu0 %v492
        %4866 = vmatprep.subr.mxu0 0.0
        %4867 = vmatpush2.msra.mxu0 %v491
        %4868 = vmatprep.subr.mxu0 0.0
        %4869 = vmatpush2.msra.mxu0 %v490
        %4870 = vmatprep.subr.mxu0 0.0
        %4871 = vmatpush2.msra.mxu0 %v489
        %4872 = vmatprep.subr.mxu0 0.0
        %4873 = vmatpush2.msra.mxu0 %v488
        %4874 = vmatprep.subr.mxu0 0.0
        %4875 = vmatpush2.msra.mxu0 %v487
        %4876 = vmatprep.subr.mxu0 0.0
        %4877 = vmatpush2.msra.mxu0 %v486
        %4878 = vmatprep.subr.mxu0 0.0
        %4879 = vmatpush2.msra.mxu0 %v485
        %4880 = vmatprep.subr.mxu0 0.0
        %4881 = vmatpush2.msra.mxu0 %v484
        %4882 = vmatprep.subr.mxu0 0.0
        %4883 = vmatpush2.msra.mxu0 %v483
        %4884 = vmatprep.subr.mxu0 0.0
        %4885 = vmatpush2.msra.mxu0 %v482
        %4886 = vmatprep.mubr.f32.mxu0 %v3460
        %4887 = vmatmul.mubr.f32.gmra.mxu0 %v3452
        %v4888 = vpop.f32.mrf.mxu0
        %v4889 = vadd.f32 %v4819, %v4888
        %v4890 = vpop.f32.mrf.mxu0
        %4891 = vdwg.mxu0
        %4892 = vmatprep.subr.mxu0 0.0
        %4893 = vmatpush1.msra.mxu0 %v513
        %4894 = vmatprep.subr.mxu0 0.0
        %4895 = vmatpush1.msra.mxu0 %v512
        %4896 = vmatprep.subr.mxu0 0.0
        %4897 = vmatpush1.msra.mxu0 %v511
        %4898 = vmatprep.subr.mxu0 0.0
        %4899 = vmatpush1.msra.mxu0 %v510
        %4900 = vmatprep.subr.mxu0 0.0
        %4901 = vmatpush1.msra.mxu0 %v509
        %4902 = vmatprep.subr.mxu0 0.0
        %4903 = vmatpush1.msra.mxu0 %v508
        %4904 = vmatprep.subr.mxu0 0.0
        %4905 = vmatpush1.msra.mxu0 %v507
        %4906 = vmatprep.subr.mxu0 0.0
        %4907 = vmatpush1.msra.mxu0 %v506
        %4908 = vmatprep.subr.mxu0 0.0
        %4909 = vmatpush1.msra.mxu0 %v505
        %4910 = vmatprep.subr.mxu0 0.0
        %4911 = vmatpush1.msra.mxu0 %v504
        %4912 = vmatprep.subr.mxu0 0.0
        %4913 = vmatpush1.msra.mxu0 %v503
        %4914 = vmatprep.subr.mxu0 0.0
        %4915 = vmatpush1.msra.mxu0 %v502
        %4916 = vmatprep.subr.mxu0 0.0
        %4917 = vmatpush1.msra.mxu0 %v501
        %4918 = vmatprep.subr.mxu0 0.0
        %4919 = vmatpush1.msra.mxu0 %v500
        %4920 = vmatprep.subr.mxu0 0.0
        %4921 = vmatpush1.msra.mxu0 %v499
        %4922 = vmatprep.subr.mxu0 0.0
        %4923 = vmatpush1.msra.mxu0 %v498
        %4924 = vmatprep.subr.mxu0 0.0
        %4925 = vmatpush2.msra.mxu0 %v529
        %4926 = vmatprep.subr.mxu0 0.0
        %4927 = vmatpush2.msra.mxu0 %v528
        %4928 = vmatprep.subr.mxu0 0.0
        %4929 = vmatpush2.msra.mxu0 %v527
        %4930 = vmatprep.subr.mxu0 0.0
        %4931 = vmatpush2.msra.mxu0 %v526
        %4932 = vmatprep.subr.mxu0 0.0
        %4933 = vmatpush2.msra.mxu0 %v525
        %4934 = vmatprep.subr.mxu0 0.0
        %4935 = vmatpush2.msra.mxu0 %v524
        %4936 = vmatprep.subr.mxu0 0.0
        %4937 = vmatpush2.msra.mxu0 %v523
        %4938 = vmatprep.subr.mxu0 0.0
        %4939 = vmatpush2.msra.mxu0 %v522
        %4940 = vmatprep.subr.mxu0 0.0
        %4941 = vmatpush2.msra.mxu0 %v521
        %4942 = vmatprep.subr.mxu0 0.0
        %4943 = vmatpush2.msra.mxu0 %v520
        %4944 = vmatprep.subr.mxu0 0.0
        %4945 = vmatpush2.msra.mxu0 %v519
        %4946 = vmatprep.subr.mxu0 0.0
        %4947 = vmatpush2.msra.mxu0 %v518
        %4948 = vmatprep.subr.mxu0 0.0
        %4949 = vmatpush2.msra.mxu0 %v517
        %4950 = vmatprep.subr.mxu0 0.0
        %4951 = vmatpush2.msra.mxu0 %v516
        %4952 = vmatprep.subr.mxu0 0.0
        %4953 = vmatpush2.msra.mxu0 %v515
        %4954 = vmatprep.subr.mxu0 0.0
        %4955 = vmatpush2.msra.mxu0 %v514
        %4956 = vmatprep.mubr.f32.mxu0 %v3461
        %4957 = vmatmul.mubr.f32.gmra.mxu0 %v3459
        %v4958 = vpop.f32.mrf.mxu0
        %v4959 = vadd.f32 %v4889, %v4958
        %v4960 = vpop.f32.mrf.mxu0
        %4961 = vdwg.mxu0
        %4962 = vmatprep.subr.mxu0 0.0
        %4963 = vmatpush1.msra.mxu0 %v545
        %4964 = vmatprep.subr.mxu0 0.0
        %4965 = vmatpush1.msra.mxu0 %v544
        %4966 = vmatprep.subr.mxu0 0.0
        %4967 = vmatpush1.msra.mxu0 %v543
        %4968 = vmatprep.subr.mxu0 0.0
        %4969 = vmatpush1.msra.mxu0 %v542
        %4970 = vmatprep.subr.mxu0 0.0
        %4971 = vmatpush1.msra.mxu0 %v541
        %4972 = vmatprep.subr.mxu0 0.0
        %4973 = vmatpush1.msra.mxu0 %v540
        %4974 = vmatprep.subr.mxu0 0.0
        %4975 = vmatpush1.msra.mxu0 %v539
        %4976 = vmatprep.subr.mxu0 0.0
        %4977 = vmatpush1.msra.mxu0 %v538
        %4978 = vmatprep.subr.mxu0 0.0
        %4979 = vmatpush1.msra.mxu0 %v537
        %4980 = vmatprep.subr.mxu0 0.0
        %4981 = vmatpush1.msra.mxu0 %v536
        %4982 = vmatprep.subr.mxu0 0.0
        %4983 = vmatpush1.msra.mxu0 %v535
        %4984 = vmatprep.subr.mxu0 0.0
        %4985 = vmatpush1.msra.mxu0 %v534
        %4986 = vmatprep.subr.mxu0 0.0
        %4987 = vmatpush1.msra.mxu0 %v533
        %4988 = vmatprep.subr.mxu0 0.0
        %4989 = vmatpush1.msra.mxu0 %v532
        %4990 = vmatprep.subr.mxu0 0.0
        %4991 = vmatpush1.msra.mxu0 %v531
        %4992 = vmatprep.subr.mxu0 0.0
        %4993 = vmatpush1.msra.mxu0 %v530
        %4994 = vmatprep.subr.mxu0 0.0
        %4995 = vmatpush2.msra.mxu0 %v561
        %4996 = vmatprep.subr.mxu0 0.0
        %4997 = vmatpush2.msra.mxu0 %v560
        %4998 = vmatprep.subr.mxu0 0.0
        %4999 = vmatpush2.msra.mxu0 %v559
        %5000 = vmatprep.subr.mxu0 0.0
        %5001 = vmatpush2.msra.mxu0 %v558
        %5002 = vmatprep.subr.mxu0 0.0
        %5003 = vmatpush2.msra.mxu0 %v557
        %5004 = vmatprep.subr.mxu0 0.0
        %5005 = vmatpush2.msra.mxu0 %v556
        %5006 = vmatprep.subr.mxu0 0.0
        %5007 = vmatpush2.msra.mxu0 %v555
        %5008 = vmatprep.subr.mxu0 0.0
        %5009 = vmatpush2.msra.mxu0 %v554
        %5010 = vmatprep.subr.mxu0 0.0
        %5011 = vmatpush2.msra.mxu0 %v553
        %5012 = vmatprep.subr.mxu0 0.0
        %5013 = vmatpush2.msra.mxu0 %v552
        %5014 = vmatprep.subr.mxu0 0.0
        %5015 = vmatpush2.msra.mxu0 %v551
        %5016 = vmatprep.subr.mxu0 0.0
        %5017 = vmatpush2.msra.mxu0 %v550
        %5018 = vmatprep.subr.mxu0 0.0
        %5019 = vmatpush2.msra.mxu0 %v549
        %5020 = vmatprep.subr.mxu0 0.0
        %5021 = vmatpush2.msra.mxu0 %v548
        %5022 = vmatprep.subr.mxu0 0.0
        %5023 = vmatpush2.msra.mxu0 %v547
        %5024 = vmatprep.subr.mxu0 0.0
        %5025 = vmatpush2.msra.mxu0 %v546
        %5026 = vmatprep.mubr.f32.mxu0 %v3477
        %5027 = vmatmul.mubr.f32.gmra.mxu0 %v3469
        %v5028 = vpop.f32.mrf.mxu0
        %v5029 = vadd.f32 %v4959, %v5028
        %v5030 = vpop.f32.mrf.mxu0
        %5031 = vdwg.mxu0
        %5032 = vmatprep.subr.mxu0 0.0
        %5033 = vmatpush1.msra.mxu0 %v577
        %5034 = vmatprep.subr.mxu0 0.0
        %5035 = vmatpush1.msra.mxu0 %v576
        %5036 = vmatprep.subr.mxu0 0.0
        %5037 = vmatpush1.msra.mxu0 %v575
        %5038 = vmatprep.subr.mxu0 0.0
        %5039 = vmatpush1.msra.mxu0 %v574
        %5040 = vmatprep.subr.mxu0 0.0
        %5041 = vmatpush1.msra.mxu0 %v573
        %5042 = vmatprep.subr.mxu0 0.0
        %5043 = vmatpush1.msra.mxu0 %v572
        %5044 = vmatprep.subr.mxu0 0.0
        %5045 = vmatpush1.msra.mxu0 %v571
        %5046 = vmatprep.subr.mxu0 0.0
        %5047 = vmatpush1.msra.mxu0 %v570
        %5048 = vmatprep.subr.mxu0 0.0
        %5049 = vmatpush1.msra.mxu0 %v569
        %5050 = vmatprep.subr.mxu0 0.0
        %5051 = vmatpush1.msra.mxu0 %v568
        %5052 = vmatprep.subr.mxu0 0.0
        %5053 = vmatpush1.msra.mxu0 %v567
        %5054 = vmatprep.subr.mxu0 0.0
        %5055 = vmatpush1.msra.mxu0 %v566
        %5056 = vmatprep.subr.mxu0 0.0
        %5057 = vmatpush1.msra.mxu0 %v565
        %5058 = vmatprep.subr.mxu0 0.0
        %5059 = vmatpush1.msra.mxu0 %v564
        %5060 = vmatprep.subr.mxu0 0.0
        %5061 = vmatpush1.msra.mxu0 %v563
        %5062 = vmatprep.subr.mxu0 0.0
        %5063 = vmatpush1.msra.mxu0 %v562
        %5064 = vmatprep.subr.mxu0 0.0
        %5065 = vmatpush2.msra.mxu0 %v593
        %5066 = vmatprep.subr.mxu0 0.0
        %5067 = vmatpush2.msra.mxu0 %v592
        %5068 = vmatprep.subr.mxu0 0.0
        %5069 = vmatpush2.msra.mxu0 %v591
        %5070 = vmatprep.subr.mxu0 0.0
        %5071 = vmatpush2.msra.mxu0 %v590
        %5072 = vmatprep.subr.mxu0 0.0
        %5073 = vmatpush2.msra.mxu0 %v589
        %5074 = vmatprep.subr.mxu0 0.0
        %5075 = vmatpush2.msra.mxu0 %v588
        %5076 = vmatprep.subr.mxu0 0.0
        %5077 = vmatpush2.msra.mxu0 %v587
        %5078 = vmatprep.subr.mxu0 0.0
        %5079 = vmatpush2.msra.mxu0 %v586
        %5080 = vmatprep.subr.mxu0 0.0
        %5081 = vmatpush2.msra.mxu0 %v585
        %5082 = vmatprep.subr.mxu0 0.0
        %5083 = vmatpush2.msra.mxu0 %v584
        %5084 = vmatprep.subr.mxu0 0.0
        %5085 = vmatpush2.msra.mxu0 %v583
        %5086 = vmatprep.subr.mxu0 0.0
        %5087 = vmatpush2.msra.mxu0 %v582
        %5088 = vmatprep.subr.mxu0 0.0
        %5089 = vmatpush2.msra.mxu0 %v581
        %5090 = vmatprep.subr.mxu0 0.0
        %5091 = vmatpush2.msra.mxu0 %v580
        %5092 = vmatprep.subr.mxu0 0.0
        %5093 = vmatpush2.msra.mxu0 %v579
        %5094 = vmatprep.subr.mxu0 0.0
        %5095 = vmatpush2.msra.mxu0 %v578
        %5096 = vmatprep.mubr.f32.mxu0 %v3478
        %5097 = vmatmul.mubr.f32.gmra.mxu0 %v3476
        %v5098 = vpop.f32.mrf.mxu0
        %v5099 = vadd.f32 %v5029, %v5098
        %v5100 = vpop.f32.mrf.mxu0
        %5101 = vdwg.mxu0
        %5102 = vmatprep.subr.mxu0 0.0
        %5103 = vmatpush1.msra.mxu0 %v609
        %5104 = vmatprep.subr.mxu0 0.0
        %5105 = vmatpush1.msra.mxu0 %v608
        %5106 = vmatprep.subr.mxu0 0.0
        %5107 = vmatpush1.msra.mxu0 %v607
        %5108 = vmatprep.subr.mxu0 0.0
        %5109 = vmatpush1.msra.mxu0 %v606
        %5110 = vmatprep.subr.mxu0 0.0
        %5111 = vmatpush1.msra.mxu0 %v605
        %5112 = vmatprep.subr.mxu0 0.0
        %5113 = vmatpush1.msra.mxu0 %v604
        %5114 = vmatprep.subr.mxu0 0.0
        %5115 = vmatpush1.msra.mxu0 %v603
        %5116 = vmatprep.subr.mxu0 0.0
        %5117 = vmatpush1.msra.mxu0 %v602
        %5118 = vmatprep.subr.mxu0 0.0
        %5119 = vmatpush1.msra.mxu0 %v601
        %5120 = vmatprep.subr.mxu0 0.0
        %5121 = vmatpush1.msra.mxu0 %v600
        %5122 = vmatprep.subr.mxu0 0.0
        %5123 = vmatpush1.msra.mxu0 %v599
        %5124 = vmatprep.subr.mxu0 0.0
        %5125 = vmatpush1.msra.mxu0 %v598
        %5126 = vmatprep.subr.mxu0 0.0
        %5127 = vmatpush1.msra.mxu0 %v597
        %5128 = vmatprep.subr.mxu0 0.0
        %5129 = vmatpush1.msra.mxu0 %v596
        %5130 = vmatprep.subr.mxu0 0.0
        %5131 = vmatpush1.msra.mxu0 %v595
        %5132 = vmatprep.subr.mxu0 0.0
        %5133 = vmatpush1.msra.mxu0 %v594
        %5134 = vmatprep.subr.mxu0 0.0
        %5135 = vmatpush2.msra.mxu0 %v625
        %5136 = vmatprep.subr.mxu0 0.0
        %5137 = vmatpush2.msra.mxu0 %v624
        %5138 = vmatprep.subr.mxu0 0.0
        %5139 = vmatpush2.msra.mxu0 %v623
        %5140 = vmatprep.subr.mxu0 0.0
        %5141 = vmatpush2.msra.mxu0 %v622
        %5142 = vmatprep.subr.mxu0 0.0
        %5143 = vmatpush2.msra.mxu0 %v621
        %5144 = vmatprep.subr.mxu0 0.0
        %5145 = vmatpush2.msra.mxu0 %v620
        %5146 = vmatprep.subr.mxu0 0.0
        %5147 = vmatpush2.msra.mxu0 %v619
        %5148 = vmatprep.subr.mxu0 0.0
        %5149 = vmatpush2.msra.mxu0 %v618
        %5150 = vmatprep.subr.mxu0 0.0
        %5151 = vmatpush2.msra.mxu0 %v617
        %5152 = vmatprep.subr.mxu0 0.0
        %5153 = vmatpush2.msra.mxu0 %v616
        %5154 = vmatprep.subr.mxu0 0.0
        %5155 = vmatpush2.msra.mxu0 %v615
        %5156 = vmatprep.subr.mxu0 0.0
        %5157 = vmatpush2.msra.mxu0 %v614
        %5158 = vmatprep.subr.mxu0 0.0
        %5159 = vmatpush2.msra.mxu0 %v613
        %5160 = vmatprep.subr.mxu0 0.0
        %5161 = vmatpush2.msra.mxu0 %v612
        %5162 = vmatprep.subr.mxu0 0.0
        %5163 = vmatpush2.msra.mxu0 %v611
        %5164 = vmatprep.subr.mxu0 0.0
        %5165 = vmatpush2.msra.mxu0 %v610
        %5166 = vmatprep.mubr.f32.mxu0 %v3494
        %5167 = vmatmul.mubr.f32.gmra.mxu0 %v3486
        %v5168 = vpop.f32.mrf.mxu0
        %v5169 = vadd.f32 %v5099, %v5168
        %v5170 = vpop.f32.mrf.mxu0
        %5171 = vdwg.mxu0
        %5172 = vmatprep.subr.mxu0 0.0
        %5173 = vmatpush1.msra.mxu0 %v641
        %5174 = vmatprep.subr.mxu0 0.0
        %5175 = vmatpush1.msra.mxu0 %v640
        %5176 = vmatprep.subr.mxu0 0.0
        %5177 = vmatpush1.msra.mxu0 %v639
        %5178 = vmatprep.subr.mxu0 0.0
        %5179 = vmatpush1.msra.mxu0 %v638
        %5180 = vmatprep.subr.mxu0 0.0
        %5181 = vmatpush1.msra.mxu0 %v637
        %5182 = vmatprep.subr.mxu0 0.0
        %5183 = vmatpush1.msra.mxu0 %v636
        %5184 = vmatprep.subr.mxu0 0.0
        %5185 = vmatpush1.msra.mxu0 %v635
        %5186 = vmatprep.subr.mxu0 0.0
        %5187 = vmatpush1.msra.mxu0 %v634
        %5188 = vmatprep.subr.mxu0 0.0
        %5189 = vmatpush1.msra.mxu0 %v633
        %5190 = vmatprep.subr.mxu0 0.0
        %5191 = vmatpush1.msra.mxu0 %v632
        %5192 = vmatprep.subr.mxu0 0.0
        %5193 = vmatpush1.msra.mxu0 %v631
        %5194 = vmatprep.subr.mxu0 0.0
        %5195 = vmatpush1.msra.mxu0 %v630
        %5196 = vmatprep.subr.mxu0 0.0
        %5197 = vmatpush1.msra.mxu0 %v629
        %5198 = vmatprep.subr.mxu0 0.0
        %5199 = vmatpush1.msra.mxu0 %v628
        %5200 = vmatprep.subr.mxu0 0.0
        %5201 = vmatpush1.msra.mxu0 %v627
        %5202 = vmatprep.subr.mxu0 0.0
        %5203 = vmatpush1.msra.mxu0 %v626
        %5204 = vmatprep.subr.mxu0 0.0
        %5205 = vmatpush2.msra.mxu0 %v657
        %5206 = vmatprep.subr.mxu0 0.0
        %5207 = vmatpush2.msra.mxu0 %v656
        %5208 = vmatprep.subr.mxu0 0.0
        %5209 = vmatpush2.msra.mxu0 %v655
        %5210 = vmatprep.subr.mxu0 0.0
        %5211 = vmatpush2.msra.mxu0 %v654
        %5212 = vmatprep.subr.mxu0 0.0
        %5213 = vmatpush2.msra.mxu0 %v653
        %5214 = vmatprep.subr.mxu0 0.0
        %5215 = vmatpush2.msra.mxu0 %v652
        %5216 = vmatprep.subr.mxu0 0.0
        %5217 = vmatpush2.msra.mxu0 %v651
        %5218 = vmatprep.subr.mxu0 0.0
        %5219 = vmatpush2.msra.mxu0 %v650
        %5220 = vmatprep.subr.mxu0 0.0
        %5221 = vmatpush2.msra.mxu0 %v649
        %5222 = vmatprep.subr.mxu0 0.0
        %5223 = vmatpush2.msra.mxu0 %v648
        %5224 = vmatprep.subr.mxu0 0.0
        %5225 = vmatpush2.msra.mxu0 %v647
        %5226 = vmatprep.subr.mxu0 0.0
        %5227 = vmatpush2.msra.mxu0 %v646
        %5228 = vmatprep.subr.mxu0 0.0
        %5229 = vmatpush2.msra.mxu0 %v645
        %5230 = vmatprep.subr.mxu0 0.0
        %5231 = vmatpush2.msra.mxu0 %v644
        %5232 = vmatprep.subr.mxu0 0.0
        %5233 = vmatpush2.msra.mxu0 %v643
        %5234 = vmatprep.subr.mxu0 0.0
        %5235 = vmatpush2.msra.mxu0 %v642
        %5236 = vmatprep.mubr.f32.mxu0 %v3495
        %5237 = vmatmul.mubr.f32.gmra.mxu0 %v3493
        %v5238 = vpop.f32.mrf.mxu0
        %v5239 = vadd.f32 %v5169, %v5238
        %v5240 = vpop.f32.mrf.mxu0
        %5241 = vdwg.mxu0
        %5242 = vmatprep.subr.mxu0 0.0
        %5243 = vmatpush1.msra.mxu0 %v673
        %5244 = vmatprep.subr.mxu0 0.0
        %5245 = vmatpush1.msra.mxu0 %v672
        %5246 = vmatprep.subr.mxu0 0.0
        %5247 = vmatpush1.msra.mxu0 %v671
        %5248 = vmatprep.subr.mxu0 0.0
        %5249 = vmatpush1.msra.mxu0 %v670
        %5250 = vmatprep.subr.mxu0 0.0
        %5251 = vmatpush1.msra.mxu0 %v669
        %5252 = vmatprep.subr.mxu0 0.0
        %5253 = vmatpush1.msra.mxu0 %v668
        %5254 = vmatprep.subr.mxu0 0.0
        %5255 = vmatpush1.msra.mxu0 %v667
        %5256 = vmatprep.subr.mxu0 0.0
        %5257 = vmatpush1.msra.mxu0 %v666
        %5258 = vmatprep.subr.mxu0 0.0
        %5259 = vmatpush1.msra.mxu0 %v665
        %5260 = vmatprep.subr.mxu0 0.0
        %5261 = vmatpush1.msra.mxu0 %v664
        %5262 = vmatprep.subr.mxu0 0.0
        %5263 = vmatpush1.msra.mxu0 %v663
        %5264 = vmatprep.subr.mxu0 0.0
        %5265 = vmatpush1.msra.mxu0 %v662
        %5266 = vmatprep.subr.mxu0 0.0
        %5267 = vmatpush1.msra.mxu0 %v661
        %5268 = vmatprep.subr.mxu0 0.0
        %5269 = vmatpush1.msra.mxu0 %v660
        %5270 = vmatprep.subr.mxu0 0.0
        %5271 = vmatpush1.msra.mxu0 %v659
        %5272 = vmatprep.subr.mxu0 0.0
        %5273 = vmatpush1.msra.mxu0 %v658
        %5274 = vmatprep.subr.mxu0 0.0
        %5275 = vmatpush2.msra.mxu0 %v689
        %5276 = vmatprep.subr.mxu0 0.0
        %5277 = vmatpush2.msra.mxu0 %v688
        %5278 = vmatprep.subr.mxu0 0.0
        %5279 = vmatpush2.msra.mxu0 %v687
        %5280 = vmatprep.subr.mxu0 0.0
        %5281 = vmatpush2.msra.mxu0 %v686
        %5282 = vmatprep.subr.mxu0 0.0
        %5283 = vmatpush2.msra.mxu0 %v685
        %5284 = vmatprep.subr.mxu0 0.0
        %5285 = vmatpush2.msra.mxu0 %v684
        %5286 = vmatprep.subr.mxu0 0.0
        %5287 = vmatpush2.msra.mxu0 %v683
        %5288 = vmatprep.subr.mxu0 0.0
        %5289 = vmatpush2.msra.mxu0 %v682
        %5290 = vmatprep.subr.mxu0 0.0
        %5291 = vmatpush2.msra.mxu0 %v681
        %5292 = vmatprep.subr.mxu0 0.0
        %5293 = vmatpush2.msra.mxu0 %v680
        %5294 = vmatprep.subr.mxu0 0.0
        %5295 = vmatpush2.msra.mxu0 %v679
        %5296 = vmatprep.subr.mxu0 0.0
        %5297 = vmatpush2.msra.mxu0 %v678
        %5298 = vmatprep.subr.mxu0 0.0
        %5299 = vmatpush2.msra.mxu0 %v677
        %5300 = vmatprep.subr.mxu0 0.0
        %5301 = vmatpush2.msra.mxu0 %v676
        %5302 = vmatprep.subr.mxu0 0.0
        %5303 = vmatpush2.msra.mxu0 %v675
        %5304 = vmatprep.subr.mxu0 0.0
        %5305 = vmatpush2.msra.mxu0 %v674
        %5306 = vmatprep.mubr.f32.mxu0 %v3511
        %5307 = vmatmul.mubr.f32.gmra.mxu0 %v3503
        %v5308 = vpop.f32.mrf.mxu0
        %v5309 = vadd.f32 %v5239, %v5308
        %v5310 = vpop.f32.mrf.mxu0
        %5311 = vdwg.mxu0
        %5312 = vmatprep.subr.mxu0 0.0
        %5313 = vmatpush1.msra.mxu0 %v705
        %5314 = vmatprep.subr.mxu0 0.0
        %5315 = vmatpush1.msra.mxu0 %v704
        %5316 = vmatprep.subr.mxu0 0.0
        %5317 = vmatpush1.msra.mxu0 %v703
        %5318 = vmatprep.subr.mxu0 0.0
        %5319 = vmatpush1.msra.mxu0 %v702
        %5320 = vmatprep.subr.mxu0 0.0
        %5321 = vmatpush1.msra.mxu0 %v701
        %5322 = vmatprep.subr.mxu0 0.0
        %5323 = vmatpush1.msra.mxu0 %v700
        %5324 = vmatprep.subr.mxu0 0.0
        %5325 = vmatpush1.msra.mxu0 %v699
        %5326 = vmatprep.subr.mxu0 0.0
        %5327 = vmatpush1.msra.mxu0 %v698
        %5328 = vmatprep.subr.mxu0 0.0
        %5329 = vmatpush1.msra.mxu0 %v697
        %5330 = vmatprep.subr.mxu0 0.0
        %5331 = vmatpush1.msra.mxu0 %v696
        %5332 = vmatprep.subr.mxu0 0.0
        %5333 = vmatpush1.msra.mxu0 %v695
        %5334 = vmatprep.subr.mxu0 0.0
        %5335 = vmatpush1.msra.mxu0 %v694
        %5336 = vmatprep.subr.mxu0 0.0
        %5337 = vmatpush1.msra.mxu0 %v693
        %5338 = vmatprep.subr.mxu0 0.0
        %5339 = vmatpush1.msra.mxu0 %v692
        %5340 = vmatprep.subr.mxu0 0.0
        %5341 = vmatpush1.msra.mxu0 %v691
        %5342 = vmatprep.subr.mxu0 0.0
        %5343 = vmatpush1.msra.mxu0 %v690
        %5344 = vmatprep.subr.mxu0 0.0
        %5345 = vmatpush2.msra.mxu0 %v721
        %5346 = vmatprep.subr.mxu0 0.0
        %5347 = vmatpush2.msra.mxu0 %v720
        %5348 = vmatprep.subr.mxu0 0.0
        %5349 = vmatpush2.msra.mxu0 %v719
        %5350 = vmatprep.subr.mxu0 0.0
        %5351 = vmatpush2.msra.mxu0 %v718
        %5352 = vmatprep.subr.mxu0 0.0
        %5353 = vmatpush2.msra.mxu0 %v717
        %5354 = vmatprep.subr.mxu0 0.0
        %5355 = vmatpush2.msra.mxu0 %v716
        %5356 = vmatprep.subr.mxu0 0.0
        %5357 = vmatpush2.msra.mxu0 %v715
        %5358 = vmatprep.subr.mxu0 0.0
        %5359 = vmatpush2.msra.mxu0 %v714
        %5360 = vmatprep.subr.mxu0 0.0
        %5361 = vmatpush2.msra.mxu0 %v713
        %5362 = vmatprep.subr.mxu0 0.0
        %5363 = vmatpush2.msra.mxu0 %v712
        %5364 = vmatprep.subr.mxu0 0.0
        %5365 = vmatpush2.msra.mxu0 %v711
        %5366 = vmatprep.subr.mxu0 0.0
        %5367 = vmatpush2.msra.mxu0 %v710
        %5368 = vmatprep.subr.mxu0 0.0
        %5369 = vmatpush2.msra.mxu0 %v709
        %5370 = vmatprep.subr.mxu0 0.0
        %5371 = vmatpush2.msra.mxu0 %v708
        %5372 = vmatprep.subr.mxu0 0.0
        %5373 = vmatpush2.msra.mxu0 %v707
        %5374 = vmatprep.subr.mxu0 0.0
        %5375 = vmatpush2.msra.mxu0 %v706
        %5376 = vmatprep.mubr.f32.mxu0 %v3512
        %5377 = vmatmul.mubr.f32.gmra.mxu0 %v3510
        %v5378 = vpop.f32.mrf.mxu0
        %v5379 = vadd.f32 %v5309, %v5378
        %v5380 = vpop.f32.mrf.mxu0
        %5381 = vdwg.mxu0
        %5382 = vmatprep.subr.mxu0 0.0
        %5383 = vmatpush1.msra.mxu0 %v737
        %5384 = vmatprep.subr.mxu0 0.0
        %5385 = vmatpush1.msra.mxu0 %v736
        %5386 = vmatprep.subr.mxu0 0.0
        %5387 = vmatpush1.msra.mxu0 %v735
        %5388 = vmatprep.subr.mxu0 0.0
        %5389 = vmatpush1.msra.mxu0 %v734
        %5390 = vmatprep.subr.mxu0 0.0
        %5391 = vmatpush1.msra.mxu0 %v733
        %5392 = vmatprep.subr.mxu0 0.0
        %5393 = vmatpush1.msra.mxu0 %v732
        %5394 = vmatprep.subr.mxu0 0.0
        %5395 = vmatpush1.msra.mxu0 %v731
        %5396 = vmatprep.subr.mxu0 0.0
        %5397 = vmatpush1.msra.mxu0 %v730
        %5398 = vmatprep.subr.mxu0 0.0
        %5399 = vmatpush1.msra.mxu0 %v729
        %5400 = vmatprep.subr.mxu0 0.0
        %5401 = vmatpush1.msra.mxu0 %v728
        %5402 = vmatprep.subr.mxu0 0.0
        %5403 = vmatpush1.msra.mxu0 %v727
        %5404 = vmatprep.subr.mxu0 0.0
        %5405 = vmatpush1.msra.mxu0 %v726
        %5406 = vmatprep.subr.mxu0 0.0
        %5407 = vmatpush1.msra.mxu0 %v725
        %5408 = vmatprep.subr.mxu0 0.0
        %5409 = vmatpush1.msra.mxu0 %v724
        %5410 = vmatprep.subr.mxu0 0.0
        %5411 = vmatpush1.msra.mxu0 %v723
        %5412 = vmatprep.subr.mxu0 0.0
        %5413 = vmatpush1.msra.mxu0 %v722
        %5414 = vmatprep.subr.mxu0 0.0
        %5415 = vmatpush2.msra.mxu0 %v753
        %5416 = vmatprep.subr.mxu0 0.0
        %5417 = vmatpush2.msra.mxu0 %v752
        %5418 = vmatprep.subr.mxu0 0.0
        %5419 = vmatpush2.msra.mxu0 %v751
        %5420 = vmatprep.subr.mxu0 0.0
        %5421 = vmatpush2.msra.mxu0 %v750
        %5422 = vmatprep.subr.mxu0 0.0
        %5423 = vmatpush2.msra.mxu0 %v749
        %5424 = vmatprep.subr.mxu0 0.0
        %5425 = vmatpush2.msra.mxu0 %v748
        %5426 = vmatprep.subr.mxu0 0.0
        %5427 = vmatpush2.msra.mxu0 %v747
        %5428 = vmatprep.subr.mxu0 0.0
        %5429 = vmatpush2.msra.mxu0 %v746
        %5430 = vmatprep.subr.mxu0 0.0
        %5431 = vmatpush2.msra.mxu0 %v745
        %5432 = vmatprep.subr.mxu0 0.0
        %5433 = vmatpush2.msra.mxu0 %v744
        %5434 = vmatprep.subr.mxu0 0.0
        %5435 = vmatpush2.msra.mxu0 %v743
        %5436 = vmatprep.subr.mxu0 0.0
        %5437 = vmatpush2.msra.mxu0 %v742
        %5438 = vmatprep.subr.mxu0 0.0
        %5439 = vmatpush2.msra.mxu0 %v741
        %5440 = vmatprep.subr.mxu0 0.0
        %5441 = vmatpush2.msra.mxu0 %v740
        %5442 = vmatprep.subr.mxu0 0.0
        %5443 = vmatpush2.msra.mxu0 %v739
        %5444 = vmatprep.subr.mxu0 0.0
        %5445 = vmatpush2.msra.mxu0 %v738
        %5446 = vmatprep.mubr.f32.mxu0 %v3528
        %5447 = vmatmul.mubr.f32.gmra.mxu0 %v3520
        %v5448 = vpop.f32.mrf.mxu0
        %v5449 = vadd.f32 %v5379, %v5448
        %v5450 = vpop.f32.mrf.mxu0
        %5451 = vdwg.mxu0
        %5452 = vmatprep.subr.mxu0 0.0
        %5453 = vmatpush1.msra.mxu0 %v769
        %5454 = vmatprep.subr.mxu0 0.0
        %5455 = vmatpush1.msra.mxu0 %v768
        %5456 = vmatprep.subr.mxu0 0.0
        %5457 = vmatpush1.msra.mxu0 %v767
        %5458 = vmatprep.subr.mxu0 0.0
        %5459 = vmatpush1.msra.mxu0 %v766
        %5460 = vmatprep.subr.mxu0 0.0
        %5461 = vmatpush1.msra.mxu0 %v765
        %5462 = vmatprep.subr.mxu0 0.0
        %5463 = vmatpush1.msra.mxu0 %v764
        %5464 = vmatprep.subr.mxu0 0.0
        %5465 = vmatpush1.msra.mxu0 %v763
        %5466 = vmatprep.subr.mxu0 0.0
        %5467 = vmatpush1.msra.mxu0 %v762
        %5468 = vmatprep.subr.mxu0 0.0
        %5469 = vmatpush1.msra.mxu0 %v761
        %5470 = vmatprep.subr.mxu0 0.0
        %5471 = vmatpush1.msra.mxu0 %v760
        %5472 = vmatprep.subr.mxu0 0.0
        %5473 = vmatpush1.msra.mxu0 %v759
        %5474 = vmatprep.subr.mxu0 0.0
        %5475 = vmatpush1.msra.mxu0 %v758
        %5476 = vmatprep.subr.mxu0 0.0
        %5477 = vmatpush1.msra.mxu0 %v757
        %5478 = vmatprep.subr.mxu0 0.0
        %5479 = vmatpush1.msra.mxu0 %v756
        %5480 = vmatprep.subr.mxu0 0.0
        %5481 = vmatpush1.msra.mxu0 %v755
        %5482 = vmatprep.subr.mxu0 0.0
        %5483 = vmatpush1.msra.mxu0 %v754
        %5484 = vmatprep.subr.mxu0 0.0
        %5485 = vmatpush2.msra.mxu0 %v785
        %5486 = vmatprep.subr.mxu0 0.0
        %5487 = vmatpush2.msra.mxu0 %v784
        %5488 = vmatprep.subr.mxu0 0.0
        %5489 = vmatpush2.msra.mxu0 %v783
        %5490 = vmatprep.subr.mxu0 0.0
        %5491 = vmatpush2.msra.mxu0 %v782
        %5492 = vmatprep.subr.mxu0 0.0
        %5493 = vmatpush2.msra.mxu0 %v781
        %5494 = vmatprep.subr.mxu0 0.0
        %5495 = vmatpush2.msra.mxu0 %v780
        %5496 = vmatprep.subr.mxu0 0.0
        %5497 = vmatpush2.msra.mxu0 %v779
        %5498 = vmatprep.subr.mxu0 0.0
        %5499 = vmatpush2.msra.mxu0 %v778
        %5500 = vmatprep.subr.mxu0 0.0
        %5501 = vmatpush2.msra.mxu0 %v777
        %5502 = vmatprep.subr.mxu0 0.0
        %5503 = vmatpush2.msra.mxu0 %v776
        %5504 = vmatprep.subr.mxu0 0.0
        %5505 = vmatpush2.msra.mxu0 %v775
        %5506 = vmatprep.subr.mxu0 0.0
        %5507 = vmatpush2.msra.mxu0 %v774
        %5508 = vmatprep.subr.mxu0 0.0
        %5509 = vmatpush2.msra.mxu0 %v773
        %5510 = vmatprep.subr.mxu0 0.0
        %5511 = vmatpush2.msra.mxu0 %v772
        %5512 = vmatprep.subr.mxu0 0.0
        %5513 = vmatpush2.msra.mxu0 %v771
        %5514 = vmatprep.subr.mxu0 0.0
        %5515 = vmatpush2.msra.mxu0 %v770
        %5516 = vmatprep.mubr.f32.mxu0 %v3529
        %5517 = vmatmul.mubr.f32.gmra.mxu0 %v3527
        %v5518 = vpop.f32.mrf.mxu0
        %v5519 = vadd.f32 %v5449, %v5518
        %v5520 = vpop.f32.mrf.mxu0
        %5521 = vdwg.mxu0
        %5522 = vmatprep.subr.mxu0 0.0
        %5523 = vmatpush1.msra.mxu0 %v801
        %5524 = vmatprep.subr.mxu0 0.0
        %5525 = vmatpush1.msra.mxu0 %v800
        %5526 = vmatprep.subr.mxu0 0.0
        %5527 = vmatpush1.msra.mxu0 %v799
        %5528 = vmatprep.subr.mxu0 0.0
        %5529 = vmatpush1.msra.mxu0 %v798
        %5530 = vmatprep.subr.mxu0 0.0
        %5531 = vmatpush1.msra.mxu0 %v797
        %5532 = vmatprep.subr.mxu0 0.0
        %5533 = vmatpush1.msra.mxu0 %v796
        %5534 = vmatprep.subr.mxu0 0.0
        %5535 = vmatpush1.msra.mxu0 %v795
        %5536 = vmatprep.subr.mxu0 0.0
        %5537 = vmatpush1.msra.mxu0 %v794
        %5538 = vmatprep.subr.mxu0 0.0
        %5539 = vmatpush1.msra.mxu0 %v793
        %5540 = vmatprep.subr.mxu0 0.0
        %5541 = vmatpush1.msra.mxu0 %v792
        %5542 = vmatprep.subr.mxu0 0.0
        %5543 = vmatpush1.msra.mxu0 %v791
        %5544 = vmatprep.subr.mxu0 0.0
        %5545 = vmatpush1.msra.mxu0 %v790
        %5546 = vmatprep.subr.mxu0 0.0
        %5547 = vmatpush1.msra.mxu0 %v789
        %5548 = vmatprep.subr.mxu0 0.0
        %5549 = vmatpush1.msra.mxu0 %v788
        %5550 = vmatprep.subr.mxu0 0.0
        %5551 = vmatpush1.msra.mxu0 %v787
        %5552 = vmatprep.subr.mxu0 0.0
        %5553 = vmatpush1.msra.mxu0 %v786
        %5554 = vmatprep.subr.mxu0 0.0
        %5555 = vmatpush2.msra.mxu0 %v817
        %5556 = vmatprep.subr.mxu0 0.0
        %5557 = vmatpush2.msra.mxu0 %v816
        %5558 = vmatprep.subr.mxu0 0.0
        %5559 = vmatpush2.msra.mxu0 %v815
        %5560 = vmatprep.subr.mxu0 0.0
        %5561 = vmatpush2.msra.mxu0 %v814
        %5562 = vmatprep.subr.mxu0 0.0
        %5563 = vmatpush2.msra.mxu0 %v813
        %5564 = vmatprep.subr.mxu0 0.0
        %5565 = vmatpush2.msra.mxu0 %v812
        %5566 = vmatprep.subr.mxu0 0.0
        %5567 = vmatpush2.msra.mxu0 %v811
        %5568 = vmatprep.subr.mxu0 0.0
        %5569 = vmatpush2.msra.mxu0 %v810
        %5570 = vmatprep.subr.mxu0 0.0
        %5571 = vmatpush2.msra.mxu0 %v809
        %5572 = vmatprep.subr.mxu0 0.0
        %5573 = vmatpush2.msra.mxu0 %v808
        %5574 = vmatprep.subr.mxu0 0.0
        %5575 = vmatpush2.msra.mxu0 %v807
        %5576 = vmatprep.subr.mxu0 0.0
        %5577 = vmatpush2.msra.mxu0 %v806
        %5578 = vmatprep.subr.mxu0 0.0
        %5579 = vmatpush2.msra.mxu0 %v805
        %5580 = vmatprep.subr.mxu0 0.0
        %5581 = vmatpush2.msra.mxu0 %v804
        %5582 = vmatprep.subr.mxu0 0.0
        %5583 = vmatpush2.msra.mxu0 %v803
        %5584 = vmatprep.subr.mxu0 0.0
        %5585 = vmatpush2.msra.mxu0 %v802
        %5586 = vmatprep.mubr.f32.mxu0 %v3545
        %5587 = vmatmul.mubr.f32.gmra.mxu0 %v3537
        %v5588 = vpop.f32.mrf.mxu0
        %v5589 = vadd.f32 %v5519, %v5588
        %v5590 = vpop.f32.mrf.mxu0
        %5591 = vdwg.mxu0
        %5592 = vmatprep.subr.mxu0 0.0
        %5593 = vmatpush1.msra.mxu0 %v833
        %5594 = vmatprep.subr.mxu0 0.0
        %5595 = vmatpush1.msra.mxu0 %v832
        %5596 = vmatprep.subr.mxu0 0.0
        %5597 = vmatpush1.msra.mxu0 %v831
        %5598 = vmatprep.subr.mxu0 0.0
        %5599 = vmatpush1.msra.mxu0 %v830
        %5600 = vmatprep.subr.mxu0 0.0
        %5601 = vmatpush1.msra.mxu0 %v829
        %5602 = vmatprep.subr.mxu0 0.0
        %5603 = vmatpush1.msra.mxu0 %v828
        %5604 = vmatprep.subr.mxu0 0.0
        %5605 = vmatpush1.msra.mxu0 %v827
        %5606 = vmatprep.subr.mxu0 0.0
        %5607 = vmatpush1.msra.mxu0 %v826
        %5608 = vmatprep.subr.mxu0 0.0
        %5609 = vmatpush1.msra.mxu0 %v825
        %5610 = vmatprep.subr.mxu0 0.0
        %5611 = vmatpush1.msra.mxu0 %v824
        %5612 = vmatprep.subr.mxu0 0.0
        %5613 = vmatpush1.msra.mxu0 %v823
        %5614 = vmatprep.subr.mxu0 0.0
        %5615 = vmatpush1.msra.mxu0 %v822
        %5616 = vmatprep.subr.mxu0 0.0
        %5617 = vmatpush1.msra.mxu0 %v821
        %5618 = vmatprep.subr.mxu0 0.0
        %5619 = vmatpush1.msra.mxu0 %v820
        %5620 = vmatprep.subr.mxu0 0.0
        %5621 = vmatpush1.msra.mxu0 %v819
        %5622 = vmatprep.subr.mxu0 0.0
        %5623 = vmatpush1.msra.mxu0 %v818
        %5624 = vmatprep.subr.mxu0 0.0
        %5625 = vmatpush2.msra.mxu0 %v849
        %5626 = vmatprep.subr.mxu0 0.0
        %5627 = vmatpush2.msra.mxu0 %v848
        %5628 = vmatprep.subr.mxu0 0.0
        %5629 = vmatpush2.msra.mxu0 %v847
        %5630 = vmatprep.subr.mxu0 0.0
        %5631 = vmatpush2.msra.mxu0 %v846
        %5632 = vmatprep.subr.mxu0 0.0
        %5633 = vmatpush2.msra.mxu0 %v845
        %5634 = vmatprep.subr.mxu0 0.0
        %5635 = vmatpush2.msra.mxu0 %v844
        %5636 = vmatprep.subr.mxu0 0.0
        %5637 = vmatpush2.msra.mxu0 %v843
        %5638 = vmatprep.subr.mxu0 0.0
        %5639 = vmatpush2.msra.mxu0 %v842
        %5640 = vmatprep.subr.mxu0 0.0
        %5641 = vmatpush2.msra.mxu0 %v841
        %5642 = vmatprep.subr.mxu0 0.0
        %5643 = vmatpush2.msra.mxu0 %v840
        %5644 = vmatprep.subr.mxu0 0.0
        %5645 = vmatpush2.msra.mxu0 %v839
        %5646 = vmatprep.subr.mxu0 0.0
        %5647 = vmatpush2.msra.mxu0 %v838
        %5648 = vmatprep.subr.mxu0 0.0
        %5649 = vmatpush2.msra.mxu0 %v837
        %5650 = vmatprep.subr.mxu0 0.0
        %5651 = vmatpush2.msra.mxu0 %v836
        %5652 = vmatprep.subr.mxu0 0.0
        %5653 = vmatpush2.msra.mxu0 %v835
        %5654 = vmatprep.subr.mxu0 0.0
        %5655 = vmatpush2.msra.mxu0 %v834
        %5656 = vmatprep.mubr.f32.mxu0 %v3546
        %5657 = vmatmul.mubr.f32.gmra.mxu0 %v3544
        %v5658 = vpop.f32.mrf.mxu0
        %v5659 = vadd.f32 %v5589, %v5658
        %v5660 = vpop.f32.mrf.mxu0
        %5661 = vdwg.mxu0
        %5662 = vmatprep.subr.mxu0 0.0
        %5663 = vmatpush1.msra.mxu0 %v865
        %5664 = vmatprep.subr.mxu0 0.0
        %5665 = vmatpush1.msra.mxu0 %v864
        %5666 = vmatprep.subr.mxu0 0.0
        %5667 = vmatpush1.msra.mxu0 %v863
        %5668 = vmatprep.subr.mxu0 0.0
        %5669 = vmatpush1.msra.mxu0 %v862
        %5670 = vmatprep.subr.mxu0 0.0
        %5671 = vmatpush1.msra.mxu0 %v861
        %5672 = vmatprep.subr.mxu0 0.0
        %5673 = vmatpush1.msra.mxu0 %v860
        %5674 = vmatprep.subr.mxu0 0.0
        %5675 = vmatpush1.msra.mxu0 %v859
        %5676 = vmatprep.subr.mxu0 0.0
        %5677 = vmatpush1.msra.mxu0 %v858
        %5678 = vmatprep.subr.mxu0 0.0
        %5679 = vmatpush1.msra.mxu0 %v857
        %5680 = vmatprep.subr.mxu0 0.0
        %5681 = vmatpush1.msra.mxu0 %v856
        %5682 = vmatprep.subr.mxu0 0.0
        %5683 = vmatpush1.msra.mxu0 %v855
        %5684 = vmatprep.subr.mxu0 0.0
        %5685 = vmatpush1.msra.mxu0 %v854
        %5686 = vmatprep.subr.mxu0 0.0
        %5687 = vmatpush1.msra.mxu0 %v853
        %5688 = vmatprep.subr.mxu0 0.0
        %5689 = vmatpush1.msra.mxu0 %v852
        %5690 = vmatprep.subr.mxu0 0.0
        %5691 = vmatpush1.msra.mxu0 %v851
        %5692 = vmatprep.subr.mxu0 0.0
        %5693 = vmatpush1.msra.mxu0 %v850
        %5694 = vmatprep.subr.mxu0 0.0
        %5695 = vmatpush2.msra.mxu0 %v881
        %5696 = vmatprep.subr.mxu0 0.0
        %5697 = vmatpush2.msra.mxu0 %v880
        %5698 = vmatprep.subr.mxu0 0.0
        %5699 = vmatpush2.msra.mxu0 %v879
        %5700 = vmatprep.subr.mxu0 0.0
        %5701 = vmatpush2.msra.mxu0 %v878
        %5702 = vmatprep.subr.mxu0 0.0
        %5703 = vmatpush2.msra.mxu0 %v877
        %5704 = vmatprep.subr.mxu0 0.0
        %5705 = vmatpush2.msra.mxu0 %v876
        %5706 = vmatprep.subr.mxu0 0.0
        %5707 = vmatpush2.msra.mxu0 %v875
        %5708 = vmatprep.subr.mxu0 0.0
        %5709 = vmatpush2.msra.mxu0 %v874
        %5710 = vmatprep.subr.mxu0 0.0
        %5711 = vmatpush2.msra.mxu0 %v873
        %5712 = vmatprep.subr.mxu0 0.0
        %5713 = vmatpush2.msra.mxu0 %v872
        %5714 = vmatprep.subr.mxu0 0.0
        %5715 = vmatpush2.msra.mxu0 %v871
        %5716 = vmatprep.subr.mxu0 0.0
        %5717 = vmatpush2.msra.mxu0 %v870
        %5718 = vmatprep.subr.mxu0 0.0
        %5719 = vmatpush2.msra.mxu0 %v869
        %5720 = vmatprep.subr.mxu0 0.0
        %5721 = vmatpush2.msra.mxu0 %v868
        %5722 = vmatprep.subr.mxu0 0.0
        %5723 = vmatpush2.msra.mxu0 %v867
        %5724 = vmatprep.subr.mxu0 0.0
        %5725 = vmatpush2.msra.mxu0 %v866
        %5726 = vmatprep.mubr.f32.mxu0 %v3562
        %5727 = vmatmul.mubr.f32.gmra.mxu0 %v3554
        %v5728 = vpop.f32.mrf.mxu0
        %v5729 = vadd.f32 %v5659, %v5728
        %v5730 = vpop.f32.mrf.mxu0
        %5731 = vdwg.mxu0
        %5732 = vmatprep.subr.mxu0 0.0
        %5733 = vmatpush1.msra.mxu0 %v897
        %5734 = vmatprep.subr.mxu0 0.0
        %5735 = vmatpush1.msra.mxu0 %v896
        %5736 = vmatprep.subr.mxu0 0.0
        %5737 = vmatpush1.msra.mxu0 %v895
        %5738 = vmatprep.subr.mxu0 0.0
        %5739 = vmatpush1.msra.mxu0 %v894
        %5740 = vmatprep.subr.mxu0 0.0
        %5741 = vmatpush1.msra.mxu0 %v893
        %5742 = vmatprep.subr.mxu0 0.0
        %5743 = vmatpush1.msra.mxu0 %v892
        %5744 = vmatprep.subr.mxu0 0.0
        %5745 = vmatpush1.msra.mxu0 %v891
        %5746 = vmatprep.subr.mxu0 0.0
        %5747 = vmatpush1.msra.mxu0 %v890
        %5748 = vmatprep.subr.mxu0 0.0
        %5749 = vmatpush1.msra.mxu0 %v889
        %5750 = vmatprep.subr.mxu0 0.0
        %5751 = vmatpush1.msra.mxu0 %v888
        %5752 = vmatprep.subr.mxu0 0.0
        %5753 = vmatpush1.msra.mxu0 %v887
        %5754 = vmatprep.subr.mxu0 0.0
        %5755 = vmatpush1.msra.mxu0 %v886
        %5756 = vmatprep.subr.mxu0 0.0
        %5757 = vmatpush1.msra.mxu0 %v885
        %5758 = vmatprep.subr.mxu0 0.0
        %5759 = vmatpush1.msra.mxu0 %v884
        %5760 = vmatprep.subr.mxu0 0.0
        %5761 = vmatpush1.msra.mxu0 %v883
        %5762 = vmatprep.subr.mxu0 0.0
        %5763 = vmatpush1.msra.mxu0 %v882
        %5764 = vmatprep.subr.mxu0 0.0
        %5765 = vmatpush2.msra.mxu0 %v913
        %5766 = vmatprep.subr.mxu0 0.0
        %5767 = vmatpush2.msra.mxu0 %v912
        %5768 = vmatprep.subr.mxu0 0.0
        %5769 = vmatpush2.msra.mxu0 %v911
        %5770 = vmatprep.subr.mxu0 0.0
        %5771 = vmatpush2.msra.mxu0 %v910
        %5772 = vmatprep.subr.mxu0 0.0
        %5773 = vmatpush2.msra.mxu0 %v909
        %5774 = vmatprep.subr.mxu0 0.0
        %5775 = vmatpush2.msra.mxu0 %v908
        %5776 = vmatprep.subr.mxu0 0.0
        %5777 = vmatpush2.msra.mxu0 %v907
        %5778 = vmatprep.subr.mxu0 0.0
        %5779 = vmatpush2.msra.mxu0 %v906
        %5780 = vmatprep.subr.mxu0 0.0
        %5781 = vmatpush2.msra.mxu0 %v905
        %5782 = vmatprep.subr.mxu0 0.0
        %5783 = vmatpush2.msra.mxu0 %v904
        %5784 = vmatprep.subr.mxu0 0.0
        %5785 = vmatpush2.msra.mxu0 %v903
        %5786 = vmatprep.subr.mxu0 0.0
        %5787 = vmatpush2.msra.mxu0 %v902
        %5788 = vmatprep.subr.mxu0 0.0
        %5789 = vmatpush2.msra.mxu0 %v901
        %5790 = vmatprep.subr.mxu0 0.0
        %5791 = vmatpush2.msra.mxu0 %v900
        %5792 = vmatprep.subr.mxu0 0.0
        %5793 = vmatpush2.msra.mxu0 %v899
        %5794 = vmatprep.subr.mxu0 0.0
        %5795 = vmatpush2.msra.mxu0 %v898
        %5796 = vmatprep.mubr.f32.mxu0 %v3563
        %5797 = vmatmul.mubr.f32.gmra.mxu0 %v3561
        %v5798 = vpop.f32.mrf.mxu0
        %v5799 = vadd.f32 %v5729, %v5798
        %v5800 = vpop.f32.mrf.mxu0
        %5801 = vdwg.mxu0
        %5802 = vmatprep.subr.mxu0 0.0
        %5803 = vmatpush1.msra.mxu0 %v929
        %5804 = vmatprep.subr.mxu0 0.0
        %5805 = vmatpush1.msra.mxu0 %v928
        %5806 = vmatprep.subr.mxu0 0.0
        %5807 = vmatpush1.msra.mxu0 %v927
        %5808 = vmatprep.subr.mxu0 0.0
        %5809 = vmatpush1.msra.mxu0 %v926
        %5810 = vmatprep.subr.mxu0 0.0
        %5811 = vmatpush1.msra.mxu0 %v925
        %5812 = vmatprep.subr.mxu0 0.0
        %5813 = vmatpush1.msra.mxu0 %v924
        %5814 = vmatprep.subr.mxu0 0.0
        %5815 = vmatpush1.msra.mxu0 %v923
        %5816 = vmatprep.subr.mxu0 0.0
        %5817 = vmatpush1.msra.mxu0 %v922
        %5818 = vmatprep.subr.mxu0 0.0
        %5819 = vmatpush1.msra.mxu0 %v921
        %5820 = vmatprep.subr.mxu0 0.0
        %5821 = vmatpush1.msra.mxu0 %v920
        %5822 = vmatprep.subr.mxu0 0.0
        %5823 = vmatpush1.msra.mxu0 %v919
        %5824 = vmatprep.subr.mxu0 0.0
        %5825 = vmatpush1.msra.mxu0 %v918
        %5826 = vmatprep.subr.mxu0 0.0
        %5827 = vmatpush1.msra.mxu0 %v917
        %5828 = vmatprep.subr.mxu0 0.0
        %5829 = vmatpush1.msra.mxu0 %v916
        %5830 = vmatprep.subr.mxu0 0.0
        %5831 = vmatpush1.msra.mxu0 %v915
        %5832 = vmatprep.subr.mxu0 0.0
        %5833 = vmatpush1.msra.mxu0 %v914
        %5834 = vmatprep.subr.mxu0 0.0
        %5835 = vmatpush2.msra.mxu0 %v945
        %5836 = vmatprep.subr.mxu0 0.0
        %5837 = vmatpush2.msra.mxu0 %v944
        %5838 = vmatprep.subr.mxu0 0.0
        %5839 = vmatpush2.msra.mxu0 %v943
        %5840 = vmatprep.subr.mxu0 0.0
        %5841 = vmatpush2.msra.mxu0 %v942
        %5842 = vmatprep.subr.mxu0 0.0
        %5843 = vmatpush2.msra.mxu0 %v941
        %5844 = vmatprep.subr.mxu0 0.0
        %5845 = vmatpush2.msra.mxu0 %v940
        %5846 = vmatprep.subr.mxu0 0.0
        %5847 = vmatpush2.msra.mxu0 %v939
        %5848 = vmatprep.subr.mxu0 0.0
        %5849 = vmatpush2.msra.mxu0 %v938
        %5850 = vmatprep.subr.mxu0 0.0
        %5851 = vmatpush2.msra.mxu0 %v937
        %5852 = vmatprep.subr.mxu0 0.0
        %5853 = vmatpush2.msra.mxu0 %v936
        %5854 = vmatprep.subr.mxu0 0.0
        %5855 = vmatpush2.msra.mxu0 %v935
        %5856 = vmatprep.subr.mxu0 0.0
        %5857 = vmatpush2.msra.mxu0 %v934
        %5858 = vmatprep.subr.mxu0 0.0
        %5859 = vmatpush2.msra.mxu0 %v933
        %5860 = vmatprep.subr.mxu0 0.0
        %5861 = vmatpush2.msra.mxu0 %v932
        %5862 = vmatprep.subr.mxu0 0.0
        %5863 = vmatpush2.msra.mxu0 %v931
        %5864 = vmatprep.subr.mxu0 0.0
        %5865 = vmatpush2.msra.mxu0 %v930
        %5866 = vmatprep.mubr.f32.mxu0 %v3579
        %5867 = vmatmul.mubr.f32.gmra.mxu0 %v3571
        %v5868 = vpop.f32.mrf.mxu0
        %v5869 = vadd.f32 %v5799, %v5868
        %v5870 = vpop.f32.mrf.mxu0
        %5871 = vdwg.mxu0
        %5872 = vmatprep.subr.mxu0 0.0
        %5873 = vmatpush1.msra.mxu0 %v961
        %5874 = vmatprep.subr.mxu0 0.0
        %5875 = vmatpush1.msra.mxu0 %v960
        %5876 = vmatprep.subr.mxu0 0.0
        %5877 = vmatpush1.msra.mxu0 %v959
        %5878 = vmatprep.subr.mxu0 0.0
        %5879 = vmatpush1.msra.mxu0 %v958
        %5880 = vmatprep.subr.mxu0 0.0
        %5881 = vmatpush1.msra.mxu0 %v957
        %5882 = vmatprep.subr.mxu0 0.0
        %5883 = vmatpush1.msra.mxu0 %v956
        %5884 = vmatprep.subr.mxu0 0.0
        %5885 = vmatpush1.msra.mxu0 %v955
        %5886 = vmatprep.subr.mxu0 0.0
        %5887 = vmatpush1.msra.mxu0 %v954
        %5888 = vmatprep.subr.mxu0 0.0
        %5889 = vmatpush1.msra.mxu0 %v953
        %5890 = vmatprep.subr.mxu0 0.0
        %5891 = vmatpush1.msra.mxu0 %v952
        %5892 = vmatprep.subr.mxu0 0.0
        %5893 = vmatpush1.msra.mxu0 %v951
        %5894 = vmatprep.subr.mxu0 0.0
        %5895 = vmatpush1.msra.mxu0 %v950
        %5896 = vmatprep.subr.mxu0 0.0
        %5897 = vmatpush1.msra.mxu0 %v949
        %5898 = vmatprep.subr.mxu0 0.0
        %5899 = vmatpush1.msra.mxu0 %v948
        %5900 = vmatprep.subr.mxu0 0.0
        %5901 = vmatpush1.msra.mxu0 %v947
        %5902 = vmatprep.subr.mxu0 0.0
        %5903 = vmatpush1.msra.mxu0 %v946
        %5904 = vmatprep.subr.mxu0 0.0
        %5905 = vmatpush2.msra.mxu0 %v977
        %5906 = vmatprep.subr.mxu0 0.0
        %5907 = vmatpush2.msra.mxu0 %v976
        %5908 = vmatprep.subr.mxu0 0.0
        %5909 = vmatpush2.msra.mxu0 %v975
        %5910 = vmatprep.subr.mxu0 0.0
        %5911 = vmatpush2.msra.mxu0 %v974
        %5912 = vmatprep.subr.mxu0 0.0
        %5913 = vmatpush2.msra.mxu0 %v973
        %5914 = vmatprep.subr.mxu0 0.0
        %5915 = vmatpush2.msra.mxu0 %v972
        %5916 = vmatprep.subr.mxu0 0.0
        %5917 = vmatpush2.msra.mxu0 %v971
        %5918 = vmatprep.subr.mxu0 0.0
        %5919 = vmatpush2.msra.mxu0 %v970
        %5920 = vmatprep.subr.mxu0 0.0
        %5921 = vmatpush2.msra.mxu0 %v969
        %5922 = vmatprep.subr.mxu0 0.0
        %5923 = vmatpush2.msra.mxu0 %v968
        %5924 = vmatprep.subr.mxu0 0.0
        %5925 = vmatpush2.msra.mxu0 %v967
        %5926 = vmatprep.subr.mxu0 0.0
        %5927 = vmatpush2.msra.mxu0 %v966
        %5928 = vmatprep.subr.mxu0 0.0
        %5929 = vmatpush2.msra.mxu0 %v965
        %5930 = vmatprep.subr.mxu0 0.0
        %5931 = vmatpush2.msra.mxu0 %v964
        %5932 = vmatprep.subr.mxu0 0.0
        %5933 = vmatpush2.msra.mxu0 %v963
        %5934 = vmatprep.subr.mxu0 0.0
        %5935 = vmatpush2.msra.mxu0 %v962
        %5936 = vmatprep.mubr.f32.mxu0 %v3580
        %5937 = vmatmul.mubr.f32.gmra.mxu0 %v3578
        %v5938 = vpop.f32.mrf.mxu0
        %v5939 = vadd.f32 %v5869, %v5938
        %v5940 = vpop.f32.mrf.mxu0
        %5941 = vdwg.mxu0
        %5942 = vmatprep.subr.mxu0 0.0
        %5943 = vmatpush1.msra.mxu0 %v993
        %5944 = vmatprep.subr.mxu0 0.0
        %5945 = vmatpush1.msra.mxu0 %v992
        %5946 = vmatprep.subr.mxu0 0.0
        %5947 = vmatpush1.msra.mxu0 %v991
        %5948 = vmatprep.subr.mxu0 0.0
        %5949 = vmatpush1.msra.mxu0 %v990
        %5950 = vmatprep.subr.mxu0 0.0
        %5951 = vmatpush1.msra.mxu0 %v989
        %5952 = vmatprep.subr.mxu0 0.0
        %5953 = vmatpush1.msra.mxu0 %v988
        %5954 = vmatprep.subr.mxu0 0.0
        %5955 = vmatpush1.msra.mxu0 %v987
        %5956 = vmatprep.subr.mxu0 0.0
        %5957 = vmatpush1.msra.mxu0 %v986
        %5958 = vmatprep.subr.mxu0 0.0
        %5959 = vmatpush1.msra.mxu0 %v985
        %5960 = vmatprep.subr.mxu0 0.0
        %5961 = vmatpush1.msra.mxu0 %v984
        %5962 = vmatprep.subr.mxu0 0.0
        %5963 = vmatpush1.msra.mxu0 %v983
        %5964 = vmatprep.subr.mxu0 0.0
        %5965 = vmatpush1.msra.mxu0 %v982
        %5966 = vmatprep.subr.mxu0 0.0
        %5967 = vmatpush1.msra.mxu0 %v981
        %5968 = vmatprep.subr.mxu0 0.0
        %5969 = vmatpush1.msra.mxu0 %v980
        %5970 = vmatprep.subr.mxu0 0.0
        %5971 = vmatpush1.msra.mxu0 %v979
        %5972 = vmatprep.subr.mxu0 0.0
        %5973 = vmatpush1.msra.mxu0 %v978
        %5974 = vmatprep.subr.mxu0 0.0
        %5975 = vmatpush2.msra.mxu0 %v1009
        %5976 = vmatprep.subr.mxu0 0.0
        %5977 = vmatpush2.msra.mxu0 %v1008
        %5978 = vmatprep.subr.mxu0 0.0
        %5979 = vmatpush2.msra.mxu0 %v1007
        %5980 = vmatprep.subr.mxu0 0.0
        %5981 = vmatpush2.msra.mxu0 %v1006
        %5982 = vmatprep.subr.mxu0 0.0
        %5983 = vmatpush2.msra.mxu0 %v1005
        %5984 = vmatprep.subr.mxu0 0.0
        %5985 = vmatpush2.msra.mxu0 %v1004
        %5986 = vmatprep.subr.mxu0 0.0
        %5987 = vmatpush2.msra.mxu0 %v1003
        %5988 = vmatprep.subr.mxu0 0.0
        %5989 = vmatpush2.msra.mxu0 %v1002
        %5990 = vmatprep.subr.mxu0 0.0
        %5991 = vmatpush2.msra.mxu0 %v1001
        %5992 = vmatprep.subr.mxu0 0.0
        %5993 = vmatpush2.msra.mxu0 %v1000
        %5994 = vmatprep.subr.mxu0 0.0
        %5995 = vmatpush2.msra.mxu0 %v999
        %5996 = vmatprep.subr.mxu0 0.0
        %5997 = vmatpush2.msra.mxu0 %v998
        %5998 = vmatprep.subr.mxu0 0.0
        %5999 = vmatpush2.msra.mxu0 %v997
        %6000 = vmatprep.subr.mxu0 0.0
        %6001 = vmatpush2.msra.mxu0 %v996
        %6002 = vmatprep.subr.mxu0 0.0
        %6003 = vmatpush2.msra.mxu0 %v995
        %6004 = vmatprep.subr.mxu0 0.0
        %6005 = vmatpush2.msra.mxu0 %v994
        %6006 = vmatprep.mubr.f32.mxu0 %v3596
        %6007 = vmatmul.mubr.f32.gmra.mxu0 %v3588
        %v6008 = vpop.f32.mrf.mxu0
        %v6009 = vadd.f32 %v5939, %v6008
        %v6010 = vpop.f32.mrf.mxu0
        %6011 = vdwg.mxu0
        %6012 = vmatprep.subr.mxu0 0.0
        %6013 = vmatpush1.msra.mxu0 %v1025
        %6014 = vmatprep.subr.mxu0 0.0
        %6015 = vmatpush1.msra.mxu0 %v1024
        %6016 = vmatprep.subr.mxu0 0.0
        %6017 = vmatpush1.msra.mxu0 %v1023
        %6018 = vmatprep.subr.mxu0 0.0
        %6019 = vmatpush1.msra.mxu0 %v1022
        %6020 = vmatprep.subr.mxu0 0.0
        %6021 = vmatpush1.msra.mxu0 %v1021
        %6022 = vmatprep.subr.mxu0 0.0
        %6023 = vmatpush1.msra.mxu0 %v1020
        %6024 = vmatprep.subr.mxu0 0.0
        %6025 = vmatpush1.msra.mxu0 %v1019
        %6026 = vmatprep.subr.mxu0 0.0
        %6027 = vmatpush1.msra.mxu0 %v1018
        %6028 = vmatprep.subr.mxu0 0.0
        %6029 = vmatpush1.msra.mxu0 %v1017
        %6030 = vmatprep.subr.mxu0 0.0
        %6031 = vmatpush1.msra.mxu0 %v1016
        %6032 = vmatprep.subr.mxu0 0.0
        %6033 = vmatpush1.msra.mxu0 %v1015
        %6034 = vmatprep.subr.mxu0 0.0
        %6035 = vmatpush1.msra.mxu0 %v1014
        %6036 = vmatprep.subr.mxu0 0.0
        %6037 = vmatpush1.msra.mxu0 %v1013
        %6038 = vmatprep.subr.mxu0 0.0
        %6039 = vmatpush1.msra.mxu0 %v1012
        %6040 = vmatprep.subr.mxu0 0.0
        %6041 = vmatpush1.msra.mxu0 %v1011
        %6042 = vmatprep.subr.mxu0 0.0
        %6043 = vmatpush1.msra.mxu0 %v1010
        %6044 = vmatprep.subr.mxu0 0.0
        %6045 = vmatpush2.msra.mxu0 %v1041
        %6046 = vmatprep.subr.mxu0 0.0
        %6047 = vmatpush2.msra.mxu0 %v1040
        %6048 = vmatprep.subr.mxu0 0.0
        %6049 = vmatpush2.msra.mxu0 %v1039
        %6050 = vmatprep.subr.mxu0 0.0
        %6051 = vmatpush2.msra.mxu0 %v1038
        %6052 = vmatprep.subr.mxu0 0.0
        %6053 = vmatpush2.msra.mxu0 %v1037
        %6054 = vmatprep.subr.mxu0 0.0
        %6055 = vmatpush2.msra.mxu0 %v1036
        %6056 = vmatprep.subr.mxu0 0.0
        %6057 = vmatpush2.msra.mxu0 %v1035
        %6058 = vmatprep.subr.mxu0 0.0
        %6059 = vmatpush2.msra.mxu0 %v1034
        %6060 = vmatprep.subr.mxu0 0.0
        %6061 = vmatpush2.msra.mxu0 %v1033
        %6062 = vmatprep.subr.mxu0 0.0
        %6063 = vmatpush2.msra.mxu0 %v1032
        %6064 = vmatprep.subr.mxu0 0.0
        %6065 = vmatpush2.msra.mxu0 %v1031
        %6066 = vmatprep.subr.mxu0 0.0
        %6067 = vmatpush2.msra.mxu0 %v1030
        %6068 = vmatprep.subr.mxu0 0.0
        %6069 = vmatpush2.msra.mxu0 %v1029
        %6070 = vmatprep.subr.mxu0 0.0
        %6071 = vmatpush2.msra.mxu0 %v1028
        %6072 = vmatprep.subr.mxu0 0.0
        %6073 = vmatpush2.msra.mxu0 %v1027
        %6074 = vmatprep.subr.mxu0 0.0
        %6075 = vmatpush2.msra.mxu0 %v1026
        %6076 = vmatprep.mubr.f32.mxu0 %v3597
        %6077 = vmatmul.mubr.f32.gmra.mxu0 %v3595
        %v6078 = vpop.f32.mrf.mxu0
        %v6079 = vadd.f32 %v6009, %v6078
        %v6080 = vpop.f32.mrf.mxu0
        %6081 = vdwg.mxu0
        %6082 = vmatprep.subr.mxu0 0.0
        %6083 = vmatpush1.msra.mxu0 %v1057
        %6084 = vmatprep.subr.mxu0 0.0
        %6085 = vmatpush1.msra.mxu0 %v1056
        %6086 = vmatprep.subr.mxu0 0.0
        %6087 = vmatpush1.msra.mxu0 %v1055
        %6088 = vmatprep.subr.mxu0 0.0
        %6089 = vmatpush1.msra.mxu0 %v1054
        %6090 = vmatprep.subr.mxu0 0.0
        %6091 = vmatpush1.msra.mxu0 %v1053
        %6092 = vmatprep.subr.mxu0 0.0
        %6093 = vmatpush1.msra.mxu0 %v1052
        %6094 = vmatprep.subr.mxu0 0.0
        %6095 = vmatpush1.msra.mxu0 %v1051
        %6096 = vmatprep.subr.mxu0 0.0
        %6097 = vmatpush1.msra.mxu0 %v1050
        %6098 = vmatprep.subr.mxu0 0.0
        %6099 = vmatpush1.msra.mxu0 %v1049
        %6100 = vmatprep.subr.mxu0 0.0
        %6101 = vmatpush1.msra.mxu0 %v1048
        %6102 = vmatprep.subr.mxu0 0.0
        %6103 = vmatpush1.msra.mxu0 %v1047
        %6104 = vmatprep.subr.mxu0 0.0
        %6105 = vmatpush1.msra.mxu0 %v1046
        %6106 = vmatprep.subr.mxu0 0.0
        %6107 = vmatpush1.msra.mxu0 %v1045
        %6108 = vmatprep.subr.mxu0 0.0
        %6109 = vmatpush1.msra.mxu0 %v1044
        %6110 = vmatprep.subr.mxu0 0.0
        %6111 = vmatpush1.msra.mxu0 %v1043
        %6112 = vmatprep.subr.mxu0 0.0
        %6113 = vmatpush1.msra.mxu0 %v1042
        %6114 = vmatprep.subr.mxu0 0.0
        %6115 = vmatpush2.msra.mxu0 %v1073
        %6116 = vmatprep.subr.mxu0 0.0
        %6117 = vmatpush2.msra.mxu0 %v1072
        %6118 = vmatprep.subr.mxu0 0.0
        %6119 = vmatpush2.msra.mxu0 %v1071
        %6120 = vmatprep.subr.mxu0 0.0
        %6121 = vmatpush2.msra.mxu0 %v1070
        %6122 = vmatprep.subr.mxu0 0.0
        %6123 = vmatpush2.msra.mxu0 %v1069
        %6124 = vmatprep.subr.mxu0 0.0
        %6125 = vmatpush2.msra.mxu0 %v1068
        %6126 = vmatprep.subr.mxu0 0.0
        %6127 = vmatpush2.msra.mxu0 %v1067
        %6128 = vmatprep.subr.mxu0 0.0
        %6129 = vmatpush2.msra.mxu0 %v1066
        %6130 = vmatprep.subr.mxu0 0.0
        %6131 = vmatpush2.msra.mxu0 %v1065
        %6132 = vmatprep.subr.mxu0 0.0
        %6133 = vmatpush2.msra.mxu0 %v1064
        %6134 = vmatprep.subr.mxu0 0.0
        %6135 = vmatpush2.msra.mxu0 %v1063
        %6136 = vmatprep.subr.mxu0 0.0
        %6137 = vmatpush2.msra.mxu0 %v1062
        %6138 = vmatprep.subr.mxu0 0.0
        %6139 = vmatpush2.msra.mxu0 %v1061
        %6140 = vmatprep.subr.mxu0 0.0
        %6141 = vmatpush2.msra.mxu0 %v1060
        %6142 = vmatprep.subr.mxu0 0.0
        %6143 = vmatpush2.msra.mxu0 %v1059
        %6144 = vmatprep.subr.mxu0 0.0
        %6145 = vmatpush2.msra.mxu0 %v1058
        %6146 = vmatprep.mubr.f32.mxu0 %v3613
        %6147 = vmatmul.mubr.f32.gmra.mxu0 %v3605
        %v6148 = vpop.f32.mrf.mxu0
        %v6149 = vadd.f32 %v6079, %v6148
        %v6150 = vpop.f32.mrf.mxu0
        %6151 = vdwg.mxu0
        %6152 = vmatprep.subr.mxu0 0.0
        %6153 = vmatpush1.msra.mxu0 %v1089
        %6154 = vmatprep.subr.mxu0 0.0
        %6155 = vmatpush1.msra.mxu0 %v1088
        %6156 = vmatprep.subr.mxu0 0.0
        %6157 = vmatpush1.msra.mxu0 %v1087
        %6158 = vmatprep.subr.mxu0 0.0
        %6159 = vmatpush1.msra.mxu0 %v1086
        %6160 = vmatprep.subr.mxu0 0.0
        %6161 = vmatpush1.msra.mxu0 %v1085
        %6162 = vmatprep.subr.mxu0 0.0
        %6163 = vmatpush1.msra.mxu0 %v1084
        %6164 = vmatprep.subr.mxu0 0.0
        %6165 = vmatpush1.msra.mxu0 %v1083
        %6166 = vmatprep.subr.mxu0 0.0
        %6167 = vmatpush1.msra.mxu0 %v1082
        %6168 = vmatprep.subr.mxu0 0.0
        %6169 = vmatpush1.msra.mxu0 %v1081
        %6170 = vmatprep.subr.mxu0 0.0
        %6171 = vmatpush1.msra.mxu0 %v1080
        %6172 = vmatprep.subr.mxu0 0.0
        %6173 = vmatpush1.msra.mxu0 %v1079
        %6174 = vmatprep.subr.mxu0 0.0
        %6175 = vmatpush1.msra.mxu0 %v1078
        %6176 = vmatprep.subr.mxu0 0.0
        %6177 = vmatpush1.msra.mxu0 %v1077
        %6178 = vmatprep.subr.mxu0 0.0
        %6179 = vmatpush1.msra.mxu0 %v1076
        %6180 = vmatprep.subr.mxu0 0.0
        %6181 = vmatpush1.msra.mxu0 %v1075
        %6182 = vmatprep.subr.mxu0 0.0
        %6183 = vmatpush1.msra.mxu0 %v1074
        %6184 = vmatprep.subr.mxu0 0.0
        %6185 = vmatpush2.msra.mxu0 %v1105
        %6186 = vmatprep.subr.mxu0 0.0
        %6187 = vmatpush2.msra.mxu0 %v1104
        %6188 = vmatprep.subr.mxu0 0.0
        %6189 = vmatpush2.msra.mxu0 %v1103
        %6190 = vmatprep.subr.mxu0 0.0
        %6191 = vmatpush2.msra.mxu0 %v1102
        %6192 = vmatprep.subr.mxu0 0.0
        %6193 = vmatpush2.msra.mxu0 %v1101
        %6194 = vmatprep.subr.mxu0 0.0
        %6195 = vmatpush2.msra.mxu0 %v1100
        %6196 = vmatprep.subr.mxu0 0.0
        %6197 = vmatpush2.msra.mxu0 %v1099
        %6198 = vmatprep.subr.mxu0 0.0
        %6199 = vmatpush2.msra.mxu0 %v1098
        %6200 = vmatprep.subr.mxu0 0.0
        %6201 = vmatpush2.msra.mxu0 %v1097
        %6202 = vmatprep.subr.mxu0 0.0
        %6203 = vmatpush2.msra.mxu0 %v1096
        %6204 = vmatprep.subr.mxu0 0.0
        %6205 = vmatpush2.msra.mxu0 %v1095
        %6206 = vmatprep.subr.mxu0 0.0
        %6207 = vmatpush2.msra.mxu0 %v1094
        %6208 = vmatprep.subr.mxu0 0.0
        %6209 = vmatpush2.msra.mxu0 %v1093
        %6210 = vmatprep.subr.mxu0 0.0
        %6211 = vmatpush2.msra.mxu0 %v1092
        %6212 = vmatprep.subr.mxu0 0.0
        %6213 = vmatpush2.msra.mxu0 %v1091
        %6214 = vmatprep.subr.mxu0 0.0
        %6215 = vmatpush2.msra.mxu0 %v1090
        %6216 = vmatprep.mubr.f32.mxu0 %v3614
        %6217 = vmatmul.mubr.f32.gmra.mxu0 %v3612
        %v6218 = vpop.f32.mrf.mxu0
        %v6219 = vadd.f32 %v6149, %v6218
        %v6220 = vpop.f32.mrf.mxu0
        %6221 = vdwg.mxu0
        %6222 = vmatprep.subr.mxu0 0.0
        %6223 = vmatpush1.msra.mxu0 %v1121
        %6224 = vmatprep.subr.mxu0 0.0
        %6225 = vmatpush1.msra.mxu0 %v1120
        %6226 = vmatprep.subr.mxu0 0.0
        %6227 = vmatpush1.msra.mxu0 %v1119
        %6228 = vmatprep.subr.mxu0 0.0
        %6229 = vmatpush1.msra.mxu0 %v1118
        %6230 = vmatprep.subr.mxu0 0.0
        %6231 = vmatpush1.msra.mxu0 %v1117
        %6232 = vmatprep.subr.mxu0 0.0
        %6233 = vmatpush1.msra.mxu0 %v1116
        %6234 = vmatprep.subr.mxu0 0.0
        %6235 = vmatpush1.msra.mxu0 %v1115
        %6236 = vmatprep.subr.mxu0 0.0
        %6237 = vmatpush1.msra.mxu0 %v1114
        %6238 = vmatprep.subr.mxu0 0.0
        %6239 = vmatpush1.msra.mxu0 %v1113
        %6240 = vmatprep.subr.mxu0 0.0
        %6241 = vmatpush1.msra.mxu0 %v1112
        %6242 = vmatprep.subr.mxu0 0.0
        %6243 = vmatpush1.msra.mxu0 %v1111
        %6244 = vmatprep.subr.mxu0 0.0
        %6245 = vmatpush1.msra.mxu0 %v1110
        %6246 = vmatprep.subr.mxu0 0.0
        %6247 = vmatpush1.msra.mxu0 %v1109
        %6248 = vmatprep.subr.mxu0 0.0
        %6249 = vmatpush1.msra.mxu0 %v1108
        %6250 = vmatprep.subr.mxu0 0.0
        %6251 = vmatpush1.msra.mxu0 %v1107
        %6252 = vmatprep.subr.mxu0 0.0
        %6253 = vmatpush1.msra.mxu0 %v1106
        %6254 = vmatprep.subr.mxu0 0.0
        %6255 = vmatpush2.msra.mxu0 %v1137
        %6256 = vmatprep.subr.mxu0 0.0
        %6257 = vmatpush2.msra.mxu0 %v1136
        %6258 = vmatprep.subr.mxu0 0.0
        %6259 = vmatpush2.msra.mxu0 %v1135
        %6260 = vmatprep.subr.mxu0 0.0
        %6261 = vmatpush2.msra.mxu0 %v1134
        %6262 = vmatprep.subr.mxu0 0.0
        %6263 = vmatpush2.msra.mxu0 %v1133
        %6264 = vmatprep.subr.mxu0 0.0
        %6265 = vmatpush2.msra.mxu0 %v1132
        %6266 = vmatprep.subr.mxu0 0.0
        %6267 = vmatpush2.msra.mxu0 %v1131
        %6268 = vmatprep.subr.mxu0 0.0
        %6269 = vmatpush2.msra.mxu0 %v1130
        %6270 = vmatprep.subr.mxu0 0.0
        %6271 = vmatpush2.msra.mxu0 %v1129
        %6272 = vmatprep.subr.mxu0 0.0
        %6273 = vmatpush2.msra.mxu0 %v1128
        %6274 = vmatprep.subr.mxu0 0.0
        %6275 = vmatpush2.msra.mxu0 %v1127
        %6276 = vmatprep.subr.mxu0 0.0
        %6277 = vmatpush2.msra.mxu0 %v1126
        %6278 = vmatprep.subr.mxu0 0.0
        %6279 = vmatpush2.msra.mxu0 %v1125
        %6280 = vmatprep.subr.mxu0 0.0
        %6281 = vmatpush2.msra.mxu0 %v1124
        %6282 = vmatprep.subr.mxu0 0.0
        %6283 = vmatpush2.msra.mxu0 %v1123
        %6284 = vmatprep.subr.mxu0 0.0
        %6285 = vmatpush2.msra.mxu0 %v1122
        %6286 = vmatprep.mubr.f32.mxu0 %v3630
        %6287 = vmatmul.mubr.f32.gmra.mxu0 %v3622
        %v6288 = vpop.f32.mrf.mxu0
        %v6289 = vadd.f32 %v6219, %v6288
        %v6290 = vpop.f32.mrf.mxu0
        %6291 = vdwg.mxu0
        %6292 = vmatprep.subr.mxu0 0.0
        %6293 = vmatpush1.msra.mxu0 %v1153
        %6294 = vmatprep.subr.mxu0 0.0
        %6295 = vmatpush1.msra.mxu0 %v1152
        %6296 = vmatprep.subr.mxu0 0.0
        %6297 = vmatpush1.msra.mxu0 %v1151
        %6298 = vmatprep.subr.mxu0 0.0
        %6299 = vmatpush1.msra.mxu0 %v1150
        %6300 = vmatprep.subr.mxu0 0.0
        %6301 = vmatpush1.msra.mxu0 %v1149
        %6302 = vmatprep.subr.mxu0 0.0
        %6303 = vmatpush1.msra.mxu0 %v1148
        %6304 = vmatprep.subr.mxu0 0.0
        %6305 = vmatpush1.msra.mxu0 %v1147
        %6306 = vmatprep.subr.mxu0 0.0
        %6307 = vmatpush1.msra.mxu0 %v1146
        %6308 = vmatprep.subr.mxu0 0.0
        %6309 = vmatpush1.msra.mxu0 %v1145
        %6310 = vmatprep.subr.mxu0 0.0
        %6311 = vmatpush1.msra.mxu0 %v1144
        %6312 = vmatprep.subr.mxu0 0.0
        %6313 = vmatpush1.msra.mxu0 %v1143
        %6314 = vmatprep.subr.mxu0 0.0
        %6315 = vmatpush1.msra.mxu0 %v1142
        %6316 = vmatprep.subr.mxu0 0.0
        %6317 = vmatpush1.msra.mxu0 %v1141
        %6318 = vmatprep.subr.mxu0 0.0
        %6319 = vmatpush1.msra.mxu0 %v1140
        %6320 = vmatprep.subr.mxu0 0.0
        %6321 = vmatpush1.msra.mxu0 %v1139
        %6322 = vmatprep.subr.mxu0 0.0
        %6323 = vmatpush1.msra.mxu0 %v1138
        %6324 = vmatprep.subr.mxu0 0.0
        %6325 = vmatpush2.msra.mxu0 %v1169
        %6326 = vmatprep.subr.mxu0 0.0
        %6327 = vmatpush2.msra.mxu0 %v1168
        %6328 = vmatprep.subr.mxu0 0.0
        %6329 = vmatpush2.msra.mxu0 %v1167
        %6330 = vmatprep.subr.mxu0 0.0
        %6331 = vmatpush2.msra.mxu0 %v1166
        %6332 = vmatprep.subr.mxu0 0.0
        %6333 = vmatpush2.msra.mxu0 %v1165
        %6334 = vmatprep.subr.mxu0 0.0
        %6335 = vmatpush2.msra.mxu0 %v1164
        %6336 = vmatprep.subr.mxu0 0.0
        %6337 = vmatpush2.msra.mxu0 %v1163
        %6338 = vmatprep.subr.mxu0 0.0
        %6339 = vmatpush2.msra.mxu0 %v1162
        %6340 = vmatprep.subr.mxu0 0.0
        %6341 = vmatpush2.msra.mxu0 %v1161
        %6342 = vmatprep.subr.mxu0 0.0
        %6343 = vmatpush2.msra.mxu0 %v1160
        %6344 = vmatprep.subr.mxu0 0.0
        %6345 = vmatpush2.msra.mxu0 %v1159
        %6346 = vmatprep.subr.mxu0 0.0
        %6347 = vmatpush2.msra.mxu0 %v1158
        %6348 = vmatprep.subr.mxu0 0.0
        %6349 = vmatpush2.msra.mxu0 %v1157
        %6350 = vmatprep.subr.mxu0 0.0
        %6351 = vmatpush2.msra.mxu0 %v1156
        %6352 = vmatprep.subr.mxu0 0.0
        %6353 = vmatpush2.msra.mxu0 %v1155
        %6354 = vmatprep.subr.mxu0 0.0
        %6355 = vmatpush2.msra.mxu0 %v1154
        %6356 = vmatprep.mubr.f32.mxu0 %v3631
        %6357 = vmatmul.mubr.f32.gmra.mxu0 %v3629
        %v6358 = vpop.f32.mrf.mxu0
        %v6359 = vadd.f32 %v6289, %v6358
        %v6360 = vpop.f32.mrf.mxu0
        %6361 = vdwg.mxu0
        %6362 = vmatprep.subr.mxu0 0.0
        %6363 = vmatpush1.msra.mxu0 %v1185
        %6364 = vmatprep.subr.mxu0 0.0
        %6365 = vmatpush1.msra.mxu0 %v1184
        %6366 = vmatprep.subr.mxu0 0.0
        %6367 = vmatpush1.msra.mxu0 %v1183
        %6368 = vmatprep.subr.mxu0 0.0
        %6369 = vmatpush1.msra.mxu0 %v1182
        %6370 = vmatprep.subr.mxu0 0.0
        %6371 = vmatpush1.msra.mxu0 %v1181
        %6372 = vmatprep.subr.mxu0 0.0
        %6373 = vmatpush1.msra.mxu0 %v1180
        %6374 = vmatprep.subr.mxu0 0.0
        %6375 = vmatpush1.msra.mxu0 %v1179
        %6376 = vmatprep.subr.mxu0 0.0
        %6377 = vmatpush1.msra.mxu0 %v1178
        %6378 = vmatprep.subr.mxu0 0.0
        %6379 = vmatpush1.msra.mxu0 %v1177
        %6380 = vmatprep.subr.mxu0 0.0
        %6381 = vmatpush1.msra.mxu0 %v1176
        %6382 = vmatprep.subr.mxu0 0.0
        %6383 = vmatpush1.msra.mxu0 %v1175
        %6384 = vmatprep.subr.mxu0 0.0
        %6385 = vmatpush1.msra.mxu0 %v1174
        %6386 = vmatprep.subr.mxu0 0.0
        %6387 = vmatpush1.msra.mxu0 %v1173
        %6388 = vmatprep.subr.mxu0 0.0
        %6389 = vmatpush1.msra.mxu0 %v1172
        %6390 = vmatprep.subr.mxu0 0.0
        %6391 = vmatpush1.msra.mxu0 %v1171
        %6392 = vmatprep.subr.mxu0 0.0
        %6393 = vmatpush1.msra.mxu0 %v1170
        %6394 = vmatprep.subr.mxu0 0.0
        %6395 = vmatpush2.msra.mxu0 %v1201
        %6396 = vmatprep.subr.mxu0 0.0
        %6397 = vmatpush2.msra.mxu0 %v1200
        %6398 = vmatprep.subr.mxu0 0.0
        %6399 = vmatpush2.msra.mxu0 %v1199
        %6400 = vmatprep.subr.mxu0 0.0
        %6401 = vmatpush2.msra.mxu0 %v1198
        %6402 = vmatprep.subr.mxu0 0.0
        %6403 = vmatpush2.msra.mxu0 %v1197
        %6404 = vmatprep.subr.mxu0 0.0
        %6405 = vmatpush2.msra.mxu0 %v1196
        %6406 = vmatprep.subr.mxu0 0.0
        %6407 = vmatpush2.msra.mxu0 %v1195
        %6408 = vmatprep.subr.mxu0 0.0
        %6409 = vmatpush2.msra.mxu0 %v1194
        %6410 = vmatprep.subr.mxu0 0.0
        %6411 = vmatpush2.msra.mxu0 %v1193
        %6412 = vmatprep.subr.mxu0 0.0
        %6413 = vmatpush2.msra.mxu0 %v1192
        %6414 = vmatprep.subr.mxu0 0.0
        %6415 = vmatpush2.msra.mxu0 %v1191
        %6416 = vmatprep.subr.mxu0 0.0
        %6417 = vmatpush2.msra.mxu0 %v1190
        %6418 = vmatprep.subr.mxu0 0.0
        %6419 = vmatpush2.msra.mxu0 %v1189
        %6420 = vmatprep.subr.mxu0 0.0
        %6421 = vmatpush2.msra.mxu0 %v1188
        %6422 = vmatprep.subr.mxu0 0.0
        %6423 = vmatpush2.msra.mxu0 %v1187
        %6424 = vmatprep.subr.mxu0 0.0
        %6425 = vmatpush2.msra.mxu0 %v1186
        %6426 = vmatprep.mubr.f32.mxu0 %v3647
        %6427 = vmatmul.mubr.f32.gmra.mxu0 %v3639
        %v6428 = vpop.f32.mrf.mxu0
        %v6429 = vadd.f32 %v6359, %v6428
        %v6430 = vpop.f32.mrf.mxu0
        %6431 = vdwg.mxu0
        %6432 = vmatprep.subr.mxu0 0.0
        %6433 = vmatpush1.msra.mxu0 %v1217
        %6434 = vmatprep.subr.mxu0 0.0
        %6435 = vmatpush1.msra.mxu0 %v1216
        %6436 = vmatprep.subr.mxu0 0.0
        %6437 = vmatpush1.msra.mxu0 %v1215
        %6438 = vmatprep.subr.mxu0 0.0
        %6439 = vmatpush1.msra.mxu0 %v1214
        %6440 = vmatprep.subr.mxu0 0.0
        %6441 = vmatpush1.msra.mxu0 %v1213
        %6442 = vmatprep.subr.mxu0 0.0
        %6443 = vmatpush1.msra.mxu0 %v1212
        %6444 = vmatprep.subr.mxu0 0.0
        %6445 = vmatpush1.msra.mxu0 %v1211
        %6446 = vmatprep.subr.mxu0 0.0
        %6447 = vmatpush1.msra.mxu0 %v1210
        %6448 = vmatprep.subr.mxu0 0.0
        %6449 = vmatpush1.msra.mxu0 %v1209
        %6450 = vmatprep.subr.mxu0 0.0
        %6451 = vmatpush1.msra.mxu0 %v1208
        %6452 = vmatprep.subr.mxu0 0.0
        %6453 = vmatpush1.msra.mxu0 %v1207
        %6454 = vmatprep.subr.mxu0 0.0
        %6455 = vmatpush1.msra.mxu0 %v1206
        %6456 = vmatprep.subr.mxu0 0.0
        %6457 = vmatpush1.msra.mxu0 %v1205
        %6458 = vmatprep.subr.mxu0 0.0
        %6459 = vmatpush1.msra.mxu0 %v1204
        %6460 = vmatprep.subr.mxu0 0.0
        %6461 = vmatpush1.msra.mxu0 %v1203
        %6462 = vmatprep.subr.mxu0 0.0
        %6463 = vmatpush1.msra.mxu0 %v1202
        %6464 = vmatprep.subr.mxu0 0.0
        %6465 = vmatpush2.msra.mxu0 %v1233
        %6466 = vmatprep.subr.mxu0 0.0
        %6467 = vmatpush2.msra.mxu0 %v1232
        %6468 = vmatprep.subr.mxu0 0.0
        %6469 = vmatpush2.msra.mxu0 %v1231
        %6470 = vmatprep.subr.mxu0 0.0
        %6471 = vmatpush2.msra.mxu0 %v1230
        %6472 = vmatprep.subr.mxu0 0.0
        %6473 = vmatpush2.msra.mxu0 %v1229
        %6474 = vmatprep.subr.mxu0 0.0
        %6475 = vmatpush2.msra.mxu0 %v1228
        %6476 = vmatprep.subr.mxu0 0.0
        %6477 = vmatpush2.msra.mxu0 %v1227
        %6478 = vmatprep.subr.mxu0 0.0
        %6479 = vmatpush2.msra.mxu0 %v1226
        %6480 = vmatprep.subr.mxu0 0.0
        %6481 = vmatpush2.msra.mxu0 %v1225
        %6482 = vmatprep.subr.mxu0 0.0
        %6483 = vmatpush2.msra.mxu0 %v1224
        %6484 = vmatprep.subr.mxu0 0.0
        %6485 = vmatpush2.msra.mxu0 %v1223
        %6486 = vmatprep.subr.mxu0 0.0
        %6487 = vmatpush2.msra.mxu0 %v1222
        %6488 = vmatprep.subr.mxu0 0.0
        %6489 = vmatpush2.msra.mxu0 %v1221
        %6490 = vmatprep.subr.mxu0 0.0
        %6491 = vmatpush2.msra.mxu0 %v1220
        %6492 = vmatprep.subr.mxu0 0.0
        %6493 = vmatpush2.msra.mxu0 %v1219
        %6494 = vmatprep.subr.mxu0 0.0
        %6495 = vmatpush2.msra.mxu0 %v1218
        %6496 = vmatprep.mubr.f32.mxu0 %v3648
        %6497 = vmatmul.mubr.f32.gmra.mxu0 %v3646
        %v6498 = vpop.f32.mrf.mxu0
        %v6499 = vadd.f32 %v6429, %v6498
        %v6500 = vpop.f32.mrf.mxu0
        %6501 = vdwg.mxu0
        %6502 = vmatprep.subr.mxu0 0.0
        %6503 = vmatpush1.msra.mxu0 %v1249
        %6504 = vmatprep.subr.mxu0 0.0
        %6505 = vmatpush1.msra.mxu0 %v1248
        %6506 = vmatprep.subr.mxu0 0.0
        %6507 = vmatpush1.msra.mxu0 %v1247
        %6508 = vmatprep.subr.mxu0 0.0
        %6509 = vmatpush1.msra.mxu0 %v1246
        %6510 = vmatprep.subr.mxu0 0.0
        %6511 = vmatpush1.msra.mxu0 %v1245
        %6512 = vmatprep.subr.mxu0 0.0
        %6513 = vmatpush1.msra.mxu0 %v1244
        %6514 = vmatprep.subr.mxu0 0.0
        %6515 = vmatpush1.msra.mxu0 %v1243
        %6516 = vmatprep.subr.mxu0 0.0
        %6517 = vmatpush1.msra.mxu0 %v1242
        %6518 = vmatprep.subr.mxu0 0.0
        %6519 = vmatpush1.msra.mxu0 %v1241
        %6520 = vmatprep.subr.mxu0 0.0
        %6521 = vmatpush1.msra.mxu0 %v1240
        %6522 = vmatprep.subr.mxu0 0.0
        %6523 = vmatpush1.msra.mxu0 %v1239
        %6524 = vmatprep.subr.mxu0 0.0
        %6525 = vmatpush1.msra.mxu0 %v1238
        %6526 = vmatprep.subr.mxu0 0.0
        %6527 = vmatpush1.msra.mxu0 %v1237
        %6528 = vmatprep.subr.mxu0 0.0
        %6529 = vmatpush1.msra.mxu0 %v1236
        %6530 = vmatprep.subr.mxu0 0.0
        %6531 = vmatpush1.msra.mxu0 %v1235
        %6532 = vmatprep.subr.mxu0 0.0
        %6533 = vmatpush1.msra.mxu0 %v1234
        %6534 = vmatprep.subr.mxu0 0.0
        %6535 = vmatpush2.msra.mxu0 %v1265
        %6536 = vmatprep.subr.mxu0 0.0
        %6537 = vmatpush2.msra.mxu0 %v1264
        %6538 = vmatprep.subr.mxu0 0.0
        %6539 = vmatpush2.msra.mxu0 %v1263
        %6540 = vmatprep.subr.mxu0 0.0
        %6541 = vmatpush2.msra.mxu0 %v1262
        %6542 = vmatprep.subr.mxu0 0.0
        %6543 = vmatpush2.msra.mxu0 %v1261
        %6544 = vmatprep.subr.mxu0 0.0
        %6545 = vmatpush2.msra.mxu0 %v1260
        %6546 = vmatprep.subr.mxu0 0.0
        %6547 = vmatpush2.msra.mxu0 %v1259
        %6548 = vmatprep.subr.mxu0 0.0
        %6549 = vmatpush2.msra.mxu0 %v1258
        %6550 = vmatprep.subr.mxu0 0.0
        %6551 = vmatpush2.msra.mxu0 %v1257
        %6552 = vmatprep.subr.mxu0 0.0
        %6553 = vmatpush2.msra.mxu0 %v1256
        %6554 = vmatprep.subr.mxu0 0.0
        %6555 = vmatpush2.msra.mxu0 %v1255
        %6556 = vmatprep.subr.mxu0 0.0
        %6557 = vmatpush2.msra.mxu0 %v1254
        %6558 = vmatprep.subr.mxu0 0.0
        %6559 = vmatpush2.msra.mxu0 %v1253
        %6560 = vmatprep.subr.mxu0 0.0
        %6561 = vmatpush2.msra.mxu0 %v1252
        %6562 = vmatprep.subr.mxu0 0.0
        %6563 = vmatpush2.msra.mxu0 %v1251
        %6564 = vmatprep.subr.mxu0 0.0
        %6565 = vmatpush2.msra.mxu0 %v1250
        %6566 = vmatprep.mubr.f32.mxu0 %v3664
        %6567 = vmatmul.mubr.f32.gmra.mxu0 %v3656
        %v6568 = vpop.f32.mrf.mxu0
        %v6569 = vadd.f32 %v6499, %v6568
        %v6570 = vpop.f32.mrf.mxu0
        %6571 = vdwg.mxu0
        %6572 = vmatprep.subr.mxu0 0.0
        %6573 = vmatpush1.msra.mxu0 %v1281
        %6574 = vmatprep.subr.mxu0 0.0
        %6575 = vmatpush1.msra.mxu0 %v1280
        %6576 = vmatprep.subr.mxu0 0.0
        %6577 = vmatpush1.msra.mxu0 %v1279
        %6578 = vmatprep.subr.mxu0 0.0
        %6579 = vmatpush1.msra.mxu0 %v1278
        %6580 = vmatprep.subr.mxu0 0.0
        %6581 = vmatpush1.msra.mxu0 %v1277
        %6582 = vmatprep.subr.mxu0 0.0
        %6583 = vmatpush1.msra.mxu0 %v1276
        %6584 = vmatprep.subr.mxu0 0.0
        %6585 = vmatpush1.msra.mxu0 %v1275
        %6586 = vmatprep.subr.mxu0 0.0
        %6587 = vmatpush1.msra.mxu0 %v1274
        %6588 = vmatprep.subr.mxu0 0.0
        %6589 = vmatpush1.msra.mxu0 %v1273
        %6590 = vmatprep.subr.mxu0 0.0
        %6591 = vmatpush1.msra.mxu0 %v1272
        %6592 = vmatprep.subr.mxu0 0.0
        %6593 = vmatpush1.msra.mxu0 %v1271
        %6594 = vmatprep.subr.mxu0 0.0
        %6595 = vmatpush1.msra.mxu0 %v1270
        %6596 = vmatprep.subr.mxu0 0.0
        %6597 = vmatpush1.msra.mxu0 %v1269
        %6598 = vmatprep.subr.mxu0 0.0
        %6599 = vmatpush1.msra.mxu0 %v1268
        %6600 = vmatprep.subr.mxu0 0.0
        %6601 = vmatpush1.msra.mxu0 %v1267
        %6602 = vmatprep.subr.mxu0 0.0
        %6603 = vmatpush1.msra.mxu0 %v1266
        %6604 = vmatprep.subr.mxu0 0.0
        %6605 = vmatpush2.msra.mxu0 %v1297
        %6606 = vmatprep.subr.mxu0 0.0
        %6607 = vmatpush2.msra.mxu0 %v1296
        %6608 = vmatprep.subr.mxu0 0.0
        %6609 = vmatpush2.msra.mxu0 %v1295
        %6610 = vmatprep.subr.mxu0 0.0
        %6611 = vmatpush2.msra.mxu0 %v1294
        %6612 = vmatprep.subr.mxu0 0.0
        %6613 = vmatpush2.msra.mxu0 %v1293
        %6614 = vmatprep.subr.mxu0 0.0
        %6615 = vmatpush2.msra.mxu0 %v1292
        %6616 = vmatprep.subr.mxu0 0.0
        %6617 = vmatpush2.msra.mxu0 %v1291
        %6618 = vmatprep.subr.mxu0 0.0
        %6619 = vmatpush2.msra.mxu0 %v1290
        %6620 = vmatprep.subr.mxu0 0.0
        %6621 = vmatpush2.msra.mxu0 %v1289
        %6622 = vmatprep.subr.mxu0 0.0
        %6623 = vmatpush2.msra.mxu0 %v1288
        %6624 = vmatprep.subr.mxu0 0.0
        %6625 = vmatpush2.msra.mxu0 %v1287
        %6626 = vmatprep.subr.mxu0 0.0
        %6627 = vmatpush2.msra.mxu0 %v1286
        %6628 = vmatprep.subr.mxu0 0.0
        %6629 = vmatpush2.msra.mxu0 %v1285
        %6630 = vmatprep.subr.mxu0 0.0
        %6631 = vmatpush2.msra.mxu0 %v1284
        %6632 = vmatprep.subr.mxu0 0.0
        %6633 = vmatpush2.msra.mxu0 %v1283
        %6634 = vmatprep.subr.mxu0 0.0
        %6635 = vmatpush2.msra.mxu0 %v1282
        %6636 = vmatprep.mubr.f32.mxu0 %v3665
        %6637 = vmatmul.mubr.f32.gmra.mxu0 %v3663
        %v6638 = vpop.f32.mrf.mxu0
        %v6639 = vadd.f32 %v6569, %v6638
        %v6640 = vpop.f32.mrf.mxu0
        %6641 = vdwg.mxu0
        %6642 = vmatprep.subr.mxu0 0.0
        %6643 = vmatpush1.msra.mxu0 %v1313
        %6644 = vmatprep.subr.mxu0 0.0
        %6645 = vmatpush1.msra.mxu0 %v1312
        %6646 = vmatprep.subr.mxu0 0.0
        %6647 = vmatpush1.msra.mxu0 %v1311
        %6648 = vmatprep.subr.mxu0 0.0
        %6649 = vmatpush1.msra.mxu0 %v1310
        %6650 = vmatprep.subr.mxu0 0.0
        %6651 = vmatpush1.msra.mxu0 %v1309
        %6652 = vmatprep.subr.mxu0 0.0
        %6653 = vmatpush1.msra.mxu0 %v1308
        %6654 = vmatprep.subr.mxu0 0.0
        %6655 = vmatpush1.msra.mxu0 %v1307
        %6656 = vmatprep.subr.mxu0 0.0
        %6657 = vmatpush1.msra.mxu0 %v1306
        %6658 = vmatprep.subr.mxu0 0.0
        %6659 = vmatpush1.msra.mxu0 %v1305
        %6660 = vmatprep.subr.mxu0 0.0
        %6661 = vmatpush1.msra.mxu0 %v1304
        %6662 = vmatprep.subr.mxu0 0.0
        %6663 = vmatpush1.msra.mxu0 %v1303
        %6664 = vmatprep.subr.mxu0 0.0
        %6665 = vmatpush1.msra.mxu0 %v1302
        %6666 = vmatprep.subr.mxu0 0.0
        %6667 = vmatpush1.msra.mxu0 %v1301
        %6668 = vmatprep.subr.mxu0 0.0
        %6669 = vmatpush1.msra.mxu0 %v1300
        %6670 = vmatprep.subr.mxu0 0.0
        %6671 = vmatpush1.msra.mxu0 %v1299
        %6672 = vmatprep.subr.mxu0 0.0
        %6673 = vmatpush1.msra.mxu0 %v1298
        %6674 = vmatprep.subr.mxu0 0.0
        %6675 = vmatpush2.msra.mxu0 %v1329
        %6676 = vmatprep.subr.mxu0 0.0
        %6677 = vmatpush2.msra.mxu0 %v1328
        %6678 = vmatprep.subr.mxu0 0.0
        %6679 = vmatpush2.msra.mxu0 %v1327
        %6680 = vmatprep.subr.mxu0 0.0
        %6681 = vmatpush2.msra.mxu0 %v1326
        %6682 = vmatprep.subr.mxu0 0.0
        %6683 = vmatpush2.msra.mxu0 %v1325
        %6684 = vmatprep.subr.mxu0 0.0
        %6685 = vmatpush2.msra.mxu0 %v1324
        %6686 = vmatprep.subr.mxu0 0.0
        %6687 = vmatpush2.msra.mxu0 %v1323
        %6688 = vmatprep.subr.mxu0 0.0
        %6689 = vmatpush2.msra.mxu0 %v1322
        %6690 = vmatprep.subr.mxu0 0.0
        %6691 = vmatpush2.msra.mxu0 %v1321
        %6692 = vmatprep.subr.mxu0 0.0
        %6693 = vmatpush2.msra.mxu0 %v1320
        %6694 = vmatprep.subr.mxu0 0.0
        %6695 = vmatpush2.msra.mxu0 %v1319
        %6696 = vmatprep.subr.mxu0 0.0
        %6697 = vmatpush2.msra.mxu0 %v1318
        %6698 = vmatprep.subr.mxu0 0.0
        %6699 = vmatpush2.msra.mxu0 %v1317
        %6700 = vmatprep.subr.mxu0 0.0
        %6701 = vmatpush2.msra.mxu0 %v1316
        %6702 = vmatprep.subr.mxu0 0.0
        %6703 = vmatpush2.msra.mxu0 %v1315
        %6704 = vmatprep.subr.mxu0 0.0
        %6705 = vmatpush2.msra.mxu0 %v1314
        %6706 = vmatprep.mubr.f32.mxu0 %v3681
        %6707 = vmatmul.mubr.f32.gmra.mxu0 %v3673
        %v6708 = vpop.f32.mrf.mxu0
        %v6709 = vadd.f32 %v6639, %v6708
        %v6710 = vpop.f32.mrf.mxu0
        %6711 = vdwg.mxu0
        %6712 = vmatprep.subr.mxu0 0.0
        %6713 = vmatpush1.msra.mxu0 %v1345
        %6714 = vmatprep.subr.mxu0 0.0
        %6715 = vmatpush1.msra.mxu0 %v1344
        %6716 = vmatprep.subr.mxu0 0.0
        %6717 = vmatpush1.msra.mxu0 %v1343
        %6718 = vmatprep.subr.mxu0 0.0
        %6719 = vmatpush1.msra.mxu0 %v1342
        %6720 = vmatprep.subr.mxu0 0.0
        %6721 = vmatpush1.msra.mxu0 %v1341
        %6722 = vmatprep.subr.mxu0 0.0
        %6723 = vmatpush1.msra.mxu0 %v1340
        %6724 = vmatprep.subr.mxu0 0.0
        %6725 = vmatpush1.msra.mxu0 %v1339
        %6726 = vmatprep.subr.mxu0 0.0
        %6727 = vmatpush1.msra.mxu0 %v1338
        %6728 = vmatprep.subr.mxu0 0.0
        %6729 = vmatpush1.msra.mxu0 %v1337
        %6730 = vmatprep.subr.mxu0 0.0
        %6731 = vmatpush1.msra.mxu0 %v1336
        %6732 = vmatprep.subr.mxu0 0.0
        %6733 = vmatpush1.msra.mxu0 %v1335
        %6734 = vmatprep.subr.mxu0 0.0
        %6735 = vmatpush1.msra.mxu0 %v1334
        %6736 = vmatprep.subr.mxu0 0.0
        %6737 = vmatpush1.msra.mxu0 %v1333
        %6738 = vmatprep.subr.mxu0 0.0
        %6739 = vmatpush1.msra.mxu0 %v1332
        %6740 = vmatprep.subr.mxu0 0.0
        %6741 = vmatpush1.msra.mxu0 %v1331
        %6742 = vmatprep.subr.mxu0 0.0
        %6743 = vmatpush1.msra.mxu0 %v1330
        %6744 = vmatprep.subr.mxu0 0.0
        %6745 = vmatpush2.msra.mxu0 %v1361
        %6746 = vmatprep.subr.mxu0 0.0
        %6747 = vmatpush2.msra.mxu0 %v1360
        %6748 = vmatprep.subr.mxu0 0.0
        %6749 = vmatpush2.msra.mxu0 %v1359
        %6750 = vmatprep.subr.mxu0 0.0
        %6751 = vmatpush2.msra.mxu0 %v1358
        %6752 = vmatprep.subr.mxu0 0.0
        %6753 = vmatpush2.msra.mxu0 %v1357
        %6754 = vmatprep.subr.mxu0 0.0
        %6755 = vmatpush2.msra.mxu0 %v1356
        %6756 = vmatprep.subr.mxu0 0.0
        %6757 = vmatpush2.msra.mxu0 %v1355
        %6758 = vmatprep.subr.mxu0 0.0
        %6759 = vmatpush2.msra.mxu0 %v1354
        %6760 = vmatprep.subr.mxu0 0.0
        %6761 = vmatpush2.msra.mxu0 %v1353
        %6762 = vmatprep.subr.mxu0 0.0
        %6763 = vmatpush2.msra.mxu0 %v1352
        %6764 = vmatprep.subr.mxu0 0.0
        %6765 = vmatpush2.msra.mxu0 %v1351
        %6766 = vmatprep.subr.mxu0 0.0
        %6767 = vmatpush2.msra.mxu0 %v1350
        %6768 = vmatprep.subr.mxu0 0.0
        %6769 = vmatpush2.msra.mxu0 %v1349
        %6770 = vmatprep.subr.mxu0 0.0
        %6771 = vmatpush2.msra.mxu0 %v1348
        %6772 = vmatprep.subr.mxu0 0.0
        %6773 = vmatpush2.msra.mxu0 %v1347
        %6774 = vmatprep.subr.mxu0 0.0
        %6775 = vmatpush2.msra.mxu0 %v1346
        %6776 = vmatprep.mubr.f32.mxu0 %v3682
        %6777 = vmatmul.mubr.f32.gmra.mxu0 %v3680
        %v6778 = vpop.f32.mrf.mxu0
        %v6779 = vadd.f32 %v6709, %v6778
        %v6780 = vpop.f32.mrf.mxu0
        %6781 = vdwg.mxu0
        %6782 = vmatprep.subr.mxu0 0.0
        %6783 = vmatpush1.msra.mxu0 %v1377
        %6784 = vmatprep.subr.mxu0 0.0
        %6785 = vmatpush1.msra.mxu0 %v1376
        %6786 = vmatprep.subr.mxu0 0.0
        %6787 = vmatpush1.msra.mxu0 %v1375
        %6788 = vmatprep.subr.mxu0 0.0
        %6789 = vmatpush1.msra.mxu0 %v1374
        %6790 = vmatprep.subr.mxu0 0.0
        %6791 = vmatpush1.msra.mxu0 %v1373
        %6792 = vmatprep.subr.mxu0 0.0
        %6793 = vmatpush1.msra.mxu0 %v1372
        %6794 = vmatprep.subr.mxu0 0.0
        %6795 = vmatpush1.msra.mxu0 %v1371
        %6796 = vmatprep.subr.mxu0 0.0
        %6797 = vmatpush1.msra.mxu0 %v1370
        %6798 = vmatprep.subr.mxu0 0.0
        %6799 = vmatpush1.msra.mxu0 %v1369
        %6800 = vmatprep.subr.mxu0 0.0
        %6801 = vmatpush1.msra.mxu0 %v1368
        %6802 = vmatprep.subr.mxu0 0.0
        %6803 = vmatpush1.msra.mxu0 %v1367
        %6804 = vmatprep.subr.mxu0 0.0
        %6805 = vmatpush1.msra.mxu0 %v1366
        %6806 = vmatprep.subr.mxu0 0.0
        %6807 = vmatpush1.msra.mxu0 %v1365
        %6808 = vmatprep.subr.mxu0 0.0
        %6809 = vmatpush1.msra.mxu0 %v1364
        %6810 = vmatprep.subr.mxu0 0.0
        %6811 = vmatpush1.msra.mxu0 %v1363
        %6812 = vmatprep.subr.mxu0 0.0
        %6813 = vmatpush1.msra.mxu0 %v1362
        %6814 = vmatprep.subr.mxu0 0.0
        %6815 = vmatpush2.msra.mxu0 %v1393
        %6816 = vmatprep.subr.mxu0 0.0
        %6817 = vmatpush2.msra.mxu0 %v1392
        %6818 = vmatprep.subr.mxu0 0.0
        %6819 = vmatpush2.msra.mxu0 %v1391
        %6820 = vmatprep.subr.mxu0 0.0
        %6821 = vmatpush2.msra.mxu0 %v1390
        %6822 = vmatprep.subr.mxu0 0.0
        %6823 = vmatpush2.msra.mxu0 %v1389
        %6824 = vmatprep.subr.mxu0 0.0
        %6825 = vmatpush2.msra.mxu0 %v1388
        %6826 = vmatprep.subr.mxu0 0.0
        %6827 = vmatpush2.msra.mxu0 %v1387
        %6828 = vmatprep.subr.mxu0 0.0
        %6829 = vmatpush2.msra.mxu0 %v1386
        %6830 = vmatprep.subr.mxu0 0.0
        %6831 = vmatpush2.msra.mxu0 %v1385
        %6832 = vmatprep.subr.mxu0 0.0
        %6833 = vmatpush2.msra.mxu0 %v1384
        %6834 = vmatprep.subr.mxu0 0.0
        %6835 = vmatpush2.msra.mxu0 %v1383
        %6836 = vmatprep.subr.mxu0 0.0
        %6837 = vmatpush2.msra.mxu0 %v1382
        %6838 = vmatprep.subr.mxu0 0.0
        %6839 = vmatpush2.msra.mxu0 %v1381
        %6840 = vmatprep.subr.mxu0 0.0
        %6841 = vmatpush2.msra.mxu0 %v1380
        %6842 = vmatprep.subr.mxu0 0.0
        %6843 = vmatpush2.msra.mxu0 %v1379
        %6844 = vmatprep.subr.mxu0 0.0
        %6845 = vmatpush2.msra.mxu0 %v1378
        %6846 = vmatprep.mubr.f32.mxu0 %v3698
        %6847 = vmatmul.mubr.f32.gmra.mxu0 %v3690
        %v6848 = vpop.f32.mrf.mxu0
        %v6849 = vadd.f32 %v6779, %v6848
        %v6850 = vpop.f32.mrf.mxu0
        %6851 = vdwg.mxu0
        %6852 = vmatprep.subr.mxu0 0.0
        %6853 = vmatpush1.msra.mxu0 %v1409
        %6854 = vmatprep.subr.mxu0 0.0
        %6855 = vmatpush1.msra.mxu0 %v1408
        %6856 = vmatprep.subr.mxu0 0.0
        %6857 = vmatpush1.msra.mxu0 %v1407
        %6858 = vmatprep.subr.mxu0 0.0
        %6859 = vmatpush1.msra.mxu0 %v1406
        %6860 = vmatprep.subr.mxu0 0.0
        %6861 = vmatpush1.msra.mxu0 %v1405
        %6862 = vmatprep.subr.mxu0 0.0
        %6863 = vmatpush1.msra.mxu0 %v1404
        %6864 = vmatprep.subr.mxu0 0.0
        %6865 = vmatpush1.msra.mxu0 %v1403
        %6866 = vmatprep.subr.mxu0 0.0
        %6867 = vmatpush1.msra.mxu0 %v1402
        %6868 = vmatprep.subr.mxu0 0.0
        %6869 = vmatpush1.msra.mxu0 %v1401
        %6870 = vmatprep.subr.mxu0 0.0
        %6871 = vmatpush1.msra.mxu0 %v1400
        %6872 = vmatprep.subr.mxu0 0.0
        %6873 = vmatpush1.msra.mxu0 %v1399
        %6874 = vmatprep.subr.mxu0 0.0
        %6875 = vmatpush1.msra.mxu0 %v1398
        %6876 = vmatprep.subr.mxu0 0.0
        %6877 = vmatpush1.msra.mxu0 %v1397
        %6878 = vmatprep.subr.mxu0 0.0
        %6879 = vmatpush1.msra.mxu0 %v1396
        %6880 = vmatprep.subr.mxu0 0.0
        %6881 = vmatpush1.msra.mxu0 %v1395
        %6882 = vmatprep.subr.mxu0 0.0
        %6883 = vmatpush1.msra.mxu0 %v1394
        %6884 = vmatprep.subr.mxu0 0.0
        %6885 = vmatpush2.msra.mxu0 %v1425
        %6886 = vmatprep.subr.mxu0 0.0
        %6887 = vmatpush2.msra.mxu0 %v1424
        %6888 = vmatprep.subr.mxu0 0.0
        %6889 = vmatpush2.msra.mxu0 %v1423
        %6890 = vmatprep.subr.mxu0 0.0
        %6891 = vmatpush2.msra.mxu0 %v1422
        %6892 = vmatprep.subr.mxu0 0.0
        %6893 = vmatpush2.msra.mxu0 %v1421
        %6894 = vmatprep.subr.mxu0 0.0
        %6895 = vmatpush2.msra.mxu0 %v1420
        %6896 = vmatprep.subr.mxu0 0.0
        %6897 = vmatpush2.msra.mxu0 %v1419
        %6898 = vmatprep.subr.mxu0 0.0
        %6899 = vmatpush2.msra.mxu0 %v1418
        %6900 = vmatprep.subr.mxu0 0.0
        %6901 = vmatpush2.msra.mxu0 %v1417
        %6902 = vmatprep.subr.mxu0 0.0
        %6903 = vmatpush2.msra.mxu0 %v1416
        %6904 = vmatprep.subr.mxu0 0.0
        %6905 = vmatpush2.msra.mxu0 %v1415
        %6906 = vmatprep.subr.mxu0 0.0
        %6907 = vmatpush2.msra.mxu0 %v1414
        %6908 = vmatprep.subr.mxu0 0.0
        %6909 = vmatpush2.msra.mxu0 %v1413
        %6910 = vmatprep.subr.mxu0 0.0
        %6911 = vmatpush2.msra.mxu0 %v1412
        %6912 = vmatprep.subr.mxu0 0.0
        %6913 = vmatpush2.msra.mxu0 %v1411
        %6914 = vmatprep.subr.mxu0 0.0
        %6915 = vmatpush2.msra.mxu0 %v1410
        %6916 = vmatprep.mubr.f32.mxu0 %v3699
        %6917 = vmatmul.mubr.f32.gmra.mxu0 %v3697
        %v6918 = vpop.f32.mrf.mxu0
        %v6919 = vadd.f32 %v6849, %v6918
        %v6920 = vpop.f32.mrf.mxu0
        %6921 = vdwg.mxu0
        %6922 = vmatprep.subr.mxu0 0.0
        %6923 = vmatpush1.msra.mxu0 %v1441
        %6924 = vmatprep.subr.mxu0 0.0
        %6925 = vmatpush1.msra.mxu0 %v1440
        %6926 = vmatprep.subr.mxu0 0.0
        %6927 = vmatpush1.msra.mxu0 %v1439
        %6928 = vmatprep.subr.mxu0 0.0
        %6929 = vmatpush1.msra.mxu0 %v1438
        %6930 = vmatprep.subr.mxu0 0.0
        %6931 = vmatpush1.msra.mxu0 %v1437
        %6932 = vmatprep.subr.mxu0 0.0
        %6933 = vmatpush1.msra.mxu0 %v1436
        %6934 = vmatprep.subr.mxu0 0.0
        %6935 = vmatpush1.msra.mxu0 %v1435
        %6936 = vmatprep.subr.mxu0 0.0
        %6937 = vmatpush1.msra.mxu0 %v1434
        %6938 = vmatprep.subr.mxu0 0.0
        %6939 = vmatpush1.msra.mxu0 %v1433
        %6940 = vmatprep.subr.mxu0 0.0
        %6941 = vmatpush1.msra.mxu0 %v1432
        %6942 = vmatprep.subr.mxu0 0.0
        %6943 = vmatpush1.msra.mxu0 %v1431
        %6944 = vmatprep.subr.mxu0 0.0
        %6945 = vmatpush1.msra.mxu0 %v1430
        %6946 = vmatprep.subr.mxu0 0.0
        %6947 = vmatpush1.msra.mxu0 %v1429
        %6948 = vmatprep.subr.mxu0 0.0
        %6949 = vmatpush1.msra.mxu0 %v1428
        %6950 = vmatprep.subr.mxu0 0.0
        %6951 = vmatpush1.msra.mxu0 %v1427
        %6952 = vmatprep.subr.mxu0 0.0
        %6953 = vmatpush1.msra.mxu0 %v1426
        %6954 = vmatprep.subr.mxu0 0.0
        %6955 = vmatpush2.msra.mxu0 %v1457
        %6956 = vmatprep.subr.mxu0 0.0
        %6957 = vmatpush2.msra.mxu0 %v1456
        %6958 = vmatprep.subr.mxu0 0.0
        %6959 = vmatpush2.msra.mxu0 %v1455
        %6960 = vmatprep.subr.mxu0 0.0
        %6961 = vmatpush2.msra.mxu0 %v1454
        %6962 = vmatprep.subr.mxu0 0.0
        %6963 = vmatpush2.msra.mxu0 %v1453
        %6964 = vmatprep.subr.mxu0 0.0
        %6965 = vmatpush2.msra.mxu0 %v1452
        %6966 = vmatprep.subr.mxu0 0.0
        %6967 = vmatpush2.msra.mxu0 %v1451
        %6968 = vmatprep.subr.mxu0 0.0
        %6969 = vmatpush2.msra.mxu0 %v1450
        %6970 = vmatprep.subr.mxu0 0.0
        %6971 = vmatpush2.msra.mxu0 %v1449
        %6972 = vmatprep.subr.mxu0 0.0
        %6973 = vmatpush2.msra.mxu0 %v1448
        %6974 = vmatprep.subr.mxu0 0.0
        %6975 = vmatpush2.msra.mxu0 %v1447
        %6976 = vmatprep.subr.mxu0 0.0
        %6977 = vmatpush2.msra.mxu0 %v1446
        %6978 = vmatprep.subr.mxu0 0.0
        %6979 = vmatpush2.msra.mxu0 %v1445
        %6980 = vmatprep.subr.mxu0 0.0
        %6981 = vmatpush2.msra.mxu0 %v1444
        %6982 = vmatprep.subr.mxu0 0.0
        %6983 = vmatpush2.msra.mxu0 %v1443
        %6984 = vmatprep.subr.mxu0 0.0
        %6985 = vmatpush2.msra.mxu0 %v1442
        %6986 = vmatprep.mubr.f32.mxu0 %v3715
        %6987 = vmatmul.mubr.f32.gmra.mxu0 %v3707
        %v6988 = vpop.f32.mrf.mxu0
        %v6989 = vadd.f32 %v6919, %v6988
        %v6990 = vpop.f32.mrf.mxu0
        %6991 = vdwg.mxu0
        %6992 = vmatprep.subr.mxu0 0.0
        %6993 = vmatpush1.msra.mxu0 %v1473
        %6994 = vmatprep.subr.mxu0 0.0
        %6995 = vmatpush1.msra.mxu0 %v1472
        %6996 = vmatprep.subr.mxu0 0.0
        %6997 = vmatpush1.msra.mxu0 %v1471
        %6998 = vmatprep.subr.mxu0 0.0
        %6999 = vmatpush1.msra.mxu0 %v1470
        %7000 = vmatprep.subr.mxu0 0.0
        %7001 = vmatpush1.msra.mxu0 %v1469
        %7002 = vmatprep.subr.mxu0 0.0
        %7003 = vmatpush1.msra.mxu0 %v1468
        %7004 = vmatprep.subr.mxu0 0.0
        %7005 = vmatpush1.msra.mxu0 %v1467
        %7006 = vmatprep.subr.mxu0 0.0
        %7007 = vmatpush1.msra.mxu0 %v1466
        %7008 = vmatprep.subr.mxu0 0.0
        %7009 = vmatpush1.msra.mxu0 %v1465
        %7010 = vmatprep.subr.mxu0 0.0
        %7011 = vmatpush1.msra.mxu0 %v1464
        %7012 = vmatprep.subr.mxu0 0.0
        %7013 = vmatpush1.msra.mxu0 %v1463
        %7014 = vmatprep.subr.mxu0 0.0
        %7015 = vmatpush1.msra.mxu0 %v1462
        %7016 = vmatprep.subr.mxu0 0.0
        %7017 = vmatpush1.msra.mxu0 %v1461
        %7018 = vmatprep.subr.mxu0 0.0
        %7019 = vmatpush1.msra.mxu0 %v1460
        %7020 = vmatprep.subr.mxu0 0.0
        %7021 = vmatpush1.msra.mxu0 %v1459
        %7022 = vmatprep.subr.mxu0 0.0
        %7023 = vmatpush1.msra.mxu0 %v1458
        %7024 = vmatprep.subr.mxu0 0.0
        %7025 = vmatpush2.msra.mxu0 %v1489
        %7026 = vmatprep.subr.mxu0 0.0
        %7027 = vmatpush2.msra.mxu0 %v1488
        %7028 = vmatprep.subr.mxu0 0.0
        %7029 = vmatpush2.msra.mxu0 %v1487
        %7030 = vmatprep.subr.mxu0 0.0
        %7031 = vmatpush2.msra.mxu0 %v1486
        %7032 = vmatprep.subr.mxu0 0.0
        %7033 = vmatpush2.msra.mxu0 %v1485
        %7034 = vmatprep.subr.mxu0 0.0
        %7035 = vmatpush2.msra.mxu0 %v1484
        %7036 = vmatprep.subr.mxu0 0.0
        %7037 = vmatpush2.msra.mxu0 %v1483
        %7038 = vmatprep.subr.mxu0 0.0
        %7039 = vmatpush2.msra.mxu0 %v1482
        %7040 = vmatprep.subr.mxu0 0.0
        %7041 = vmatpush2.msra.mxu0 %v1481
        %7042 = vmatprep.subr.mxu0 0.0
        %7043 = vmatpush2.msra.mxu0 %v1480
        %7044 = vmatprep.subr.mxu0 0.0
        %7045 = vmatpush2.msra.mxu0 %v1479
        %7046 = vmatprep.subr.mxu0 0.0
        %7047 = vmatpush2.msra.mxu0 %v1478
        %7048 = vmatprep.subr.mxu0 0.0
        %7049 = vmatpush2.msra.mxu0 %v1477
        %7050 = vmatprep.subr.mxu0 0.0
        %7051 = vmatpush2.msra.mxu0 %v1476
        %7052 = vmatprep.subr.mxu0 0.0
        %7053 = vmatpush2.msra.mxu0 %v1475
        %7054 = vmatprep.subr.mxu0 0.0
        %7055 = vmatpush2.msra.mxu0 %v1474
        %7056 = vmatprep.mubr.f32.mxu0 %v3716
        %7057 = vmatmul.mubr.f32.gmra.mxu0 %v3714
        %v7058 = vpop.f32.mrf.mxu0
        %v7059 = vadd.f32 %v6989, %v7058
        %v7060 = vpop.f32.mrf.mxu0
        %7061 = vdwg.mxu0
        %7062 = vmatprep.subr.mxu0 0.0
        %7063 = vmatpush1.msra.mxu0 %v1505
        %7064 = vmatprep.subr.mxu0 0.0
        %7065 = vmatpush1.msra.mxu0 %v1504
        %7066 = vmatprep.subr.mxu0 0.0
        %7067 = vmatpush1.msra.mxu0 %v1503
        %7068 = vmatprep.subr.mxu0 0.0
        %7069 = vmatpush1.msra.mxu0 %v1502
        %7070 = vmatprep.subr.mxu0 0.0
        %7071 = vmatpush1.msra.mxu0 %v1501
        %7072 = vmatprep.subr.mxu0 0.0
        %7073 = vmatpush1.msra.mxu0 %v1500
        %7074 = vmatprep.subr.mxu0 0.0
        %7075 = vmatpush1.msra.mxu0 %v1499
        %7076 = vmatprep.subr.mxu0 0.0
        %7077 = vmatpush1.msra.mxu0 %v1498
        %7078 = vmatprep.subr.mxu0 0.0
        %7079 = vmatpush1.msra.mxu0 %v1497
        %7080 = vmatprep.subr.mxu0 0.0
        %7081 = vmatpush1.msra.mxu0 %v1496
        %7082 = vmatprep.subr.mxu0 0.0
        %7083 = vmatpush1.msra.mxu0 %v1495
        %7084 = vmatprep.subr.mxu0 0.0
        %7085 = vmatpush1.msra.mxu0 %v1494
        %7086 = vmatprep.subr.mxu0 0.0
        %7087 = vmatpush1.msra.mxu0 %v1493
        %7088 = vmatprep.subr.mxu0 0.0
        %7089 = vmatpush1.msra.mxu0 %v1492
        %7090 = vmatprep.subr.mxu0 0.0
        %7091 = vmatpush1.msra.mxu0 %v1491
        %7092 = vmatprep.subr.mxu0 0.0
        %7093 = vmatpush1.msra.mxu0 %v1490
        %7094 = vmatprep.subr.mxu0 0.0
        %7095 = vmatpush2.msra.mxu0 %v1521
        %7096 = vmatprep.subr.mxu0 0.0
        %7097 = vmatpush2.msra.mxu0 %v1520
        %7098 = vmatprep.subr.mxu0 0.0
        %7099 = vmatpush2.msra.mxu0 %v1519
        %7100 = vmatprep.subr.mxu0 0.0
        %7101 = vmatpush2.msra.mxu0 %v1518
        %7102 = vmatprep.subr.mxu0 0.0
        %7103 = vmatpush2.msra.mxu0 %v1517
        %7104 = vmatprep.subr.mxu0 0.0
        %7105 = vmatpush2.msra.mxu0 %v1516
        %7106 = vmatprep.subr.mxu0 0.0
        %7107 = vmatpush2.msra.mxu0 %v1515
        %7108 = vmatprep.subr.mxu0 0.0
        %7109 = vmatpush2.msra.mxu0 %v1514
        %7110 = vmatprep.subr.mxu0 0.0
        %7111 = vmatpush2.msra.mxu0 %v1513
        %7112 = vmatprep.subr.mxu0 0.0
        %7113 = vmatpush2.msra.mxu0 %v1512
        %7114 = vmatprep.subr.mxu0 0.0
        %7115 = vmatpush2.msra.mxu0 %v1511
        %7116 = vmatprep.subr.mxu0 0.0
        %7117 = vmatpush2.msra.mxu0 %v1510
        %7118 = vmatprep.subr.mxu0 0.0
        %7119 = vmatpush2.msra.mxu0 %v1509
        %7120 = vmatprep.subr.mxu0 0.0
        %7121 = vmatpush2.msra.mxu0 %v1508
        %7122 = vmatprep.subr.mxu0 0.0
        %7123 = vmatpush2.msra.mxu0 %v1507
        %7124 = vmatprep.subr.mxu0 0.0
        %7125 = vmatpush2.msra.mxu0 %v1506
        %7126 = vmatprep.mubr.f32.mxu0 %v3732
        %7127 = vmatmul.mubr.f32.gmra.mxu0 %v3724
        %v7128 = vpop.f32.mrf.mxu0
        %v7129 = vadd.f32 %v7059, %v7128
        %v7130 = vpop.f32.mrf.mxu0
        %7131 = vdwg.mxu0
        %7132 = vmatprep.subr.mxu0 0.0
        %7133 = vmatpush1.msra.mxu0 %v1537
        %7134 = vmatprep.subr.mxu0 0.0
        %7135 = vmatpush1.msra.mxu0 %v1536
        %7136 = vmatprep.subr.mxu0 0.0
        %7137 = vmatpush1.msra.mxu0 %v1535
        %7138 = vmatprep.subr.mxu0 0.0
        %7139 = vmatpush1.msra.mxu0 %v1534
        %7140 = vmatprep.subr.mxu0 0.0
        %7141 = vmatpush1.msra.mxu0 %v1533
        %7142 = vmatprep.subr.mxu0 0.0
        %7143 = vmatpush1.msra.mxu0 %v1532
        %7144 = vmatprep.subr.mxu0 0.0
        %7145 = vmatpush1.msra.mxu0 %v1531
        %7146 = vmatprep.subr.mxu0 0.0
        %7147 = vmatpush1.msra.mxu0 %v1530
        %7148 = vmatprep.subr.mxu0 0.0
        %7149 = vmatpush1.msra.mxu0 %v1529
        %7150 = vmatprep.subr.mxu0 0.0
        %7151 = vmatpush1.msra.mxu0 %v1528
        %7152 = vmatprep.subr.mxu0 0.0
        %7153 = vmatpush1.msra.mxu0 %v1527
        %7154 = vmatprep.subr.mxu0 0.0
        %7155 = vmatpush1.msra.mxu0 %v1526
        %7156 = vmatprep.subr.mxu0 0.0
        %7157 = vmatpush1.msra.mxu0 %v1525
        %7158 = vmatprep.subr.mxu0 0.0
        %7159 = vmatpush1.msra.mxu0 %v1524
        %7160 = vmatprep.subr.mxu0 0.0
        %7161 = vmatpush1.msra.mxu0 %v1523
        %7162 = vmatprep.subr.mxu0 0.0
        %7163 = vmatpush1.msra.mxu0 %v1522
        %7164 = vmatprep.subr.mxu0 0.0
        %7165 = vmatpush2.msra.mxu0 %v1553
        %7166 = vmatprep.subr.mxu0 0.0
        %7167 = vmatpush2.msra.mxu0 %v1552
        %7168 = vmatprep.subr.mxu0 0.0
        %7169 = vmatpush2.msra.mxu0 %v1551
        %7170 = vmatprep.subr.mxu0 0.0
        %7171 = vmatpush2.msra.mxu0 %v1550
        %7172 = vmatprep.subr.mxu0 0.0
        %7173 = vmatpush2.msra.mxu0 %v1549
        %7174 = vmatprep.subr.mxu0 0.0
        %7175 = vmatpush2.msra.mxu0 %v1548
        %7176 = vmatprep.subr.mxu0 0.0
        %7177 = vmatpush2.msra.mxu0 %v1547
        %7178 = vmatprep.subr.mxu0 0.0
        %7179 = vmatpush2.msra.mxu0 %v1546
        %7180 = vmatprep.subr.mxu0 0.0
        %7181 = vmatpush2.msra.mxu0 %v1545
        %7182 = vmatprep.subr.mxu0 0.0
        %7183 = vmatpush2.msra.mxu0 %v1544
        %7184 = vmatprep.subr.mxu0 0.0
        %7185 = vmatpush2.msra.mxu0 %v1543
        %7186 = vmatprep.subr.mxu0 0.0
        %7187 = vmatpush2.msra.mxu0 %v1542
        %7188 = vmatprep.subr.mxu0 0.0
        %7189 = vmatpush2.msra.mxu0 %v1541
        %7190 = vmatprep.subr.mxu0 0.0
        %7191 = vmatpush2.msra.mxu0 %v1540
        %7192 = vmatprep.subr.mxu0 0.0
        %7193 = vmatpush2.msra.mxu0 %v1539
        %7194 = vmatprep.subr.mxu0 0.0
        %7195 = vmatpush2.msra.mxu0 %v1538
        %7196 = vmatprep.mubr.f32.mxu0 %v3733
        %7197 = vmatmul.mubr.f32.gmra.mxu0 %v3731
        %v7198 = vpop.f32.mrf.mxu0
        %v7199 = vadd.f32 %v7129, %v7198
        %v7200 = vpop.f32.mrf.mxu0
        %7201 = vdwg.mxu0
        %7202 = vmatprep.subr.mxu0 0.0
        %7203 = vmatpush1.msra.mxu0 %v1569
        %7204 = vmatprep.subr.mxu0 0.0
        %7205 = vmatpush1.msra.mxu0 %v1568
        %7206 = vmatprep.subr.mxu0 0.0
        %7207 = vmatpush1.msra.mxu0 %v1567
        %7208 = vmatprep.subr.mxu0 0.0
        %7209 = vmatpush1.msra.mxu0 %v1566
        %7210 = vmatprep.subr.mxu0 0.0
        %7211 = vmatpush1.msra.mxu0 %v1565
        %7212 = vmatprep.subr.mxu0 0.0
        %7213 = vmatpush1.msra.mxu0 %v1564
        %7214 = vmatprep.subr.mxu0 0.0
        %7215 = vmatpush1.msra.mxu0 %v1563
        %7216 = vmatprep.subr.mxu0 0.0
        %7217 = vmatpush1.msra.mxu0 %v1562
        %7218 = vmatprep.subr.mxu0 0.0
        %7219 = vmatpush1.msra.mxu0 %v1561
        %7220 = vmatprep.subr.mxu0 0.0
        %7221 = vmatpush1.msra.mxu0 %v1560
        %7222 = vmatprep.subr.mxu0 0.0
        %7223 = vmatpush1.msra.mxu0 %v1559
        %7224 = vmatprep.subr.mxu0 0.0
        %7225 = vmatpush1.msra.mxu0 %v1558
        %7226 = vmatprep.subr.mxu0 0.0
        %7227 = vmatpush1.msra.mxu0 %v1557
        %7228 = vmatprep.subr.mxu0 0.0
        %7229 = vmatpush1.msra.mxu0 %v1556
        %7230 = vmatprep.subr.mxu0 0.0
        %7231 = vmatpush1.msra.mxu0 %v1555
        %7232 = vmatprep.subr.mxu0 0.0
        %7233 = vmatpush1.msra.mxu0 %v1554
        %7234 = vmatprep.subr.mxu0 0.0
        %7235 = vmatpush2.msra.mxu0 %v1585
        %7236 = vmatprep.subr.mxu0 0.0
        %7237 = vmatpush2.msra.mxu0 %v1584
        %7238 = vmatprep.subr.mxu0 0.0
        %7239 = vmatpush2.msra.mxu0 %v1583
        %7240 = vmatprep.subr.mxu0 0.0
        %7241 = vmatpush2.msra.mxu0 %v1582
        %7242 = vmatprep.subr.mxu0 0.0
        %7243 = vmatpush2.msra.mxu0 %v1581
        %7244 = vmatprep.subr.mxu0 0.0
        %7245 = vmatpush2.msra.mxu0 %v1580
        %7246 = vmatprep.subr.mxu0 0.0
        %7247 = vmatpush2.msra.mxu0 %v1579
        %7248 = vmatprep.subr.mxu0 0.0
        %7249 = vmatpush2.msra.mxu0 %v1578
        %7250 = vmatprep.subr.mxu0 0.0
        %7251 = vmatpush2.msra.mxu0 %v1577
        %7252 = vmatprep.subr.mxu0 0.0
        %7253 = vmatpush2.msra.mxu0 %v1576
        %7254 = vmatprep.subr.mxu0 0.0
        %7255 = vmatpush2.msra.mxu0 %v1575
        %7256 = vmatprep.subr.mxu0 0.0
        %7257 = vmatpush2.msra.mxu0 %v1574
        %7258 = vmatprep.subr.mxu0 0.0
        %7259 = vmatpush2.msra.mxu0 %v1573
        %7260 = vmatprep.subr.mxu0 0.0
        %7261 = vmatpush2.msra.mxu0 %v1572
        %7262 = vmatprep.subr.mxu0 0.0
        %7263 = vmatpush2.msra.mxu0 %v1571
        %7264 = vmatprep.subr.mxu0 0.0
        %7265 = vmatpush2.msra.mxu0 %v1570
        %7266 = vmatprep.mubr.f32.mxu0 %v3749
        %7267 = vmatmul.mubr.f32.gmra.mxu0 %v3741
        %v7268 = vpop.f32.mrf.mxu0
        %v7269 = vadd.f32 %v7199, %v7268
        %v7270 = vpop.f32.mrf.mxu0
        %7271 = vdwg.mxu0
        %7272 = vmatprep.subr.mxu0 0.0
        %7273 = vmatpush1.msra.mxu0 %v1601
        %7274 = vmatprep.subr.mxu0 0.0
        %7275 = vmatpush1.msra.mxu0 %v1600
        %7276 = vmatprep.subr.mxu0 0.0
        %7277 = vmatpush1.msra.mxu0 %v1599
        %7278 = vmatprep.subr.mxu0 0.0
        %7279 = vmatpush1.msra.mxu0 %v1598
        %7280 = vmatprep.subr.mxu0 0.0
        %7281 = vmatpush1.msra.mxu0 %v1597
        %7282 = vmatprep.subr.mxu0 0.0
        %7283 = vmatpush1.msra.mxu0 %v1596
        %7284 = vmatprep.subr.mxu0 0.0
        %7285 = vmatpush1.msra.mxu0 %v1595
        %7286 = vmatprep.subr.mxu0 0.0
        %7287 = vmatpush1.msra.mxu0 %v1594
        %7288 = vmatprep.subr.mxu0 0.0
        %7289 = vmatpush1.msra.mxu0 %v1593
        %7290 = vmatprep.subr.mxu0 0.0
        %7291 = vmatpush1.msra.mxu0 %v1592
        %7292 = vmatprep.subr.mxu0 0.0
        %7293 = vmatpush1.msra.mxu0 %v1591
        %7294 = vmatprep.subr.mxu0 0.0
        %7295 = vmatpush1.msra.mxu0 %v1590
        %7296 = vmatprep.subr.mxu0 0.0
        %7297 = vmatpush1.msra.mxu0 %v1589
        %7298 = vmatprep.subr.mxu0 0.0
        %7299 = vmatpush1.msra.mxu0 %v1588
        %7300 = vmatprep.subr.mxu0 0.0
        %7301 = vmatpush1.msra.mxu0 %v1587
        %7302 = vmatprep.subr.mxu0 0.0
        %7303 = vmatpush1.msra.mxu0 %v1586
        %7304 = vmatprep.subr.mxu0 0.0
        %7305 = vmatpush2.msra.mxu0 %v1617
        %7306 = vmatprep.subr.mxu0 0.0
        %7307 = vmatpush2.msra.mxu0 %v1616
        %7308 = vmatprep.subr.mxu0 0.0
        %7309 = vmatpush2.msra.mxu0 %v1615
        %7310 = vmatprep.subr.mxu0 0.0
        %7311 = vmatpush2.msra.mxu0 %v1614
        %7312 = vmatprep.subr.mxu0 0.0
        %7313 = vmatpush2.msra.mxu0 %v1613
        %7314 = vmatprep.subr.mxu0 0.0
        %7315 = vmatpush2.msra.mxu0 %v1612
        %7316 = vmatprep.subr.mxu0 0.0
        %7317 = vmatpush2.msra.mxu0 %v1611
        %7318 = vmatprep.subr.mxu0 0.0
        %7319 = vmatpush2.msra.mxu0 %v1610
        %7320 = vmatprep.subr.mxu0 0.0
        %7321 = vmatpush2.msra.mxu0 %v1609
        %7322 = vmatprep.subr.mxu0 0.0
        %7323 = vmatpush2.msra.mxu0 %v1608
        %7324 = vmatprep.subr.mxu0 0.0
        %7325 = vmatpush2.msra.mxu0 %v1607
        %7326 = vmatprep.subr.mxu0 0.0
        %7327 = vmatpush2.msra.mxu0 %v1606
        %7328 = vmatprep.subr.mxu0 0.0
        %7329 = vmatpush2.msra.mxu0 %v1605
        %7330 = vmatprep.subr.mxu0 0.0
        %7331 = vmatpush2.msra.mxu0 %v1604
        %7332 = vmatprep.subr.mxu0 0.0
        %7333 = vmatpush2.msra.mxu0 %v1603
        %7334 = vmatprep.subr.mxu0 0.0
        %7335 = vmatpush2.msra.mxu0 %v1602
        %7336 = vmatprep.mubr.f32.mxu0 %v3750
        %7337 = vmatmul.mubr.f32.gmra.mxu0 %v3748
        %v7338 = vpop.f32.mrf.mxu0
        %v7339 = vadd.f32 %v7269, %v7338
        %v7340 = vpop.f32.mrf.mxu0
        %7341 = vdwg.mxu0
        %7342 = vmatprep.subr.mxu0 0.0
        %7343 = vmatpush1.msra.mxu0 %v1633
        %7344 = vmatprep.subr.mxu0 0.0
        %7345 = vmatpush1.msra.mxu0 %v1632
        %7346 = vmatprep.subr.mxu0 0.0
        %7347 = vmatpush1.msra.mxu0 %v1631
        %7348 = vmatprep.subr.mxu0 0.0
        %7349 = vmatpush1.msra.mxu0 %v1630
        %7350 = vmatprep.subr.mxu0 0.0
        %7351 = vmatpush1.msra.mxu0 %v1629
        %7352 = vmatprep.subr.mxu0 0.0
        %7353 = vmatpush1.msra.mxu0 %v1628
        %7354 = vmatprep.subr.mxu0 0.0
        %7355 = vmatpush1.msra.mxu0 %v1627
        %7356 = vmatprep.subr.mxu0 0.0
        %7357 = vmatpush1.msra.mxu0 %v1626
        %7358 = vmatprep.subr.mxu0 0.0
        %7359 = vmatpush1.msra.mxu0 %v1625
        %7360 = vmatprep.subr.mxu0 0.0
        %7361 = vmatpush1.msra.mxu0 %v1624
        %7362 = vmatprep.subr.mxu0 0.0
        %7363 = vmatpush1.msra.mxu0 %v1623
        %7364 = vmatprep.subr.mxu0 0.0
        %7365 = vmatpush1.msra.mxu0 %v1622
        %7366 = vmatprep.subr.mxu0 0.0
        %7367 = vmatpush1.msra.mxu0 %v1621
        %7368 = vmatprep.subr.mxu0 0.0
        %7369 = vmatpush1.msra.mxu0 %v1620
        %7370 = vmatprep.subr.mxu0 0.0
        %7371 = vmatpush1.msra.mxu0 %v1619
        %7372 = vmatprep.subr.mxu0 0.0
        %7373 = vmatpush1.msra.mxu0 %v1618
        %7374 = vmatprep.subr.mxu0 0.0
        %7375 = vmatpush2.msra.mxu0 %v1649
        %7376 = vmatprep.subr.mxu0 0.0
        %7377 = vmatpush2.msra.mxu0 %v1648
        %7378 = vmatprep.subr.mxu0 0.0
        %7379 = vmatpush2.msra.mxu0 %v1647
        %7380 = vmatprep.subr.mxu0 0.0
        %7381 = vmatpush2.msra.mxu0 %v1646
        %7382 = vmatprep.subr.mxu0 0.0
        %7383 = vmatpush2.msra.mxu0 %v1645
        %7384 = vmatprep.subr.mxu0 0.0
        %7385 = vmatpush2.msra.mxu0 %v1644
        %7386 = vmatprep.subr.mxu0 0.0
        %7387 = vmatpush2.msra.mxu0 %v1643
        %7388 = vmatprep.subr.mxu0 0.0
        %7389 = vmatpush2.msra.mxu0 %v1642
        %7390 = vmatprep.subr.mxu0 0.0
        %7391 = vmatpush2.msra.mxu0 %v1641
        %7392 = vmatprep.subr.mxu0 0.0
        %7393 = vmatpush2.msra.mxu0 %v1640
        %7394 = vmatprep.subr.mxu0 0.0
        %7395 = vmatpush2.msra.mxu0 %v1639
        %7396 = vmatprep.subr.mxu0 0.0
        %7397 = vmatpush2.msra.mxu0 %v1638
        %7398 = vmatprep.subr.mxu0 0.0
        %7399 = vmatpush2.msra.mxu0 %v1637
        %7400 = vmatprep.subr.mxu0 0.0
        %7401 = vmatpush2.msra.mxu0 %v1636
        %7402 = vmatprep.subr.mxu0 0.0
        %7403 = vmatpush2.msra.mxu0 %v1635
        %7404 = vmatprep.subr.mxu0 0.0
        %7405 = vmatpush2.msra.mxu0 %v1634
        %7406 = vmatprep.mubr.f32.mxu0 %v3766
        %7407 = vmatmul.mubr.f32.gmra.mxu0 %v3758
        %v7408 = vpop.f32.mrf.mxu0
        %v7409 = vadd.f32 %v7339, %v7408
        %v7410 = vpop.f32.mrf.mxu0
        %7411 = vdwg.mxu0
        %7412 = vmatprep.subr.mxu0 0.0
        %7413 = vmatpush1.msra.mxu0 %v1665
        %7414 = vmatprep.subr.mxu0 0.0
        %7415 = vmatpush1.msra.mxu0 %v1664
        %7416 = vmatprep.subr.mxu0 0.0
        %7417 = vmatpush1.msra.mxu0 %v1663
        %7418 = vmatprep.subr.mxu0 0.0
        %7419 = vmatpush1.msra.mxu0 %v1662
        %7420 = vmatprep.subr.mxu0 0.0
        %7421 = vmatpush1.msra.mxu0 %v1661
        %7422 = vmatprep.subr.mxu0 0.0
        %7423 = vmatpush1.msra.mxu0 %v1660
        %7424 = vmatprep.subr.mxu0 0.0
        %7425 = vmatpush1.msra.mxu0 %v1659
        %7426 = vmatprep.subr.mxu0 0.0
        %7427 = vmatpush1.msra.mxu0 %v1658
        %7428 = vmatprep.subr.mxu0 0.0
        %7429 = vmatpush1.msra.mxu0 %v1657
        %7430 = vmatprep.subr.mxu0 0.0
        %7431 = vmatpush1.msra.mxu0 %v1656
        %7432 = vmatprep.subr.mxu0 0.0
        %7433 = vmatpush1.msra.mxu0 %v1655
        %7434 = vmatprep.subr.mxu0 0.0
        %7435 = vmatpush1.msra.mxu0 %v1654
        %7436 = vmatprep.subr.mxu0 0.0
        %7437 = vmatpush1.msra.mxu0 %v1653
        %7438 = vmatprep.subr.mxu0 0.0
        %7439 = vmatpush1.msra.mxu0 %v1652
        %7440 = vmatprep.subr.mxu0 0.0
        %7441 = vmatpush1.msra.mxu0 %v1651
        %7442 = vmatprep.subr.mxu0 0.0
        %7443 = vmatpush1.msra.mxu0 %v1650
        %7444 = vmatprep.subr.mxu0 0.0
        %7445 = vmatpush2.msra.mxu0 %v1681
        %7446 = vmatprep.subr.mxu0 0.0
        %7447 = vmatpush2.msra.mxu0 %v1680
        %7448 = vmatprep.subr.mxu0 0.0
        %7449 = vmatpush2.msra.mxu0 %v1679
        %7450 = vmatprep.subr.mxu0 0.0
        %7451 = vmatpush2.msra.mxu0 %v1678
        %7452 = vmatprep.subr.mxu0 0.0
        %7453 = vmatpush2.msra.mxu0 %v1677
        %7454 = vmatprep.subr.mxu0 0.0
        %7455 = vmatpush2.msra.mxu0 %v1676
        %7456 = vmatprep.subr.mxu0 0.0
        %7457 = vmatpush2.msra.mxu0 %v1675
        %7458 = vmatprep.subr.mxu0 0.0
        %7459 = vmatpush2.msra.mxu0 %v1674
        %7460 = vmatprep.subr.mxu0 0.0
        %7461 = vmatpush2.msra.mxu0 %v1673
        %7462 = vmatprep.subr.mxu0 0.0
        %7463 = vmatpush2.msra.mxu0 %v1672
        %7464 = vmatprep.subr.mxu0 0.0
        %7465 = vmatpush2.msra.mxu0 %v1671
        %7466 = vmatprep.subr.mxu0 0.0
        %7467 = vmatpush2.msra.mxu0 %v1670
        %7468 = vmatprep.subr.mxu0 0.0
        %7469 = vmatpush2.msra.mxu0 %v1669
        %7470 = vmatprep.subr.mxu0 0.0
        %7471 = vmatpush2.msra.mxu0 %v1668
        %7472 = vmatprep.subr.mxu0 0.0
        %7473 = vmatpush2.msra.mxu0 %v1667
        %7474 = vmatprep.subr.mxu0 0.0
        %7475 = vmatpush2.msra.mxu0 %v1666
        %7476 = vmatprep.mubr.f32.mxu0 %v3767
        %7477 = vmatmul.mubr.f32.gmra.mxu0 %v3765
        %v7478 = vpop.f32.mrf.mxu0
        %v7479 = vadd.f32 %v7409, %v7478
        %v7480 = vpop.f32.mrf.mxu0
        %7481 = vdwg.mxu0
        %7482 = vmatprep.subr.mxu0 0.0
        %7483 = vmatpush1.msra.mxu0 %v1697
        %7484 = vmatprep.subr.mxu0 0.0
        %7485 = vmatpush1.msra.mxu0 %v1696
        %7486 = vmatprep.subr.mxu0 0.0
        %7487 = vmatpush1.msra.mxu0 %v1695
        %7488 = vmatprep.subr.mxu0 0.0
        %7489 = vmatpush1.msra.mxu0 %v1694
        %7490 = vmatprep.subr.mxu0 0.0
        %7491 = vmatpush1.msra.mxu0 %v1693
        %7492 = vmatprep.subr.mxu0 0.0
        %7493 = vmatpush1.msra.mxu0 %v1692
        %7494 = vmatprep.subr.mxu0 0.0
        %7495 = vmatpush1.msra.mxu0 %v1691
        %7496 = vmatprep.subr.mxu0 0.0
        %7497 = vmatpush1.msra.mxu0 %v1690
        %7498 = vmatprep.subr.mxu0 0.0
        %7499 = vmatpush1.msra.mxu0 %v1689
        %7500 = vmatprep.subr.mxu0 0.0
        %7501 = vmatpush1.msra.mxu0 %v1688
        %7502 = vmatprep.subr.mxu0 0.0
        %7503 = vmatpush1.msra.mxu0 %v1687
        %7504 = vmatprep.subr.mxu0 0.0
        %7505 = vmatpush1.msra.mxu0 %v1686
        %7506 = vmatprep.subr.mxu0 0.0
        %7507 = vmatpush1.msra.mxu0 %v1685
        %7508 = vmatprep.subr.mxu0 0.0
        %7509 = vmatpush1.msra.mxu0 %v1684
        %7510 = vmatprep.subr.mxu0 0.0
        %7511 = vmatpush1.msra.mxu0 %v1683
        %7512 = vmatprep.subr.mxu0 0.0
        %7513 = vmatpush1.msra.mxu0 %v1682
        %7514 = vmatprep.subr.mxu0 0.0
        %7515 = vmatpush2.msra.mxu0 %v1713
        %7516 = vmatprep.subr.mxu0 0.0
        %7517 = vmatpush2.msra.mxu0 %v1712
        %7518 = vmatprep.subr.mxu0 0.0
        %7519 = vmatpush2.msra.mxu0 %v1711
        %7520 = vmatprep.subr.mxu0 0.0
        %7521 = vmatpush2.msra.mxu0 %v1710
        %7522 = vmatprep.subr.mxu0 0.0
        %7523 = vmatpush2.msra.mxu0 %v1709
        %7524 = vmatprep.subr.mxu0 0.0
        %7525 = vmatpush2.msra.mxu0 %v1708
        %7526 = vmatprep.subr.mxu0 0.0
        %7527 = vmatpush2.msra.mxu0 %v1707
        %7528 = vmatprep.subr.mxu0 0.0
        %7529 = vmatpush2.msra.mxu0 %v1706
        %7530 = vmatprep.subr.mxu0 0.0
        %7531 = vmatpush2.msra.mxu0 %v1705
        %7532 = vmatprep.subr.mxu0 0.0
        %7533 = vmatpush2.msra.mxu0 %v1704
        %7534 = vmatprep.subr.mxu0 0.0
        %7535 = vmatpush2.msra.mxu0 %v1703
        %7536 = vmatprep.subr.mxu0 0.0
        %7537 = vmatpush2.msra.mxu0 %v1702
        %7538 = vmatprep.subr.mxu0 0.0
        %7539 = vmatpush2.msra.mxu0 %v1701
        %7540 = vmatprep.subr.mxu0 0.0
        %7541 = vmatpush2.msra.mxu0 %v1700
        %7542 = vmatprep.subr.mxu0 0.0
        %7543 = vmatpush2.msra.mxu0 %v1699
        %7544 = vmatprep.subr.mxu0 0.0
        %7545 = vmatpush2.msra.mxu0 %v1698
        %7546 = vmatprep.mubr.f32.mxu0 %v3783
        %7547 = vmatmul.mubr.f32.gmra.mxu0 %v3775
        %v7548 = vpop.f32.mrf.mxu0
        %v7549 = vadd.f32 %v7479, %v7548
        %v7550 = vpop.f32.mrf.mxu0
        %7551 = vdwg.mxu0
        %7552 = vmatprep.subr.mxu0 0.0
        %7553 = vmatpush1.msra.mxu0 %v1729
        %7554 = vmatprep.subr.mxu0 0.0
        %7555 = vmatpush1.msra.mxu0 %v1728
        %7556 = vmatprep.subr.mxu0 0.0
        %7557 = vmatpush1.msra.mxu0 %v1727
        %7558 = vmatprep.subr.mxu0 0.0
        %7559 = vmatpush1.msra.mxu0 %v1726
        %7560 = vmatprep.subr.mxu0 0.0
        %7561 = vmatpush1.msra.mxu0 %v1725
        %7562 = vmatprep.subr.mxu0 0.0
        %7563 = vmatpush1.msra.mxu0 %v1724
        %7564 = vmatprep.subr.mxu0 0.0
        %7565 = vmatpush1.msra.mxu0 %v1723
        %7566 = vmatprep.subr.mxu0 0.0
        %7567 = vmatpush1.msra.mxu0 %v1722
        %7568 = vmatprep.subr.mxu0 0.0
        %7569 = vmatpush1.msra.mxu0 %v1721
        %7570 = vmatprep.subr.mxu0 0.0
        %7571 = vmatpush1.msra.mxu0 %v1720
        %7572 = vmatprep.subr.mxu0 0.0
        %7573 = vmatpush1.msra.mxu0 %v1719
        %7574 = vmatprep.subr.mxu0 0.0
        %7575 = vmatpush1.msra.mxu0 %v1718
        %7576 = vmatprep.subr.mxu0 0.0
        %7577 = vmatpush1.msra.mxu0 %v1717
        %7578 = vmatprep.subr.mxu0 0.0
        %7579 = vmatpush1.msra.mxu0 %v1716
        %7580 = vmatprep.subr.mxu0 0.0
        %7581 = vmatpush1.msra.mxu0 %v1715
        %7582 = vmatprep.subr.mxu0 0.0
        %7583 = vmatpush1.msra.mxu0 %v1714
        %7584 = vmatprep.subr.mxu0 0.0
        %7585 = vmatpush2.msra.mxu0 %v1745
        %7586 = vmatprep.subr.mxu0 0.0
        %7587 = vmatpush2.msra.mxu0 %v1744
        %7588 = vmatprep.subr.mxu0 0.0
        %7589 = vmatpush2.msra.mxu0 %v1743
        %7590 = vmatprep.subr.mxu0 0.0
        %7591 = vmatpush2.msra.mxu0 %v1742
        %7592 = vmatprep.subr.mxu0 0.0
        %7593 = vmatpush2.msra.mxu0 %v1741
        %7594 = vmatprep.subr.mxu0 0.0
        %7595 = vmatpush2.msra.mxu0 %v1740
        %7596 = vmatprep.subr.mxu0 0.0
        %7597 = vmatpush2.msra.mxu0 %v1739
        %7598 = vmatprep.subr.mxu0 0.0
        %7599 = vmatpush2.msra.mxu0 %v1738
        %7600 = vmatprep.subr.mxu0 0.0
        %7601 = vmatpush2.msra.mxu0 %v1737
        %7602 = vmatprep.subr.mxu0 0.0
        %7603 = vmatpush2.msra.mxu0 %v1736
        %7604 = vmatprep.subr.mxu0 0.0
        %7605 = vmatpush2.msra.mxu0 %v1735
        %7606 = vmatprep.subr.mxu0 0.0
        %7607 = vmatpush2.msra.mxu0 %v1734
        %7608 = vmatprep.subr.mxu0 0.0
        %7609 = vmatpush2.msra.mxu0 %v1733
        %7610 = vmatprep.subr.mxu0 0.0
        %7611 = vmatpush2.msra.mxu0 %v1732
        %7612 = vmatprep.subr.mxu0 0.0
        %7613 = vmatpush2.msra.mxu0 %v1731
        %7614 = vmatprep.subr.mxu0 0.0
        %7615 = vmatpush2.msra.mxu0 %v1730
        %7616 = vmatprep.mubr.f32.mxu0 %v3784
        %7617 = vmatmul.mubr.f32.gmra.mxu0 %v3782
        %v7618 = vpop.f32.mrf.mxu0
        %v7619 = vadd.f32 %v7549, %v7618
        %v7620 = vpop.f32.mrf.mxu0
        %7621 = vdwg.mxu0
        %7622 = vmatprep.subr.mxu0 0.0
        %7623 = vmatpush1.msra.mxu0 %v1761
        %7624 = vmatprep.subr.mxu0 0.0
        %7625 = vmatpush1.msra.mxu0 %v1760
        %7626 = vmatprep.subr.mxu0 0.0
        %7627 = vmatpush1.msra.mxu0 %v1759
        %7628 = vmatprep.subr.mxu0 0.0
        %7629 = vmatpush1.msra.mxu0 %v1758
        %7630 = vmatprep.subr.mxu0 0.0
        %7631 = vmatpush1.msra.mxu0 %v1757
        %7632 = vmatprep.subr.mxu0 0.0
        %7633 = vmatpush1.msra.mxu0 %v1756
        %7634 = vmatprep.subr.mxu0 0.0
        %7635 = vmatpush1.msra.mxu0 %v1755
        %7636 = vmatprep.subr.mxu0 0.0
        %7637 = vmatpush1.msra.mxu0 %v1754
        %7638 = vmatprep.subr.mxu0 0.0
        %7639 = vmatpush1.msra.mxu0 %v1753
        %7640 = vmatprep.subr.mxu0 0.0
        %7641 = vmatpush1.msra.mxu0 %v1752
        %7642 = vmatprep.subr.mxu0 0.0
        %7643 = vmatpush1.msra.mxu0 %v1751
        %7644 = vmatprep.subr.mxu0 0.0
        %7645 = vmatpush1.msra.mxu0 %v1750
        %7646 = vmatprep.subr.mxu0 0.0
        %7647 = vmatpush1.msra.mxu0 %v1749
        %7648 = vmatprep.subr.mxu0 0.0
        %7649 = vmatpush1.msra.mxu0 %v1748
        %7650 = vmatprep.subr.mxu0 0.0
        %7651 = vmatpush1.msra.mxu0 %v1747
        %7652 = vmatprep.subr.mxu0 0.0
        %7653 = vmatpush1.msra.mxu0 %v1746
        %7654 = vmatprep.subr.mxu0 0.0
        %7655 = vmatpush2.msra.mxu0 %v1777
        %7656 = vmatprep.subr.mxu0 0.0
        %7657 = vmatpush2.msra.mxu0 %v1776
        %7658 = vmatprep.subr.mxu0 0.0
        %7659 = vmatpush2.msra.mxu0 %v1775
        %7660 = vmatprep.subr.mxu0 0.0
        %7661 = vmatpush2.msra.mxu0 %v1774
        %7662 = vmatprep.subr.mxu0 0.0
        %7663 = vmatpush2.msra.mxu0 %v1773
        %7664 = vmatprep.subr.mxu0 0.0
        %7665 = vmatpush2.msra.mxu0 %v1772
        %7666 = vmatprep.subr.mxu0 0.0
        %7667 = vmatpush2.msra.mxu0 %v1771
        %7668 = vmatprep.subr.mxu0 0.0
        %7669 = vmatpush2.msra.mxu0 %v1770
        %7670 = vmatprep.subr.mxu0 0.0
        %7671 = vmatpush2.msra.mxu0 %v1769
        %7672 = vmatprep.subr.mxu0 0.0
        %7673 = vmatpush2.msra.mxu0 %v1768
        %7674 = vmatprep.subr.mxu0 0.0
        %7675 = vmatpush2.msra.mxu0 %v1767
        %7676 = vmatprep.subr.mxu0 0.0
        %7677 = vmatpush2.msra.mxu0 %v1766
        %7678 = vmatprep.subr.mxu0 0.0
        %7679 = vmatpush2.msra.mxu0 %v1765
        %7680 = vmatprep.subr.mxu0 0.0
        %7681 = vmatpush2.msra.mxu0 %v1764
        %7682 = vmatprep.subr.mxu0 0.0
        %7683 = vmatpush2.msra.mxu0 %v1763
        %7684 = vmatprep.subr.mxu0 0.0
        %7685 = vmatpush2.msra.mxu0 %v1762
        %7686 = vmatprep.mubr.f32.mxu0 %v3800
        %7687 = vmatmul.mubr.f32.gmra.mxu0 %v3792
        %v7688 = vpop.f32.mrf.mxu0
        %v7689 = vadd.f32 %v7619, %v7688
        %v7690 = vpop.f32.mrf.mxu0
        %7691 = vdwg.mxu0
        %7692 = vmatprep.subr.mxu0 0.0
        %7693 = vmatpush1.msra.mxu0 %v1793
        %7694 = vmatprep.subr.mxu0 0.0
        %7695 = vmatpush1.msra.mxu0 %v1792
        %7696 = vmatprep.subr.mxu0 0.0
        %7697 = vmatpush1.msra.mxu0 %v1791
        %7698 = vmatprep.subr.mxu0 0.0
        %7699 = vmatpush1.msra.mxu0 %v1790
        %7700 = vmatprep.subr.mxu0 0.0
        %7701 = vmatpush1.msra.mxu0 %v1789
        %7702 = vmatprep.subr.mxu0 0.0
        %7703 = vmatpush1.msra.mxu0 %v1788
        %7704 = vmatprep.subr.mxu0 0.0
        %7705 = vmatpush1.msra.mxu0 %v1787
        %7706 = vmatprep.subr.mxu0 0.0
        %7707 = vmatpush1.msra.mxu0 %v1786
        %7708 = vmatprep.subr.mxu0 0.0
        %7709 = vmatpush1.msra.mxu0 %v1785
        %7710 = vmatprep.subr.mxu0 0.0
        %7711 = vmatpush1.msra.mxu0 %v1784
        %7712 = vmatprep.subr.mxu0 0.0
        %7713 = vmatpush1.msra.mxu0 %v1783
        %7714 = vmatprep.subr.mxu0 0.0
        %7715 = vmatpush1.msra.mxu0 %v1782
        %7716 = vmatprep.subr.mxu0 0.0
        %7717 = vmatpush1.msra.mxu0 %v1781
        %7718 = vmatprep.subr.mxu0 0.0
        %7719 = vmatpush1.msra.mxu0 %v1780
        %7720 = vmatprep.subr.mxu0 0.0
        %7721 = vmatpush1.msra.mxu0 %v1779
        %7722 = vmatprep.subr.mxu0 0.0
        %7723 = vmatpush1.msra.mxu0 %v1778
        %7724 = vmatprep.subr.mxu0 0.0
        %7725 = vmatpush2.msra.mxu0 %v1809
        %7726 = vmatprep.subr.mxu0 0.0
        %7727 = vmatpush2.msra.mxu0 %v1808
        %7728 = vmatprep.subr.mxu0 0.0
        %7729 = vmatpush2.msra.mxu0 %v1807
        %7730 = vmatprep.subr.mxu0 0.0
        %7731 = vmatpush2.msra.mxu0 %v1806
        %7732 = vmatprep.subr.mxu0 0.0
        %7733 = vmatpush2.msra.mxu0 %v1805
        %7734 = vmatprep.subr.mxu0 0.0
        %7735 = vmatpush2.msra.mxu0 %v1804
        %7736 = vmatprep.subr.mxu0 0.0
        %7737 = vmatpush2.msra.mxu0 %v1803
        %7738 = vmatprep.subr.mxu0 0.0
        %7739 = vmatpush2.msra.mxu0 %v1802
        %7740 = vmatprep.subr.mxu0 0.0
        %7741 = vmatpush2.msra.mxu0 %v1801
        %7742 = vmatprep.subr.mxu0 0.0
        %7743 = vmatpush2.msra.mxu0 %v1800
        %7744 = vmatprep.subr.mxu0 0.0
        %7745 = vmatpush2.msra.mxu0 %v1799
        %7746 = vmatprep.subr.mxu0 0.0
        %7747 = vmatpush2.msra.mxu0 %v1798
        %7748 = vmatprep.subr.mxu0 0.0
        %7749 = vmatpush2.msra.mxu0 %v1797
        %7750 = vmatprep.subr.mxu0 0.0
        %7751 = vmatpush2.msra.mxu0 %v1796
        %7752 = vmatprep.subr.mxu0 0.0
        %7753 = vmatpush2.msra.mxu0 %v1795
        %7754 = vmatprep.subr.mxu0 0.0
        %7755 = vmatpush2.msra.mxu0 %v1794
        %7756 = vmatprep.mubr.f32.mxu0 %v3801
        %7757 = vmatmul.mubr.f32.gmra.mxu0 %v3799
        %v7758 = vpop.f32.mrf.mxu0
        %v7759 = vadd.f32 %v7689, %v7758
        %v7760 = vpop.f32.mrf.mxu0
        %7761 = vdwg.mxu0
        %7762 = vmatprep.subr.mxu0 0.0
        %7763 = vmatpush1.msra.mxu0 %v1825
        %7764 = vmatprep.subr.mxu0 0.0
        %7765 = vmatpush1.msra.mxu0 %v1824
        %7766 = vmatprep.subr.mxu0 0.0
        %7767 = vmatpush1.msra.mxu0 %v1823
        %7768 = vmatprep.subr.mxu0 0.0
        %7769 = vmatpush1.msra.mxu0 %v1822
        %7770 = vmatprep.subr.mxu0 0.0
        %7771 = vmatpush1.msra.mxu0 %v1821
        %7772 = vmatprep.subr.mxu0 0.0
        %7773 = vmatpush1.msra.mxu0 %v1820
        %7774 = vmatprep.subr.mxu0 0.0
        %7775 = vmatpush1.msra.mxu0 %v1819
        %7776 = vmatprep.subr.mxu0 0.0
        %7777 = vmatpush1.msra.mxu0 %v1818
        %7778 = vmatprep.subr.mxu0 0.0
        %7779 = vmatpush1.msra.mxu0 %v1817
        %7780 = vmatprep.subr.mxu0 0.0
        %7781 = vmatpush1.msra.mxu0 %v1816
        %7782 = vmatprep.subr.mxu0 0.0
        %7783 = vmatpush1.msra.mxu0 %v1815
        %7784 = vmatprep.subr.mxu0 0.0
        %7785 = vmatpush1.msra.mxu0 %v1814
        %7786 = vmatprep.subr.mxu0 0.0
        %7787 = vmatpush1.msra.mxu0 %v1813
        %7788 = vmatprep.subr.mxu0 0.0
        %7789 = vmatpush1.msra.mxu0 %v1812
        %7790 = vmatprep.subr.mxu0 0.0
        %7791 = vmatpush1.msra.mxu0 %v1811
        %7792 = vmatprep.subr.mxu0 0.0
        %7793 = vmatpush1.msra.mxu0 %v1810
        %7794 = vmatprep.subr.mxu0 0.0
        %7795 = vmatpush2.msra.mxu0 %v1841
        %7796 = vmatprep.subr.mxu0 0.0
        %7797 = vmatpush2.msra.mxu0 %v1840
        %7798 = vmatprep.subr.mxu0 0.0
        %7799 = vmatpush2.msra.mxu0 %v1839
        %7800 = vmatprep.subr.mxu0 0.0
        %7801 = vmatpush2.msra.mxu0 %v1838
        %7802 = vmatprep.subr.mxu0 0.0
        %7803 = vmatpush2.msra.mxu0 %v1837
        %7804 = vmatprep.subr.mxu0 0.0
        %7805 = vmatpush2.msra.mxu0 %v1836
        %7806 = vmatprep.subr.mxu0 0.0
        %7807 = vmatpush2.msra.mxu0 %v1835
        %7808 = vmatprep.subr.mxu0 0.0
        %7809 = vmatpush2.msra.mxu0 %v1834
        %7810 = vmatprep.subr.mxu0 0.0
        %7811 = vmatpush2.msra.mxu0 %v1833
        %7812 = vmatprep.subr.mxu0 0.0
        %7813 = vmatpush2.msra.mxu0 %v1832
        %7814 = vmatprep.subr.mxu0 0.0
        %7815 = vmatpush2.msra.mxu0 %v1831
        %7816 = vmatprep.subr.mxu0 0.0
        %7817 = vmatpush2.msra.mxu0 %v1830
        %7818 = vmatprep.subr.mxu0 0.0
        %7819 = vmatpush2.msra.mxu0 %v1829
        %7820 = vmatprep.subr.mxu0 0.0
        %7821 = vmatpush2.msra.mxu0 %v1828
        %7822 = vmatprep.subr.mxu0 0.0
        %7823 = vmatpush2.msra.mxu0 %v1827
        %7824 = vmatprep.subr.mxu0 0.0
        %7825 = vmatpush2.msra.mxu0 %v1826
        %7826 = vmatprep.mubr.f32.mxu0 %v3817
        %7827 = vmatmul.mubr.f32.gmra.mxu0 %v3809
        %v7828 = vpop.f32.mrf.mxu0
        %v7829 = vadd.f32 %v7759, %v7828
        %v7830 = vpop.f32.mrf.mxu0
        %7831 = vdwg.mxu0
        %7832 = vmatprep.subr.mxu0 0.0
        %7833 = vmatpush1.msra.mxu0 %v1857
        %7834 = vmatprep.subr.mxu0 0.0
        %7835 = vmatpush1.msra.mxu0 %v1856
        %7836 = vmatprep.subr.mxu0 0.0
        %7837 = vmatpush1.msra.mxu0 %v1855
        %7838 = vmatprep.subr.mxu0 0.0
        %7839 = vmatpush1.msra.mxu0 %v1854
        %7840 = vmatprep.subr.mxu0 0.0
        %7841 = vmatpush1.msra.mxu0 %v1853
        %7842 = vmatprep.subr.mxu0 0.0
        %7843 = vmatpush1.msra.mxu0 %v1852
        %7844 = vmatprep.subr.mxu0 0.0
        %7845 = vmatpush1.msra.mxu0 %v1851
        %7846 = vmatprep.subr.mxu0 0.0
        %7847 = vmatpush1.msra.mxu0 %v1850
        %7848 = vmatprep.subr.mxu0 0.0
        %7849 = vmatpush1.msra.mxu0 %v1849
        %7850 = vmatprep.subr.mxu0 0.0
        %7851 = vmatpush1.msra.mxu0 %v1848
        %7852 = vmatprep.subr.mxu0 0.0
        %7853 = vmatpush1.msra.mxu0 %v1847
        %7854 = vmatprep.subr.mxu0 0.0
        %7855 = vmatpush1.msra.mxu0 %v1846
        %7856 = vmatprep.subr.mxu0 0.0
        %7857 = vmatpush1.msra.mxu0 %v1845
        %7858 = vmatprep.subr.mxu0 0.0
        %7859 = vmatpush1.msra.mxu0 %v1844
        %7860 = vmatprep.subr.mxu0 0.0
        %7861 = vmatpush1.msra.mxu0 %v1843
        %7862 = vmatprep.subr.mxu0 0.0
        %7863 = vmatpush1.msra.mxu0 %v1842
        %7864 = vmatprep.subr.mxu0 0.0
        %7865 = vmatpush2.msra.mxu0 %v1873
        %7866 = vmatprep.subr.mxu0 0.0
        %7867 = vmatpush2.msra.mxu0 %v1872
        %7868 = vmatprep.subr.mxu0 0.0
        %7869 = vmatpush2.msra.mxu0 %v1871
        %7870 = vmatprep.subr.mxu0 0.0
        %7871 = vmatpush2.msra.mxu0 %v1870
        %7872 = vmatprep.subr.mxu0 0.0
        %7873 = vmatpush2.msra.mxu0 %v1869
        %7874 = vmatprep.subr.mxu0 0.0
        %7875 = vmatpush2.msra.mxu0 %v1868
        %7876 = vmatprep.subr.mxu0 0.0
        %7877 = vmatpush2.msra.mxu0 %v1867
        %7878 = vmatprep.subr.mxu0 0.0
        %7879 = vmatpush2.msra.mxu0 %v1866
        %7880 = vmatprep.subr.mxu0 0.0
        %7881 = vmatpush2.msra.mxu0 %v1865
        %7882 = vmatprep.subr.mxu0 0.0
        %7883 = vmatpush2.msra.mxu0 %v1864
        %7884 = vmatprep.subr.mxu0 0.0
        %7885 = vmatpush2.msra.mxu0 %v1863
        %7886 = vmatprep.subr.mxu0 0.0
        %7887 = vmatpush2.msra.mxu0 %v1862
        %7888 = vmatprep.subr.mxu0 0.0
        %7889 = vmatpush2.msra.mxu0 %v1861
        %7890 = vmatprep.subr.mxu0 0.0
        %7891 = vmatpush2.msra.mxu0 %v1860
        %7892 = vmatprep.subr.mxu0 0.0
        %7893 = vmatpush2.msra.mxu0 %v1859
        %7894 = vmatprep.subr.mxu0 0.0
        %7895 = vmatpush2.msra.mxu0 %v1858
        %7896 = vmatprep.mubr.f32.mxu0 %v3818
        %7897 = vmatmul.mubr.f32.gmra.mxu0 %v3816
        %v7898 = vpop.f32.mrf.mxu0
        %v7899 = vadd.f32 %v7829, %v7898
        %v7900 = vpop.f32.mrf.mxu0
        %7901 = vdwg.mxu0
        %7902 = vmatprep.subr.mxu0 0.0
        %7903 = vmatpush1.msra.mxu0 %v1889
        %7904 = vmatprep.subr.mxu0 0.0
        %7905 = vmatpush1.msra.mxu0 %v1888
        %7906 = vmatprep.subr.mxu0 0.0
        %7907 = vmatpush1.msra.mxu0 %v1887
        %7908 = vmatprep.subr.mxu0 0.0
        %7909 = vmatpush1.msra.mxu0 %v1886
        %7910 = vmatprep.subr.mxu0 0.0
        %7911 = vmatpush1.msra.mxu0 %v1885
        %7912 = vmatprep.subr.mxu0 0.0
        %7913 = vmatpush1.msra.mxu0 %v1884
        %7914 = vmatprep.subr.mxu0 0.0
        %7915 = vmatpush1.msra.mxu0 %v1883
        %7916 = vmatprep.subr.mxu0 0.0
        %7917 = vmatpush1.msra.mxu0 %v1882
        %7918 = vmatprep.subr.mxu0 0.0
        %7919 = vmatpush1.msra.mxu0 %v1881
        %7920 = vmatprep.subr.mxu0 0.0
        %7921 = vmatpush1.msra.mxu0 %v1880
        %7922 = vmatprep.subr.mxu0 0.0
        %7923 = vmatpush1.msra.mxu0 %v1879
        %7924 = vmatprep.subr.mxu0 0.0
        %7925 = vmatpush1.msra.mxu0 %v1878
        %7926 = vmatprep.subr.mxu0 0.0
        %7927 = vmatpush1.msra.mxu0 %v1877
        %7928 = vmatprep.subr.mxu0 0.0
        %7929 = vmatpush1.msra.mxu0 %v1876
        %7930 = vmatprep.subr.mxu0 0.0
        %7931 = vmatpush1.msra.mxu0 %v1875
        %7932 = vmatprep.subr.mxu0 0.0
        %7933 = vmatpush1.msra.mxu0 %v1874
        %7934 = vmatprep.subr.mxu0 0.0
        %7935 = vmatpush2.msra.mxu0 %v1905
        %7936 = vmatprep.subr.mxu0 0.0
        %7937 = vmatpush2.msra.mxu0 %v1904
        %7938 = vmatprep.subr.mxu0 0.0
        %7939 = vmatpush2.msra.mxu0 %v1903
        %7940 = vmatprep.subr.mxu0 0.0
        %7941 = vmatpush2.msra.mxu0 %v1902
        %7942 = vmatprep.subr.mxu0 0.0
        %7943 = vmatpush2.msra.mxu0 %v1901
        %7944 = vmatprep.subr.mxu0 0.0
        %7945 = vmatpush2.msra.mxu0 %v1900
        %7946 = vmatprep.subr.mxu0 0.0
        %7947 = vmatpush2.msra.mxu0 %v1899
        %7948 = vmatprep.subr.mxu0 0.0
        %7949 = vmatpush2.msra.mxu0 %v1898
        %7950 = vmatprep.subr.mxu0 0.0
        %7951 = vmatpush2.msra.mxu0 %v1897
        %7952 = vmatprep.subr.mxu0 0.0
        %7953 = vmatpush2.msra.mxu0 %v1896
        %7954 = vmatprep.subr.mxu0 0.0
        %7955 = vmatpush2.msra.mxu0 %v1895
        %7956 = vmatprep.subr.mxu0 0.0
        %7957 = vmatpush2.msra.mxu0 %v1894
        %7958 = vmatprep.subr.mxu0 0.0
        %7959 = vmatpush2.msra.mxu0 %v1893
        %7960 = vmatprep.subr.mxu0 0.0
        %7961 = vmatpush2.msra.mxu0 %v1892
        %7962 = vmatprep.subr.mxu0 0.0
        %7963 = vmatpush2.msra.mxu0 %v1891
        %7964 = vmatprep.subr.mxu0 0.0
        %7965 = vmatpush2.msra.mxu0 %v1890
        %7966 = vmatprep.mubr.f32.mxu0 %v3834
        %7967 = vmatmul.mubr.f32.gmra.mxu0 %v3826
        %v7968 = vpop.f32.mrf.mxu0
        %v7969 = vadd.f32 %v7899, %v7968
        %v7970 = vpop.f32.mrf.mxu0
        %7971 = vdwg.mxu0
        %7972 = vmatprep.subr.mxu0 0.0
        %7973 = vmatpush1.msra.mxu0 %v1921
        %7974 = vmatprep.subr.mxu0 0.0
        %7975 = vmatpush1.msra.mxu0 %v1920
        %7976 = vmatprep.subr.mxu0 0.0
        %7977 = vmatpush1.msra.mxu0 %v1919
        %7978 = vmatprep.subr.mxu0 0.0
        %7979 = vmatpush1.msra.mxu0 %v1918
        %7980 = vmatprep.subr.mxu0 0.0
        %7981 = vmatpush1.msra.mxu0 %v1917
        %7982 = vmatprep.subr.mxu0 0.0
        %7983 = vmatpush1.msra.mxu0 %v1916
        %7984 = vmatprep.subr.mxu0 0.0
        %7985 = vmatpush1.msra.mxu0 %v1915
        %7986 = vmatprep.subr.mxu0 0.0
        %7987 = vmatpush1.msra.mxu0 %v1914
        %7988 = vmatprep.subr.mxu0 0.0
        %7989 = vmatpush1.msra.mxu0 %v1913
        %7990 = vmatprep.subr.mxu0 0.0
        %7991 = vmatpush1.msra.mxu0 %v1912
        %7992 = vmatprep.subr.mxu0 0.0
        %7993 = vmatpush1.msra.mxu0 %v1911
        %7994 = vmatprep.subr.mxu0 0.0
        %7995 = vmatpush1.msra.mxu0 %v1910
        %7996 = vmatprep.subr.mxu0 0.0
        %7997 = vmatpush1.msra.mxu0 %v1909
        %7998 = vmatprep.subr.mxu0 0.0
        %7999 = vmatpush1.msra.mxu0 %v1908
        %8000 = vmatprep.subr.mxu0 0.0
        %8001 = vmatpush1.msra.mxu0 %v1907
        %8002 = vmatprep.subr.mxu0 0.0
        %8003 = vmatpush1.msra.mxu0 %v1906
        %8004 = vmatprep.subr.mxu0 0.0
        %8005 = vmatpush2.msra.mxu0 %v1937
        %8006 = vmatprep.subr.mxu0 0.0
        %8007 = vmatpush2.msra.mxu0 %v1936
        %8008 = vmatprep.subr.mxu0 0.0
        %8009 = vmatpush2.msra.mxu0 %v1935
        %8010 = vmatprep.subr.mxu0 0.0
        %8011 = vmatpush2.msra.mxu0 %v1934
        %8012 = vmatprep.subr.mxu0 0.0
        %8013 = vmatpush2.msra.mxu0 %v1933
        %8014 = vmatprep.subr.mxu0 0.0
        %8015 = vmatpush2.msra.mxu0 %v1932
        %8016 = vmatprep.subr.mxu0 0.0
        %8017 = vmatpush2.msra.mxu0 %v1931
        %8018 = vmatprep.subr.mxu0 0.0
        %8019 = vmatpush2.msra.mxu0 %v1930
        %8020 = vmatprep.subr.mxu0 0.0
        %8021 = vmatpush2.msra.mxu0 %v1929
        %8022 = vmatprep.subr.mxu0 0.0
        %8023 = vmatpush2.msra.mxu0 %v1928
        %8024 = vmatprep.subr.mxu0 0.0
        %8025 = vmatpush2.msra.mxu0 %v1927
        %8026 = vmatprep.subr.mxu0 0.0
        %8027 = vmatpush2.msra.mxu0 %v1926
        %8028 = vmatprep.subr.mxu0 0.0
        %8029 = vmatpush2.msra.mxu0 %v1925
        %8030 = vmatprep.subr.mxu0 0.0
        %8031 = vmatpush2.msra.mxu0 %v1924
        %8032 = vmatprep.subr.mxu0 0.0
        %8033 = vmatpush2.msra.mxu0 %v1923
        %8034 = vmatprep.subr.mxu0 0.0
        %8035 = vmatpush2.msra.mxu0 %v1922
        %8036 = vmatprep.mubr.f32.mxu0 %v3835
        %8037 = vmatmul.mubr.f32.gmra.mxu0 %v3833
        %v8038 = vpop.f32.mrf.mxu0
        %v8039 = vadd.f32 %v7969, %v8038
        %v8040 = vpop.f32.mrf.mxu0
        %8041 = vdwg.mxu0
        %8042 = vmatprep.subr.mxu0 0.0
        %8043 = vmatpush1.msra.mxu0 %v1953
        %8044 = vmatprep.subr.mxu0 0.0
        %8045 = vmatpush1.msra.mxu0 %v1952
        %8046 = vmatprep.subr.mxu0 0.0
        %8047 = vmatpush1.msra.mxu0 %v1951
        %8048 = vmatprep.subr.mxu0 0.0
        %8049 = vmatpush1.msra.mxu0 %v1950
        %8050 = vmatprep.subr.mxu0 0.0
        %8051 = vmatpush1.msra.mxu0 %v1949
        %8052 = vmatprep.subr.mxu0 0.0
        %8053 = vmatpush1.msra.mxu0 %v1948
        %8054 = vmatprep.subr.mxu0 0.0
        %8055 = vmatpush1.msra.mxu0 %v1947
        %8056 = vmatprep.subr.mxu0 0.0
        %8057 = vmatpush1.msra.mxu0 %v1946
        %8058 = vmatprep.subr.mxu0 0.0
        %8059 = vmatpush1.msra.mxu0 %v1945
        %8060 = vmatprep.subr.mxu0 0.0
        %8061 = vmatpush1.msra.mxu0 %v1944
        %8062 = vmatprep.subr.mxu0 0.0
        %8063 = vmatpush1.msra.mxu0 %v1943
        %8064 = vmatprep.subr.mxu0 0.0
        %8065 = vmatpush1.msra.mxu0 %v1942
        %8066 = vmatprep.subr.mxu0 0.0
        %8067 = vmatpush1.msra.mxu0 %v1941
        %8068 = vmatprep.subr.mxu0 0.0
        %8069 = vmatpush1.msra.mxu0 %v1940
        %8070 = vmatprep.subr.mxu0 0.0
        %8071 = vmatpush1.msra.mxu0 %v1939
        %8072 = vmatprep.subr.mxu0 0.0
        %8073 = vmatpush1.msra.mxu0 %v1938
        %8074 = vmatprep.subr.mxu0 0.0
        %8075 = vmatpush2.msra.mxu0 %v1969
        %8076 = vmatprep.subr.mxu0 0.0
        %8077 = vmatpush2.msra.mxu0 %v1968
        %8078 = vmatprep.subr.mxu0 0.0
        %8079 = vmatpush2.msra.mxu0 %v1967
        %8080 = vmatprep.subr.mxu0 0.0
        %8081 = vmatpush2.msra.mxu0 %v1966
        %8082 = vmatprep.subr.mxu0 0.0
        %8083 = vmatpush2.msra.mxu0 %v1965
        %8084 = vmatprep.subr.mxu0 0.0
        %8085 = vmatpush2.msra.mxu0 %v1964
        %8086 = vmatprep.subr.mxu0 0.0
        %8087 = vmatpush2.msra.mxu0 %v1963
        %8088 = vmatprep.subr.mxu0 0.0
        %8089 = vmatpush2.msra.mxu0 %v1962
        %8090 = vmatprep.subr.mxu0 0.0
        %8091 = vmatpush2.msra.mxu0 %v1961
        %8092 = vmatprep.subr.mxu0 0.0
        %8093 = vmatpush2.msra.mxu0 %v1960
        %8094 = vmatprep.subr.mxu0 0.0
        %8095 = vmatpush2.msra.mxu0 %v1959
        %8096 = vmatprep.subr.mxu0 0.0
        %8097 = vmatpush2.msra.mxu0 %v1958
        %8098 = vmatprep.subr.mxu0 0.0
        %8099 = vmatpush2.msra.mxu0 %v1957
        %8100 = vmatprep.subr.mxu0 0.0
        %8101 = vmatpush2.msra.mxu0 %v1956
        %8102 = vmatprep.subr.mxu0 0.0
        %8103 = vmatpush2.msra.mxu0 %v1955
        %8104 = vmatprep.subr.mxu0 0.0
        %8105 = vmatpush2.msra.mxu0 %v1954
        %8106 = vmatprep.mubr.f32.mxu0 %v3851
        %8107 = vmatmul.mubr.f32.gmra.mxu0 %v3843
        %v8108 = vpop.f32.mrf.mxu0
        %v8109 = vadd.f32 %v8039, %v8108
        %v8110 = vpop.f32.mrf.mxu0
        %8111 = vdwg.mxu0
        %8112 = vmatprep.subr.mxu0 0.0
        %8113 = vmatpush1.msra.mxu0 %v1985
        %8114 = vmatprep.subr.mxu0 0.0
        %8115 = vmatpush1.msra.mxu0 %v1984
        %8116 = vmatprep.subr.mxu0 0.0
        %8117 = vmatpush1.msra.mxu0 %v1983
        %8118 = vmatprep.subr.mxu0 0.0
        %8119 = vmatpush1.msra.mxu0 %v1982
        %8120 = vmatprep.subr.mxu0 0.0
        %8121 = vmatpush1.msra.mxu0 %v1981
        %8122 = vmatprep.subr.mxu0 0.0
        %8123 = vmatpush1.msra.mxu0 %v1980
        %8124 = vmatprep.subr.mxu0 0.0
        %8125 = vmatpush1.msra.mxu0 %v1979
        %8126 = vmatprep.subr.mxu0 0.0
        %8127 = vmatpush1.msra.mxu0 %v1978
        %8128 = vmatprep.subr.mxu0 0.0
        %8129 = vmatpush1.msra.mxu0 %v1977
        %8130 = vmatprep.subr.mxu0 0.0
        %8131 = vmatpush1.msra.mxu0 %v1976
        %8132 = vmatprep.subr.mxu0 0.0
        %8133 = vmatpush1.msra.mxu0 %v1975
        %8134 = vmatprep.subr.mxu0 0.0
        %8135 = vmatpush1.msra.mxu0 %v1974
        %8136 = vmatprep.subr.mxu0 0.0
        %8137 = vmatpush1.msra.mxu0 %v1973
        %8138 = vmatprep.subr.mxu0 0.0
        %8139 = vmatpush1.msra.mxu0 %v1972
        %8140 = vmatprep.subr.mxu0 0.0
        %8141 = vmatpush1.msra.mxu0 %v1971
        %8142 = vmatprep.subr.mxu0 0.0
        %8143 = vmatpush1.msra.mxu0 %v1970
        %8144 = vmatprep.subr.mxu0 0.0
        %8145 = vmatpush2.msra.mxu0 %v2001
        %8146 = vmatprep.subr.mxu0 0.0
        %8147 = vmatpush2.msra.mxu0 %v2000
        %8148 = vmatprep.subr.mxu0 0.0
        %8149 = vmatpush2.msra.mxu0 %v1999
        %8150 = vmatprep.subr.mxu0 0.0
        %8151 = vmatpush2.msra.mxu0 %v1998
        %8152 = vmatprep.subr.mxu0 0.0
        %8153 = vmatpush2.msra.mxu0 %v1997
        %8154 = vmatprep.subr.mxu0 0.0
        %8155 = vmatpush2.msra.mxu0 %v1996
        %8156 = vmatprep.subr.mxu0 0.0
        %8157 = vmatpush2.msra.mxu0 %v1995
        %8158 = vmatprep.subr.mxu0 0.0
        %8159 = vmatpush2.msra.mxu0 %v1994
        %8160 = vmatprep.subr.mxu0 0.0
        %8161 = vmatpush2.msra.mxu0 %v1993
        %8162 = vmatprep.subr.mxu0 0.0
        %8163 = vmatpush2.msra.mxu0 %v1992
        %8164 = vmatprep.subr.mxu0 0.0
        %8165 = vmatpush2.msra.mxu0 %v1991
        %8166 = vmatprep.subr.mxu0 0.0
        %8167 = vmatpush2.msra.mxu0 %v1990
        %8168 = vmatprep.subr.mxu0 0.0
        %8169 = vmatpush2.msra.mxu0 %v1989
        %8170 = vmatprep.subr.mxu0 0.0
        %8171 = vmatpush2.msra.mxu0 %v1988
        %8172 = vmatprep.subr.mxu0 0.0
        %8173 = vmatpush2.msra.mxu0 %v1987
        %8174 = vmatprep.subr.mxu0 0.0
        %8175 = vmatpush2.msra.mxu0 %v1986
        %8176 = vmatprep.mubr.f32.mxu0 %v3852
        %8177 = vmatmul.mubr.f32.gmra.mxu0 %v3850
        %v8178 = vpop.f32.mrf.mxu0
        %v8179 = vadd.f32 %v8109, %v8178
        %v8180 = vpop.f32.mrf.mxu0
        %8181 = vdwg.mxu0
        %8182 = vmatprep.subr.mxu0 0.0
        %8183 = vmatpush1.msra.mxu0 %v2017
        %8184 = vmatprep.subr.mxu0 0.0
        %8185 = vmatpush1.msra.mxu0 %v2016
        %8186 = vmatprep.subr.mxu0 0.0
        %8187 = vmatpush1.msra.mxu0 %v2015
        %8188 = vmatprep.subr.mxu0 0.0
        %8189 = vmatpush1.msra.mxu0 %v2014
        %8190 = vmatprep.subr.mxu0 0.0
        %8191 = vmatpush1.msra.mxu0 %v2013
        %8192 = vmatprep.subr.mxu0 0.0
        %8193 = vmatpush1.msra.mxu0 %v2012
        %8194 = vmatprep.subr.mxu0 0.0
        %8195 = vmatpush1.msra.mxu0 %v2011
        %8196 = vmatprep.subr.mxu0 0.0
        %8197 = vmatpush1.msra.mxu0 %v2010
        %8198 = vmatprep.subr.mxu0 0.0
        %8199 = vmatpush1.msra.mxu0 %v2009
        %8200 = vmatprep.subr.mxu0 0.0
        %8201 = vmatpush1.msra.mxu0 %v2008
        %8202 = vmatprep.subr.mxu0 0.0
        %8203 = vmatpush1.msra.mxu0 %v2007
        %8204 = vmatprep.subr.mxu0 0.0
        %8205 = vmatpush1.msra.mxu0 %v2006
        %8206 = vmatprep.subr.mxu0 0.0
        %8207 = vmatpush1.msra.mxu0 %v2005
        %8208 = vmatprep.subr.mxu0 0.0
        %8209 = vmatpush1.msra.mxu0 %v2004
        %8210 = vmatprep.subr.mxu0 0.0
        %8211 = vmatpush1.msra.mxu0 %v2003
        %8212 = vmatprep.subr.mxu0 0.0
        %8213 = vmatpush1.msra.mxu0 %v2002
        %8214 = vmatprep.subr.mxu0 0.0
        %8215 = vmatpush2.msra.mxu0 %v2033
        %8216 = vmatprep.subr.mxu0 0.0
        %8217 = vmatpush2.msra.mxu0 %v2032
        %8218 = vmatprep.subr.mxu0 0.0
        %8219 = vmatpush2.msra.mxu0 %v2031
        %8220 = vmatprep.subr.mxu0 0.0
        %8221 = vmatpush2.msra.mxu0 %v2030
        %8222 = vmatprep.subr.mxu0 0.0
        %8223 = vmatpush2.msra.mxu0 %v2029
        %8224 = vmatprep.subr.mxu0 0.0
        %8225 = vmatpush2.msra.mxu0 %v2028
        %8226 = vmatprep.subr.mxu0 0.0
        %8227 = vmatpush2.msra.mxu0 %v2027
        %8228 = vmatprep.subr.mxu0 0.0
        %8229 = vmatpush2.msra.mxu0 %v2026
        %8230 = vmatprep.subr.mxu0 0.0
        %8231 = vmatpush2.msra.mxu0 %v2025
        %8232 = vmatprep.subr.mxu0 0.0
        %8233 = vmatpush2.msra.mxu0 %v2024
        %8234 = vmatprep.subr.mxu0 0.0
        %8235 = vmatpush2.msra.mxu0 %v2023
        %8236 = vmatprep.subr.mxu0 0.0
        %8237 = vmatpush2.msra.mxu0 %v2022
        %8238 = vmatprep.subr.mxu0 0.0
        %8239 = vmatpush2.msra.mxu0 %v2021
        %8240 = vmatprep.subr.mxu0 0.0
        %8241 = vmatpush2.msra.mxu0 %v2020
        %8242 = vmatprep.subr.mxu0 0.0
        %8243 = vmatpush2.msra.mxu0 %v2019
        %8244 = vmatprep.subr.mxu0 0.0
        %8245 = vmatpush2.msra.mxu0 %v2018
        %8246 = vmatprep.mubr.f32.mxu0 %v3868
        %8247 = vmatmul.mubr.f32.gmra.mxu0 %v3860
        %v8248 = vpop.f32.mrf.mxu0
        %v8249 = vadd.f32 %v8179, %v8248
        %v8250 = vpop.f32.mrf.mxu0
        %8251 = vdwg.mxu0
        %8252 = vmatprep.subr.mxu0 0.0
        %8253 = vmatpush1.msra.mxu0 %v2049
        %8254 = vmatprep.subr.mxu0 0.0
        %8255 = vmatpush1.msra.mxu0 %v2048
        %8256 = vmatprep.subr.mxu0 0.0
        %8257 = vmatpush1.msra.mxu0 %v2047
        %8258 = vmatprep.subr.mxu0 0.0
        %8259 = vmatpush1.msra.mxu0 %v2046
        %8260 = vmatprep.subr.mxu0 0.0
        %8261 = vmatpush1.msra.mxu0 %v2045
        %8262 = vmatprep.subr.mxu0 0.0
        %8263 = vmatpush1.msra.mxu0 %v2044
        %8264 = vmatprep.subr.mxu0 0.0
        %8265 = vmatpush1.msra.mxu0 %v2043
        %8266 = vmatprep.subr.mxu0 0.0
        %8267 = vmatpush1.msra.mxu0 %v2042
        %8268 = vmatprep.subr.mxu0 0.0
        %8269 = vmatpush1.msra.mxu0 %v2041
        %8270 = vmatprep.subr.mxu0 0.0
        %8271 = vmatpush1.msra.mxu0 %v2040
        %8272 = vmatprep.subr.mxu0 0.0
        %8273 = vmatpush1.msra.mxu0 %v2039
        %8274 = vmatprep.subr.mxu0 0.0
        %8275 = vmatpush1.msra.mxu0 %v2038
        %8276 = vmatprep.subr.mxu0 0.0
        %8277 = vmatpush1.msra.mxu0 %v2037
        %8278 = vmatprep.subr.mxu0 0.0
        %8279 = vmatpush1.msra.mxu0 %v2036
        %8280 = vmatprep.subr.mxu0 0.0
        %8281 = vmatpush1.msra.mxu0 %v2035
        %8282 = vmatprep.subr.mxu0 0.0
        %8283 = vmatpush1.msra.mxu0 %v2034
        %8284 = vmatprep.subr.mxu0 0.0
        %8285 = vmatpush2.msra.mxu0 %v2065
        %8286 = vmatprep.subr.mxu0 0.0
        %8287 = vmatpush2.msra.mxu0 %v2064
        %8288 = vmatprep.subr.mxu0 0.0
        %8289 = vmatpush2.msra.mxu0 %v2063
        %8290 = vmatprep.subr.mxu0 0.0
        %8291 = vmatpush2.msra.mxu0 %v2062
        %8292 = vmatprep.subr.mxu0 0.0
        %8293 = vmatpush2.msra.mxu0 %v2061
        %8294 = vmatprep.subr.mxu0 0.0
        %8295 = vmatpush2.msra.mxu0 %v2060
        %8296 = vmatprep.subr.mxu0 0.0
        %8297 = vmatpush2.msra.mxu0 %v2059
        %8298 = vmatprep.subr.mxu0 0.0
        %8299 = vmatpush2.msra.mxu0 %v2058
        %8300 = vmatprep.subr.mxu0 0.0
        %8301 = vmatpush2.msra.mxu0 %v2057
        %8302 = vmatprep.subr.mxu0 0.0
        %8303 = vmatpush2.msra.mxu0 %v2056
        %8304 = vmatprep.subr.mxu0 0.0
        %8305 = vmatpush2.msra.mxu0 %v2055
        %8306 = vmatprep.subr.mxu0 0.0
        %8307 = vmatpush2.msra.mxu0 %v2054
        %8308 = vmatprep.subr.mxu0 0.0
        %8309 = vmatpush2.msra.mxu0 %v2053
        %8310 = vmatprep.subr.mxu0 0.0
        %8311 = vmatpush2.msra.mxu0 %v2052
        %8312 = vmatprep.subr.mxu0 0.0
        %8313 = vmatpush2.msra.mxu0 %v2051
        %8314 = vmatprep.subr.mxu0 0.0
        %8315 = vmatpush2.msra.mxu0 %v2050
        %8316 = vmatprep.mubr.f32.mxu0 %v3869
        %8317 = vmatmul.mubr.f32.gmra.mxu0 %v3867
        %v8318 = vpop.f32.mrf.mxu0
        %v8319 = vadd.f32 %v8249, %v8318
        %v8320 = vpop.f32.mrf.mxu0
        %8321 = vdwg.mxu0
        %8322 = vmatprep.subr.mxu0 0.0
        %8323 = vmatpush1.msra.mxu0 %v2081
        %8324 = vmatprep.subr.mxu0 0.0
        %8325 = vmatpush1.msra.mxu0 %v2080
        %8326 = vmatprep.subr.mxu0 0.0
        %8327 = vmatpush1.msra.mxu0 %v2079
        %8328 = vmatprep.subr.mxu0 0.0
        %8329 = vmatpush1.msra.mxu0 %v2078
        %8330 = vmatprep.subr.mxu0 0.0
        %8331 = vmatpush1.msra.mxu0 %v2077
        %8332 = vmatprep.subr.mxu0 0.0
        %8333 = vmatpush1.msra.mxu0 %v2076
        %8334 = vmatprep.subr.mxu0 0.0
        %8335 = vmatpush1.msra.mxu0 %v2075
        %8336 = vmatprep.subr.mxu0 0.0
        %8337 = vmatpush1.msra.mxu0 %v2074
        %8338 = vmatprep.subr.mxu0 0.0
        %8339 = vmatpush1.msra.mxu0 %v2073
        %8340 = vmatprep.subr.mxu0 0.0
        %8341 = vmatpush1.msra.mxu0 %v2072
        %8342 = vmatprep.subr.mxu0 0.0
        %8343 = vmatpush1.msra.mxu0 %v2071
        %8344 = vmatprep.subr.mxu0 0.0
        %8345 = vmatpush1.msra.mxu0 %v2070
        %8346 = vmatprep.subr.mxu0 0.0
        %8347 = vmatpush1.msra.mxu0 %v2069
        %8348 = vmatprep.subr.mxu0 0.0
        %8349 = vmatpush1.msra.mxu0 %v2068
        %8350 = vmatprep.subr.mxu0 0.0
        %8351 = vmatpush1.msra.mxu0 %v2067
        %8352 = vmatprep.subr.mxu0 0.0
        %8353 = vmatpush1.msra.mxu0 %v2066
        %8354 = vmatprep.subr.mxu0 0.0
        %8355 = vmatpush2.msra.mxu0 %v2097
        %8356 = vmatprep.subr.mxu0 0.0
        %8357 = vmatpush2.msra.mxu0 %v2096
        %8358 = vmatprep.subr.mxu0 0.0
        %8359 = vmatpush2.msra.mxu0 %v2095
        %8360 = vmatprep.subr.mxu0 0.0
        %8361 = vmatpush2.msra.mxu0 %v2094
        %8362 = vmatprep.subr.mxu0 0.0
        %8363 = vmatpush2.msra.mxu0 %v2093
        %8364 = vmatprep.subr.mxu0 0.0
        %8365 = vmatpush2.msra.mxu0 %v2092
        %8366 = vmatprep.subr.mxu0 0.0
        %8367 = vmatpush2.msra.mxu0 %v2091
        %8368 = vmatprep.subr.mxu0 0.0
        %8369 = vmatpush2.msra.mxu0 %v2090
        %8370 = vmatprep.subr.mxu0 0.0
        %8371 = vmatpush2.msra.mxu0 %v2089
        %8372 = vmatprep.subr.mxu0 0.0
        %8373 = vmatpush2.msra.mxu0 %v2088
        %8374 = vmatprep.subr.mxu0 0.0
        %8375 = vmatpush2.msra.mxu0 %v2087
        %8376 = vmatprep.subr.mxu0 0.0
        %8377 = vmatpush2.msra.mxu0 %v2086
        %8378 = vmatprep.subr.mxu0 0.0
        %8379 = vmatpush2.msra.mxu0 %v2085
        %8380 = vmatprep.subr.mxu0 0.0
        %8381 = vmatpush2.msra.mxu0 %v2084
        %8382 = vmatprep.subr.mxu0 0.0
        %8383 = vmatpush2.msra.mxu0 %v2083
        %8384 = vmatprep.subr.mxu0 0.0
        %8385 = vmatpush2.msra.mxu0 %v2082
        %8386 = vmatprep.mubr.f32.mxu0 %v3885
        %8387 = vmatmul.mubr.f32.gmra.mxu0 %v3877
        %v8388 = vpop.f32.mrf.mxu0
        %v8389 = vadd.f32 %v8319, %v8388
        %v8390 = vpop.f32.mrf.mxu0
        %8391 = vdwg.mxu0
        %8392 = vmatprep.subr.mxu0 0.0
        %8393 = vmatpush1.msra.mxu0 %v2113
        %8394 = vmatprep.subr.mxu0 0.0
        %8395 = vmatpush1.msra.mxu0 %v2112
        %8396 = vmatprep.subr.mxu0 0.0
        %8397 = vmatpush1.msra.mxu0 %v2111
        %8398 = vmatprep.subr.mxu0 0.0
        %8399 = vmatpush1.msra.mxu0 %v2110
        %8400 = vmatprep.subr.mxu0 0.0
        %8401 = vmatpush1.msra.mxu0 %v2109
        %8402 = vmatprep.subr.mxu0 0.0
        %8403 = vmatpush1.msra.mxu0 %v2108
        %8404 = vmatprep.subr.mxu0 0.0
        %8405 = vmatpush1.msra.mxu0 %v2107
        %8406 = vmatprep.subr.mxu0 0.0
        %8407 = vmatpush1.msra.mxu0 %v2106
        %8408 = vmatprep.subr.mxu0 0.0
        %8409 = vmatpush1.msra.mxu0 %v2105
        %8410 = vmatprep.subr.mxu0 0.0
        %8411 = vmatpush1.msra.mxu0 %v2104
        %8412 = vmatprep.subr.mxu0 0.0
        %8413 = vmatpush1.msra.mxu0 %v2103
        %8414 = vmatprep.subr.mxu0 0.0
        %8415 = vmatpush1.msra.mxu0 %v2102
        %8416 = vmatprep.subr.mxu0 0.0
        %8417 = vmatpush1.msra.mxu0 %v2101
        %8418 = vmatprep.subr.mxu0 0.0
        %8419 = vmatpush1.msra.mxu0 %v2100
        %8420 = vmatprep.subr.mxu0 0.0
        %8421 = vmatpush1.msra.mxu0 %v2099
        %8422 = vmatprep.subr.mxu0 0.0
        %8423 = vmatpush1.msra.mxu0 %v2098
        %8424 = vmatprep.subr.mxu0 0.0
        %8425 = vmatpush2.msra.mxu0 %v2129
        %8426 = vmatprep.subr.mxu0 0.0
        %8427 = vmatpush2.msra.mxu0 %v2128
        %8428 = vmatprep.subr.mxu0 0.0
        %8429 = vmatpush2.msra.mxu0 %v2127
        %8430 = vmatprep.subr.mxu0 0.0
        %8431 = vmatpush2.msra.mxu0 %v2126
        %8432 = vmatprep.subr.mxu0 0.0
        %8433 = vmatpush2.msra.mxu0 %v2125
        %8434 = vmatprep.subr.mxu0 0.0
        %8435 = vmatpush2.msra.mxu0 %v2124
        %8436 = vmatprep.subr.mxu0 0.0
        %8437 = vmatpush2.msra.mxu0 %v2123
        %8438 = vmatprep.subr.mxu0 0.0
        %8439 = vmatpush2.msra.mxu0 %v2122
        %8440 = vmatprep.subr.mxu0 0.0
        %8441 = vmatpush2.msra.mxu0 %v2121
        %8442 = vmatprep.subr.mxu0 0.0
        %8443 = vmatpush2.msra.mxu0 %v2120
        %8444 = vmatprep.subr.mxu0 0.0
        %8445 = vmatpush2.msra.mxu0 %v2119
        %8446 = vmatprep.subr.mxu0 0.0
        %8447 = vmatpush2.msra.mxu0 %v2118
        %8448 = vmatprep.subr.mxu0 0.0
        %8449 = vmatpush2.msra.mxu0 %v2117
        %8450 = vmatprep.subr.mxu0 0.0
        %8451 = vmatpush2.msra.mxu0 %v2116
        %8452 = vmatprep.subr.mxu0 0.0
        %8453 = vmatpush2.msra.mxu0 %v2115
        %8454 = vmatprep.subr.mxu0 0.0
        %8455 = vmatpush2.msra.mxu0 %v2114
        %8456 = vmatprep.mubr.f32.mxu0 %v3886
        %8457 = vmatmul.mubr.f32.gmra.mxu0 %v3884
        %v8458 = vpop.f32.mrf.mxu0
        %v8459 = vadd.f32 %v8389, %v8458
        %v8460 = vpop.f32.mrf.mxu0
        %8461 = vdwg.mxu0
        %8462 = vmatprep.subr.mxu0 0.0
        %8463 = vmatpush1.msra.mxu0 %v2145
        %8464 = vmatprep.subr.mxu0 0.0
        %8465 = vmatpush1.msra.mxu0 %v2144
        %8466 = vmatprep.subr.mxu0 0.0
        %8467 = vmatpush1.msra.mxu0 %v2143
        %8468 = vmatprep.subr.mxu0 0.0
        %8469 = vmatpush1.msra.mxu0 %v2142
        %8470 = vmatprep.subr.mxu0 0.0
        %8471 = vmatpush1.msra.mxu0 %v2141
        %8472 = vmatprep.subr.mxu0 0.0
        %8473 = vmatpush1.msra.mxu0 %v2140
        %8474 = vmatprep.subr.mxu0 0.0
        %8475 = vmatpush1.msra.mxu0 %v2139
        %8476 = vmatprep.subr.mxu0 0.0
        %8477 = vmatpush1.msra.mxu0 %v2138
        %8478 = vmatprep.subr.mxu0 0.0
        %8479 = vmatpush1.msra.mxu0 %v2137
        %8480 = vmatprep.subr.mxu0 0.0
        %8481 = vmatpush1.msra.mxu0 %v2136
        %8482 = vmatprep.subr.mxu0 0.0
        %8483 = vmatpush1.msra.mxu0 %v2135
        %8484 = vmatprep.subr.mxu0 0.0
        %8485 = vmatpush1.msra.mxu0 %v2134
        %8486 = vmatprep.subr.mxu0 0.0
        %8487 = vmatpush1.msra.mxu0 %v2133
        %8488 = vmatprep.subr.mxu0 0.0
        %8489 = vmatpush1.msra.mxu0 %v2132
        %8490 = vmatprep.subr.mxu0 0.0
        %8491 = vmatpush1.msra.mxu0 %v2131
        %8492 = vmatprep.subr.mxu0 0.0
        %8493 = vmatpush1.msra.mxu0 %v2130
        %8494 = vmatprep.subr.mxu0 0.0
        %8495 = vmatpush2.msra.mxu0 %v2161
        %8496 = vmatprep.subr.mxu0 0.0
        %8497 = vmatpush2.msra.mxu0 %v2160
        %8498 = vmatprep.subr.mxu0 0.0
        %8499 = vmatpush2.msra.mxu0 %v2159
        %8500 = vmatprep.subr.mxu0 0.0
        %8501 = vmatpush2.msra.mxu0 %v2158
        %8502 = vmatprep.subr.mxu0 0.0
        %8503 = vmatpush2.msra.mxu0 %v2157
        %8504 = vmatprep.subr.mxu0 0.0
        %8505 = vmatpush2.msra.mxu0 %v2156
        %8506 = vmatprep.subr.mxu0 0.0
        %8507 = vmatpush2.msra.mxu0 %v2155
        %8508 = vmatprep.subr.mxu0 0.0
        %8509 = vmatpush2.msra.mxu0 %v2154
        %8510 = vmatprep.subr.mxu0 0.0
        %8511 = vmatpush2.msra.mxu0 %v2153
        %8512 = vmatprep.subr.mxu0 0.0
        %8513 = vmatpush2.msra.mxu0 %v2152
        %8514 = vmatprep.subr.mxu0 0.0
        %8515 = vmatpush2.msra.mxu0 %v2151
        %8516 = vmatprep.subr.mxu0 0.0
        %8517 = vmatpush2.msra.mxu0 %v2150
        %8518 = vmatprep.subr.mxu0 0.0
        %8519 = vmatpush2.msra.mxu0 %v2149
        %8520 = vmatprep.subr.mxu0 0.0
        %8521 = vmatpush2.msra.mxu0 %v2148
        %8522 = vmatprep.subr.mxu0 0.0
        %8523 = vmatpush2.msra.mxu0 %v2147
        %8524 = vmatprep.subr.mxu0 0.0
        %8525 = vmatpush2.msra.mxu0 %v2146
        %8526 = vmatprep.mubr.f32.mxu0 %v3902
        %8527 = vmatmul.mubr.f32.gmra.mxu0 %v3894
        %v8528 = vpop.f32.mrf.mxu0
        %v8529 = vadd.f32 %v8459, %v8528
        %v8530 = vpop.f32.mrf.mxu0
        %8531 = vdwg.mxu0
        %8532 = vmatprep.subr.mxu0 0.0
        %8533 = vmatpush1.msra.mxu0 %v2177
        %8534 = vmatprep.subr.mxu0 0.0
        %8535 = vmatpush1.msra.mxu0 %v2176
        %8536 = vmatprep.subr.mxu0 0.0
        %8537 = vmatpush1.msra.mxu0 %v2175
        %8538 = vmatprep.subr.mxu0 0.0
        %8539 = vmatpush1.msra.mxu0 %v2174
        %8540 = vmatprep.subr.mxu0 0.0
        %8541 = vmatpush1.msra.mxu0 %v2173
        %8542 = vmatprep.subr.mxu0 0.0
        %8543 = vmatpush1.msra.mxu0 %v2172
        %8544 = vmatprep.subr.mxu0 0.0
        %8545 = vmatpush1.msra.mxu0 %v2171
        %8546 = vmatprep.subr.mxu0 0.0
        %8547 = vmatpush1.msra.mxu0 %v2170
        %8548 = vmatprep.subr.mxu0 0.0
        %8549 = vmatpush1.msra.mxu0 %v2169
        %8550 = vmatprep.subr.mxu0 0.0
        %8551 = vmatpush1.msra.mxu0 %v2168
        %8552 = vmatprep.subr.mxu0 0.0
        %8553 = vmatpush1.msra.mxu0 %v2167
        %8554 = vmatprep.subr.mxu0 0.0
        %8555 = vmatpush1.msra.mxu0 %v2166
        %8556 = vmatprep.subr.mxu0 0.0
        %8557 = vmatpush1.msra.mxu0 %v2165
        %8558 = vmatprep.subr.mxu0 0.0
        %8559 = vmatpush1.msra.mxu0 %v2164
        %8560 = vmatprep.subr.mxu0 0.0
        %8561 = vmatpush1.msra.mxu0 %v2163
        %8562 = vmatprep.subr.mxu0 0.0
        %8563 = vmatpush1.msra.mxu0 %v2162
        %8564 = vmatprep.subr.mxu0 0.0
        %8565 = vmatpush2.msra.mxu0 %v2193
        %8566 = vmatprep.subr.mxu0 0.0
        %8567 = vmatpush2.msra.mxu0 %v2192
        %8568 = vmatprep.subr.mxu0 0.0
        %8569 = vmatpush2.msra.mxu0 %v2191
        %8570 = vmatprep.subr.mxu0 0.0
        %8571 = vmatpush2.msra.mxu0 %v2190
        %8572 = vmatprep.subr.mxu0 0.0
        %8573 = vmatpush2.msra.mxu0 %v2189
        %8574 = vmatprep.subr.mxu0 0.0
        %8575 = vmatpush2.msra.mxu0 %v2188
        %8576 = vmatprep.subr.mxu0 0.0
        %8577 = vmatpush2.msra.mxu0 %v2187
        %8578 = vmatprep.subr.mxu0 0.0
        %8579 = vmatpush2.msra.mxu0 %v2186
        %8580 = vmatprep.subr.mxu0 0.0
        %8581 = vmatpush2.msra.mxu0 %v2185
        %8582 = vmatprep.subr.mxu0 0.0
        %8583 = vmatpush2.msra.mxu0 %v2184
        %8584 = vmatprep.subr.mxu0 0.0
        %8585 = vmatpush2.msra.mxu0 %v2183
        %8586 = vmatprep.subr.mxu0 0.0
        %8587 = vmatpush2.msra.mxu0 %v2182
        %8588 = vmatprep.subr.mxu0 0.0
        %8589 = vmatpush2.msra.mxu0 %v2181
        %8590 = vmatprep.subr.mxu0 0.0
        %8591 = vmatpush2.msra.mxu0 %v2180
        %8592 = vmatprep.subr.mxu0 0.0
        %8593 = vmatpush2.msra.mxu0 %v2179
        %8594 = vmatprep.subr.mxu0 0.0
        %8595 = vmatpush2.msra.mxu0 %v2178
        %8596 = vmatprep.mubr.f32.mxu0 %v3903
        %8597 = vmatmul.mubr.f32.gmra.mxu0 %v3901
        %v8598 = vpop.f32.mrf.mxu0
        %v8599 = vadd.f32 %v8529, %v8598
        %v8600 = vpop.f32.mrf.mxu0
        %8601 = vdwg.mxu0
        %8602 = vmatprep.subr.mxu0 0.0
        %8603 = vmatpush1.msra.mxu0 %v2209
        %8604 = vmatprep.subr.mxu0 0.0
        %8605 = vmatpush1.msra.mxu0 %v2208
        %8606 = vmatprep.subr.mxu0 0.0
        %8607 = vmatpush1.msra.mxu0 %v2207
        %8608 = vmatprep.subr.mxu0 0.0
        %8609 = vmatpush1.msra.mxu0 %v2206
        %8610 = vmatprep.subr.mxu0 0.0
        %8611 = vmatpush1.msra.mxu0 %v2205
        %8612 = vmatprep.subr.mxu0 0.0
        %8613 = vmatpush1.msra.mxu0 %v2204
        %8614 = vmatprep.subr.mxu0 0.0
        %8615 = vmatpush1.msra.mxu0 %v2203
        %8616 = vmatprep.subr.mxu0 0.0
        %8617 = vmatpush1.msra.mxu0 %v2202
        %8618 = vmatprep.subr.mxu0 0.0
        %8619 = vmatpush1.msra.mxu0 %v2201
        %8620 = vmatprep.subr.mxu0 0.0
        %8621 = vmatpush1.msra.mxu0 %v2200
        %8622 = vmatprep.subr.mxu0 0.0
        %8623 = vmatpush1.msra.mxu0 %v2199
        %8624 = vmatprep.subr.mxu0 0.0
        %8625 = vmatpush1.msra.mxu0 %v2198
        %8626 = vmatprep.subr.mxu0 0.0
        %8627 = vmatpush1.msra.mxu0 %v2197
        %8628 = vmatprep.subr.mxu0 0.0
        %8629 = vmatpush1.msra.mxu0 %v2196
        %8630 = vmatprep.subr.mxu0 0.0
        %8631 = vmatpush1.msra.mxu0 %v2195
        %8632 = vmatprep.subr.mxu0 0.0
        %8633 = vmatpush1.msra.mxu0 %v2194
        %8634 = vmatprep.subr.mxu0 0.0
        %8635 = vmatpush2.msra.mxu0 %v2225
        %8636 = vmatprep.subr.mxu0 0.0
        %8637 = vmatpush2.msra.mxu0 %v2224
        %8638 = vmatprep.subr.mxu0 0.0
        %8639 = vmatpush2.msra.mxu0 %v2223
        %8640 = vmatprep.subr.mxu0 0.0
        %8641 = vmatpush2.msra.mxu0 %v2222
        %8642 = vmatprep.subr.mxu0 0.0
        %8643 = vmatpush2.msra.mxu0 %v2221
        %8644 = vmatprep.subr.mxu0 0.0
        %8645 = vmatpush2.msra.mxu0 %v2220
        %8646 = vmatprep.subr.mxu0 0.0
        %8647 = vmatpush2.msra.mxu0 %v2219
        %8648 = vmatprep.subr.mxu0 0.0
        %8649 = vmatpush2.msra.mxu0 %v2218
        %8650 = vmatprep.subr.mxu0 0.0
        %8651 = vmatpush2.msra.mxu0 %v2217
        %8652 = vmatprep.subr.mxu0 0.0
        %8653 = vmatpush2.msra.mxu0 %v2216
        %8654 = vmatprep.subr.mxu0 0.0
        %8655 = vmatpush2.msra.mxu0 %v2215
        %8656 = vmatprep.subr.mxu0 0.0
        %8657 = vmatpush2.msra.mxu0 %v2214
        %8658 = vmatprep.subr.mxu0 0.0
        %8659 = vmatpush2.msra.mxu0 %v2213
        %8660 = vmatprep.subr.mxu0 0.0
        %8661 = vmatpush2.msra.mxu0 %v2212
        %8662 = vmatprep.subr.mxu0 0.0
        %8663 = vmatpush2.msra.mxu0 %v2211
        %8664 = vmatprep.subr.mxu0 0.0
        %8665 = vmatpush2.msra.mxu0 %v2210
        %8666 = vmatprep.mubr.f32.mxu0 %v3919
        %8667 = vmatmul.mubr.f32.gmra.mxu0 %v3911
        %v8668 = vpop.f32.mrf.mxu0
        %v8669 = vadd.f32 %v8599, %v8668
        %v8670 = vpop.f32.mrf.mxu0
        %8671 = vdwg.mxu0
        %8672 = vmatprep.subr.mxu0 0.0
        %8673 = vmatpush1.msra.mxu0 %v2241
        %8674 = vmatprep.subr.mxu0 0.0
        %8675 = vmatpush1.msra.mxu0 %v2240
        %8676 = vmatprep.subr.mxu0 0.0
        %8677 = vmatpush1.msra.mxu0 %v2239
        %8678 = vmatprep.subr.mxu0 0.0
        %8679 = vmatpush1.msra.mxu0 %v2238
        %8680 = vmatprep.subr.mxu0 0.0
        %8681 = vmatpush1.msra.mxu0 %v2237
        %8682 = vmatprep.subr.mxu0 0.0
        %8683 = vmatpush1.msra.mxu0 %v2236
        %8684 = vmatprep.subr.mxu0 0.0
        %8685 = vmatpush1.msra.mxu0 %v2235
        %8686 = vmatprep.subr.mxu0 0.0
        %8687 = vmatpush1.msra.mxu0 %v2234
        %8688 = vmatprep.subr.mxu0 0.0
        %8689 = vmatpush1.msra.mxu0 %v2233
        %8690 = vmatprep.subr.mxu0 0.0
        %8691 = vmatpush1.msra.mxu0 %v2232
        %8692 = vmatprep.subr.mxu0 0.0
        %8693 = vmatpush1.msra.mxu0 %v2231
        %8694 = vmatprep.subr.mxu0 0.0
        %8695 = vmatpush1.msra.mxu0 %v2230
        %8696 = vmatprep.subr.mxu0 0.0
        %8697 = vmatpush1.msra.mxu0 %v2229
        %8698 = vmatprep.subr.mxu0 0.0
        %8699 = vmatpush1.msra.mxu0 %v2228
        %8700 = vmatprep.subr.mxu0 0.0
        %8701 = vmatpush1.msra.mxu0 %v2227
        %8702 = vmatprep.subr.mxu0 0.0
        %8703 = vmatpush1.msra.mxu0 %v2226
        %8704 = vmatprep.subr.mxu0 0.0
        %8705 = vmatpush2.msra.mxu0 %v2257
        %8706 = vmatprep.subr.mxu0 0.0
        %8707 = vmatpush2.msra.mxu0 %v2256
        %8708 = vmatprep.subr.mxu0 0.0
        %8709 = vmatpush2.msra.mxu0 %v2255
        %8710 = vmatprep.subr.mxu0 0.0
        %8711 = vmatpush2.msra.mxu0 %v2254
        %8712 = vmatprep.subr.mxu0 0.0
        %8713 = vmatpush2.msra.mxu0 %v2253
        %8714 = vmatprep.subr.mxu0 0.0
        %8715 = vmatpush2.msra.mxu0 %v2252
        %8716 = vmatprep.subr.mxu0 0.0
        %8717 = vmatpush2.msra.mxu0 %v2251
        %8718 = vmatprep.subr.mxu0 0.0
        %8719 = vmatpush2.msra.mxu0 %v2250
        %8720 = vmatprep.subr.mxu0 0.0
        %8721 = vmatpush2.msra.mxu0 %v2249
        %8722 = vmatprep.subr.mxu0 0.0
        %8723 = vmatpush2.msra.mxu0 %v2248
        %8724 = vmatprep.subr.mxu0 0.0
        %8725 = vmatpush2.msra.mxu0 %v2247
        %8726 = vmatprep.subr.mxu0 0.0
        %8727 = vmatpush2.msra.mxu0 %v2246
        %8728 = vmatprep.subr.mxu0 0.0
        %8729 = vmatpush2.msra.mxu0 %v2245
        %8730 = vmatprep.subr.mxu0 0.0
        %8731 = vmatpush2.msra.mxu0 %v2244
        %8732 = vmatprep.subr.mxu0 0.0
        %8733 = vmatpush2.msra.mxu0 %v2243
        %8734 = vmatprep.subr.mxu0 0.0
        %8735 = vmatpush2.msra.mxu0 %v2242
        %8736 = vmatprep.mubr.f32.mxu0 %v3920
        %8737 = vmatmul.mubr.f32.gmra.mxu0 %v3918
        %v8738 = vpop.f32.mrf.mxu0
        %v8739 = vadd.f32 %v8669, %v8738
        %v8740 = vpop.f32.mrf.mxu0
        %8741 = vdwg.mxu0
        %8742 = vmatprep.subr.mxu0 0.0
        %8743 = vmatpush1.msra.mxu0 %v2273
        %8744 = vmatprep.subr.mxu0 0.0
        %8745 = vmatpush1.msra.mxu0 %v2272
        %8746 = vmatprep.subr.mxu0 0.0
        %8747 = vmatpush1.msra.mxu0 %v2271
        %8748 = vmatprep.subr.mxu0 0.0
        %8749 = vmatpush1.msra.mxu0 %v2270
        %8750 = vmatprep.subr.mxu0 0.0
        %8751 = vmatpush1.msra.mxu0 %v2269
        %8752 = vmatprep.subr.mxu0 0.0
        %8753 = vmatpush1.msra.mxu0 %v2268
        %8754 = vmatprep.subr.mxu0 0.0
        %8755 = vmatpush1.msra.mxu0 %v2267
        %8756 = vmatprep.subr.mxu0 0.0
        %8757 = vmatpush1.msra.mxu0 %v2266
        %8758 = vmatprep.subr.mxu0 0.0
        %8759 = vmatpush1.msra.mxu0 %v2265
        %8760 = vmatprep.subr.mxu0 0.0
        %8761 = vmatpush1.msra.mxu0 %v2264
        %8762 = vmatprep.subr.mxu0 0.0
        %8763 = vmatpush1.msra.mxu0 %v2263
        %8764 = vmatprep.subr.mxu0 0.0
        %8765 = vmatpush1.msra.mxu0 %v2262
        %8766 = vmatprep.subr.mxu0 0.0
        %8767 = vmatpush1.msra.mxu0 %v2261
        %8768 = vmatprep.subr.mxu0 0.0
        %8769 = vmatpush1.msra.mxu0 %v2260
        %8770 = vmatprep.subr.mxu0 0.0
        %8771 = vmatpush1.msra.mxu0 %v2259
        %8772 = vmatprep.subr.mxu0 0.0
        %8773 = vmatpush1.msra.mxu0 %v2258
        %8774 = vmatprep.subr.mxu0 0.0
        %8775 = vmatpush2.msra.mxu0 %v2289
        %8776 = vmatprep.subr.mxu0 0.0
        %8777 = vmatpush2.msra.mxu0 %v2288
        %8778 = vmatprep.subr.mxu0 0.0
        %8779 = vmatpush2.msra.mxu0 %v2287
        %8780 = vmatprep.subr.mxu0 0.0
        %8781 = vmatpush2.msra.mxu0 %v2286
        %8782 = vmatprep.subr.mxu0 0.0
        %8783 = vmatpush2.msra.mxu0 %v2285
        %8784 = vmatprep.subr.mxu0 0.0
        %8785 = vmatpush2.msra.mxu0 %v2284
        %8786 = vmatprep.subr.mxu0 0.0
        %8787 = vmatpush2.msra.mxu0 %v2283
        %8788 = vmatprep.subr.mxu0 0.0
        %8789 = vmatpush2.msra.mxu0 %v2282
        %8790 = vmatprep.subr.mxu0 0.0
        %8791 = vmatpush2.msra.mxu0 %v2281
        %8792 = vmatprep.subr.mxu0 0.0
        %8793 = vmatpush2.msra.mxu0 %v2280
        %8794 = vmatprep.subr.mxu0 0.0
        %8795 = vmatpush2.msra.mxu0 %v2279
        %8796 = vmatprep.subr.mxu0 0.0
        %8797 = vmatpush2.msra.mxu0 %v2278
        %8798 = vmatprep.subr.mxu0 0.0
        %8799 = vmatpush2.msra.mxu0 %v2277
        %8800 = vmatprep.subr.mxu0 0.0
        %8801 = vmatpush2.msra.mxu0 %v2276
        %8802 = vmatprep.subr.mxu0 0.0
        %8803 = vmatpush2.msra.mxu0 %v2275
        %8804 = vmatprep.subr.mxu0 0.0
        %8805 = vmatpush2.msra.mxu0 %v2274
        %8806 = vmatprep.mubr.f32.mxu0 %v3936
        %8807 = vmatmul.mubr.f32.gmra.mxu0 %v3928
        %v8808 = vpop.f32.mrf.mxu0
        %v8809 = vadd.f32 %v8739, %v8808
        %v8810 = vpop.f32.mrf.mxu0
        %8811 = vdwg.mxu0
        %8812 = vmatprep.subr.mxu0 0.0
        %8813 = vmatpush1.msra.mxu0 %v2305
        %8814 = vmatprep.subr.mxu0 0.0
        %8815 = vmatpush1.msra.mxu0 %v2304
        %8816 = vmatprep.subr.mxu0 0.0
        %8817 = vmatpush1.msra.mxu0 %v2303
        %8818 = vmatprep.subr.mxu0 0.0
        %8819 = vmatpush1.msra.mxu0 %v2302
        %8820 = vmatprep.subr.mxu0 0.0
        %8821 = vmatpush1.msra.mxu0 %v2301
        %8822 = vmatprep.subr.mxu0 0.0
        %8823 = vmatpush1.msra.mxu0 %v2300
        %8824 = vmatprep.subr.mxu0 0.0
        %8825 = vmatpush1.msra.mxu0 %v2299
        %8826 = vmatprep.subr.mxu0 0.0
        %8827 = vmatpush1.msra.mxu0 %v2298
        %8828 = vmatprep.subr.mxu0 0.0
        %8829 = vmatpush1.msra.mxu0 %v2297
        %8830 = vmatprep.subr.mxu0 0.0
        %8831 = vmatpush1.msra.mxu0 %v2296
        %8832 = vmatprep.subr.mxu0 0.0
        %8833 = vmatpush1.msra.mxu0 %v2295
        %8834 = vmatprep.subr.mxu0 0.0
        %8835 = vmatpush1.msra.mxu0 %v2294
        %8836 = vmatprep.subr.mxu0 0.0
        %8837 = vmatpush1.msra.mxu0 %v2293
        %8838 = vmatprep.subr.mxu0 0.0
        %8839 = vmatpush1.msra.mxu0 %v2292
        %8840 = vmatprep.subr.mxu0 0.0
        %8841 = vmatpush1.msra.mxu0 %v2291
        %8842 = vmatprep.subr.mxu0 0.0
        %8843 = vmatpush1.msra.mxu0 %v2290
        %8844 = vmatprep.subr.mxu0 0.0
        %8845 = vmatpush2.msra.mxu0 %v2321
        %8846 = vmatprep.subr.mxu0 0.0
        %8847 = vmatpush2.msra.mxu0 %v2320
        %8848 = vmatprep.subr.mxu0 0.0
        %8849 = vmatpush2.msra.mxu0 %v2319
        %8850 = vmatprep.subr.mxu0 0.0
        %8851 = vmatpush2.msra.mxu0 %v2318
        %8852 = vmatprep.subr.mxu0 0.0
        %8853 = vmatpush2.msra.mxu0 %v2317
        %8854 = vmatprep.subr.mxu0 0.0
        %8855 = vmatpush2.msra.mxu0 %v2316
        %8856 = vmatprep.subr.mxu0 0.0
        %8857 = vmatpush2.msra.mxu0 %v2315
        %8858 = vmatprep.subr.mxu0 0.0
        %8859 = vmatpush2.msra.mxu0 %v2314
        %8860 = vmatprep.subr.mxu0 0.0
        %8861 = vmatpush2.msra.mxu0 %v2313
        %8862 = vmatprep.subr.mxu0 0.0
        %8863 = vmatpush2.msra.mxu0 %v2312
        %8864 = vmatprep.subr.mxu0 0.0
        %8865 = vmatpush2.msra.mxu0 %v2311
        %8866 = vmatprep.subr.mxu0 0.0
        %8867 = vmatpush2.msra.mxu0 %v2310
        %8868 = vmatprep.subr.mxu0 0.0
        %8869 = vmatpush2.msra.mxu0 %v2309
        %8870 = vmatprep.subr.mxu0 0.0
        %8871 = vmatpush2.msra.mxu0 %v2308
        %8872 = vmatprep.subr.mxu0 0.0
        %8873 = vmatpush2.msra.mxu0 %v2307
        %8874 = vmatprep.subr.mxu0 0.0
        %8875 = vmatpush2.msra.mxu0 %v2306
        %8876 = vmatprep.mubr.f32.mxu0 %v3937
        %8877 = vmatmul.mubr.f32.gmra.mxu0 %v3935
        %v8878 = vpop.f32.mrf.mxu0
        %v8879 = vadd.f32 %v8809, %v8878
        %v8880 = vpop.f32.mrf.mxu0
        %8881 = vdwg.mxu0
        %8882 = vmatprep.subr.mxu0 0.0
        %8883 = vmatpush1.msra.mxu0 %v2337
        %8884 = vmatprep.subr.mxu0 0.0
        %8885 = vmatpush1.msra.mxu0 %v2336
        %8886 = vmatprep.subr.mxu0 0.0
        %8887 = vmatpush1.msra.mxu0 %v2335
        %8888 = vmatprep.subr.mxu0 0.0
        %8889 = vmatpush1.msra.mxu0 %v2334
        %8890 = vmatprep.subr.mxu0 0.0
        %8891 = vmatpush1.msra.mxu0 %v2333
        %8892 = vmatprep.subr.mxu0 0.0
        %8893 = vmatpush1.msra.mxu0 %v2332
        %8894 = vmatprep.subr.mxu0 0.0
        %8895 = vmatpush1.msra.mxu0 %v2331
        %8896 = vmatprep.subr.mxu0 0.0
        %8897 = vmatpush1.msra.mxu0 %v2330
        %8898 = vmatprep.subr.mxu0 0.0
        %8899 = vmatpush1.msra.mxu0 %v2329
        %8900 = vmatprep.subr.mxu0 0.0
        %8901 = vmatpush1.msra.mxu0 %v2328
        %8902 = vmatprep.subr.mxu0 0.0
        %8903 = vmatpush1.msra.mxu0 %v2327
        %8904 = vmatprep.subr.mxu0 0.0
        %8905 = vmatpush1.msra.mxu0 %v2326
        %8906 = vmatprep.subr.mxu0 0.0
        %8907 = vmatpush1.msra.mxu0 %v2325
        %8908 = vmatprep.subr.mxu0 0.0
        %8909 = vmatpush1.msra.mxu0 %v2324
        %8910 = vmatprep.subr.mxu0 0.0
        %8911 = vmatpush1.msra.mxu0 %v2323
        %8912 = vmatprep.subr.mxu0 0.0
        %8913 = vmatpush1.msra.mxu0 %v2322
        %8914 = vmatprep.subr.mxu0 0.0
        %8915 = vmatpush2.msra.mxu0 %v2353
        %8916 = vmatprep.subr.mxu0 0.0
        %8917 = vmatpush2.msra.mxu0 %v2352
        %8918 = vmatprep.subr.mxu0 0.0
        %8919 = vmatpush2.msra.mxu0 %v2351
        %8920 = vmatprep.subr.mxu0 0.0
        %8921 = vmatpush2.msra.mxu0 %v2350
        %8922 = vmatprep.subr.mxu0 0.0
        %8923 = vmatpush2.msra.mxu0 %v2349
        %8924 = vmatprep.subr.mxu0 0.0
        %8925 = vmatpush2.msra.mxu0 %v2348
        %8926 = vmatprep.subr.mxu0 0.0
        %8927 = vmatpush2.msra.mxu0 %v2347
        %8928 = vmatprep.subr.mxu0 0.0
        %8929 = vmatpush2.msra.mxu0 %v2346
        %8930 = vmatprep.subr.mxu0 0.0
        %8931 = vmatpush2.msra.mxu0 %v2345
        %8932 = vmatprep.subr.mxu0 0.0
        %8933 = vmatpush2.msra.mxu0 %v2344
        %8934 = vmatprep.subr.mxu0 0.0
        %8935 = vmatpush2.msra.mxu0 %v2343
        %8936 = vmatprep.subr.mxu0 0.0
        %8937 = vmatpush2.msra.mxu0 %v2342
        %8938 = vmatprep.subr.mxu0 0.0
        %8939 = vmatpush2.msra.mxu0 %v2341
        %8940 = vmatprep.subr.mxu0 0.0
        %8941 = vmatpush2.msra.mxu0 %v2340
        %8942 = vmatprep.subr.mxu0 0.0
        %8943 = vmatpush2.msra.mxu0 %v2339
        %8944 = vmatprep.subr.mxu0 0.0
        %8945 = vmatpush2.msra.mxu0 %v2338
        %8946 = vmatprep.mubr.f32.mxu0 %v3953
        %8947 = vmatmul.mubr.f32.gmra.mxu0 %v3945
        %v8948 = vpop.f32.mrf.mxu0
        %v8949 = vadd.f32 %v8879, %v8948
        %v8950 = vpop.f32.mrf.mxu0
        %8951 = vdwg.mxu0
        %8952 = vmatprep.subr.mxu0 0.0
        %8953 = vmatpush1.msra.mxu0 %v2369
        %8954 = vmatprep.subr.mxu0 0.0
        %8955 = vmatpush1.msra.mxu0 %v2368
        %8956 = vmatprep.subr.mxu0 0.0
        %8957 = vmatpush1.msra.mxu0 %v2367
        %8958 = vmatprep.subr.mxu0 0.0
        %8959 = vmatpush1.msra.mxu0 %v2366
        %8960 = vmatprep.subr.mxu0 0.0
        %8961 = vmatpush1.msra.mxu0 %v2365
        %8962 = vmatprep.subr.mxu0 0.0
        %8963 = vmatpush1.msra.mxu0 %v2364
        %8964 = vmatprep.subr.mxu0 0.0
        %8965 = vmatpush1.msra.mxu0 %v2363
        %8966 = vmatprep.subr.mxu0 0.0
        %8967 = vmatpush1.msra.mxu0 %v2362
        %8968 = vmatprep.subr.mxu0 0.0
        %8969 = vmatpush1.msra.mxu0 %v2361
        %8970 = vmatprep.subr.mxu0 0.0
        %8971 = vmatpush1.msra.mxu0 %v2360
        %8972 = vmatprep.subr.mxu0 0.0
        %8973 = vmatpush1.msra.mxu0 %v2359
        %8974 = vmatprep.subr.mxu0 0.0
        %8975 = vmatpush1.msra.mxu0 %v2358
        %8976 = vmatprep.subr.mxu0 0.0
        %8977 = vmatpush1.msra.mxu0 %v2357
        %8978 = vmatprep.subr.mxu0 0.0
        %8979 = vmatpush1.msra.mxu0 %v2356
        %8980 = vmatprep.subr.mxu0 0.0
        %8981 = vmatpush1.msra.mxu0 %v2355
        %8982 = vmatprep.subr.mxu0 0.0
        %8983 = vmatpush1.msra.mxu0 %v2354
        %8984 = vmatprep.subr.mxu0 0.0
        %8985 = vmatpush2.msra.mxu0 %v2385
        %8986 = vmatprep.subr.mxu0 0.0
        %8987 = vmatpush2.msra.mxu0 %v2384
        %8988 = vmatprep.subr.mxu0 0.0
        %8989 = vmatpush2.msra.mxu0 %v2383
        %8990 = vmatprep.subr.mxu0 0.0
        %8991 = vmatpush2.msra.mxu0 %v2382
        %8992 = vmatprep.subr.mxu0 0.0
        %8993 = vmatpush2.msra.mxu0 %v2381
        %8994 = vmatprep.subr.mxu0 0.0
        %8995 = vmatpush2.msra.mxu0 %v2380
        %8996 = vmatprep.subr.mxu0 0.0
        %8997 = vmatpush2.msra.mxu0 %v2379
        %8998 = vmatprep.subr.mxu0 0.0
        %8999 = vmatpush2.msra.mxu0 %v2378
        %9000 = vmatprep.subr.mxu0 0.0
        %9001 = vmatpush2.msra.mxu0 %v2377
        %9002 = vmatprep.subr.mxu0 0.0
        %9003 = vmatpush2.msra.mxu0 %v2376
        %9004 = vmatprep.subr.mxu0 0.0
        %9005 = vmatpush2.msra.mxu0 %v2375
        %9006 = vmatprep.subr.mxu0 0.0
        %9007 = vmatpush2.msra.mxu0 %v2374
        %9008 = vmatprep.subr.mxu0 0.0
        %9009 = vmatpush2.msra.mxu0 %v2373
        %9010 = vmatprep.subr.mxu0 0.0
        %9011 = vmatpush2.msra.mxu0 %v2372
        %9012 = vmatprep.subr.mxu0 0.0
        %9013 = vmatpush2.msra.mxu0 %v2371
        %9014 = vmatprep.subr.mxu0 0.0
        %9015 = vmatpush2.msra.mxu0 %v2370
        %9016 = vmatprep.mubr.f32.mxu0 %v3954
        %9017 = vmatmul.mubr.f32.gmra.mxu0 %v3952
        %v9018 = vpop.f32.mrf.mxu0
        %v9019 = vadd.f32 %v8949, %v9018
        %v9020 = vpop.f32.mrf.mxu0
        %9021 = vdwg.mxu0
        %9022 = vmatprep.subr.mxu0 0.0
        %9023 = vmatpush1.msra.mxu0 %v2401
        %9024 = vmatprep.subr.mxu0 0.0
        %9025 = vmatpush1.msra.mxu0 %v2400
        %9026 = vmatprep.subr.mxu0 0.0
        %9027 = vmatpush1.msra.mxu0 %v2399
        %9028 = vmatprep.subr.mxu0 0.0
        %9029 = vmatpush1.msra.mxu0 %v2398
        %9030 = vmatprep.subr.mxu0 0.0
        %9031 = vmatpush1.msra.mxu0 %v2397
        %9032 = vmatprep.subr.mxu0 0.0
        %9033 = vmatpush1.msra.mxu0 %v2396
        %9034 = vmatprep.subr.mxu0 0.0
        %9035 = vmatpush1.msra.mxu0 %v2395
        %9036 = vmatprep.subr.mxu0 0.0
        %9037 = vmatpush1.msra.mxu0 %v2394
        %9038 = vmatprep.subr.mxu0 0.0
        %9039 = vmatpush1.msra.mxu0 %v2393
        %9040 = vmatprep.subr.mxu0 0.0
        %9041 = vmatpush1.msra.mxu0 %v2392
        %9042 = vmatprep.subr.mxu0 0.0
        %9043 = vmatpush1.msra.mxu0 %v2391
        %9044 = vmatprep.subr.mxu0 0.0
        %9045 = vmatpush1.msra.mxu0 %v2390
        %9046 = vmatprep.subr.mxu0 0.0
        %9047 = vmatpush1.msra.mxu0 %v2389
        %9048 = vmatprep.subr.mxu0 0.0
        %9049 = vmatpush1.msra.mxu0 %v2388
        %9050 = vmatprep.subr.mxu0 0.0
        %9051 = vmatpush1.msra.mxu0 %v2387
        %9052 = vmatprep.subr.mxu0 0.0
        %9053 = vmatpush1.msra.mxu0 %v2386
        %9054 = vmatprep.subr.mxu0 0.0
        %9055 = vmatpush2.msra.mxu0 %v2417
        %9056 = vmatprep.subr.mxu0 0.0
        %9057 = vmatpush2.msra.mxu0 %v2416
        %9058 = vmatprep.subr.mxu0 0.0
        %9059 = vmatpush2.msra.mxu0 %v2415
        %9060 = vmatprep.subr.mxu0 0.0
        %9061 = vmatpush2.msra.mxu0 %v2414
        %9062 = vmatprep.subr.mxu0 0.0
        %9063 = vmatpush2.msra.mxu0 %v2413
        %9064 = vmatprep.subr.mxu0 0.0
        %9065 = vmatpush2.msra.mxu0 %v2412
        %9066 = vmatprep.subr.mxu0 0.0
        %9067 = vmatpush2.msra.mxu0 %v2411
        %9068 = vmatprep.subr.mxu0 0.0
        %9069 = vmatpush2.msra.mxu0 %v2410
        %9070 = vmatprep.subr.mxu0 0.0
        %9071 = vmatpush2.msra.mxu0 %v2409
        %9072 = vmatprep.subr.mxu0 0.0
        %9073 = vmatpush2.msra.mxu0 %v2408
        %9074 = vmatprep.subr.mxu0 0.0
        %9075 = vmatpush2.msra.mxu0 %v2407
        %9076 = vmatprep.subr.mxu0 0.0
        %9077 = vmatpush2.msra.mxu0 %v2406
        %9078 = vmatprep.subr.mxu0 0.0
        %9079 = vmatpush2.msra.mxu0 %v2405
        %9080 = vmatprep.subr.mxu0 0.0
        %9081 = vmatpush2.msra.mxu0 %v2404
        %9082 = vmatprep.subr.mxu0 0.0
        %9083 = vmatpush2.msra.mxu0 %v2403
        %9084 = vmatprep.subr.mxu0 0.0
        %9085 = vmatpush2.msra.mxu0 %v2402
        %9086 = vmatprep.mubr.f32.mxu0 %v3970
        %9087 = vmatmul.mubr.f32.gmra.mxu0 %v3962
        %v9088 = vpop.f32.mrf.mxu0
        %v9089 = vadd.f32 %v9019, %v9088
        %v9090 = vpop.f32.mrf.mxu0
        %9091 = vdwg.mxu0
        %9092 = vmatprep.subr.mxu0 0.0
        %9093 = vmatpush1.msra.mxu0 %v2433
        %9094 = vmatprep.subr.mxu0 0.0
        %9095 = vmatpush1.msra.mxu0 %v2432
        %9096 = vmatprep.subr.mxu0 0.0
        %9097 = vmatpush1.msra.mxu0 %v2431
        %9098 = vmatprep.subr.mxu0 0.0
        %9099 = vmatpush1.msra.mxu0 %v2430
        %9100 = vmatprep.subr.mxu0 0.0
        %9101 = vmatpush1.msra.mxu0 %v2429
        %9102 = vmatprep.subr.mxu0 0.0
        %9103 = vmatpush1.msra.mxu0 %v2428
        %9104 = vmatprep.subr.mxu0 0.0
        %9105 = vmatpush1.msra.mxu0 %v2427
        %9106 = vmatprep.subr.mxu0 0.0
        %9107 = vmatpush1.msra.mxu0 %v2426
        %9108 = vmatprep.subr.mxu0 0.0
        %9109 = vmatpush1.msra.mxu0 %v2425
        %9110 = vmatprep.subr.mxu0 0.0
        %9111 = vmatpush1.msra.mxu0 %v2424
        %9112 = vmatprep.subr.mxu0 0.0
        %9113 = vmatpush1.msra.mxu0 %v2423
        %9114 = vmatprep.subr.mxu0 0.0
        %9115 = vmatpush1.msra.mxu0 %v2422
        %9116 = vmatprep.subr.mxu0 0.0
        %9117 = vmatpush1.msra.mxu0 %v2421
        %9118 = vmatprep.subr.mxu0 0.0
        %9119 = vmatpush1.msra.mxu0 %v2420
        %9120 = vmatprep.subr.mxu0 0.0
        %9121 = vmatpush1.msra.mxu0 %v2419
        %9122 = vmatprep.subr.mxu0 0.0
        %9123 = vmatpush1.msra.mxu0 %v2418
        %9124 = vmatprep.subr.mxu0 0.0
        %9125 = vmatpush2.msra.mxu0 %v2449
        %9126 = vmatprep.subr.mxu0 0.0
        %9127 = vmatpush2.msra.mxu0 %v2448
        %9128 = vmatprep.subr.mxu0 0.0
        %9129 = vmatpush2.msra.mxu0 %v2447
        %9130 = vmatprep.subr.mxu0 0.0
        %9131 = vmatpush2.msra.mxu0 %v2446
        %9132 = vmatprep.subr.mxu0 0.0
        %9133 = vmatpush2.msra.mxu0 %v2445
        %9134 = vmatprep.subr.mxu0 0.0
        %9135 = vmatpush2.msra.mxu0 %v2444
        %9136 = vmatprep.subr.mxu0 0.0
        %9137 = vmatpush2.msra.mxu0 %v2443
        %9138 = vmatprep.subr.mxu0 0.0
        %9139 = vmatpush2.msra.mxu0 %v2442
        %9140 = vmatprep.subr.mxu0 0.0
        %9141 = vmatpush2.msra.mxu0 %v2441
        %9142 = vmatprep.subr.mxu0 0.0
        %9143 = vmatpush2.msra.mxu0 %v2440
        %9144 = vmatprep.subr.mxu0 0.0
        %9145 = vmatpush2.msra.mxu0 %v2439
        %9146 = vmatprep.subr.mxu0 0.0
        %9147 = vmatpush2.msra.mxu0 %v2438
        %9148 = vmatprep.subr.mxu0 0.0
        %9149 = vmatpush2.msra.mxu0 %v2437
        %9150 = vmatprep.subr.mxu0 0.0
        %9151 = vmatpush2.msra.mxu0 %v2436
        %9152 = vmatprep.subr.mxu0 0.0
        %9153 = vmatpush2.msra.mxu0 %v2435
        %9154 = vmatprep.subr.mxu0 0.0
        %9155 = vmatpush2.msra.mxu0 %v2434
        %9156 = vmatprep.mubr.f32.mxu0 %v3971
        %9157 = vmatmul.mubr.f32.gmra.mxu0 %v3969
        %v9158 = vpop.f32.mrf.mxu0
        %v9159 = vadd.f32 %v9089, %v9158
        %v9160 = vpop.f32.mrf.mxu0
        %9161 = vdwg.mxu0
        %9162 = vmatprep.subr.mxu0 0.0
        %9163 = vmatpush1.msra.mxu0 %v2465
        %9164 = vmatprep.subr.mxu0 0.0
        %9165 = vmatpush1.msra.mxu0 %v2464
        %9166 = vmatprep.subr.mxu0 0.0
        %9167 = vmatpush1.msra.mxu0 %v2463
        %9168 = vmatprep.subr.mxu0 0.0
        %9169 = vmatpush1.msra.mxu0 %v2462
        %9170 = vmatprep.subr.mxu0 0.0
        %9171 = vmatpush1.msra.mxu0 %v2461
        %9172 = vmatprep.subr.mxu0 0.0
        %9173 = vmatpush1.msra.mxu0 %v2460
        %9174 = vmatprep.subr.mxu0 0.0
        %9175 = vmatpush1.msra.mxu0 %v2459
        %9176 = vmatprep.subr.mxu0 0.0
        %9177 = vmatpush1.msra.mxu0 %v2458
        %9178 = vmatprep.subr.mxu0 0.0
        %9179 = vmatpush1.msra.mxu0 %v2457
        %9180 = vmatprep.subr.mxu0 0.0
        %9181 = vmatpush1.msra.mxu0 %v2456
        %9182 = vmatprep.subr.mxu0 0.0
        %9183 = vmatpush1.msra.mxu0 %v2455
        %9184 = vmatprep.subr.mxu0 0.0
        %9185 = vmatpush1.msra.mxu0 %v2454
        %9186 = vmatprep.subr.mxu0 0.0
        %9187 = vmatpush1.msra.mxu0 %v2453
        %9188 = vmatprep.subr.mxu0 0.0
        %9189 = vmatpush1.msra.mxu0 %v2452
        %9190 = vmatprep.subr.mxu0 0.0
        %9191 = vmatpush1.msra.mxu0 %v2451
        %9192 = vmatprep.subr.mxu0 0.0
        %9193 = vmatpush1.msra.mxu0 %v2450
        %9194 = vmatprep.subr.mxu0 0.0
        %9195 = vmatpush2.msra.mxu0 %v2481
        %9196 = vmatprep.subr.mxu0 0.0
        %9197 = vmatpush2.msra.mxu0 %v2480
        %9198 = vmatprep.subr.mxu0 0.0
        %9199 = vmatpush2.msra.mxu0 %v2479
        %9200 = vmatprep.subr.mxu0 0.0
        %9201 = vmatpush2.msra.mxu0 %v2478
        %9202 = vmatprep.subr.mxu0 0.0
        %9203 = vmatpush2.msra.mxu0 %v2477
        %9204 = vmatprep.subr.mxu0 0.0
        %9205 = vmatpush2.msra.mxu0 %v2476
        %9206 = vmatprep.subr.mxu0 0.0
        %9207 = vmatpush2.msra.mxu0 %v2475
        %9208 = vmatprep.subr.mxu0 0.0
        %9209 = vmatpush2.msra.mxu0 %v2474
        %9210 = vmatprep.subr.mxu0 0.0
        %9211 = vmatpush2.msra.mxu0 %v2473
        %9212 = vmatprep.subr.mxu0 0.0
        %9213 = vmatpush2.msra.mxu0 %v2472
        %9214 = vmatprep.subr.mxu0 0.0
        %9215 = vmatpush2.msra.mxu0 %v2471
        %9216 = vmatprep.subr.mxu0 0.0
        %9217 = vmatpush2.msra.mxu0 %v2470
        %9218 = vmatprep.subr.mxu0 0.0
        %9219 = vmatpush2.msra.mxu0 %v2469
        %9220 = vmatprep.subr.mxu0 0.0
        %9221 = vmatpush2.msra.mxu0 %v2468
        %9222 = vmatprep.subr.mxu0 0.0
        %9223 = vmatpush2.msra.mxu0 %v2467
        %9224 = vmatprep.subr.mxu0 0.0
        %9225 = vmatpush2.msra.mxu0 %v2466
        %9226 = vmatprep.mubr.f32.mxu0 %v3987
        %9227 = vmatmul.mubr.f32.gmra.mxu0 %v3979
        %v9228 = vpop.f32.mrf.mxu0
        %v9229 = vadd.f32 %v9159, %v9228
        %v9230 = vpop.f32.mrf.mxu0
        %9231 = vdwg.mxu0
        %9232 = vmatprep.subr.mxu0 0.0
        %9233 = vmatpush1.msra.mxu0 %v2497
        %9234 = vmatprep.subr.mxu0 0.0
        %9235 = vmatpush1.msra.mxu0 %v2496
        %9236 = vmatprep.subr.mxu0 0.0
        %9237 = vmatpush1.msra.mxu0 %v2495
        %9238 = vmatprep.subr.mxu0 0.0
        %9239 = vmatpush1.msra.mxu0 %v2494
        %9240 = vmatprep.subr.mxu0 0.0
        %9241 = vmatpush1.msra.mxu0 %v2493
        %9242 = vmatprep.subr.mxu0 0.0
        %9243 = vmatpush1.msra.mxu0 %v2492
        %9244 = vmatprep.subr.mxu0 0.0
        %9245 = vmatpush1.msra.mxu0 %v2491
        %9246 = vmatprep.subr.mxu0 0.0
        %9247 = vmatpush1.msra.mxu0 %v2490
        %9248 = vmatprep.subr.mxu0 0.0
        %9249 = vmatpush1.msra.mxu0 %v2489
        %9250 = vmatprep.subr.mxu0 0.0
        %9251 = vmatpush1.msra.mxu0 %v2488
        %9252 = vmatprep.subr.mxu0 0.0
        %9253 = vmatpush1.msra.mxu0 %v2487
        %9254 = vmatprep.subr.mxu0 0.0
        %9255 = vmatpush1.msra.mxu0 %v2486
        %9256 = vmatprep.subr.mxu0 0.0
        %9257 = vmatpush1.msra.mxu0 %v2485
        %9258 = vmatprep.subr.mxu0 0.0
        %9259 = vmatpush1.msra.mxu0 %v2484
        %9260 = vmatprep.subr.mxu0 0.0
        %9261 = vmatpush1.msra.mxu0 %v2483
        %9262 = vmatprep.subr.mxu0 0.0
        %9263 = vmatpush1.msra.mxu0 %v2482
        %9264 = vmatprep.subr.mxu0 0.0
        %9265 = vmatpush2.msra.mxu0 %v2513
        %9266 = vmatprep.subr.mxu0 0.0
        %9267 = vmatpush2.msra.mxu0 %v2512
        %9268 = vmatprep.subr.mxu0 0.0
        %9269 = vmatpush2.msra.mxu0 %v2511
        %9270 = vmatprep.subr.mxu0 0.0
        %9271 = vmatpush2.msra.mxu0 %v2510
        %9272 = vmatprep.subr.mxu0 0.0
        %9273 = vmatpush2.msra.mxu0 %v2509
        %9274 = vmatprep.subr.mxu0 0.0
        %9275 = vmatpush2.msra.mxu0 %v2508
        %9276 = vmatprep.subr.mxu0 0.0
        %9277 = vmatpush2.msra.mxu0 %v2507
        %9278 = vmatprep.subr.mxu0 0.0
        %9279 = vmatpush2.msra.mxu0 %v2506
        %9280 = vmatprep.subr.mxu0 0.0
        %9281 = vmatpush2.msra.mxu0 %v2505
        %9282 = vmatprep.subr.mxu0 0.0
        %9283 = vmatpush2.msra.mxu0 %v2504
        %9284 = vmatprep.subr.mxu0 0.0
        %9285 = vmatpush2.msra.mxu0 %v2503
        %9286 = vmatprep.subr.mxu0 0.0
        %9287 = vmatpush2.msra.mxu0 %v2502
        %9288 = vmatprep.subr.mxu0 0.0
        %9289 = vmatpush2.msra.mxu0 %v2501
        %9290 = vmatprep.subr.mxu0 0.0
        %9291 = vmatpush2.msra.mxu0 %v2500
        %9292 = vmatprep.subr.mxu0 0.0
        %9293 = vmatpush2.msra.mxu0 %v2499
        %9294 = vmatprep.subr.mxu0 0.0
        %9295 = vmatpush2.msra.mxu0 %v2498
        %9296 = vmatprep.mubr.f32.mxu0 %v3988
        %9297 = vmatmul.mubr.f32.gmra.mxu0 %v3986
        %v9298 = vpop.f32.mrf.mxu0
        %v9299 = vadd.f32 %v9229, %v9298
        %v9300 = vpop.f32.mrf.mxu0
        %9301 = vdwg.mxu0
        %9302 = vmatprep.subr.mxu0 0.0
        %9303 = vmatpush1.msra.mxu0 %v2529
        %9304 = vmatprep.subr.mxu0 0.0
        %9305 = vmatpush1.msra.mxu0 %v2528
        %9306 = vmatprep.subr.mxu0 0.0
        %9307 = vmatpush1.msra.mxu0 %v2527
        %9308 = vmatprep.subr.mxu0 0.0
        %9309 = vmatpush1.msra.mxu0 %v2526
        %9310 = vmatprep.subr.mxu0 0.0
        %9311 = vmatpush1.msra.mxu0 %v2525
        %9312 = vmatprep.subr.mxu0 0.0
        %9313 = vmatpush1.msra.mxu0 %v2524
        %9314 = vmatprep.subr.mxu0 0.0
        %9315 = vmatpush1.msra.mxu0 %v2523
        %9316 = vmatprep.subr.mxu0 0.0
        %9317 = vmatpush1.msra.mxu0 %v2522
        %9318 = vmatprep.subr.mxu0 0.0
        %9319 = vmatpush1.msra.mxu0 %v2521
        %9320 = vmatprep.subr.mxu0 0.0
        %9321 = vmatpush1.msra.mxu0 %v2520
        %9322 = vmatprep.subr.mxu0 0.0
        %9323 = vmatpush1.msra.mxu0 %v2519
        %9324 = vmatprep.subr.mxu0 0.0
        %9325 = vmatpush1.msra.mxu0 %v2518
        %9326 = vmatprep.subr.mxu0 0.0
        %9327 = vmatpush1.msra.mxu0 %v2517
        %9328 = vmatprep.subr.mxu0 0.0
        %9329 = vmatpush1.msra.mxu0 %v2516
        %9330 = vmatprep.subr.mxu0 0.0
        %9331 = vmatpush1.msra.mxu0 %v2515
        %9332 = vmatprep.subr.mxu0 0.0
        %9333 = vmatpush1.msra.mxu0 %v2514
        %9334 = vmatprep.subr.mxu0 0.0
        %9335 = vmatpush2.msra.mxu0 %v2545
        %9336 = vmatprep.subr.mxu0 0.0
        %9337 = vmatpush2.msra.mxu0 %v2544
        %9338 = vmatprep.subr.mxu0 0.0
        %9339 = vmatpush2.msra.mxu0 %v2543
        %9340 = vmatprep.subr.mxu0 0.0
        %9341 = vmatpush2.msra.mxu0 %v2542
        %9342 = vmatprep.subr.mxu0 0.0
        %9343 = vmatpush2.msra.mxu0 %v2541
        %9344 = vmatprep.subr.mxu0 0.0
        %9345 = vmatpush2.msra.mxu0 %v2540
        %9346 = vmatprep.subr.mxu0 0.0
        %9347 = vmatpush2.msra.mxu0 %v2539
        %9348 = vmatprep.subr.mxu0 0.0
        %9349 = vmatpush2.msra.mxu0 %v2538
        %9350 = vmatprep.subr.mxu0 0.0
        %9351 = vmatpush2.msra.mxu0 %v2537
        %9352 = vmatprep.subr.mxu0 0.0
        %9353 = vmatpush2.msra.mxu0 %v2536
        %9354 = vmatprep.subr.mxu0 0.0
        %9355 = vmatpush2.msra.mxu0 %v2535
        %9356 = vmatprep.subr.mxu0 0.0
        %9357 = vmatpush2.msra.mxu0 %v2534
        %9358 = vmatprep.subr.mxu0 0.0
        %9359 = vmatpush2.msra.mxu0 %v2533
        %9360 = vmatprep.subr.mxu0 0.0
        %9361 = vmatpush2.msra.mxu0 %v2532
        %9362 = vmatprep.subr.mxu0 0.0
        %9363 = vmatpush2.msra.mxu0 %v2531
        %9364 = vmatprep.subr.mxu0 0.0
        %9365 = vmatpush2.msra.mxu0 %v2530
        %9366 = vmatprep.mubr.f32.mxu0 %v4004
        %9367 = vmatmul.mubr.f32.gmra.mxu0 %v3996
        %v9368 = vpop.f32.mrf.mxu0
        %v9369 = vadd.f32 %v9299, %v9368
        %v9370 = vpop.f32.mrf.mxu0
        %9371 = vdwg.mxu0
        %9372 = vmatprep.subr.mxu0 0.0
        %9373 = vmatpush1.msra.mxu0 %v2561
        %9374 = vmatprep.subr.mxu0 0.0
        %9375 = vmatpush1.msra.mxu0 %v2560
        %9376 = vmatprep.subr.mxu0 0.0
        %9377 = vmatpush1.msra.mxu0 %v2559
        %9378 = vmatprep.subr.mxu0 0.0
        %9379 = vmatpush1.msra.mxu0 %v2558
        %9380 = vmatprep.subr.mxu0 0.0
        %9381 = vmatpush1.msra.mxu0 %v2557
        %9382 = vmatprep.subr.mxu0 0.0
        %9383 = vmatpush1.msra.mxu0 %v2556
        %9384 = vmatprep.subr.mxu0 0.0
        %9385 = vmatpush1.msra.mxu0 %v2555
        %9386 = vmatprep.subr.mxu0 0.0
        %9387 = vmatpush1.msra.mxu0 %v2554
        %9388 = vmatprep.subr.mxu0 0.0
        %9389 = vmatpush1.msra.mxu0 %v2553
        %9390 = vmatprep.subr.mxu0 0.0
        %9391 = vmatpush1.msra.mxu0 %v2552
        %9392 = vmatprep.subr.mxu0 0.0
        %9393 = vmatpush1.msra.mxu0 %v2551
        %9394 = vmatprep.subr.mxu0 0.0
        %9395 = vmatpush1.msra.mxu0 %v2550
        %9396 = vmatprep.subr.mxu0 0.0
        %9397 = vmatpush1.msra.mxu0 %v2549
        %9398 = vmatprep.subr.mxu0 0.0
        %9399 = vmatpush1.msra.mxu0 %v2548
        %9400 = vmatprep.subr.mxu0 0.0
        %9401 = vmatpush1.msra.mxu0 %v2547
        %9402 = vmatprep.subr.mxu0 0.0
        %9403 = vmatpush1.msra.mxu0 %v2546
        %9404 = vmatprep.subr.mxu0 0.0
        %9405 = vmatpush2.msra.mxu0 %v2577
        %9406 = vmatprep.subr.mxu0 0.0
        %9407 = vmatpush2.msra.mxu0 %v2576
        %9408 = vmatprep.subr.mxu0 0.0
        %9409 = vmatpush2.msra.mxu0 %v2575
        %9410 = vmatprep.subr.mxu0 0.0
        %9411 = vmatpush2.msra.mxu0 %v2574
        %9412 = vmatprep.subr.mxu0 0.0
        %9413 = vmatpush2.msra.mxu0 %v2573
        %9414 = vmatprep.subr.mxu0 0.0
        %9415 = vmatpush2.msra.mxu0 %v2572
        %9416 = vmatprep.subr.mxu0 0.0
        %9417 = vmatpush2.msra.mxu0 %v2571
        %9418 = vmatprep.subr.mxu0 0.0
        %9419 = vmatpush2.msra.mxu0 %v2570
        %9420 = vmatprep.subr.mxu0 0.0
        %9421 = vmatpush2.msra.mxu0 %v2569
        %9422 = vmatprep.subr.mxu0 0.0
        %9423 = vmatpush2.msra.mxu0 %v2568
        %9424 = vmatprep.subr.mxu0 0.0
        %9425 = vmatpush2.msra.mxu0 %v2567
        %9426 = vmatprep.subr.mxu0 0.0
        %9427 = vmatpush2.msra.mxu0 %v2566
        %9428 = vmatprep.subr.mxu0 0.0
        %9429 = vmatpush2.msra.mxu0 %v2565
        %9430 = vmatprep.subr.mxu0 0.0
        %9431 = vmatpush2.msra.mxu0 %v2564
        %9432 = vmatprep.subr.mxu0 0.0
        %9433 = vmatpush2.msra.mxu0 %v2563
        %9434 = vmatprep.subr.mxu0 0.0
        %9435 = vmatpush2.msra.mxu0 %v2562
        %9436 = vmatprep.mubr.f32.mxu0 %v4005
        %9437 = vmatmul.mubr.f32.gmra.mxu0 %v4003
        %v9438 = vpop.f32.mrf.mxu0
        %v9439 = vadd.f32 %v9369, %v9438
        %v9440 = vpop.f32.mrf.mxu0
        %9441 = vdwg.mxu0
        %9442 = vmatprep.subr.mxu0 0.0
        %9443 = vmatpush1.msra.mxu0 %v2593
        %9444 = vmatprep.subr.mxu0 0.0
        %9445 = vmatpush1.msra.mxu0 %v2592
        %9446 = vmatprep.subr.mxu0 0.0
        %9447 = vmatpush1.msra.mxu0 %v2591
        %9448 = vmatprep.subr.mxu0 0.0
        %9449 = vmatpush1.msra.mxu0 %v2590
        %9450 = vmatprep.subr.mxu0 0.0
        %9451 = vmatpush1.msra.mxu0 %v2589
        %9452 = vmatprep.subr.mxu0 0.0
        %9453 = vmatpush1.msra.mxu0 %v2588
        %9454 = vmatprep.subr.mxu0 0.0
        %9455 = vmatpush1.msra.mxu0 %v2587
        %9456 = vmatprep.subr.mxu0 0.0
        %9457 = vmatpush1.msra.mxu0 %v2586
        %9458 = vmatprep.subr.mxu0 0.0
        %9459 = vmatpush1.msra.mxu0 %v2585
        %9460 = vmatprep.subr.mxu0 0.0
        %9461 = vmatpush1.msra.mxu0 %v2584
        %9462 = vmatprep.subr.mxu0 0.0
        %9463 = vmatpush1.msra.mxu0 %v2583
        %9464 = vmatprep.subr.mxu0 0.0
        %9465 = vmatpush1.msra.mxu0 %v2582
        %9466 = vmatprep.subr.mxu0 0.0
        %9467 = vmatpush1.msra.mxu0 %v2581
        %9468 = vmatprep.subr.mxu0 0.0
        %9469 = vmatpush1.msra.mxu0 %v2580
        %9470 = vmatprep.subr.mxu0 0.0
        %9471 = vmatpush1.msra.mxu0 %v2579
        %9472 = vmatprep.subr.mxu0 0.0
        %9473 = vmatpush1.msra.mxu0 %v2578
        %9474 = vmatprep.subr.mxu0 0.0
        %9475 = vmatpush2.msra.mxu0 %v2609
        %9476 = vmatprep.subr.mxu0 0.0
        %9477 = vmatpush2.msra.mxu0 %v2608
        %9478 = vmatprep.subr.mxu0 0.0
        %9479 = vmatpush2.msra.mxu0 %v2607
        %9480 = vmatprep.subr.mxu0 0.0
        %9481 = vmatpush2.msra.mxu0 %v2606
        %9482 = vmatprep.subr.mxu0 0.0
        %9483 = vmatpush2.msra.mxu0 %v2605
        %9484 = vmatprep.subr.mxu0 0.0
        %9485 = vmatpush2.msra.mxu0 %v2604
        %9486 = vmatprep.subr.mxu0 0.0
        %9487 = vmatpush2.msra.mxu0 %v2603
        %9488 = vmatprep.subr.mxu0 0.0
        %9489 = vmatpush2.msra.mxu0 %v2602
        %9490 = vmatprep.subr.mxu0 0.0
        %9491 = vmatpush2.msra.mxu0 %v2601
        %9492 = vmatprep.subr.mxu0 0.0
        %9493 = vmatpush2.msra.mxu0 %v2600
        %9494 = vmatprep.subr.mxu0 0.0
        %9495 = vmatpush2.msra.mxu0 %v2599
        %9496 = vmatprep.subr.mxu0 0.0
        %9497 = vmatpush2.msra.mxu0 %v2598
        %9498 = vmatprep.subr.mxu0 0.0
        %9499 = vmatpush2.msra.mxu0 %v2597
        %9500 = vmatprep.subr.mxu0 0.0
        %9501 = vmatpush2.msra.mxu0 %v2596
        %9502 = vmatprep.subr.mxu0 0.0
        %9503 = vmatpush2.msra.mxu0 %v2595
        %9504 = vmatprep.subr.mxu0 0.0
        %9505 = vmatpush2.msra.mxu0 %v2594
        %9506 = vmatprep.mubr.f32.mxu0 %v4021
        %9507 = vmatmul.mubr.f32.gmra.mxu0 %v4013
        %v9508 = vpop.f32.mrf.mxu0
        %v9509 = vadd.f32 %v9439, %v9508
        %v9510 = vpop.f32.mrf.mxu0
        %9511 = vdwg.mxu0
        %9512 = vmatprep.subr.mxu0 0.0
        %9513 = vmatpush1.msra.mxu0 %v2625
        %9514 = vmatprep.subr.mxu0 0.0
        %9515 = vmatpush1.msra.mxu0 %v2624
        %9516 = vmatprep.subr.mxu0 0.0
        %9517 = vmatpush1.msra.mxu0 %v2623
        %9518 = vmatprep.subr.mxu0 0.0
        %9519 = vmatpush1.msra.mxu0 %v2622
        %9520 = vmatprep.subr.mxu0 0.0
        %9521 = vmatpush1.msra.mxu0 %v2621
        %9522 = vmatprep.subr.mxu0 0.0
        %9523 = vmatpush1.msra.mxu0 %v2620
        %9524 = vmatprep.subr.mxu0 0.0
        %9525 = vmatpush1.msra.mxu0 %v2619
        %9526 = vmatprep.subr.mxu0 0.0
        %9527 = vmatpush1.msra.mxu0 %v2618
        %9528 = vmatprep.subr.mxu0 0.0
        %9529 = vmatpush1.msra.mxu0 %v2617
        %9530 = vmatprep.subr.mxu0 0.0
        %9531 = vmatpush1.msra.mxu0 %v2616
        %9532 = vmatprep.subr.mxu0 0.0
        %9533 = vmatpush1.msra.mxu0 %v2615
        %9534 = vmatprep.subr.mxu0 0.0
        %9535 = vmatpush1.msra.mxu0 %v2614
        %9536 = vmatprep.subr.mxu0 0.0
        %9537 = vmatpush1.msra.mxu0 %v2613
        %9538 = vmatprep.subr.mxu0 0.0
        %9539 = vmatpush1.msra.mxu0 %v2612
        %9540 = vmatprep.subr.mxu0 0.0
        %9541 = vmatpush1.msra.mxu0 %v2611
        %9542 = vmatprep.subr.mxu0 0.0
        %9543 = vmatpush1.msra.mxu0 %v2610
        %9544 = vmatprep.subr.mxu0 0.0
        %9545 = vmatpush2.msra.mxu0 %v2641
        %9546 = vmatprep.subr.mxu0 0.0
        %9547 = vmatpush2.msra.mxu0 %v2640
        %9548 = vmatprep.subr.mxu0 0.0
        %9549 = vmatpush2.msra.mxu0 %v2639
        %9550 = vmatprep.subr.mxu0 0.0
        %9551 = vmatpush2.msra.mxu0 %v2638
        %9552 = vmatprep.subr.mxu0 0.0
        %9553 = vmatpush2.msra.mxu0 %v2637
        %9554 = vmatprep.subr.mxu0 0.0
        %9555 = vmatpush2.msra.mxu0 %v2636
        %9556 = vmatprep.subr.mxu0 0.0
        %9557 = vmatpush2.msra.mxu0 %v2635
        %9558 = vmatprep.subr.mxu0 0.0
        %9559 = vmatpush2.msra.mxu0 %v2634
        %9560 = vmatprep.subr.mxu0 0.0
        %9561 = vmatpush2.msra.mxu0 %v2633
        %9562 = vmatprep.subr.mxu0 0.0
        %9563 = vmatpush2.msra.mxu0 %v2632
        %9564 = vmatprep.subr.mxu0 0.0
        %9565 = vmatpush2.msra.mxu0 %v2631
        %9566 = vmatprep.subr.mxu0 0.0
        %9567 = vmatpush2.msra.mxu0 %v2630
        %9568 = vmatprep.subr.mxu0 0.0
        %9569 = vmatpush2.msra.mxu0 %v2629
        %9570 = vmatprep.subr.mxu0 0.0
        %9571 = vmatpush2.msra.mxu0 %v2628
        %9572 = vmatprep.subr.mxu0 0.0
        %9573 = vmatpush2.msra.mxu0 %v2627
        %9574 = vmatprep.subr.mxu0 0.0
        %9575 = vmatpush2.msra.mxu0 %v2626
        %9576 = vmatprep.mubr.f32.mxu0 %v4022
        %9577 = vmatmul.mubr.f32.gmra.mxu0 %v4020
        %v9578 = vpop.f32.mrf.mxu0
        %v9579 = vadd.f32 %v9509, %v9578
        %v9580 = vpop.f32.mrf.mxu0
        %9581 = vdwg.mxu0
        %9582 = vmatprep.subr.mxu0 0.0
        %9583 = vmatpush1.msra.mxu0 %v2657
        %9584 = vmatprep.subr.mxu0 0.0
        %9585 = vmatpush1.msra.mxu0 %v2656
        %9586 = vmatprep.subr.mxu0 0.0
        %9587 = vmatpush1.msra.mxu0 %v2655
        %9588 = vmatprep.subr.mxu0 0.0
        %9589 = vmatpush1.msra.mxu0 %v2654
        %9590 = vmatprep.subr.mxu0 0.0
        %9591 = vmatpush1.msra.mxu0 %v2653
        %9592 = vmatprep.subr.mxu0 0.0
        %9593 = vmatpush1.msra.mxu0 %v2652
        %9594 = vmatprep.subr.mxu0 0.0
        %9595 = vmatpush1.msra.mxu0 %v2651
        %9596 = vmatprep.subr.mxu0 0.0
        %9597 = vmatpush1.msra.mxu0 %v2650
        %9598 = vmatprep.subr.mxu0 0.0
        %9599 = vmatpush1.msra.mxu0 %v2649
        %9600 = vmatprep.subr.mxu0 0.0
        %9601 = vmatpush1.msra.mxu0 %v2648
        %9602 = vmatprep.subr.mxu0 0.0
        %9603 = vmatpush1.msra.mxu0 %v2647
        %9604 = vmatprep.subr.mxu0 0.0
        %9605 = vmatpush1.msra.mxu0 %v2646
        %9606 = vmatprep.subr.mxu0 0.0
        %9607 = vmatpush1.msra.mxu0 %v2645
        %9608 = vmatprep.subr.mxu0 0.0
        %9609 = vmatpush1.msra.mxu0 %v2644
        %9610 = vmatprep.subr.mxu0 0.0
        %9611 = vmatpush1.msra.mxu0 %v2643
        %9612 = vmatprep.subr.mxu0 0.0
        %9613 = vmatpush1.msra.mxu0 %v2642
        %9614 = vmatprep.subr.mxu0 0.0
        %9615 = vmatpush2.msra.mxu0 %v2673
        %9616 = vmatprep.subr.mxu0 0.0
        %9617 = vmatpush2.msra.mxu0 %v2672
        %9618 = vmatprep.subr.mxu0 0.0
        %9619 = vmatpush2.msra.mxu0 %v2671
        %9620 = vmatprep.subr.mxu0 0.0
        %9621 = vmatpush2.msra.mxu0 %v2670
        %9622 = vmatprep.subr.mxu0 0.0
        %9623 = vmatpush2.msra.mxu0 %v2669
        %9624 = vmatprep.subr.mxu0 0.0
        %9625 = vmatpush2.msra.mxu0 %v2668
        %9626 = vmatprep.subr.mxu0 0.0
        %9627 = vmatpush2.msra.mxu0 %v2667
        %9628 = vmatprep.subr.mxu0 0.0
        %9629 = vmatpush2.msra.mxu0 %v2666
        %9630 = vmatprep.subr.mxu0 0.0
        %9631 = vmatpush2.msra.mxu0 %v2665
        %9632 = vmatprep.subr.mxu0 0.0
        %9633 = vmatpush2.msra.mxu0 %v2664
        %9634 = vmatprep.subr.mxu0 0.0
        %9635 = vmatpush2.msra.mxu0 %v2663
        %9636 = vmatprep.subr.mxu0 0.0
        %9637 = vmatpush2.msra.mxu0 %v2662
        %9638 = vmatprep.subr.mxu0 0.0
        %9639 = vmatpush2.msra.mxu0 %v2661
        %9640 = vmatprep.subr.mxu0 0.0
        %9641 = vmatpush2.msra.mxu0 %v2660
        %9642 = vmatprep.subr.mxu0 0.0
        %9643 = vmatpush2.msra.mxu0 %v2659
        %9644 = vmatprep.subr.mxu0 0.0
        %9645 = vmatpush2.msra.mxu0 %v2658
        %9646 = vmatprep.mubr.f32.mxu0 %v4038
        %9647 = vmatmul.mubr.f32.gmra.mxu0 %v4030
        %v9648 = vpop.f32.mrf.mxu0
        %v9649 = vadd.f32 %v9579, %v9648
        %v9650 = vpop.f32.mrf.mxu0
        %9651 = vdwg.mxu0
        %9652 = vmatprep.subr.mxu0 0.0
        %9653 = vmatpush1.msra.mxu0 %v2689
        %9654 = vmatprep.subr.mxu0 0.0
        %9655 = vmatpush1.msra.mxu0 %v2688
        %9656 = vmatprep.subr.mxu0 0.0
        %9657 = vmatpush1.msra.mxu0 %v2687
        %9658 = vmatprep.subr.mxu0 0.0
        %9659 = vmatpush1.msra.mxu0 %v2686
        %9660 = vmatprep.subr.mxu0 0.0
        %9661 = vmatpush1.msra.mxu0 %v2685
        %9662 = vmatprep.subr.mxu0 0.0
        %9663 = vmatpush1.msra.mxu0 %v2684
        %9664 = vmatprep.subr.mxu0 0.0
        %9665 = vmatpush1.msra.mxu0 %v2683
        %9666 = vmatprep.subr.mxu0 0.0
        %9667 = vmatpush1.msra.mxu0 %v2682
        %9668 = vmatprep.subr.mxu0 0.0
        %9669 = vmatpush1.msra.mxu0 %v2681
        %9670 = vmatprep.subr.mxu0 0.0
        %9671 = vmatpush1.msra.mxu0 %v2680
        %9672 = vmatprep.subr.mxu0 0.0
        %9673 = vmatpush1.msra.mxu0 %v2679
        %9674 = vmatprep.subr.mxu0 0.0
        %9675 = vmatpush1.msra.mxu0 %v2678
        %9676 = vmatprep.subr.mxu0 0.0
        %9677 = vmatpush1.msra.mxu0 %v2677
        %9678 = vmatprep.subr.mxu0 0.0
        %9679 = vmatpush1.msra.mxu0 %v2676
        %9680 = vmatprep.subr.mxu0 0.0
        %9681 = vmatpush1.msra.mxu0 %v2675
        %9682 = vmatprep.subr.mxu0 0.0
        %9683 = vmatpush1.msra.mxu0 %v2674
        %9684 = vmatprep.subr.mxu0 0.0
        %9685 = vmatpush2.msra.mxu0 %v2705
        %9686 = vmatprep.subr.mxu0 0.0
        %9687 = vmatpush2.msra.mxu0 %v2704
        %9688 = vmatprep.subr.mxu0 0.0
        %9689 = vmatpush2.msra.mxu0 %v2703
        %9690 = vmatprep.subr.mxu0 0.0
        %9691 = vmatpush2.msra.mxu0 %v2702
        %9692 = vmatprep.subr.mxu0 0.0
        %9693 = vmatpush2.msra.mxu0 %v2701
        %9694 = vmatprep.subr.mxu0 0.0
        %9695 = vmatpush2.msra.mxu0 %v2700
        %9696 = vmatprep.subr.mxu0 0.0
        %9697 = vmatpush2.msra.mxu0 %v2699
        %9698 = vmatprep.subr.mxu0 0.0
        %9699 = vmatpush2.msra.mxu0 %v2698
        %9700 = vmatprep.subr.mxu0 0.0
        %9701 = vmatpush2.msra.mxu0 %v2697
        %9702 = vmatprep.subr.mxu0 0.0
        %9703 = vmatpush2.msra.mxu0 %v2696
        %9704 = vmatprep.subr.mxu0 0.0
        %9705 = vmatpush2.msra.mxu0 %v2695
        %9706 = vmatprep.subr.mxu0 0.0
        %9707 = vmatpush2.msra.mxu0 %v2694
        %9708 = vmatprep.subr.mxu0 0.0
        %9709 = vmatpush2.msra.mxu0 %v2693
        %9710 = vmatprep.subr.mxu0 0.0
        %9711 = vmatpush2.msra.mxu0 %v2692
        %9712 = vmatprep.subr.mxu0 0.0
        %9713 = vmatpush2.msra.mxu0 %v2691
        %9714 = vmatprep.subr.mxu0 0.0
        %9715 = vmatpush2.msra.mxu0 %v2690
        %9716 = vmatprep.mubr.f32.mxu0 %v4039
        %9717 = vmatmul.mubr.f32.gmra.mxu0 %v4037
        %v9718 = vpop.f32.mrf.mxu0
        %v9719 = vadd.f32 %v9649, %v9718
        %v9720 = vpop.f32.mrf.mxu0
        %9721 = vdwg.mxu0
        %9722 = vmatprep.subr.mxu0 0.0
        %9723 = vmatpush1.msra.mxu0 %v2721
        %9724 = vmatprep.subr.mxu0 0.0
        %9725 = vmatpush1.msra.mxu0 %v2720
        %9726 = vmatprep.subr.mxu0 0.0
        %9727 = vmatpush1.msra.mxu0 %v2719
        %9728 = vmatprep.subr.mxu0 0.0
        %9729 = vmatpush1.msra.mxu0 %v2718
        %9730 = vmatprep.subr.mxu0 0.0
        %9731 = vmatpush1.msra.mxu0 %v2717
        %9732 = vmatprep.subr.mxu0 0.0
        %9733 = vmatpush1.msra.mxu0 %v2716
        %9734 = vmatprep.subr.mxu0 0.0
        %9735 = vmatpush1.msra.mxu0 %v2715
        %9736 = vmatprep.subr.mxu0 0.0
        %9737 = vmatpush1.msra.mxu0 %v2714
        %9738 = vmatprep.subr.mxu0 0.0
        %9739 = vmatpush1.msra.mxu0 %v2713
        %9740 = vmatprep.subr.mxu0 0.0
        %9741 = vmatpush1.msra.mxu0 %v2712
        %9742 = vmatprep.subr.mxu0 0.0
        %9743 = vmatpush1.msra.mxu0 %v2711
        %9744 = vmatprep.subr.mxu0 0.0
        %9745 = vmatpush1.msra.mxu0 %v2710
        %9746 = vmatprep.subr.mxu0 0.0
        %9747 = vmatpush1.msra.mxu0 %v2709
        %9748 = vmatprep.subr.mxu0 0.0
        %9749 = vmatpush1.msra.mxu0 %v2708
        %9750 = vmatprep.subr.mxu0 0.0
        %9751 = vmatpush1.msra.mxu0 %v2707
        %9752 = vmatprep.subr.mxu0 0.0
        %9753 = vmatpush1.msra.mxu0 %v2706
        %9754 = vmatprep.subr.mxu0 0.0
        %9755 = vmatpush2.msra.mxu0 %v2737
        %9756 = vmatprep.subr.mxu0 0.0
        %9757 = vmatpush2.msra.mxu0 %v2736
        %9758 = vmatprep.subr.mxu0 0.0
        %9759 = vmatpush2.msra.mxu0 %v2735
        %9760 = vmatprep.subr.mxu0 0.0
        %9761 = vmatpush2.msra.mxu0 %v2734
        %9762 = vmatprep.subr.mxu0 0.0
        %9763 = vmatpush2.msra.mxu0 %v2733
        %9764 = vmatprep.subr.mxu0 0.0
        %9765 = vmatpush2.msra.mxu0 %v2732
        %9766 = vmatprep.subr.mxu0 0.0
        %9767 = vmatpush2.msra.mxu0 %v2731
        %9768 = vmatprep.subr.mxu0 0.0
        %9769 = vmatpush2.msra.mxu0 %v2730
        %9770 = vmatprep.subr.mxu0 0.0
        %9771 = vmatpush2.msra.mxu0 %v2729
        %9772 = vmatprep.subr.mxu0 0.0
        %9773 = vmatpush2.msra.mxu0 %v2728
        %9774 = vmatprep.subr.mxu0 0.0
        %9775 = vmatpush2.msra.mxu0 %v2727
        %9776 = vmatprep.subr.mxu0 0.0
        %9777 = vmatpush2.msra.mxu0 %v2726
        %9778 = vmatprep.subr.mxu0 0.0
        %9779 = vmatpush2.msra.mxu0 %v2725
        %9780 = vmatprep.subr.mxu0 0.0
        %9781 = vmatpush2.msra.mxu0 %v2724
        %9782 = vmatprep.subr.mxu0 0.0
        %9783 = vmatpush2.msra.mxu0 %v2723
        %9784 = vmatprep.subr.mxu0 0.0
        %9785 = vmatpush2.msra.mxu0 %v2722
        %9786 = vmatprep.mubr.f32.mxu0 %v4055
        %9787 = vmatmul.mubr.f32.gmra.mxu0 %v4047
        %v9788 = vpop.f32.mrf.mxu0
        %v9789 = vadd.f32 %v9719, %v9788
        %v9790 = vpop.f32.mrf.mxu0
        %9791 = vdwg.mxu0
        %9792 = vmatprep.subr.mxu0 0.0
        %9793 = vmatpush1.msra.mxu0 %v2753
        %9794 = vmatprep.subr.mxu0 0.0
        %9795 = vmatpush1.msra.mxu0 %v2752
        %9796 = vmatprep.subr.mxu0 0.0
        %9797 = vmatpush1.msra.mxu0 %v2751
        %9798 = vmatprep.subr.mxu0 0.0
        %9799 = vmatpush1.msra.mxu0 %v2750
        %9800 = vmatprep.subr.mxu0 0.0
        %9801 = vmatpush1.msra.mxu0 %v2749
        %9802 = vmatprep.subr.mxu0 0.0
        %9803 = vmatpush1.msra.mxu0 %v2748
        %9804 = vmatprep.subr.mxu0 0.0
        %9805 = vmatpush1.msra.mxu0 %v2747
        %9806 = vmatprep.subr.mxu0 0.0
        %9807 = vmatpush1.msra.mxu0 %v2746
        %9808 = vmatprep.subr.mxu0 0.0
        %9809 = vmatpush1.msra.mxu0 %v2745
        %9810 = vmatprep.subr.mxu0 0.0
        %9811 = vmatpush1.msra.mxu0 %v2744
        %9812 = vmatprep.subr.mxu0 0.0
        %9813 = vmatpush1.msra.mxu0 %v2743
        %9814 = vmatprep.subr.mxu0 0.0
        %9815 = vmatpush1.msra.mxu0 %v2742
        %9816 = vmatprep.subr.mxu0 0.0
        %9817 = vmatpush1.msra.mxu0 %v2741
        %9818 = vmatprep.subr.mxu0 0.0
        %9819 = vmatpush1.msra.mxu0 %v2740
        %9820 = vmatprep.subr.mxu0 0.0
        %9821 = vmatpush1.msra.mxu0 %v2739
        %9822 = vmatprep.subr.mxu0 0.0
        %9823 = vmatpush1.msra.mxu0 %v2738
        %9824 = vmatprep.subr.mxu0 0.0
        %9825 = vmatpush2.msra.mxu0 %v2769
        %9826 = vmatprep.subr.mxu0 0.0
        %9827 = vmatpush2.msra.mxu0 %v2768
        %9828 = vmatprep.subr.mxu0 0.0
        %9829 = vmatpush2.msra.mxu0 %v2767
        %9830 = vmatprep.subr.mxu0 0.0
        %9831 = vmatpush2.msra.mxu0 %v2766
        %9832 = vmatprep.subr.mxu0 0.0
        %9833 = vmatpush2.msra.mxu0 %v2765
        %9834 = vmatprep.subr.mxu0 0.0
        %9835 = vmatpush2.msra.mxu0 %v2764
        %9836 = vmatprep.subr.mxu0 0.0
        %9837 = vmatpush2.msra.mxu0 %v2763
        %9838 = vmatprep.subr.mxu0 0.0
        %9839 = vmatpush2.msra.mxu0 %v2762
        %9840 = vmatprep.subr.mxu0 0.0
        %9841 = vmatpush2.msra.mxu0 %v2761
        %9842 = vmatprep.subr.mxu0 0.0
        %9843 = vmatpush2.msra.mxu0 %v2760
        %9844 = vmatprep.subr.mxu0 0.0
        %9845 = vmatpush2.msra.mxu0 %v2759
        %9846 = vmatprep.subr.mxu0 0.0
        %9847 = vmatpush2.msra.mxu0 %v2758
        %9848 = vmatprep.subr.mxu0 0.0
        %9849 = vmatpush2.msra.mxu0 %v2757
        %9850 = vmatprep.subr.mxu0 0.0
        %9851 = vmatpush2.msra.mxu0 %v2756
        %9852 = vmatprep.subr.mxu0 0.0
        %9853 = vmatpush2.msra.mxu0 %v2755
        %9854 = vmatprep.subr.mxu0 0.0
        %9855 = vmatpush2.msra.mxu0 %v2754
        %9856 = vmatprep.mubr.f32.mxu0 %v4056
        %9857 = vmatmul.mubr.f32.gmra.mxu0 %v4054
        %v9858 = vpop.f32.mrf.mxu0
        %v9859 = vadd.f32 %v9789, %v9858
        %v9860 = vpop.f32.mrf.mxu0
        %9861 = vdwg.mxu0
        %9862 = vmatprep.subr.mxu0 0.0
        %9863 = vmatpush1.msra.mxu0 %v2785
        %9864 = vmatprep.subr.mxu0 0.0
        %9865 = vmatpush1.msra.mxu0 %v2784
        %9866 = vmatprep.subr.mxu0 0.0
        %9867 = vmatpush1.msra.mxu0 %v2783
        %9868 = vmatprep.subr.mxu0 0.0
        %9869 = vmatpush1.msra.mxu0 %v2782
        %9870 = vmatprep.subr.mxu0 0.0
        %9871 = vmatpush1.msra.mxu0 %v2781
        %9872 = vmatprep.subr.mxu0 0.0
        %9873 = vmatpush1.msra.mxu0 %v2780
        %9874 = vmatprep.subr.mxu0 0.0
        %9875 = vmatpush1.msra.mxu0 %v2779
        %9876 = vmatprep.subr.mxu0 0.0
        %9877 = vmatpush1.msra.mxu0 %v2778
        %9878 = vmatprep.subr.mxu0 0.0
        %9879 = vmatpush1.msra.mxu0 %v2777
        %9880 = vmatprep.subr.mxu0 0.0
        %9881 = vmatpush1.msra.mxu0 %v2776
        %9882 = vmatprep.subr.mxu0 0.0
        %9883 = vmatpush1.msra.mxu0 %v2775
        %9884 = vmatprep.subr.mxu0 0.0
        %9885 = vmatpush1.msra.mxu0 %v2774
        %9886 = vmatprep.subr.mxu0 0.0
        %9887 = vmatpush1.msra.mxu0 %v2773
        %9888 = vmatprep.subr.mxu0 0.0
        %9889 = vmatpush1.msra.mxu0 %v2772
        %9890 = vmatprep.subr.mxu0 0.0
        %9891 = vmatpush1.msra.mxu0 %v2771
        %9892 = vmatprep.subr.mxu0 0.0
        %9893 = vmatpush1.msra.mxu0 %v2770
        %9894 = vmatprep.subr.mxu0 0.0
        %9895 = vmatpush2.msra.mxu0 %v2801
        %9896 = vmatprep.subr.mxu0 0.0
        %9897 = vmatpush2.msra.mxu0 %v2800
        %9898 = vmatprep.subr.mxu0 0.0
        %9899 = vmatpush2.msra.mxu0 %v2799
        %9900 = vmatprep.subr.mxu0 0.0
        %9901 = vmatpush2.msra.mxu0 %v2798
        %9902 = vmatprep.subr.mxu0 0.0
        %9903 = vmatpush2.msra.mxu0 %v2797
        %9904 = vmatprep.subr.mxu0 0.0
        %9905 = vmatpush2.msra.mxu0 %v2796
        %9906 = vmatprep.subr.mxu0 0.0
        %9907 = vmatpush2.msra.mxu0 %v2795
        %9908 = vmatprep.subr.mxu0 0.0
        %9909 = vmatpush2.msra.mxu0 %v2794
        %9910 = vmatprep.subr.mxu0 0.0
        %9911 = vmatpush2.msra.mxu0 %v2793
        %9912 = vmatprep.subr.mxu0 0.0
        %9913 = vmatpush2.msra.mxu0 %v2792
        %9914 = vmatprep.subr.mxu0 0.0
        %9915 = vmatpush2.msra.mxu0 %v2791
        %9916 = vmatprep.subr.mxu0 0.0
        %9917 = vmatpush2.msra.mxu0 %v2790
        %9918 = vmatprep.subr.mxu0 0.0
        %9919 = vmatpush2.msra.mxu0 %v2789
        %9920 = vmatprep.subr.mxu0 0.0
        %9921 = vmatpush2.msra.mxu0 %v2788
        %9922 = vmatprep.subr.mxu0 0.0
        %9923 = vmatpush2.msra.mxu0 %v2787
        %9924 = vmatprep.subr.mxu0 0.0
        %9925 = vmatpush2.msra.mxu0 %v2786
        %9926 = vmatprep.mubr.f32.mxu0 %v4072
        %9927 = vmatmul.mubr.f32.gmra.mxu0 %v4064
        %v9928 = vpop.f32.mrf.mxu0
        %v9929 = vadd.f32 %v9859, %v9928
        %v9930 = vpop.f32.mrf.mxu0
        %9931 = vdwg.mxu0
        %9932 = vmatprep.subr.mxu0 0.0
        %9933 = vmatpush1.msra.mxu0 %v2817
        %9934 = vmatprep.subr.mxu0 0.0
        %9935 = vmatpush1.msra.mxu0 %v2816
        %9936 = vmatprep.subr.mxu0 0.0
        %9937 = vmatpush1.msra.mxu0 %v2815
        %9938 = vmatprep.subr.mxu0 0.0
        %9939 = vmatpush1.msra.mxu0 %v2814
        %9940 = vmatprep.subr.mxu0 0.0
        %9941 = vmatpush1.msra.mxu0 %v2813
        %9942 = vmatprep.subr.mxu0 0.0
        %9943 = vmatpush1.msra.mxu0 %v2812
        %9944 = vmatprep.subr.mxu0 0.0
        %9945 = vmatpush1.msra.mxu0 %v2811
        %9946 = vmatprep.subr.mxu0 0.0
        %9947 = vmatpush1.msra.mxu0 %v2810
        %9948 = vmatprep.subr.mxu0 0.0
        %9949 = vmatpush1.msra.mxu0 %v2809
        %9950 = vmatprep.subr.mxu0 0.0
        %9951 = vmatpush1.msra.mxu0 %v2808
        %9952 = vmatprep.subr.mxu0 0.0
        %9953 = vmatpush1.msra.mxu0 %v2807
        %9954 = vmatprep.subr.mxu0 0.0
        %9955 = vmatpush1.msra.mxu0 %v2806
        %9956 = vmatprep.subr.mxu0 0.0
        %9957 = vmatpush1.msra.mxu0 %v2805
        %9958 = vmatprep.subr.mxu0 0.0
        %9959 = vmatpush1.msra.mxu0 %v2804
        %9960 = vmatprep.subr.mxu0 0.0
        %9961 = vmatpush1.msra.mxu0 %v2803
        %9962 = vmatprep.subr.mxu0 0.0
        %9963 = vmatpush1.msra.mxu0 %v2802
        %9964 = vmatprep.subr.mxu0 0.0
        %9965 = vmatpush2.msra.mxu0 %v2833
        %9966 = vmatprep.subr.mxu0 0.0
        %9967 = vmatpush2.msra.mxu0 %v2832
        %9968 = vmatprep.subr.mxu0 0.0
        %9969 = vmatpush2.msra.mxu0 %v2831
        %9970 = vmatprep.subr.mxu0 0.0
        %9971 = vmatpush2.msra.mxu0 %v2830
        %9972 = vmatprep.subr.mxu0 0.0
        %9973 = vmatpush2.msra.mxu0 %v2829
        %9974 = vmatprep.subr.mxu0 0.0
        %9975 = vmatpush2.msra.mxu0 %v2828
        %9976 = vmatprep.subr.mxu0 0.0
        %9977 = vmatpush2.msra.mxu0 %v2827
        %9978 = vmatprep.subr.mxu0 0.0
        %9979 = vmatpush2.msra.mxu0 %v2826
        %9980 = vmatprep.subr.mxu0 0.0
        %9981 = vmatpush2.msra.mxu0 %v2825
        %9982 = vmatprep.subr.mxu0 0.0
        %9983 = vmatpush2.msra.mxu0 %v2824
        %9984 = vmatprep.subr.mxu0 0.0
        %9985 = vmatpush2.msra.mxu0 %v2823
        %9986 = vmatprep.subr.mxu0 0.0
        %9987 = vmatpush2.msra.mxu0 %v2822
        %9988 = vmatprep.subr.mxu0 0.0
        %9989 = vmatpush2.msra.mxu0 %v2821
        %9990 = vmatprep.subr.mxu0 0.0
        %9991 = vmatpush2.msra.mxu0 %v2820
        %9992 = vmatprep.subr.mxu0 0.0
        %9993 = vmatpush2.msra.mxu0 %v2819
        %9994 = vmatprep.subr.mxu0 0.0
        %9995 = vmatpush2.msra.mxu0 %v2818
        %9996 = vmatprep.mubr.f32.mxu0 %v4073
        %9997 = vmatmul.mubr.f32.gmra.mxu0 %v4071
        %v9998 = vpop.f32.mrf.mxu0
        %v9999 = vadd.f32 %v9929, %v9998
        %v10000 = vpop.f32.mrf.mxu0
        %10001 = vdwg.mxu0
        %10002 = vmatprep.subr.mxu0 0.0
        %10003 = vmatpush1.msra.mxu0 %v2849
        %10004 = vmatprep.subr.mxu0 0.0
        %10005 = vmatpush1.msra.mxu0 %v2848
        %10006 = vmatprep.subr.mxu0 0.0
        %10007 = vmatpush1.msra.mxu0 %v2847
        %10008 = vmatprep.subr.mxu0 0.0
        %10009 = vmatpush1.msra.mxu0 %v2846
        %10010 = vmatprep.subr.mxu0 0.0
        %10011 = vmatpush1.msra.mxu0 %v2845
        %10012 = vmatprep.subr.mxu0 0.0
        %10013 = vmatpush1.msra.mxu0 %v2844
        %10014 = vmatprep.subr.mxu0 0.0
        %10015 = vmatpush1.msra.mxu0 %v2843
        %10016 = vmatprep.subr.mxu0 0.0
        %10017 = vmatpush1.msra.mxu0 %v2842
        %10018 = vmatprep.subr.mxu0 0.0
        %10019 = vmatpush1.msra.mxu0 %v2841
        %10020 = vmatprep.subr.mxu0 0.0
        %10021 = vmatpush1.msra.mxu0 %v2840
        %10022 = vmatprep.subr.mxu0 0.0
        %10023 = vmatpush1.msra.mxu0 %v2839
        %10024 = vmatprep.subr.mxu0 0.0
        %10025 = vmatpush1.msra.mxu0 %v2838
        %10026 = vmatprep.subr.mxu0 0.0
        %10027 = vmatpush1.msra.mxu0 %v2837
        %10028 = vmatprep.subr.mxu0 0.0
        %10029 = vmatpush1.msra.mxu0 %v2836
        %10030 = vmatprep.subr.mxu0 0.0
        %10031 = vmatpush1.msra.mxu0 %v2835
        %10032 = vmatprep.subr.mxu0 0.0
        %10033 = vmatpush1.msra.mxu0 %v2834
        %10034 = vmatprep.subr.mxu0 0.0
        %10035 = vmatpush2.msra.mxu0 %v2865
        %10036 = vmatprep.subr.mxu0 0.0
        %10037 = vmatpush2.msra.mxu0 %v2864
        %10038 = vmatprep.subr.mxu0 0.0
        %10039 = vmatpush2.msra.mxu0 %v2863
        %10040 = vmatprep.subr.mxu0 0.0
        %10041 = vmatpush2.msra.mxu0 %v2862
        %10042 = vmatprep.subr.mxu0 0.0
        %10043 = vmatpush2.msra.mxu0 %v2861
        %10044 = vmatprep.subr.mxu0 0.0
        %10045 = vmatpush2.msra.mxu0 %v2860
        %10046 = vmatprep.subr.mxu0 0.0
        %10047 = vmatpush2.msra.mxu0 %v2859
        %10048 = vmatprep.subr.mxu0 0.0
        %10049 = vmatpush2.msra.mxu0 %v2858
        %10050 = vmatprep.subr.mxu0 0.0
        %10051 = vmatpush2.msra.mxu0 %v2857
        %10052 = vmatprep.subr.mxu0 0.0
        %10053 = vmatpush2.msra.mxu0 %v2856
        %10054 = vmatprep.subr.mxu0 0.0
        %10055 = vmatpush2.msra.mxu0 %v2855
        %10056 = vmatprep.subr.mxu0 0.0
        %10057 = vmatpush2.msra.mxu0 %v2854
        %10058 = vmatprep.subr.mxu0 0.0
        %10059 = vmatpush2.msra.mxu0 %v2853
        %10060 = vmatprep.subr.mxu0 0.0
        %10061 = vmatpush2.msra.mxu0 %v2852
        %10062 = vmatprep.subr.mxu0 0.0
        %10063 = vmatpush2.msra.mxu0 %v2851
        %10064 = vmatprep.subr.mxu0 0.0
        %10065 = vmatpush2.msra.mxu0 %v2850
        %10066 = vmatprep.mubr.f32.mxu0 %v4089
        %10067 = vmatmul.mubr.f32.gmra.mxu0 %v4081
        %v10068 = vpop.f32.mrf.mxu0
        %v10069 = vadd.f32 %v9999, %v10068
        %v10070 = vpop.f32.mrf.mxu0
        %10071 = vdwg.mxu0
        %10072 = vmatprep.subr.mxu0 0.0
        %10073 = vmatpush1.msra.mxu0 %v2881
        %10074 = vmatprep.subr.mxu0 0.0
        %10075 = vmatpush1.msra.mxu0 %v2880
        %10076 = vmatprep.subr.mxu0 0.0
        %10077 = vmatpush1.msra.mxu0 %v2879
        %10078 = vmatprep.subr.mxu0 0.0
        %10079 = vmatpush1.msra.mxu0 %v2878
        %10080 = vmatprep.subr.mxu0 0.0
        %10081 = vmatpush1.msra.mxu0 %v2877
        %10082 = vmatprep.subr.mxu0 0.0
        %10083 = vmatpush1.msra.mxu0 %v2876
        %10084 = vmatprep.subr.mxu0 0.0
        %10085 = vmatpush1.msra.mxu0 %v2875
        %10086 = vmatprep.subr.mxu0 0.0
        %10087 = vmatpush1.msra.mxu0 %v2874
        %10088 = vmatprep.subr.mxu0 0.0
        %10089 = vmatpush1.msra.mxu0 %v2873
        %10090 = vmatprep.subr.mxu0 0.0
        %10091 = vmatpush1.msra.mxu0 %v2872
        %10092 = vmatprep.subr.mxu0 0.0
        %10093 = vmatpush1.msra.mxu0 %v2871
        %10094 = vmatprep.subr.mxu0 0.0
        %10095 = vmatpush1.msra.mxu0 %v2870
        %10096 = vmatprep.subr.mxu0 0.0
        %10097 = vmatpush1.msra.mxu0 %v2869
        %10098 = vmatprep.subr.mxu0 0.0
        %10099 = vmatpush1.msra.mxu0 %v2868
        %10100 = vmatprep.subr.mxu0 0.0
        %10101 = vmatpush1.msra.mxu0 %v2867
        %10102 = vmatprep.subr.mxu0 0.0
        %10103 = vmatpush1.msra.mxu0 %v2866
        %10104 = vmatprep.subr.mxu0 0.0
        %10105 = vmatpush2.msra.mxu0 %v2897
        %10106 = vmatprep.subr.mxu0 0.0
        %10107 = vmatpush2.msra.mxu0 %v2896
        %10108 = vmatprep.subr.mxu0 0.0
        %10109 = vmatpush2.msra.mxu0 %v2895
        %10110 = vmatprep.subr.mxu0 0.0
        %10111 = vmatpush2.msra.mxu0 %v2894
        %10112 = vmatprep.subr.mxu0 0.0
        %10113 = vmatpush2.msra.mxu0 %v2893
        %10114 = vmatprep.subr.mxu0 0.0
        %10115 = vmatpush2.msra.mxu0 %v2892
        %10116 = vmatprep.subr.mxu0 0.0
        %10117 = vmatpush2.msra.mxu0 %v2891
        %10118 = vmatprep.subr.mxu0 0.0
        %10119 = vmatpush2.msra.mxu0 %v2890
        %10120 = vmatprep.subr.mxu0 0.0
        %10121 = vmatpush2.msra.mxu0 %v2889
        %10122 = vmatprep.subr.mxu0 0.0
        %10123 = vmatpush2.msra.mxu0 %v2888
        %10124 = vmatprep.subr.mxu0 0.0
        %10125 = vmatpush2.msra.mxu0 %v2887
        %10126 = vmatprep.subr.mxu0 0.0
        %10127 = vmatpush2.msra.mxu0 %v2886
        %10128 = vmatprep.subr.mxu0 0.0
        %10129 = vmatpush2.msra.mxu0 %v2885
        %10130 = vmatprep.subr.mxu0 0.0
        %10131 = vmatpush2.msra.mxu0 %v2884
        %10132 = vmatprep.subr.mxu0 0.0
        %10133 = vmatpush2.msra.mxu0 %v2883
        %10134 = vmatprep.subr.mxu0 0.0
        %10135 = vmatpush2.msra.mxu0 %v2882
        %10136 = vmatprep.mubr.f32.mxu0 %v4090
        %10137 = vmatmul.mubr.f32.gmra.mxu0 %v4088
        %v10138 = vpop.f32.mrf.mxu0
        %v10139 = vadd.f32 %v10069, %v10138
        %v10140 = vpop.f32.mrf.mxu0
        %10141 = vdwg.mxu0
        %10142 = vmatprep.subr.mxu0 0.0
        %10143 = vmatpush1.msra.mxu0 %v2913
        %10144 = vmatprep.subr.mxu0 0.0
        %10145 = vmatpush1.msra.mxu0 %v2912
        %10146 = vmatprep.subr.mxu0 0.0
        %10147 = vmatpush1.msra.mxu0 %v2911
        %10148 = vmatprep.subr.mxu0 0.0
        %10149 = vmatpush1.msra.mxu0 %v2910
        %10150 = vmatprep.subr.mxu0 0.0
        %10151 = vmatpush1.msra.mxu0 %v2909
        %10152 = vmatprep.subr.mxu0 0.0
        %10153 = vmatpush1.msra.mxu0 %v2908
        %10154 = vmatprep.subr.mxu0 0.0
        %10155 = vmatpush1.msra.mxu0 %v2907
        %10156 = vmatprep.subr.mxu0 0.0
        %10157 = vmatpush1.msra.mxu0 %v2906
        %10158 = vmatprep.subr.mxu0 0.0
        %10159 = vmatpush1.msra.mxu0 %v2905
        %10160 = vmatprep.subr.mxu0 0.0
        %10161 = vmatpush1.msra.mxu0 %v2904
        %10162 = vmatprep.subr.mxu0 0.0
        %10163 = vmatpush1.msra.mxu0 %v2903
        %10164 = vmatprep.subr.mxu0 0.0
        %10165 = vmatpush1.msra.mxu0 %v2902
        %10166 = vmatprep.subr.mxu0 0.0
        %10167 = vmatpush1.msra.mxu0 %v2901
        %10168 = vmatprep.subr.mxu0 0.0
        %10169 = vmatpush1.msra.mxu0 %v2900
        %10170 = vmatprep.subr.mxu0 0.0
        %10171 = vmatpush1.msra.mxu0 %v2899
        %10172 = vmatprep.subr.mxu0 0.0
        %10173 = vmatpush1.msra.mxu0 %v2898
        %10174 = vmatprep.subr.mxu0 0.0
        %10175 = vmatpush2.msra.mxu0 %v2929
        %10176 = vmatprep.subr.mxu0 0.0
        %10177 = vmatpush2.msra.mxu0 %v2928
        %10178 = vmatprep.subr.mxu0 0.0
        %10179 = vmatpush2.msra.mxu0 %v2927
        %10180 = vmatprep.subr.mxu0 0.0
        %10181 = vmatpush2.msra.mxu0 %v2926
        %10182 = vmatprep.subr.mxu0 0.0
        %10183 = vmatpush2.msra.mxu0 %v2925
        %10184 = vmatprep.subr.mxu0 0.0
        %10185 = vmatpush2.msra.mxu0 %v2924
        %10186 = vmatprep.subr.mxu0 0.0
        %10187 = vmatpush2.msra.mxu0 %v2923
        %10188 = vmatprep.subr.mxu0 0.0
        %10189 = vmatpush2.msra.mxu0 %v2922
        %10190 = vmatprep.subr.mxu0 0.0
        %10191 = vmatpush2.msra.mxu0 %v2921
        %10192 = vmatprep.subr.mxu0 0.0
        %10193 = vmatpush2.msra.mxu0 %v2920
        %10194 = vmatprep.subr.mxu0 0.0
        %10195 = vmatpush2.msra.mxu0 %v2919
        %10196 = vmatprep.subr.mxu0 0.0
        %10197 = vmatpush2.msra.mxu0 %v2918
        %10198 = vmatprep.subr.mxu0 0.0
        %10199 = vmatpush2.msra.mxu0 %v2917
        %10200 = vmatprep.subr.mxu0 0.0
        %10201 = vmatpush2.msra.mxu0 %v2916
        %10202 = vmatprep.subr.mxu0 0.0
        %10203 = vmatpush2.msra.mxu0 %v2915
        %10204 = vmatprep.subr.mxu0 0.0
        %10205 = vmatpush2.msra.mxu0 %v2914
        %10206 = vmatprep.mubr.f32.mxu0 %v4106
        %10207 = vmatmul.mubr.f32.gmra.mxu0 %v4098
        %v10208 = vpop.f32.mrf.mxu0
        %v10209 = vadd.f32 %v10139, %v10208
        %v10210 = vpop.f32.mrf.mxu0
        %10211 = vdwg.mxu0
        %10212 = vmatprep.subr.mxu0 0.0
        %10213 = vmatpush1.msra.mxu0 %v2945
        %10214 = vmatprep.subr.mxu0 0.0
        %10215 = vmatpush1.msra.mxu0 %v2944
        %10216 = vmatprep.subr.mxu0 0.0
        %10217 = vmatpush1.msra.mxu0 %v2943
        %10218 = vmatprep.subr.mxu0 0.0
        %10219 = vmatpush1.msra.mxu0 %v2942
        %10220 = vmatprep.subr.mxu0 0.0
        %10221 = vmatpush1.msra.mxu0 %v2941
        %10222 = vmatprep.subr.mxu0 0.0
        %10223 = vmatpush1.msra.mxu0 %v2940
        %10224 = vmatprep.subr.mxu0 0.0
        %10225 = vmatpush1.msra.mxu0 %v2939
        %10226 = vmatprep.subr.mxu0 0.0
        %10227 = vmatpush1.msra.mxu0 %v2938
        %10228 = vmatprep.subr.mxu0 0.0
        %10229 = vmatpush1.msra.mxu0 %v2937
        %10230 = vmatprep.subr.mxu0 0.0
        %10231 = vmatpush1.msra.mxu0 %v2936
        %10232 = vmatprep.subr.mxu0 0.0
        %10233 = vmatpush1.msra.mxu0 %v2935
        %10234 = vmatprep.subr.mxu0 0.0
        %10235 = vmatpush1.msra.mxu0 %v2934
        %10236 = vmatprep.subr.mxu0 0.0
        %10237 = vmatpush1.msra.mxu0 %v2933
        %10238 = vmatprep.subr.mxu0 0.0
        %10239 = vmatpush1.msra.mxu0 %v2932
        %10240 = vmatprep.subr.mxu0 0.0
        %10241 = vmatpush1.msra.mxu0 %v2931
        %10242 = vmatprep.subr.mxu0 0.0
        %10243 = vmatpush1.msra.mxu0 %v2930
        %10244 = vmatprep.subr.mxu0 0.0
        %10245 = vmatpush2.msra.mxu0 %v2961
        %10246 = vmatprep.subr.mxu0 0.0
        %10247 = vmatpush2.msra.mxu0 %v2960
        %10248 = vmatprep.subr.mxu0 0.0
        %10249 = vmatpush2.msra.mxu0 %v2959
        %10250 = vmatprep.subr.mxu0 0.0
        %10251 = vmatpush2.msra.mxu0 %v2958
        %10252 = vmatprep.subr.mxu0 0.0
        %10253 = vmatpush2.msra.mxu0 %v2957
        %10254 = vmatprep.subr.mxu0 0.0
        %10255 = vmatpush2.msra.mxu0 %v2956
        %10256 = vmatprep.subr.mxu0 0.0
        %10257 = vmatpush2.msra.mxu0 %v2955
        %10258 = vmatprep.subr.mxu0 0.0
        %10259 = vmatpush2.msra.mxu0 %v2954
        %10260 = vmatprep.subr.mxu0 0.0
        %10261 = vmatpush2.msra.mxu0 %v2953
        %10262 = vmatprep.subr.mxu0 0.0
        %10263 = vmatpush2.msra.mxu0 %v2952
        %10264 = vmatprep.subr.mxu0 0.0
        %10265 = vmatpush2.msra.mxu0 %v2951
        %10266 = vmatprep.subr.mxu0 0.0
        %10267 = vmatpush2.msra.mxu0 %v2950
        %10268 = vmatprep.subr.mxu0 0.0
        %10269 = vmatpush2.msra.mxu0 %v2949
        %10270 = vmatprep.subr.mxu0 0.0
        %10271 = vmatpush2.msra.mxu0 %v2948
        %10272 = vmatprep.subr.mxu0 0.0
        %10273 = vmatpush2.msra.mxu0 %v2947
        %10274 = vmatprep.subr.mxu0 0.0
        %10275 = vmatpush2.msra.mxu0 %v2946
        %10276 = vmatprep.mubr.f32.mxu0 %v4107
        %10277 = vmatmul.mubr.f32.gmra.mxu0 %v4105
        %v10278 = vpop.f32.mrf.mxu0
        %v10279 = vadd.f32 %v10209, %v10278
        %v10280 = vpop.f32.mrf.mxu0
        %10281 = vdwg.mxu0
        %10282 = vmatprep.subr.mxu0 0.0
        %10283 = vmatpush1.msra.mxu0 %v2977
        %10284 = vmatprep.subr.mxu0 0.0
        %10285 = vmatpush1.msra.mxu0 %v2976
        %10286 = vmatprep.subr.mxu0 0.0
        %10287 = vmatpush1.msra.mxu0 %v2975
        %10288 = vmatprep.subr.mxu0 0.0
        %10289 = vmatpush1.msra.mxu0 %v2974
        %10290 = vmatprep.subr.mxu0 0.0
        %10291 = vmatpush1.msra.mxu0 %v2973
        %10292 = vmatprep.subr.mxu0 0.0
        %10293 = vmatpush1.msra.mxu0 %v2972
        %10294 = vmatprep.subr.mxu0 0.0
        %10295 = vmatpush1.msra.mxu0 %v2971
        %10296 = vmatprep.subr.mxu0 0.0
        %10297 = vmatpush1.msra.mxu0 %v2970
        %10298 = vmatprep.subr.mxu0 0.0
        %10299 = vmatpush1.msra.mxu0 %v2969
        %10300 = vmatprep.subr.mxu0 0.0
        %10301 = vmatpush1.msra.mxu0 %v2968
        %10302 = vmatprep.subr.mxu0 0.0
        %10303 = vmatpush1.msra.mxu0 %v2967
        %10304 = vmatprep.subr.mxu0 0.0
        %10305 = vmatpush1.msra.mxu0 %v2966
        %10306 = vmatprep.subr.mxu0 0.0
        %10307 = vmatpush1.msra.mxu0 %v2965
        %10308 = vmatprep.subr.mxu0 0.0
        %10309 = vmatpush1.msra.mxu0 %v2964
        %10310 = vmatprep.subr.mxu0 0.0
        %10311 = vmatpush1.msra.mxu0 %v2963
        %10312 = vmatprep.subr.mxu0 0.0
        %10313 = vmatpush1.msra.mxu0 %v2962
        %10314 = vmatprep.subr.mxu0 0.0
        %10315 = vmatpush2.msra.mxu0 %v2993
        %10316 = vmatprep.subr.mxu0 0.0
        %10317 = vmatpush2.msra.mxu0 %v2992
        %10318 = vmatprep.subr.mxu0 0.0
        %10319 = vmatpush2.msra.mxu0 %v2991
        %10320 = vmatprep.subr.mxu0 0.0
        %10321 = vmatpush2.msra.mxu0 %v2990
        %10322 = vmatprep.subr.mxu0 0.0
        %10323 = vmatpush2.msra.mxu0 %v2989
        %10324 = vmatprep.subr.mxu0 0.0
        %10325 = vmatpush2.msra.mxu0 %v2988
        %10326 = vmatprep.subr.mxu0 0.0
        %10327 = vmatpush2.msra.mxu0 %v2987
        %10328 = vmatprep.subr.mxu0 0.0
        %10329 = vmatpush2.msra.mxu0 %v2986
        %10330 = vmatprep.subr.mxu0 0.0
        %10331 = vmatpush2.msra.mxu0 %v2985
        %10332 = vmatprep.subr.mxu0 0.0
        %10333 = vmatpush2.msra.mxu0 %v2984
        %10334 = vmatprep.subr.mxu0 0.0
        %10335 = vmatpush2.msra.mxu0 %v2983
        %10336 = vmatprep.subr.mxu0 0.0
        %10337 = vmatpush2.msra.mxu0 %v2982
        %10338 = vmatprep.subr.mxu0 0.0
        %10339 = vmatpush2.msra.mxu0 %v2981
        %10340 = vmatprep.subr.mxu0 0.0
        %10341 = vmatpush2.msra.mxu0 %v2980
        %10342 = vmatprep.subr.mxu0 0.0
        %10343 = vmatpush2.msra.mxu0 %v2979
        %10344 = vmatprep.subr.mxu0 0.0
        %10345 = vmatpush2.msra.mxu0 %v2978
        %10346 = vmatprep.mubr.f32.mxu0 %v4123
        %10347 = vmatmul.mubr.f32.gmra.mxu0 %v4115
        %v10348 = vpop.f32.mrf.mxu0
        %v10349 = vadd.f32 %v10279, %v10348
        %v10350 = vpop.f32.mrf.mxu0
        %10351 = vdwg.mxu0
        %10352 = vmatprep.subr.mxu0 0.0
        %10353 = vmatpush1.msra.mxu0 %v3009
        %10354 = vmatprep.subr.mxu0 0.0
        %10355 = vmatpush1.msra.mxu0 %v3008
        %10356 = vmatprep.subr.mxu0 0.0
        %10357 = vmatpush1.msra.mxu0 %v3007
        %10358 = vmatprep.subr.mxu0 0.0
        %10359 = vmatpush1.msra.mxu0 %v3006
        %10360 = vmatprep.subr.mxu0 0.0
        %10361 = vmatpush1.msra.mxu0 %v3005
        %10362 = vmatprep.subr.mxu0 0.0
        %10363 = vmatpush1.msra.mxu0 %v3004
        %10364 = vmatprep.subr.mxu0 0.0
        %10365 = vmatpush1.msra.mxu0 %v3003
        %10366 = vmatprep.subr.mxu0 0.0
        %10367 = vmatpush1.msra.mxu0 %v3002
        %10368 = vmatprep.subr.mxu0 0.0
        %10369 = vmatpush1.msra.mxu0 %v3001
        %10370 = vmatprep.subr.mxu0 0.0
        %10371 = vmatpush1.msra.mxu0 %v3000
        %10372 = vmatprep.subr.mxu0 0.0
        %10373 = vmatpush1.msra.mxu0 %v2999
        %10374 = vmatprep.subr.mxu0 0.0
        %10375 = vmatpush1.msra.mxu0 %v2998
        %10376 = vmatprep.subr.mxu0 0.0
        %10377 = vmatpush1.msra.mxu0 %v2997
        %10378 = vmatprep.subr.mxu0 0.0
        %10379 = vmatpush1.msra.mxu0 %v2996
        %10380 = vmatprep.subr.mxu0 0.0
        %10381 = vmatpush1.msra.mxu0 %v2995
        %10382 = vmatprep.subr.mxu0 0.0
        %10383 = vmatpush1.msra.mxu0 %v2994
        %10384 = vmatprep.subr.mxu0 0.0
        %10385 = vmatpush2.msra.mxu0 %v3025
        %10386 = vmatprep.subr.mxu0 0.0
        %10387 = vmatpush2.msra.mxu0 %v3024
        %10388 = vmatprep.subr.mxu0 0.0
        %10389 = vmatpush2.msra.mxu0 %v3023
        %10390 = vmatprep.subr.mxu0 0.0
        %10391 = vmatpush2.msra.mxu0 %v3022
        %10392 = vmatprep.subr.mxu0 0.0
        %10393 = vmatpush2.msra.mxu0 %v3021
        %10394 = vmatprep.subr.mxu0 0.0
        %10395 = vmatpush2.msra.mxu0 %v3020
        %10396 = vmatprep.subr.mxu0 0.0
        %10397 = vmatpush2.msra.mxu0 %v3019
        %10398 = vmatprep.subr.mxu0 0.0
        %10399 = vmatpush2.msra.mxu0 %v3018
        %10400 = vmatprep.subr.mxu0 0.0
        %10401 = vmatpush2.msra.mxu0 %v3017
        %10402 = vmatprep.subr.mxu0 0.0
        %10403 = vmatpush2.msra.mxu0 %v3016
        %10404 = vmatprep.subr.mxu0 0.0
        %10405 = vmatpush2.msra.mxu0 %v3015
        %10406 = vmatprep.subr.mxu0 0.0
        %10407 = vmatpush2.msra.mxu0 %v3014
        %10408 = vmatprep.subr.mxu0 0.0
        %10409 = vmatpush2.msra.mxu0 %v3013
        %10410 = vmatprep.subr.mxu0 0.0
        %10411 = vmatpush2.msra.mxu0 %v3012
        %10412 = vmatprep.subr.mxu0 0.0
        %10413 = vmatpush2.msra.mxu0 %v3011
        %10414 = vmatprep.subr.mxu0 0.0
        %10415 = vmatpush2.msra.mxu0 %v3010
        %10416 = vmatprep.mubr.f32.mxu0 %v4124
        %10417 = vmatmul.mubr.f32.gmra.mxu0 %v4122
        %v10418 = vpop.f32.mrf.mxu0
        %v10419 = vadd.f32 %v10349, %v10418
        %v10420 = vpop.f32.mrf.mxu0
        %10421 = vdwg.mxu0
        %10422 = vmatprep.subr.mxu0 0.0
        %10423 = vmatpush1.msra.mxu0 %v3041
        %10424 = vmatprep.subr.mxu0 0.0
        %10425 = vmatpush1.msra.mxu0 %v3040
        %10426 = vmatprep.subr.mxu0 0.0
        %10427 = vmatpush1.msra.mxu0 %v3039
        %10428 = vmatprep.subr.mxu0 0.0
        %10429 = vmatpush1.msra.mxu0 %v3038
        %10430 = vmatprep.subr.mxu0 0.0
        %10431 = vmatpush1.msra.mxu0 %v3037
        %10432 = vmatprep.subr.mxu0 0.0
        %10433 = vmatpush1.msra.mxu0 %v3036
        %10434 = vmatprep.subr.mxu0 0.0
        %10435 = vmatpush1.msra.mxu0 %v3035
        %10436 = vmatprep.subr.mxu0 0.0
        %10437 = vmatpush1.msra.mxu0 %v3034
        %10438 = vmatprep.subr.mxu0 0.0
        %10439 = vmatpush1.msra.mxu0 %v3033
        %10440 = vmatprep.subr.mxu0 0.0
        %10441 = vmatpush1.msra.mxu0 %v3032
        %10442 = vmatprep.subr.mxu0 0.0
        %10443 = vmatpush1.msra.mxu0 %v3031
        %10444 = vmatprep.subr.mxu0 0.0
        %10445 = vmatpush1.msra.mxu0 %v3030
        %10446 = vmatprep.subr.mxu0 0.0
        %10447 = vmatpush1.msra.mxu0 %v3029
        %10448 = vmatprep.subr.mxu0 0.0
        %10449 = vmatpush1.msra.mxu0 %v3028
        %10450 = vmatprep.subr.mxu0 0.0
        %10451 = vmatpush1.msra.mxu0 %v3027
        %10452 = vmatprep.subr.mxu0 0.0
        %10453 = vmatpush1.msra.mxu0 %v3026
        %10454 = vmatprep.subr.mxu0 0.0
        %10455 = vmatpush2.msra.mxu0 %v3057
        %10456 = vmatprep.subr.mxu0 0.0
        %10457 = vmatpush2.msra.mxu0 %v3056
        %10458 = vmatprep.subr.mxu0 0.0
        %10459 = vmatpush2.msra.mxu0 %v3055
        %10460 = vmatprep.subr.mxu0 0.0
        %10461 = vmatpush2.msra.mxu0 %v3054
        %10462 = vmatprep.subr.mxu0 0.0
        %10463 = vmatpush2.msra.mxu0 %v3053
        %10464 = vmatprep.subr.mxu0 0.0
        %10465 = vmatpush2.msra.mxu0 %v3052
        %10466 = vmatprep.subr.mxu0 0.0
        %10467 = vmatpush2.msra.mxu0 %v3051
        %10468 = vmatprep.subr.mxu0 0.0
        %10469 = vmatpush2.msra.mxu0 %v3050
        %10470 = vmatprep.subr.mxu0 0.0
        %10471 = vmatpush2.msra.mxu0 %v3049
        %10472 = vmatprep.subr.mxu0 0.0
        %10473 = vmatpush2.msra.mxu0 %v3048
        %10474 = vmatprep.subr.mxu0 0.0
        %10475 = vmatpush2.msra.mxu0 %v3047
        %10476 = vmatprep.subr.mxu0 0.0
        %10477 = vmatpush2.msra.mxu0 %v3046
        %10478 = vmatprep.subr.mxu0 0.0
        %10479 = vmatpush2.msra.mxu0 %v3045
        %10480 = vmatprep.subr.mxu0 0.0
        %10481 = vmatpush2.msra.mxu0 %v3044
        %10482 = vmatprep.subr.mxu0 0.0
        %10483 = vmatpush2.msra.mxu0 %v3043
        %10484 = vmatprep.subr.mxu0 0.0
        %10485 = vmatpush2.msra.mxu0 %v3042
        %10486 = vmatprep.mubr.f32.mxu0 %v4140
        %10487 = vmatmul.mubr.f32.gmra.mxu0 %v4132
        %v10488 = vpop.f32.mrf.mxu0
        %v10489 = vadd.f32 %v10419, %v10488
        %v10490 = vpop.f32.mrf.mxu0
        %10491 = vdwg.mxu0
        %10492 = vmatprep.subr.mxu0 0.0
        %10493 = vmatpush1.msra.mxu0 %v3073
        %10494 = vmatprep.subr.mxu0 0.0
        %10495 = vmatpush1.msra.mxu0 %v3072
        %10496 = vmatprep.subr.mxu0 0.0
        %10497 = vmatpush1.msra.mxu0 %v3071
        %10498 = vmatprep.subr.mxu0 0.0
        %10499 = vmatpush1.msra.mxu0 %v3070
        %10500 = vmatprep.subr.mxu0 0.0
        %10501 = vmatpush1.msra.mxu0 %v3069
        %10502 = vmatprep.subr.mxu0 0.0
        %10503 = vmatpush1.msra.mxu0 %v3068
        %10504 = vmatprep.subr.mxu0 0.0
        %10505 = vmatpush1.msra.mxu0 %v3067
        %10506 = vmatprep.subr.mxu0 0.0
        %10507 = vmatpush1.msra.mxu0 %v3066
        %10508 = vmatprep.subr.mxu0 0.0
        %10509 = vmatpush1.msra.mxu0 %v3065
        %10510 = vmatprep.subr.mxu0 0.0
        %10511 = vmatpush1.msra.mxu0 %v3064
        %10512 = vmatprep.subr.mxu0 0.0
        %10513 = vmatpush1.msra.mxu0 %v3063
        %10514 = vmatprep.subr.mxu0 0.0
        %10515 = vmatpush1.msra.mxu0 %v3062
        %10516 = vmatprep.subr.mxu0 0.0
        %10517 = vmatpush1.msra.mxu0 %v3061
        %10518 = vmatprep.subr.mxu0 0.0
        %10519 = vmatpush1.msra.mxu0 %v3060
        %10520 = vmatprep.subr.mxu0 0.0
        %10521 = vmatpush1.msra.mxu0 %v3059
        %10522 = vmatprep.subr.mxu0 0.0
        %10523 = vmatpush1.msra.mxu0 %v3058
        %10524 = vmatprep.subr.mxu0 0.0
        %10525 = vmatpush2.msra.mxu0 %v3089
        %10526 = vmatprep.subr.mxu0 0.0
        %10527 = vmatpush2.msra.mxu0 %v3088
        %10528 = vmatprep.subr.mxu0 0.0
        %10529 = vmatpush2.msra.mxu0 %v3087
        %10530 = vmatprep.subr.mxu0 0.0
        %10531 = vmatpush2.msra.mxu0 %v3086
        %10532 = vmatprep.subr.mxu0 0.0
        %10533 = vmatpush2.msra.mxu0 %v3085
        %10534 = vmatprep.subr.mxu0 0.0
        %10535 = vmatpush2.msra.mxu0 %v3084
        %10536 = vmatprep.subr.mxu0 0.0
        %10537 = vmatpush2.msra.mxu0 %v3083
        %10538 = vmatprep.subr.mxu0 0.0
        %10539 = vmatpush2.msra.mxu0 %v3082
        %10540 = vmatprep.subr.mxu0 0.0
        %10541 = vmatpush2.msra.mxu0 %v3081
        %10542 = vmatprep.subr.mxu0 0.0
        %10543 = vmatpush2.msra.mxu0 %v3080
        %10544 = vmatprep.subr.mxu0 0.0
        %10545 = vmatpush2.msra.mxu0 %v3079
        %10546 = vmatprep.subr.mxu0 0.0
        %10547 = vmatpush2.msra.mxu0 %v3078
        %10548 = vmatprep.subr.mxu0 0.0
        %10549 = vmatpush2.msra.mxu0 %v3077
        %10550 = vmatprep.subr.mxu0 0.0
        %10551 = vmatpush2.msra.mxu0 %v3076
        %10552 = vmatprep.subr.mxu0 0.0
        %10553 = vmatpush2.msra.mxu0 %v3075
        %10554 = vmatprep.subr.mxu0 0.0
        %10555 = vmatpush2.msra.mxu0 %v3074
        %10556 = vmatprep.mubr.f32.mxu0 %v4141
        %10557 = vmatmul.mubr.f32.gmra.mxu0 %v4139
        %v10558 = vpop.f32.mrf.mxu0
        %v10559 = vadd.f32 %v10489, %v10558
        %v10560 = vpop.f32.mrf.mxu0
        %10561 = vdwg.mxu0
        %10562 = vmatprep.subr.mxu0 0.0
        %10563 = vmatpush1.msra.mxu0 %v3105
        %10564 = vmatprep.subr.mxu0 0.0
        %10565 = vmatpush1.msra.mxu0 %v3104
        %10566 = vmatprep.subr.mxu0 0.0
        %10567 = vmatpush1.msra.mxu0 %v3103
        %10568 = vmatprep.subr.mxu0 0.0
        %10569 = vmatpush1.msra.mxu0 %v3102
        %10570 = vmatprep.subr.mxu0 0.0
        %10571 = vmatpush1.msra.mxu0 %v3101
        %10572 = vmatprep.subr.mxu0 0.0
        %10573 = vmatpush1.msra.mxu0 %v3100
        %10574 = vmatprep.subr.mxu0 0.0
        %10575 = vmatpush1.msra.mxu0 %v3099
        %10576 = vmatprep.subr.mxu0 0.0
        %10577 = vmatpush1.msra.mxu0 %v3098
        %10578 = vmatprep.subr.mxu0 0.0
        %10579 = vmatpush1.msra.mxu0 %v3097
        %10580 = vmatprep.subr.mxu0 0.0
        %10581 = vmatpush1.msra.mxu0 %v3096
        %10582 = vmatprep.subr.mxu0 0.0
        %10583 = vmatpush1.msra.mxu0 %v3095
        %10584 = vmatprep.subr.mxu0 0.0
        %10585 = vmatpush1.msra.mxu0 %v3094
        %10586 = vmatprep.subr.mxu0 0.0
        %10587 = vmatpush1.msra.mxu0 %v3093
        %10588 = vmatprep.subr.mxu0 0.0
        %10589 = vmatpush1.msra.mxu0 %v3092
        %10590 = vmatprep.subr.mxu0 0.0
        %10591 = vmatpush1.msra.mxu0 %v3091
        %10592 = vmatprep.subr.mxu0 0.0
        %10593 = vmatpush1.msra.mxu0 %v3090
        %10594 = vmatprep.subr.mxu0 0.0
        %10595 = vmatpush2.msra.mxu0 %v3121
        %10596 = vmatprep.subr.mxu0 0.0
        %10597 = vmatpush2.msra.mxu0 %v3120
        %10598 = vmatprep.subr.mxu0 0.0
        %10599 = vmatpush2.msra.mxu0 %v3119
        %10600 = vmatprep.subr.mxu0 0.0
        %10601 = vmatpush2.msra.mxu0 %v3118
        %10602 = vmatprep.subr.mxu0 0.0
        %10603 = vmatpush2.msra.mxu0 %v3117
        %10604 = vmatprep.subr.mxu0 0.0
        %10605 = vmatpush2.msra.mxu0 %v3116
        %10606 = vmatprep.subr.mxu0 0.0
        %10607 = vmatpush2.msra.mxu0 %v3115
        %10608 = vmatprep.subr.mxu0 0.0
        %10609 = vmatpush2.msra.mxu0 %v3114
        %10610 = vmatprep.subr.mxu0 0.0
        %10611 = vmatpush2.msra.mxu0 %v3113
        %10612 = vmatprep.subr.mxu0 0.0
        %10613 = vmatpush2.msra.mxu0 %v3112
        %10614 = vmatprep.subr.mxu0 0.0
        %10615 = vmatpush2.msra.mxu0 %v3111
        %10616 = vmatprep.subr.mxu0 0.0
        %10617 = vmatpush2.msra.mxu0 %v3110
        %10618 = vmatprep.subr.mxu0 0.0
        %10619 = vmatpush2.msra.mxu0 %v3109
        %10620 = vmatprep.subr.mxu0 0.0
        %10621 = vmatpush2.msra.mxu0 %v3108
        %10622 = vmatprep.subr.mxu0 0.0
        %10623 = vmatpush2.msra.mxu0 %v3107
        %10624 = vmatprep.subr.mxu0 0.0
        %10625 = vmatpush2.msra.mxu0 %v3106
        %10626 = vmatprep.mubr.f32.mxu0 %v4157
        %10627 = vmatmul.mubr.f32.gmra.mxu0 %v4149
        %v10628 = vpop.f32.mrf.mxu0
        %v10629 = vadd.f32 %v10559, %v10628
        %v10630 = vpop.f32.mrf.mxu0
        %10631 = vdwg.mxu0
        %10632 = vmatprep.subr.mxu0 0.0
        %10633 = vmatpush1.msra.mxu0 %v3137
        %10634 = vmatprep.subr.mxu0 0.0
        %10635 = vmatpush1.msra.mxu0 %v3136
        %10636 = vmatprep.subr.mxu0 0.0
        %10637 = vmatpush1.msra.mxu0 %v3135
        %10638 = vmatprep.subr.mxu0 0.0
        %10639 = vmatpush1.msra.mxu0 %v3134
        %10640 = vmatprep.subr.mxu0 0.0
        %10641 = vmatpush1.msra.mxu0 %v3133
        %10642 = vmatprep.subr.mxu0 0.0
        %10643 = vmatpush1.msra.mxu0 %v3132
        %10644 = vmatprep.subr.mxu0 0.0
        %10645 = vmatpush1.msra.mxu0 %v3131
        %10646 = vmatprep.subr.mxu0 0.0
        %10647 = vmatpush1.msra.mxu0 %v3130
        %10648 = vmatprep.subr.mxu0 0.0
        %10649 = vmatpush1.msra.mxu0 %v3129
        %10650 = vmatprep.subr.mxu0 0.0
        %10651 = vmatpush1.msra.mxu0 %v3128
        %10652 = vmatprep.subr.mxu0 0.0
        %10653 = vmatpush1.msra.mxu0 %v3127
        %10654 = vmatprep.subr.mxu0 0.0
        %10655 = vmatpush1.msra.mxu0 %v3126
        %10656 = vmatprep.subr.mxu0 0.0
        %10657 = vmatpush1.msra.mxu0 %v3125
        %10658 = vmatprep.subr.mxu0 0.0
        %10659 = vmatpush1.msra.mxu0 %v3124
        %10660 = vmatprep.subr.mxu0 0.0
        %10661 = vmatpush1.msra.mxu0 %v3123
        %10662 = vmatprep.subr.mxu0 0.0
        %10663 = vmatpush1.msra.mxu0 %v3122
        %10664 = vmatprep.subr.mxu0 0.0
        %10665 = vmatpush2.msra.mxu0 %v3153
        %10666 = vmatprep.subr.mxu0 0.0
        %10667 = vmatpush2.msra.mxu0 %v3152
        %10668 = vmatprep.subr.mxu0 0.0
        %10669 = vmatpush2.msra.mxu0 %v3151
        %10670 = vmatprep.subr.mxu0 0.0
        %10671 = vmatpush2.msra.mxu0 %v3150
        %10672 = vmatprep.subr.mxu0 0.0
        %10673 = vmatpush2.msra.mxu0 %v3149
        %10674 = vmatprep.subr.mxu0 0.0
        %10675 = vmatpush2.msra.mxu0 %v3148
        %10676 = vmatprep.subr.mxu0 0.0
        %10677 = vmatpush2.msra.mxu0 %v3147
        %10678 = vmatprep.subr.mxu0 0.0
        %10679 = vmatpush2.msra.mxu0 %v3146
        %10680 = vmatprep.subr.mxu0 0.0
        %10681 = vmatpush2.msra.mxu0 %v3145
        %10682 = vmatprep.subr.mxu0 0.0
        %10683 = vmatpush2.msra.mxu0 %v3144
        %10684 = vmatprep.subr.mxu0 0.0
        %10685 = vmatpush2.msra.mxu0 %v3143
        %10686 = vmatprep.subr.mxu0 0.0
        %10687 = vmatpush2.msra.mxu0 %v3142
        %10688 = vmatprep.subr.mxu0 0.0
        %10689 = vmatpush2.msra.mxu0 %v3141
        %10690 = vmatprep.subr.mxu0 0.0
        %10691 = vmatpush2.msra.mxu0 %v3140
        %10692 = vmatprep.subr.mxu0 0.0
        %10693 = vmatpush2.msra.mxu0 %v3139
        %10694 = vmatprep.subr.mxu0 0.0
        %10695 = vmatpush2.msra.mxu0 %v3138
        %10696 = vmatprep.mubr.f32.mxu0 %v4158
        %10697 = vmatmul.mubr.f32.gmra.mxu0 %v4156
        %v10698 = vpop.f32.mrf.mxu0
        %v10699 = vadd.f32 %v10629, %v10698
        %v10700 = vpop.f32.mrf.mxu0
        %10701 = vdwg.mxu0
        %10702 = vmatprep.subr.mxu0 0.0
        %10703 = vmatpush1.msra.mxu0 %v3169
        %10704 = vmatprep.subr.mxu0 0.0
        %10705 = vmatpush1.msra.mxu0 %v3168
        %10706 = vmatprep.subr.mxu0 0.0
        %10707 = vmatpush1.msra.mxu0 %v3167
        %10708 = vmatprep.subr.mxu0 0.0
        %10709 = vmatpush1.msra.mxu0 %v3166
        %10710 = vmatprep.subr.mxu0 0.0
        %10711 = vmatpush1.msra.mxu0 %v3165
        %10712 = vmatprep.subr.mxu0 0.0
        %10713 = vmatpush1.msra.mxu0 %v3164
        %10714 = vmatprep.subr.mxu0 0.0
        %10715 = vmatpush1.msra.mxu0 %v3163
        %10716 = vmatprep.subr.mxu0 0.0
        %10717 = vmatpush1.msra.mxu0 %v3162
        %10718 = vmatprep.subr.mxu0 0.0
        %10719 = vmatpush1.msra.mxu0 %v3161
        %10720 = vmatprep.subr.mxu0 0.0
        %10721 = vmatpush1.msra.mxu0 %v3160
        %10722 = vmatprep.subr.mxu0 0.0
        %10723 = vmatpush1.msra.mxu0 %v3159
        %10724 = vmatprep.subr.mxu0 0.0
        %10725 = vmatpush1.msra.mxu0 %v3158
        %10726 = vmatprep.subr.mxu0 0.0
        %10727 = vmatpush1.msra.mxu0 %v3157
        %10728 = vmatprep.subr.mxu0 0.0
        %10729 = vmatpush1.msra.mxu0 %v3156
        %10730 = vmatprep.subr.mxu0 0.0
        %10731 = vmatpush1.msra.mxu0 %v3155
        %10732 = vmatprep.subr.mxu0 0.0
        %10733 = vmatpush1.msra.mxu0 %v3154
        %10734 = vmatprep.subr.mxu0 0.0
        %10735 = vmatpush2.msra.mxu0 %v3185
        %10736 = vmatprep.subr.mxu0 0.0
        %10737 = vmatpush2.msra.mxu0 %v3184
        %10738 = vmatprep.subr.mxu0 0.0
        %10739 = vmatpush2.msra.mxu0 %v3183
        %10740 = vmatprep.subr.mxu0 0.0
        %10741 = vmatpush2.msra.mxu0 %v3182
        %10742 = vmatprep.subr.mxu0 0.0
        %10743 = vmatpush2.msra.mxu0 %v3181
        %10744 = vmatprep.subr.mxu0 0.0
        %10745 = vmatpush2.msra.mxu0 %v3180
        %10746 = vmatprep.subr.mxu0 0.0
        %10747 = vmatpush2.msra.mxu0 %v3179
        %10748 = vmatprep.subr.mxu0 0.0
        %10749 = vmatpush2.msra.mxu0 %v3178
        %10750 = vmatprep.subr.mxu0 0.0
        %10751 = vmatpush2.msra.mxu0 %v3177
        %10752 = vmatprep.subr.mxu0 0.0
        %10753 = vmatpush2.msra.mxu0 %v3176
        %10754 = vmatprep.subr.mxu0 0.0
        %10755 = vmatpush2.msra.mxu0 %v3175
        %10756 = vmatprep.subr.mxu0 0.0
        %10757 = vmatpush2.msra.mxu0 %v3174
        %10758 = vmatprep.subr.mxu0 0.0
        %10759 = vmatpush2.msra.mxu0 %v3173
        %10760 = vmatprep.subr.mxu0 0.0
        %10761 = vmatpush2.msra.mxu0 %v3172
        %10762 = vmatprep.subr.mxu0 0.0
        %10763 = vmatpush2.msra.mxu0 %v3171
        %10764 = vmatprep.subr.mxu0 0.0
        %10765 = vmatpush2.msra.mxu0 %v3170
        %10766 = vmatprep.mubr.f32.mxu0 %v4174
        %10767 = vmatmul.mubr.f32.gmra.mxu0 %v4166
        %v10768 = vpop.f32.mrf.mxu0
        %v10769 = vadd.f32 %v10699, %v10768
        %v10770 = vpop.f32.mrf.mxu0
        %10771 = vdwg.mxu0
        %10772 = vmatprep.subr.mxu0 0.0
        %10773 = vmatpush1.msra.mxu0 %v3201
        %10774 = vmatprep.subr.mxu0 0.0
        %10775 = vmatpush1.msra.mxu0 %v3200
        %10776 = vmatprep.subr.mxu0 0.0
        %10777 = vmatpush1.msra.mxu0 %v3199
        %10778 = vmatprep.subr.mxu0 0.0
        %10779 = vmatpush1.msra.mxu0 %v3198
        %10780 = vmatprep.subr.mxu0 0.0
        %10781 = vmatpush1.msra.mxu0 %v3197
        %10782 = vmatprep.subr.mxu0 0.0
        %10783 = vmatpush1.msra.mxu0 %v3196
        %10784 = vmatprep.subr.mxu0 0.0
        %10785 = vmatpush1.msra.mxu0 %v3195
        %10786 = vmatprep.subr.mxu0 0.0
        %10787 = vmatpush1.msra.mxu0 %v3194
        %10788 = vmatprep.subr.mxu0 0.0
        %10789 = vmatpush1.msra.mxu0 %v3193
        %10790 = vmatprep.subr.mxu0 0.0
        %10791 = vmatpush1.msra.mxu0 %v3192
        %10792 = vmatprep.subr.mxu0 0.0
        %10793 = vmatpush1.msra.mxu0 %v3191
        %10794 = vmatprep.subr.mxu0 0.0
        %10795 = vmatpush1.msra.mxu0 %v3190
        %10796 = vmatprep.subr.mxu0 0.0
        %10797 = vmatpush1.msra.mxu0 %v3189
        %10798 = vmatprep.subr.mxu0 0.0
        %10799 = vmatpush1.msra.mxu0 %v3188
        %10800 = vmatprep.subr.mxu0 0.0
        %10801 = vmatpush1.msra.mxu0 %v3187
        %10802 = vmatprep.subr.mxu0 0.0
        %10803 = vmatpush1.msra.mxu0 %v3186
        %10804 = vmatprep.subr.mxu0 0.0
        %10805 = vmatpush2.msra.mxu0 %v3217
        %10806 = vmatprep.subr.mxu0 0.0
        %10807 = vmatpush2.msra.mxu0 %v3216
        %10808 = vmatprep.subr.mxu0 0.0
        %10809 = vmatpush2.msra.mxu0 %v3215
        %10810 = vmatprep.subr.mxu0 0.0
        %10811 = vmatpush2.msra.mxu0 %v3214
        %10812 = vmatprep.subr.mxu0 0.0
        %10813 = vmatpush2.msra.mxu0 %v3213
        %10814 = vmatprep.subr.mxu0 0.0
        %10815 = vmatpush2.msra.mxu0 %v3212
        %10816 = vmatprep.subr.mxu0 0.0
        %10817 = vmatpush2.msra.mxu0 %v3211
        %10818 = vmatprep.subr.mxu0 0.0
        %10819 = vmatpush2.msra.mxu0 %v3210
        %10820 = vmatprep.subr.mxu0 0.0
        %10821 = vmatpush2.msra.mxu0 %v3209
        %10822 = vmatprep.subr.mxu0 0.0
        %10823 = vmatpush2.msra.mxu0 %v3208
        %10824 = vmatprep.subr.mxu0 0.0
        %10825 = vmatpush2.msra.mxu0 %v3207
        %10826 = vmatprep.subr.mxu0 0.0
        %10827 = vmatpush2.msra.mxu0 %v3206
        %10828 = vmatprep.subr.mxu0 0.0
        %10829 = vmatpush2.msra.mxu0 %v3205
        %10830 = vmatprep.subr.mxu0 0.0
        %10831 = vmatpush2.msra.mxu0 %v3204
        %10832 = vmatprep.subr.mxu0 0.0
        %10833 = vmatpush2.msra.mxu0 %v3203
        %10834 = vmatprep.subr.mxu0 0.0
        %10835 = vmatpush2.msra.mxu0 %v3202
        %10836 = vmatprep.mubr.f32.mxu0 %v4175
        %10837 = vmatmul.mubr.f32.gmra.mxu0 %v4173
        %v10838 = vpop.f32.mrf.mxu0
        %v10839 = vadd.f32 %v10769, %v10838
        %v10840 = vpop.f32.mrf.mxu0
        %10841 = vdwg.mxu0
        %10842 = vmatprep.subr.mxu0 0.0
        %10843 = vmatpush1.msra.mxu0 %v3233
        %10844 = vmatprep.subr.mxu0 0.0
        %10845 = vmatpush1.msra.mxu0 %v3232
        %10846 = vmatprep.subr.mxu0 0.0
        %10847 = vmatpush1.msra.mxu0 %v3231
        %10848 = vmatprep.subr.mxu0 0.0
        %10849 = vmatpush1.msra.mxu0 %v3230
        %10850 = vmatprep.subr.mxu0 0.0
        %10851 = vmatpush1.msra.mxu0 %v3229
        %10852 = vmatprep.subr.mxu0 0.0
        %10853 = vmatpush1.msra.mxu0 %v3228
        %10854 = vmatprep.subr.mxu0 0.0
        %10855 = vmatpush1.msra.mxu0 %v3227
        %10856 = vmatprep.subr.mxu0 0.0
        %10857 = vmatpush1.msra.mxu0 %v3226
        %10858 = vmatprep.subr.mxu0 0.0
        %10859 = vmatpush1.msra.mxu0 %v3225
        %10860 = vmatprep.subr.mxu0 0.0
        %10861 = vmatpush1.msra.mxu0 %v3224
        %10862 = vmatprep.subr.mxu0 0.0
        %10863 = vmatpush1.msra.mxu0 %v3223
        %10864 = vmatprep.subr.mxu0 0.0
        %10865 = vmatpush1.msra.mxu0 %v3222
        %10866 = vmatprep.subr.mxu0 0.0
        %10867 = vmatpush1.msra.mxu0 %v3221
        %10868 = vmatprep.subr.mxu0 0.0
        %10869 = vmatpush1.msra.mxu0 %v3220
        %10870 = vmatprep.subr.mxu0 0.0
        %10871 = vmatpush1.msra.mxu0 %v3219
        %10872 = vmatprep.subr.mxu0 0.0
        %10873 = vmatpush1.msra.mxu0 %v3218
        %10874 = vmatprep.subr.mxu0 0.0
        %10875 = vmatpush2.msra.mxu0 %v3249
        %10876 = vmatprep.subr.mxu0 0.0
        %10877 = vmatpush2.msra.mxu0 %v3248
        %10878 = vmatprep.subr.mxu0 0.0
        %10879 = vmatpush2.msra.mxu0 %v3247
        %10880 = vmatprep.subr.mxu0 0.0
        %10881 = vmatpush2.msra.mxu0 %v3246
        %10882 = vmatprep.subr.mxu0 0.0
        %10883 = vmatpush2.msra.mxu0 %v3245
        %10884 = vmatprep.subr.mxu0 0.0
        %10885 = vmatpush2.msra.mxu0 %v3244
        %10886 = vmatprep.subr.mxu0 0.0
        %10887 = vmatpush2.msra.mxu0 %v3243
        %10888 = vmatprep.subr.mxu0 0.0
        %10889 = vmatpush2.msra.mxu0 %v3242
        %10890 = vmatprep.subr.mxu0 0.0
        %10891 = vmatpush2.msra.mxu0 %v3241
        %10892 = vmatprep.subr.mxu0 0.0
        %10893 = vmatpush2.msra.mxu0 %v3240
        %10894 = vmatprep.subr.mxu0 0.0
        %10895 = vmatpush2.msra.mxu0 %v3239
        %10896 = vmatprep.subr.mxu0 0.0
        %10897 = vmatpush2.msra.mxu0 %v3238
        %10898 = vmatprep.subr.mxu0 0.0
        %10899 = vmatpush2.msra.mxu0 %v3237
        %10900 = vmatprep.subr.mxu0 0.0
        %10901 = vmatpush2.msra.mxu0 %v3236
        %10902 = vmatprep.subr.mxu0 0.0
        %10903 = vmatpush2.msra.mxu0 %v3235
        %10904 = vmatprep.subr.mxu0 0.0
        %10905 = vmatpush2.msra.mxu0 %v3234
        %10906 = vmatprep.mubr.f32.mxu0 %v4191
        %10907 = vmatmul.mubr.f32.gmra.mxu0 %v4183
        %v10908 = vpop.f32.mrf.mxu0
        %v10909 = vadd.f32 %v10839, %v10908
        %v10910 = vpop.f32.mrf.mxu0
        %10911 = vdwg.mxu0
        %10912 = vmatprep.subr.mxu0 0.0
        %10913 = vmatpush1.msra.mxu0 %v3265
        %10914 = vmatprep.subr.mxu0 0.0
        %10915 = vmatpush1.msra.mxu0 %v3264
        %10916 = vmatprep.subr.mxu0 0.0
        %10917 = vmatpush1.msra.mxu0 %v3263
        %10918 = vmatprep.subr.mxu0 0.0
        %10919 = vmatpush1.msra.mxu0 %v3262
        %10920 = vmatprep.subr.mxu0 0.0
        %10921 = vmatpush1.msra.mxu0 %v3261
        %10922 = vmatprep.subr.mxu0 0.0
        %10923 = vmatpush1.msra.mxu0 %v3260
        %10924 = vmatprep.subr.mxu0 0.0
        %10925 = vmatpush1.msra.mxu0 %v3259
        %10926 = vmatprep.subr.mxu0 0.0
        %10927 = vmatpush1.msra.mxu0 %v3258
        %10928 = vmatprep.subr.mxu0 0.0
        %10929 = vmatpush1.msra.mxu0 %v3257
        %10930 = vmatprep.subr.mxu0 0.0
        %10931 = vmatpush1.msra.mxu0 %v3256
        %10932 = vmatprep.subr.mxu0 0.0
        %10933 = vmatpush1.msra.mxu0 %v3255
        %10934 = vmatprep.subr.mxu0 0.0
        %10935 = vmatpush1.msra.mxu0 %v3254
        %10936 = vmatprep.subr.mxu0 0.0
        %10937 = vmatpush1.msra.mxu0 %v3253
        %10938 = vmatprep.subr.mxu0 0.0
        %10939 = vmatpush1.msra.mxu0 %v3252
        %10940 = vmatprep.subr.mxu0 0.0
        %10941 = vmatpush1.msra.mxu0 %v3251
        %10942 = vmatprep.subr.mxu0 0.0
        %10943 = vmatpush1.msra.mxu0 %v3250
        %10944 = vmatprep.subr.mxu0 0.0
        %10945 = vmatpush2.msra.mxu0 %v3281
        %10946 = vmatprep.subr.mxu0 0.0
        %10947 = vmatpush2.msra.mxu0 %v3280
        %10948 = vmatprep.subr.mxu0 0.0
        %10949 = vmatpush2.msra.mxu0 %v3279
        %10950 = vmatprep.subr.mxu0 0.0
        %10951 = vmatpush2.msra.mxu0 %v3278
        %10952 = vmatprep.subr.mxu0 0.0
        %10953 = vmatpush2.msra.mxu0 %v3277
        %10954 = vmatprep.subr.mxu0 0.0
        %10955 = vmatpush2.msra.mxu0 %v3276
        %10956 = vmatprep.subr.mxu0 0.0
        %10957 = vmatpush2.msra.mxu0 %v3275
        %10958 = vmatprep.subr.mxu0 0.0
        %10959 = vmatpush2.msra.mxu0 %v3274
        %10960 = vmatprep.subr.mxu0 0.0
        %10961 = vmatpush2.msra.mxu0 %v3273
        %10962 = vmatprep.subr.mxu0 0.0
        %10963 = vmatpush2.msra.mxu0 %v3272
        %10964 = vmatprep.subr.mxu0 0.0
        %10965 = vmatpush2.msra.mxu0 %v3271
        %10966 = vmatprep.subr.mxu0 0.0
        %10967 = vmatpush2.msra.mxu0 %v3270
        %10968 = vmatprep.subr.mxu0 0.0
        %10969 = vmatpush2.msra.mxu0 %v3269
        %10970 = vmatprep.subr.mxu0 0.0
        %10971 = vmatpush2.msra.mxu0 %v3268
        %10972 = vmatprep.subr.mxu0 0.0
        %10973 = vmatpush2.msra.mxu0 %v3267
        %10974 = vmatprep.subr.mxu0 0.0
        %10975 = vmatpush2.msra.mxu0 %v3266
        %10976 = vmatprep.mubr.f32.mxu0 %v4192
        %10977 = vmatmul.mubr.f32.gmra.mxu0 %v4190
        %v10978 = vpop.f32.mrf.mxu0
        %v10979 = vadd.f32 %v10909, %v10978
        %v10980 = vpop.f32.mrf.mxu0
        %10981 = vdwg.mxu0
        %10982 = vmatprep.subr.mxu0 0.0
        %10983 = vmatpush1.msra.mxu0 %v3297
        %10984 = vmatprep.subr.mxu0 0.0
        %10985 = vmatpush1.msra.mxu0 %v3296
        %10986 = vmatprep.subr.mxu0 0.0
        %10987 = vmatpush1.msra.mxu0 %v3295
        %10988 = vmatprep.subr.mxu0 0.0
        %10989 = vmatpush1.msra.mxu0 %v3294
        %10990 = vmatprep.subr.mxu0 0.0
        %10991 = vmatpush1.msra.mxu0 %v3293
        %10992 = vmatprep.subr.mxu0 0.0
        %10993 = vmatpush1.msra.mxu0 %v3292
        %10994 = vmatprep.subr.mxu0 0.0
        %10995 = vmatpush1.msra.mxu0 %v3291
        %10996 = vmatprep.subr.mxu0 0.0
        %10997 = vmatpush1.msra.mxu0 %v3290
        %10998 = vmatprep.subr.mxu0 0.0
        %10999 = vmatpush1.msra.mxu0 %v3289
        %11000 = vmatprep.subr.mxu0 0.0
        %11001 = vmatpush1.msra.mxu0 %v3288
        %11002 = vmatprep.subr.mxu0 0.0
        %11003 = vmatpush1.msra.mxu0 %v3287
        %11004 = vmatprep.subr.mxu0 0.0
        %11005 = vmatpush1.msra.mxu0 %v3286
        %11006 = vmatprep.subr.mxu0 0.0
        %11007 = vmatpush1.msra.mxu0 %v3285
        %11008 = vmatprep.subr.mxu0 0.0
        %11009 = vmatpush1.msra.mxu0 %v3284
        %11010 = vmatprep.subr.mxu0 0.0
        %11011 = vmatpush1.msra.mxu0 %v3283
        %11012 = vmatprep.subr.mxu0 0.0
        %11013 = vmatpush1.msra.mxu0 %v3282
        %11014 = vmatprep.subr.mxu0 0.0
        %11015 = vmatpush2.msra.mxu0 %v3313
        %11016 = vmatprep.subr.mxu0 0.0
        %11017 = vmatpush2.msra.mxu0 %v3312
        %11018 = vmatprep.subr.mxu0 0.0
        %11019 = vmatpush2.msra.mxu0 %v3311
        %11020 = vmatprep.subr.mxu0 0.0
        %11021 = vmatpush2.msra.mxu0 %v3310
        %11022 = vmatprep.subr.mxu0 0.0
        %11023 = vmatpush2.msra.mxu0 %v3309
        %11024 = vmatprep.subr.mxu0 0.0
        %11025 = vmatpush2.msra.mxu0 %v3308
        %11026 = vmatprep.subr.mxu0 0.0
        %11027 = vmatpush2.msra.mxu0 %v3307
        %11028 = vmatprep.subr.mxu0 0.0
        %11029 = vmatpush2.msra.mxu0 %v3306
        %11030 = vmatprep.subr.mxu0 0.0
        %11031 = vmatpush2.msra.mxu0 %v3305
        %11032 = vmatprep.subr.mxu0 0.0
        %11033 = vmatpush2.msra.mxu0 %v3304
        %11034 = vmatprep.subr.mxu0 0.0
        %11035 = vmatpush2.msra.mxu0 %v3303
        %11036 = vmatprep.subr.mxu0 0.0
        %11037 = vmatpush2.msra.mxu0 %v3302
        %11038 = vmatprep.subr.mxu0 0.0
        %11039 = vmatpush2.msra.mxu0 %v3301
        %11040 = vmatprep.subr.mxu0 0.0
        %11041 = vmatpush2.msra.mxu0 %v3300
        %11042 = vmatprep.subr.mxu0 0.0
        %11043 = vmatpush2.msra.mxu0 %v3299
        %11044 = vmatprep.subr.mxu0 0.0
        %11045 = vmatpush2.msra.mxu0 %v3298
        %11046 = vmatprep.mubr.f32.mxu0 %v4208
        %11047 = vmatmul.mubr.f32.gmra.mxu0 %v4200
        %v11048 = vpop.f32.mrf.mxu0
        %v11049 = vadd.f32 %v10979, %v11048
        %v11050 = vpop.f32.mrf.mxu0
        %11051 = vdwg.mxu0
        %11052 = vmatprep.subr.mxu0 0.0
        %11053 = vmatpush1.msra.mxu0 %v3329
        %11054 = vmatprep.subr.mxu0 0.0
        %11055 = vmatpush1.msra.mxu0 %v3328
        %11056 = vmatprep.subr.mxu0 0.0
        %11057 = vmatpush1.msra.mxu0 %v3327
        %11058 = vmatprep.subr.mxu0 0.0
        %11059 = vmatpush1.msra.mxu0 %v3326
        %11060 = vmatprep.subr.mxu0 0.0
        %11061 = vmatpush1.msra.mxu0 %v3325
        %11062 = vmatprep.subr.mxu0 0.0
        %11063 = vmatpush1.msra.mxu0 %v3324
        %11064 = vmatprep.subr.mxu0 0.0
        %11065 = vmatpush1.msra.mxu0 %v3323
        %11066 = vmatprep.subr.mxu0 0.0
        %11067 = vmatpush1.msra.mxu0 %v3322
        %11068 = vmatprep.subr.mxu0 0.0
        %11069 = vmatpush1.msra.mxu0 %v3321
        %11070 = vmatprep.subr.mxu0 0.0
        %11071 = vmatpush1.msra.mxu0 %v3320
        %11072 = vmatprep.subr.mxu0 0.0
        %11073 = vmatpush1.msra.mxu0 %v3319
        %11074 = vmatprep.subr.mxu0 0.0
        %11075 = vmatpush1.msra.mxu0 %v3318
        %11076 = vmatprep.subr.mxu0 0.0
        %11077 = vmatpush1.msra.mxu0 %v3317
        %11078 = vmatprep.subr.mxu0 0.0
        %11079 = vmatpush1.msra.mxu0 %v3316
        %11080 = vmatprep.subr.mxu0 0.0
        %11081 = vmatpush1.msra.mxu0 %v3315
        %11082 = vmatprep.subr.mxu0 0.0
        %11083 = vmatpush1.msra.mxu0 %v3314
        %11084 = vmatprep.subr.mxu0 0.0
        %11085 = vmatpush2.msra.mxu0 %v3345
        %11086 = vmatprep.subr.mxu0 0.0
        %11087 = vmatpush2.msra.mxu0 %v3344
        %11088 = vmatprep.subr.mxu0 0.0
        %11089 = vmatpush2.msra.mxu0 %v3343
        %11090 = vmatprep.subr.mxu0 0.0
        %11091 = vmatpush2.msra.mxu0 %v3342
        %11092 = vmatprep.subr.mxu0 0.0
        %11093 = vmatpush2.msra.mxu0 %v3341
        %11094 = vmatprep.subr.mxu0 0.0
        %11095 = vmatpush2.msra.mxu0 %v3340
        %11096 = vmatprep.subr.mxu0 0.0
        %11097 = vmatpush2.msra.mxu0 %v3339
        %11098 = vmatprep.subr.mxu0 0.0
        %11099 = vmatpush2.msra.mxu0 %v3338
        %11100 = vmatprep.subr.mxu0 0.0
        %11101 = vmatpush2.msra.mxu0 %v3337
        %11102 = vmatprep.subr.mxu0 0.0
        %11103 = vmatpush2.msra.mxu0 %v3336
        %11104 = vmatprep.subr.mxu0 0.0
        %11105 = vmatpush2.msra.mxu0 %v3335
        %11106 = vmatprep.subr.mxu0 0.0
        %11107 = vmatpush2.msra.mxu0 %v3334
        %11108 = vmatprep.subr.mxu0 0.0
        %11109 = vmatpush2.msra.mxu0 %v3333
        %11110 = vmatprep.subr.mxu0 0.0
        %11111 = vmatpush2.msra.mxu0 %v3332
        %11112 = vmatprep.subr.mxu0 0.0
        %11113 = vmatpush2.msra.mxu0 %v3331
        %11114 = vmatprep.subr.mxu0 0.0
        %11115 = vmatpush2.msra.mxu0 %v3330
        %11116 = vmatprep.mubr.f32.mxu0 %v4209
        %11117 = vmatmul.mubr.f32.gmra.mxu0 %v4207
        %v11118 = vpop.f32.mrf.mxu0
        %v11119 = vadd.f32 %v11049, %v11118
        %v11120 = vpop.f32.mrf.mxu0
        %11121 = vdwg.mxu0
        %v11122 = vadd.f32 %v225, %v11119
        %vm11123 = vcmask 484352
        %11124 = vst.msk [vmem:[%s218] sm:$0x3] %vm11123, %v11122
        %p11125 = scmp.lt.s32.totalorder %s20, 1
        %s11126 = scalar_select %p11125, %s20, 1
        %s11127 = smul.addr %s11126, 2
        %s11128 = scalar_lea.vmem %s2, %s11127
        // Predicated region
        $region37: #{learn_linear.1} parent=27 // pred_check
          %p11129 = pneg %p106
        $region38: #{learn_linear.1} parent=27 // pred_check_branch
          %11131 = sbr.rel (%p11129) target = $region40
        $region39: #{learn_linear.1} parent=27 // pred_region
          _
        $region40: #{learn_linear.1} parent=27 // pred_fallthru
          _
      $region28: #{learn_linear.1} parent=5 // pred_fallthru
        _
      %p11132 = scmp.le.s32.totalorder 2, %s11
      // Predicated region
      $region41: #{learn_linear.1} parent=5 // pred_check
        %p11133 = pneg %p11132
      $region42: #{learn_linear.1} parent=5 // pred_check_branch
        %11135 = sbr.rel (%p11133) target = $region44
      $region43: #{learn_linear.1} parent=5 // pred_region
        %s11136 = ssub.s32 %s11, 2
        // Predicated region
        $region45: #{learn_linear.1} parent=43 // pred_check
          %p11137 = pneg %p112
        $region46: #{learn_linear.1} parent=43 // pred_check_branch
          %11139 = sbr.rel (%p11137) target = $region48
        $region47: #{learn_linear.1} parent=43 // pred_region
          %p11140 = scmp.lt.s32.totalorder %s22, 1
          %s11141 = scalar_select %p11140, %s22, 1
          %s11142 = smul.addr %s11141, 2
          %s11143 = scalar_lea.vmem %s2, %s11142
        $region48: #{learn_linear.1} parent=43 // pred_fallthru
          _
      $region44: #{learn_linear.1} parent=5 // pred_fallthru
        _
    $region6: #{learn_linear.1} parent=1 // loop_footer
      %s15 = sadd.s32 1, %s11
    $region7: #{learn_linear.1} parent=1 // loop_footer_branch
      %10 = sbr.rel target = $region3
    $region8: #{learn_linear.1} parent=1 // loop_exit
      _
    %11144 = vsyncpa [#allocation3], 1
    %s11145 = scalar_lea.sflag [#allocation3], 1
    %11146 = vsyncpa %s11145, 1

</llo_original>
